<compile_context>
chip_gen: v7x
topology: tpu7x:2x2x1
jax: 0.10.0
libtpu: 0.0.40
codegen_flags: <defaults>
</compile_context>

<pallas_src>
import functools

import jax
import jax.numpy as jnp
from jax import lax
from jax.experimental import pallas as pl
from jax.experimental.pallas import tpu as pltpu


_DILATIONS = (2, 4, 8)       # astrous rates of branches 2-4 (output_stride=8)
_DMAX = max(_DILATIONS)      # 8
_HZ = _DMAX                  # zero-pad planes on each z side
_HY = _DMAX + 1              # zero-pad rows on each y side (absorbs x spillover)


# ----------------------------------------------------------------------------
# Fused Pallas kernel: one (image, z-plane) tile per grid step.
# ----------------------------------------------------------------------------
def _aspp_fused_kernel(xz_ref, w1_ref, b1_ref, wd_ref, bd_ref, wb_ref,
                       xmask_ref, cbias_ref, out_ref, *, H, W):
    HW = H * W
    zp = pl.program_id(1)          # output z-plane within this image
    base_col = _HY * W             # start of the valid y-region of a padded plane

    def window(zsrc, col0):
        # (Cin, H*W) shifted view of the padded input; stays in VMEM.
        w = xz_ref[pl.ds(0, 1), pl.ds(zsrc, 1), :, pl.ds(col0, HW)]
        return w[0, 0]

    f32 = jnp.float32

    # ---- branch 1: 1x1x1 conv (BN-scale folded into w1) + bias + ReLU ----
    x0 = window(_HZ + zp, base_col)
    y = jnp.maximum(
        jnp.dot(w1_ref[...], x0, preferred_element_type=f32) + b1_ref[...], 0.0)
    # bottleneck accumulation with the scale-folded 1x1 bottleneck block
    bott = jnp.dot(wb_ref[0], y, preferred_element_type=f32)

    # ---- branches 2-4: dilated 3x3x3 convs via in-kernel im2col (27 taps) ----
    for bi, d in enumerate(_DILATIONS):
        acc = None
        t = 0
        for dz in (-1, 0, 1):
            zsrc = _HZ + zp + dz * d          # z handled by zero-padded planes
            for dy in (-1, 0, 1):
                for dx in (-1, 0, 1):
                    col0 = base_col + (dy * W + dx) * d
                    win = window(zsrc, col0)
                    contrib = jnp.dot(wd_ref[bi, t], win,
                                      preferred_element_type=f32)
                    if dx != 0:
                        # only the x axis can wrap into a neighbouring row;
                        # y/z out-of-range reads hit zero padding.
                        j = bi * 3 + dx + 1
                        contrib = contrib * xmask_ref[j:j + 1, :]
                    acc = contrib if acc is None else acc + contrib
                    t += 1
        y = jnp.maximum(acc + bd_ref[bi], 0.0)
        bott = bott + jnp.dot(wb_ref[bi + 1], y, preferred_element_type=f32)

    # ---- bottleneck epilogue: per-image bias (pool branch folded in) + ReLU ----
    out_ref[0, 0, :, :] = jnp.maximum(bott + cbias_ref[0], 0.0).astype(out_ref.dtype)


# ----------------------------------------------------------------------------
# Wrapper: BN folding, padding / re-layout, pallas_call
# ----------------------------------------------------------------------------
def _fold_bn(bn, eps=1e-5):
    gamma, beta, mean, var = bn
    scale = gamma / jnp.sqrt(var + eps)
    bias = beta - mean * scale
    return scale, bias


@functools.partial(jax.jit, static_argnames=("compute_dtype",))
def aspp_forward_pallas(x, params, compute_dtype=jnp.float32):
    # x: (N, Cin, D, H, W) float32 (PyTorch NCDHW convention)
    N, Cin, D, H, W = x.shape
    Cout = params["w1"].shape[0]
    if W < _DMAX:
        raise ValueError("fused ASPP kernel requires W >= max dilation (8)")
    HW = H * W
    Hy = H + 2 * _HY
    Dz = D + 2 * _HZ

    # ---- fold BatchNorm (eval) into weights / biases ----
    s1, b1 = _fold_bn(params["bn1"])
    w1 = (s1[:, None] * params["w1"].reshape(Cout, Cin)).astype(compute_dtype)
    b1 = b1[:, None].astype(jnp.float32)                             # (Cout, 1)

    wds, bds = [], []
    for name, bn in (("w2", "bn2"), ("w3", "bn3"), ("w4", "bn4")):
        s, b = _fold_bn(params[bn])
        wt = params[name].reshape(Cout, Cin, 27)                     # taps: kz,ky,kx
        wt = jnp.transpose(wt, (2, 0, 1)) * s[None, :, None]         # (27, Cout, Cin)
        wds.append(wt)
        bds.append(b[:, None])
    wd = jnp.stack(wds).astype(compute_dtype)                        # (3, 27, Cout, Cin)
    bd = jnp.stack(bds).astype(jnp.float32)                          # (3, Cout, 1)

    sb, bb = _fold_bn(params["bnb"])
    wbs = sb[:, None] * params["wb"].reshape(Cout, 5 * Cout)         # scale folded
    wb_blocks = jnp.transpose(wbs.reshape(Cout, 5, Cout), (1, 0, 2)) # (5, Cout, Cout)
    wb4 = wb_blocks[:4].astype(jnp.float32)                          # branches 1-4

    # ---- branch 5 (global pool + 1x1 + BN + ReLU + upsample) -> per-image bias ----
    sp, bp = _fold_bn(params["bnp"])
    pooled = jnp.mean(x, axis=(2, 3, 4))                             # (N, Cin), plain JAX (negligible)
    wp = params["wp"].reshape(Cout, Cin)
    v = jnp.maximum((pooled @ wp.T) * sp[None, :] + bp[None, :], 0.0)  # (N, Cout)
    cbias = ((v @ wb_blocks[4].T) + bb[None, :])[:, :, None].astype(jnp.float32)  # (N, Cout, 1)

    # ---- pad + re-layout the input once: (N, Dz, Cin, Hy*W), spatial on lanes ----
    xt = jnp.transpose(x, (0, 2, 1, 3, 4))                           # (N, D, Cin, H, W)
    xt = jnp.pad(xt, ((0, 0), (0, 0), (0, 0), (_HY, _HY), (0, 0)))   # pad y
    xt = xt.reshape(N, D, Cin, Hy * W)
    xz = jnp.pad(xt, ((0, 0), (_HZ, _HZ), (0, 0), (0, 0)))           # pad z
    xz = xz.astype(compute_dtype)

    # ---- x-boundary masks (row = branch*3 + dx+1), shape (9, H*W) f32 ----
    xs = jnp.arange(HW, dtype=jnp.int32) % W
    rows = []
    for d in _DILATIONS:
        for dx in (-1, 0, 1):
            xx = xs + dx * d
            rows.append(((xx >= 0) & (xx < W)).astype(jnp.float32))
    xmask = jnp.stack(rows)                                          # (9, HW)

    kernel = functools.partial(_aspp_fused_kernel, H=H, W=W)
    out = pl.pallas_call(
        kernel,
        out_shape=jax.ShapeDtypeStruct((N, D, Cout, HW), jnp.float32),
        grid=(N, D),
        in_specs=[
            pl.BlockSpec((1, Dz, Cin, Hy * W), lambda n, z: (n, 0, 0, 0)),  # padded image (resident per n)
            pl.BlockSpec((Cout, Cin), lambda n, z: (0, 0)),                 # w1 (scale-folded)
            pl.BlockSpec((Cout, 1), lambda n, z: (0, 0)),                   # b1
            pl.BlockSpec((3, 27, Cout, Cin), lambda n, z: (0, 0, 0, 0)),    # dilated tap weights
            pl.BlockSpec((3, Cout, 1), lambda n, z: (0, 0, 0)),             # dilated biases
            pl.BlockSpec((4, Cout, Cout), lambda n, z: (0, 0, 0)),          # bottleneck blocks 1-4
            pl.BlockSpec((9, HW), lambda n, z: (0, 0)),                     # x-boundary masks
            pl.BlockSpec((1, Cout, 1), lambda n, z: (n, 0, 0)),             # per-image bias (pool branch)
        ],
        out_specs=pl.BlockSpec((1, 1, Cout, HW), lambda n, z: (n, z, 0, 0)),
        compiler_params=pltpu.CompilerParams(
            dimension_semantics=("parallel", "parallel")),
    )(xz, w1, b1, wd, bd, wb4, xmask, cbias)

    out = out.reshape(N, D, Cout, H, W)
    return jnp.transpose(out, (0, 2, 1, 3, 4))                       # NCDHW


# ----------------------------------------------------------------------------
# Parameter construction (deterministic) and pure-JAX reference
# ----------------------------------------------------------------------------
def make_params(key, in_channels, out_channels):
    ks = jax.random.split(key, 16)

    def bn_params(k, c):
        k1, k2, k3, k4 = jax.random.split(k, 4)
        gamma = 1.0 + 0.1 * jax.random.normal(k1, (c,), jnp.float32)
        beta = 0.1 * jax.random.normal(k2, (c,), jnp.float32)
        mean = 0.1 * jax.random.normal(k3, (c,), jnp.float32)
        var = 0.5 + jax.random.uniform(k4, (c,), jnp.float32)
        return (gamma, beta, mean, var)

    return {
        "w1": 0.1 * jax.random.normal(ks[0], (out_channels, in_channels, 1, 1, 1), jnp.float32),
        "w2": 0.1 * jax.random.normal(ks[1], (out_channels, in_channels, 3, 3, 3), jnp.float32),
        "w3": 0.1 * jax.random.normal(ks[2], (out_channels, in_channels, 3, 3, 3), jnp.float32),
        "w4": 0.1 * jax.random.normal(ks[3], (out_channels, in_channels, 3, 3, 3), jnp.float32),
        "wp": 0.1 * jax.random.normal(ks[4], (out_channels, in_channels, 1, 1, 1), jnp.float32),
        "wb": 0.1 * jax.random.normal(ks[5], (out_channels, 5 * out_channels, 1, 1, 1), jnp.float32),
        "bn1": bn_params(ks[6], out_channels),
        "bn2": bn_params(ks[7], out_channels),
        "bn3": bn_params(ks[8], out_channels),
        "bn4": bn_params(ks[9], out_channels),
        "bnp": bn_params(ks[10], out_channels),
        "bnb": bn_params(ks[11], out_channels),
    }


def _conv3d(x, w, dilation=1, padding=0):
    return lax.conv_general_dilated(
        x, w, window_strides=(1, 1, 1),
        padding=[(padding, padding)] * 3,
        rhs_dilation=(dilation,) * 3,
        dimension_numbers=("NCDHW", "OIDHW", "NCDHW"),
    )


def _bn_relu(x, bn, eps=1e-5):
    gamma, beta, mean, var = bn
    sh = (1, -1, 1, 1, 1)
    y = (x - mean.reshape(sh)) / jnp.sqrt(var.reshape(sh) + eps)
    y = y * gamma.reshape(sh) + beta.reshape(sh)
    return jnp.maximum(y, 0.0)


def aspp_forward_ref(x, params):
    N, Cin, D, H, W = x.shape
    y1 = _bn_relu(_conv3d(x, params["w1"]), params["bn1"])
    y2 = _bn_relu(_conv3d(x, params["w2"], 2, 2), params["bn2"])
    y3 = _bn_relu(_conv3d(x, params["w3"], 4, 4), params["bn3"])
    y4 = _bn_relu(_conv3d(x, params["w4"], 8, 8), params["bn4"])
    pooled = jnp.mean(x, axis=(2, 3, 4), keepdims=True)
    y5 = _bn_relu(_conv3d(pooled, params["wp"]), params["bnp"])
    y5 = jnp.broadcast_to(y5, (N, y5.shape[1], D, H, W))
    cat = jnp.concatenate([y1, y2, y3, y4, y5], axis=1)
    return _bn_relu(_conv3d(cat, params["wb"]), params["bnb"])


# ----------------------------------------------------------------------------
if __name__ == "__main__":
    key = jax.random.PRNGKey(0)
    kx, kp = jax.random.split(key)

    N, Cin, Cout = 2, 4, 8
    D = H = W = 16
    x = jax.random.normal(kx, (N, Cin, D, H, W), jnp.float32)
    params = make_params(kp, Cin, Cout)

    out = aspp_forward_pallas(x, params)
    out = jax.block_until_ready(out)

    ref = jax.block_until_ready(aspp_forward_ref(x, params))
    assert out.shape == (N, Cout, D, H, W)
    assert jnp.allclose(out, ref, atol=1e-3, rtol=1e-3), (
        f"max abs err {jnp.max(jnp.abs(out - ref))}"
    )
    print("KERNEL_OK")
</pallas_src>

<mosaic_0001>
module attributes {stable_mosaic.version = 11 : i64} {
  func.func @_aspp_fused_kernel(%arg0: i32, %arg1: i32, %arg2: memref<1x32x4x544xf32, #tpu.memory_space<vmem>>, %arg3: memref<8x4xf32, #tpu.memory_space<vmem>>, %arg4: memref<8x1xf32, #tpu.memory_space<vmem>>, %arg5: memref<3x27x8x4xf32, #tpu.memory_space<vmem>>, %arg6: memref<3x8x1xf32, #tpu.memory_space<vmem>>, %arg7: memref<4x8x8xf32, #tpu.memory_space<vmem>>, %arg8: memref<9x256xf32, #tpu.memory_space<vmem>>, %arg9: memref<1x8x1xf32, #tpu.memory_space<vmem>>, %arg10: memref<1x1x8x256xf32, #tpu.memory_space<vmem>>) attributes {dimension_semantics = [#tpu.dimension_semantics<parallel>, #tpu.dimension_semantics<parallel>], iteration_bounds = array<i64: 2, 16>, scalar_prefetch = 0 : i64, scratch_operands = 0 : i64, tpu.core_type = #tpu.core_type<tc>, window_params = [{transform_indices = @transform_0, window_bounds = array<i64: 1, 32, 4, 544>}, {pipeline_mode = #tpu.pipeline_mode<synchronous>, transform_indices = @transform_1, window_bounds = array<i64: 8, 4>}, {pipeline_mode = #tpu.pipeline_mode<synchronous>, transform_indices = @transform_2, window_bounds = array<i64: 8, 1>}, {pipeline_mode = #tpu.pipeline_mode<synchronous>, transform_indices = @transform_3, window_bounds = array<i64: 3, 27, 8, 4>}, {pipeline_mode = #tpu.pipeline_mode<synchronous>, transform_indices = @transform_4, window_bounds = array<i64: 3, 8, 1>}, {pipeline_mode = #tpu.pipeline_mode<synchronous>, transform_indices = @transform_5, window_bounds = array<i64: 4, 8, 8>}, {pipeline_mode = #tpu.pipeline_mode<synchronous>, transform_indices = @transform_6, window_bounds = array<i64: 9, 256>}, {transform_indices = @transform_7, window_bounds = array<i64: 1, 8, 1>}, {transform_indices = @transform_8, window_bounds = array<i64: 1, 1, 8, 256>}]} {
    %c8_i32 = arith.constant 8 : i32
    %0 = arith.addi %c8_i32, %arg1 : i32
    %c0 = arith.constant 0 : index
    %1 = arith.index_cast %0 : i32 to index
    %c0_0 = arith.constant 0 : index
    %c144 = arith.constant 144 : index
    %2 = vector.load %arg2[%c0, %1, %c0_0, %c144] : memref<1x32x4x544xf32, #tpu.memory_space<vmem>>, vector<1x1x4x256xf32>
    %3 = vector.shape_cast %2 : vector<1x1x4x256xf32> to vector<4x256xf32>
    %c0_1 = arith.constant 0 : index
    %c0_2 = arith.constant 0 : index
    %4 = vector.load %arg3[%c0_1, %c0_2] : memref<8x4xf32, #tpu.memory_space<vmem>>, vector<8x4xf32>
    %cst = arith.constant dense<0.000000e+00> : vector<8x256xf32>
    %5 = tpu.matmul %4, %3, %cst {dimension_numbers = #tpu.dot_dimension_numbers<[1], [0], [0], [1], [0, 0, 1, 1], [], []>} : vector<8x4xf32>, vector<4x256xf32>, vector<8x256xf32> -> vector<8x256xf32>
    %c0_3 = arith.constant 0 : index
    %c0_4 = arith.constant 0 : index
    %6 = vector.load %arg4[%c0_3, %c0_4] : memref<8x1xf32, #tpu.memory_space<vmem>>, vector<8x1xf32>
    %7 = vector.broadcast %6 : vector<8x1xf32> to vector<8x256xf32>
    %8 = arith.addf %5, %7 : vector<8x256xf32>
    %cst_5 = arith.constant 0.000000e+00 : f32
    %9 = vector.broadcast %cst_5 : f32 to vector<8x256xf32>
    %10 = arith.maximumf %8, %9 : vector<8x256xf32>
    %c0_6 = arith.constant 0 : index
    %c0_7 = arith.constant 0 : index
    %c0_8 = arith.constant 0 : index
    %11 = vector.load %arg7[%c0_6, %c0_7, %c0_8] : memref<4x8x8xf32, #tpu.memory_space<vmem>>, vector<1x8x8xf32>
    %12 = vector.shape_cast %11 : vector<1x8x8xf32> to vector<8x8xf32>
    %cst_9 = arith.constant dense<0.000000e+00> : vector<8x256xf32>
    %13 = tpu.matmul %12, %10, %cst_9 {dimension_numbers = #tpu.dot_dimension_numbers<[1], [0], [0], [1], [0, 0, 1, 1], [], []>} : vector<8x8xf32>, vector<8x256xf32>, vector<8x256xf32> -> vector<8x256xf32>
    %c8_i32_10 = arith.constant 8 : i32
    %14 = arith.addi %c8_i32_10, %arg1 : i32
    %c-2_i32 = arith.constant -2 : i32
    %15 = arith.addi %14, %c-2_i32 : i32
    %c0_11 = arith.constant 0 : index
    %16 = arith.index_cast %15 : i32 to index
    %c0_12 = arith.constant 0 : index
    %c110 = arith.constant 110 : index
    %17 = vector.load %arg2[%c0_11, %16, %c0_12, %c110] : memref<1x32x4x544xf32, #tpu.memory_space<vmem>>, vector<1x1x4x256xf32>
    %18 = vector.shape_cast %17 : vector<1x1x4x256xf32> to vector<4x256xf32>
    %c0_13 = arith.constant 0 : index
    %c0_14 = arith.constant 0 : index
    %c0_15 = arith.constant 0 : index
    %c0_16 = arith.constant 0 : index
    %19 = vector.load %arg5[%c0_13, %c0_14, %c0_15, %c0_16] : memref<3x27x8x4xf32, #tpu.memory_space<vmem>>, vector<1x1x8x4xf32>
    %20 = vector.shape_cast %19 : vector<1x1x8x4xf32> to vector<8x4xf32>
    %cst_17 = arith.constant dense<0.000000e+00> : vector<8x256xf32>
    %21 = tpu.matmul %20, %18, %cst_17 {dimension_numbers = #tpu.dot_dimension_numbers<[1], [0], [0], [1], [0, 0, 1, 1], [], []>} : vector<8x4xf32>, vector<4x256xf32>, vector<8x256xf32> -> vector<8x256xf32>
    %c0_18 = arith.constant 0 : index
    %c0_19 = arith.constant 0 : index
    %22 = vector.load %arg8[%c0_18, %c0_19] : memref<9x256xf32, #tpu.memory_space<vmem>>, vector<1x256xf32>
    %23 = vector.broadcast %22 : vector<1x256xf32> to vector<8x256xf32>
    %24 = arith.mulf %21, %23 : vector<8x256xf32>
    %c0_20 = arith.constant 0 : index
    %25 = arith.index_cast %15 : i32 to index
    %c0_21 = arith.constant 0 : index
    %c112 = arith.constant 112 : index
    %26 = vector.load %arg2[%c0_20, %25, %c0_21, %c112] : memref<1x32x4x544xf32, #tpu.memory_space<vmem>>, vector<1x1x4x256xf32>
    %27 = vector.shape_cast %26 : vector<1x1x4x256xf32> to vector<4x256xf32>
    %c0_22 = arith.constant 0 : index
    %c1 = arith.constant 1 : index
    %c0_23 = arith.constant 0 : index
    %c0_24 = arith.constant 0 : index
    %28 = vector.load %arg5[%c0_22, %c1, %c0_23, %c0_24] : memref<3x27x8x4xf32, #tpu.memory_space<vmem>>, vector<1x1x8x4xf32>
    %29 = vector.shape_cast %28 : vector<1x1x8x4xf32> to vector<8x4xf32>
    %cst_25 = arith.constant dense<0.000000e+00> : vector<8x256xf32>
    %30 = tpu.matmul %29, %27, %cst_25 {dimension_numbers = #tpu.dot_dimension_numbers<[1], [0], [0], [1], [0, 0, 1, 1], [], []>} : vector<8x4xf32>, vector<4x256xf32>, vector<8x256xf32> -> vector<8x256xf32>
    %31 = arith.addf %24, %30 : vector<8x256xf32>
    %c0_26 = arith.constant 0 : index
    %32 = arith.index_cast %15 : i32 to index
    %c0_27 = arith.constant 0 : index
    %c114 = arith.constant 114 : index
    %33 = vector.load %arg2[%c0_26, %32, %c0_27, %c114] : memref<1x32x4x544xf32, #tpu.memory_space<vmem>>, vector<1x1x4x256xf32>
    %34 = vector.shape_cast %33 : vector<1x1x4x256xf32> to vector<4x256xf32>
    %c0_28 = arith.constant 0 : index
    %c2 = arith.constant 2 : index
    %c0_29 = arith.constant 0 : index
    %c0_30 = arith.constant 0 : index
    %35 = vector.load %arg5[%c0_28, %c2, %c0_29, %c0_30] : memref<3x27x8x4xf32, #tpu.memory_space<vmem>>, vector<1x1x8x4xf32>
    %36 = vector.shape_cast %35 : vector<1x1x8x4xf32> to vector<8x4xf32>
    %cst_31 = arith.constant dense<0.000000e+00> : vector<8x256xf32>
    %37 = tpu.matmul %36, %34, %cst_31 {dimension_numbers = #tpu.dot_dimension_numbers<[1], [0], [0], [1], [0, 0, 1, 1], [], []>} : vector<8x4xf32>, vector<4x256xf32>, vector<8x256xf32> -> vector<8x256xf32>
    %c2_32 = arith.constant 2 : index
    %c0_33 = arith.constant 0 : index
    %38 = vector.load %arg8[%c2_32, %c0_33] : memref<9x256xf32, #tpu.memory_space<vmem>>, vector<1x256xf32>
    %39 = vector.broadcast %38 : vector<1x256xf32> to vector<8x256xf32>
    %40 = arith.mulf %37, %39 : vector<8x256xf32>
    %41 = arith.addf %31, %40 : vector<8x256xf32>
    %c0_34 = arith.constant 0 : index
    %42 = arith.index_cast %15 : i32 to index
    %c0_35 = arith.constant 0 : index
    %c142 = arith.constant 142 : index
    %43 = vector.load %arg2[%c0_34, %42, %c0_35, %c142] : memref<1x32x4x544xf32, #tpu.memory_space<vmem>>, vector<1x1x4x256xf32>
    %44 = vector.shape_cast %43 : vector<1x1x4x256xf32> to vector<4x256xf32>
    %c0_36 = arith.constant 0 : index
    %c3 = arith.constant 3 : index
    %c0_37 = arith.constant 0 : index
    %c0_38 = arith.constant 0 : index
    %45 = vector.load %arg5[%c0_36, %c3, %c0_37, %c0_38] : memref<3x27x8x4xf32, #tpu.memory_space<vmem>>, vector<1x1x8x4xf32>
    %46 = vector.shape_cast %45 : vector<1x1x8x4xf32> to vector<8x4xf32>
    %cst_39 = arith.constant dense<0.000000e+00> : vector<8x256xf32>
    %47 = tpu.matmul %46, %44, %cst_39 {dimension_numbers = #tpu.dot_dimension_numbers<[1], [0], [0], [1], [0, 0, 1, 1], [], []>} : vector<8x4xf32>, vector<4x256xf32>, vector<8x256xf32> -> vector<8x256xf32>
    %c0_40 = arith.constant 0 : index
    %c0_41 = arith.constant 0 : index
    %48 = vector.load %arg8[%c0_40, %c0_41] : memref<9x256xf32, #tpu.memory_space<vmem>>, vector<1x256xf32>
    %49 = vector.broadcast %48 : vector<1x256xf32> to vector<8x256xf32>
    %50 = arith.mulf %47, %49 : vector<8x256xf32>
    %51 = arith.addf %41, %50 : vector<8x256xf32>
    %c0_42 = arith.constant 0 : index
    %52 = arith.index_cast %15 : i32 to index
    %c0_43 = arith.constant 0 : index
    %c144_44 = arith.constant 144 : index
    %53 = vector.load %arg2[%c0_42, %52, %c0_43, %c144_44] : memref<1x32x4x544xf32, #tpu.memory_space<vmem>>, vector<1x1x4x256xf32>
    %54 = vector.shape_cast %53 : vector<1x1x4x256xf32> to vector<4x256xf32>
    %c0_45 = arith.constant 0 : index
    %c4 = arith.constant 4 : index
    %c0_46 = arith.constant 0 : index
    %c0_47 = arith.constant 0 : index
    %55 = vector.load %arg5[%c0_45, %c4, %c0_46, %c0_47] : memref<3x27x8x4xf32, #tpu.memory_space<vmem>>, vector<1x1x8x4xf32>
    %56 = vector.shape_cast %55 : vector<1x1x8x4xf32> to vector<8x4xf32>
    %cst_48 = arith.constant dense<0.000000e+00> : vector<8x256xf32>
    %57 = tpu.matmul %56, %54, %cst_48 {dimension_numbers = #tpu.dot_dimension_numbers<[1], [0], [0], [1], [0, 0, 1, 1], [], []>} : vector<8x4xf32>, vector<4x256xf32>, vector<8x256xf32> -> vector<8x256xf32>
    %58 = arith.addf %51, %57 : vector<8x256xf32>
    %c0_49 = arith.constant 0 : index
    %59 = arith.index_cast %15 : i32 to index
    %c0_50 = arith.constant 0 : index
    %c146 = arith.constant 146 : index
    %60 = vector.load %arg2[%c0_49, %59, %c0_50, %c146] : memref<1x32x4x544xf32, #tpu.memory_space<vmem>>, vector<1x1x4x256xf32>
    %61 = vector.shape_cast %60 : vector<1x1x4x256xf32> to vector<4x256xf32>
    %c0_51 = arith.constant 0 : index
    %c5 = arith.constant 5 : index
    %c0_52 = arith.constant 0 : index
    %c0_53 = arith.constant 0 : index
    %62 = vector.load %arg5[%c0_51, %c5, %c0_52, %c0_53] : memref<3x27x8x4xf32, #tpu.memory_space<vmem>>, vector<1x1x8x4xf32>
    %63 = vector.shape_cast %62 : vector<1x1x8x4xf32> to vector<8x4xf32>
    %cst_54 = arith.constant dense<0.000000e+00> : vector<8x256xf32>
    %64 = tpu.matmul %63, %61, %cst_54 {dimension_numbers = #tpu.dot_dimension_numbers<[1], [0], [0], [1], [0, 0, 1, 1], [], []>} : vector<8x4xf32>, vector<4x256xf32>, vector<8x256xf32> -> vector<8x256xf32>
    %c2_55 = arith.constant 2 : index
    %c0_56 = arith.constant 0 : index
    %65 = vector.load %arg8[%c2_55, %c0_56] : memref<9x256xf32, #tpu.memory_space<vmem>>, vector<1x256xf32>
    %66 = vector.broadcast %65 : vector<1x256xf32> to vector<8x256xf32>
    %67 = arith.mulf %64, %66 : vector<8x256xf32>
    %68 = arith.addf %58, %67 : vector<8x256xf32>
    %c0_57 = arith.constant 0 : index
    %69 = arith.index_cast %15 : i32 to index
    %c0_58 = arith.constant 0 : index
    %c174 = arith.constant 174 : index
    %70 = vector.load %arg2[%c0_57, %69, %c0_58, %c174] : memref<1x32x4x544xf32, #tpu.memory_space<vmem>>, vector<1x1x4x256xf32>
    %71 = vector.shape_cast %70 : vector<1x1x4x256xf32> to vector<4x256xf32>
    %c0_59 = arith.constant 0 : index
    %c6 = arith.constant 6 : index
    %c0_60 = arith.constant 0 : index
    %c0_61 = arith.constant 0 : index
    %72 = vector.load %arg5[%c0_59, %c6, %c0_60, %c0_61] : memref<3x27x8x4xf32, #tpu.memory_space<vmem>>, vector<1x1x8x4xf32>
    %73 = vector.shape_cast %72 : vector<1x1x8x4xf32> to vector<8x4xf32>
    %cst_62 = arith.constant dense<0.000000e+00> : vector<8x256xf32>
    %74 = tpu.matmul %73, %71, %cst_62 {dimension_numbers = #tpu.dot_dimension_numbers<[1], [0], [0], [1], [0, 0, 1, 1], [], []>} : vector<8x4xf32>, vector<4x256xf32>, vector<8x256xf32> -> vector<8x256xf32>
    %c0_63 = arith.constant 0 : index
    %c0_64 = arith.constant 0 : index
    %75 = vector.load %arg8[%c0_63, %c0_64] : memref<9x256xf32, #tpu.memory_space<vmem>>, vector<1x256xf32>
    %76 = vector.broadcast %75 : vector<1x256xf32> to vector<8x256xf32>
    %77 = arith.mulf %74, %76 : vector<8x256xf32>
    %78 = arith.addf %68, %77 : vector<8x256xf32>
    %c0_65 = arith.constant 0 : index
    %79 = arith.index_cast %15 : i32 to index
    %c0_66 = arith.constant 0 : index
    %c176 = arith.constant 176 : index
    %80 = vector.load %arg2[%c0_65, %79, %c0_66, %c176] : memref<1x32x4x544xf32, #tpu.memory_space<vmem>>, vector<1x1x4x256xf32>
    %81 = vector.shape_cast %80 : vector<1x1x4x256xf32> to vector<4x256xf32>
    %c0_67 = arith.constant 0 : index
    %c7 = arith.constant 7 : index
    %c0_68 = arith.constant 0 : index
    %c0_69 = arith.constant 0 : index
    %82 = vector.load %arg5[%c0_67, %c7, %c0_68, %c0_69] : memref<3x27x8x4xf32, #tpu.memory_space<vmem>>, vector<1x1x8x4xf32>
    %83 = vector.shape_cast %82 : vector<1x1x8x4xf32> to vector<8x4xf32>
    %cst_70 = arith.constant dense<0.000000e+00> : vector<8x256xf32>
    %84 = tpu.matmul %83, %81, %cst_70 {dimension_numbers = #tpu.dot_dimension_numbers<[1], [0], [0], [1], [0, 0, 1, 1], [], []>} : vector<8x4xf32>, vector<4x256xf32>, vector<8x256xf32> -> vector<8x256xf32>
    %85 = arith.addf %78, %84 : vector<8x256xf32>
    %c0_71 = arith.constant 0 : index
    %86 = arith.index_cast %15 : i32 to index
    %c0_72 = arith.constant 0 : index
    %c178 = arith.constant 178 : index
    %87 = vector.load %arg2[%c0_71, %86, %c0_72, %c178] : memref<1x32x4x544xf32, #tpu.memory_space<vmem>>, vector<1x1x4x256xf32>
    %88 = vector.shape_cast %87 : vector<1x1x4x256xf32> to vector<4x256xf32>
    %c0_73 = arith.constant 0 : index
    %c8 = arith.constant 8 : index
    %c0_74 = arith.constant 0 : index
    %c0_75 = arith.constant 0 : index
    %89 = vector.load %arg5[%c0_73, %c8, %c0_74, %c0_75] : memref<3x27x8x4xf32, #tpu.memory_space<vmem>>, vector<1x1x8x4xf32>
    %90 = vector.shape_cast %89 : vector<1x1x8x4xf32> to vector<8x4xf32>
    %cst_76 = arith.constant dense<0.000000e+00> : vector<8x256xf32>
    %91 = tpu.matmul %90, %88, %cst_76 {dimension_numbers = #tpu.dot_dimension_numbers<[1], [0], [0], [1], [0, 0, 1, 1], [], []>} : vector<8x4xf32>, vector<4x256xf32>, vector<8x256xf32> -> vector<8x256xf32>
    %c2_77 = arith.constant 2 : index
    %c0_78 = arith.constant 0 : index
    %92 = vector.load %arg8[%c2_77, %c0_78] : memref<9x256xf32, #tpu.memory_space<vmem>>, vector<1x256xf32>
    %93 = vector.broadcast %92 : vector<1x256xf32> to vector<8x256xf32>
    %94 = arith.mulf %91, %93 : vector<8x256xf32>
    %95 = arith.addf %85, %94 : vector<8x256xf32>
    %c8_i32_79 = arith.constant 8 : i32
    %96 = arith.addi %c8_i32_79, %arg1 : i32
    %c0_i32 = arith.constant 0 : i32
    %97 = arith.addi %96, %c0_i32 : i32
    %c0_80 = arith.constant 0 : index
    %98 = arith.index_cast %97 : i32 to index
    %c0_81 = arith.constant 0 : index
    %c110_82 = arith.constant 110 : index
    %99 = vector.load %arg2[%c0_80, %98, %c0_81, %c110_82] : memref<1x32x4x544xf32, #tpu.memory_space<vmem>>, vector<1x1x4x256xf32>
    %100 = vector.shape_cast %99 : vector<1x1x4x256xf32> to vector<4x256xf32>
    %c0_83 = arith.constant 0 : index
    %c9 = arith.constant 9 : index
    %c0_84 = arith.constant 0 : index
    %c0_85 = arith.constant 0 : index
    %101 = vector.load %arg5[%c0_83, %c9, %c0_84, %c0_85] : memref<3x27x8x4xf32, #tpu.memory_space<vmem>>, vector<1x1x8x4xf32>
    %102 = vector.shape_cast %101 : vector<1x1x8x4xf32> to vector<8x4xf32>
    %cst_86 = arith.constant dense<0.000000e+00> : vector<8x256xf32>
    %103 = tpu.matmul %102, %100, %cst_86 {dimension_numbers = #tpu.dot_dimension_numbers<[1], [0], [0], [1], [0, 0, 1, 1], [], []>} : vector<8x4xf32>, vector<4x256xf32>, vector<8x256xf32> -> vector<8x256xf32>
    %c0_87 = arith.constant 0 : index
    %c0_88 = arith.constant 0 : index
    %104 = vector.load %arg8[%c0_87, %c0_88] : memref<9x256xf32, #tpu.memory_space<vmem>>, vector<1x256xf32>
    %105 = vector.broadcast %104 : vector<1x256xf32> to vector<8x256xf32>
    %106 = arith.mulf %103, %105 : vector<8x256xf32>
    %107 = arith.addf %95, %106 : vector<8x256xf32>
    %c0_89 = arith.constant 0 : index
    %108 = arith.index_cast %97 : i32 to index
    %c0_90 = arith.constant 0 : index
    %c112_91 = arith.constant 112 : index
    %109 = vector.load %arg2[%c0_89, %108, %c0_90, %c112_91] : memref<1x32x4x544xf32, #tpu.memory_space<vmem>>, vector<1x1x4x256xf32>
    %110 = vector.shape_cast %109 : vector<1x1x4x256xf32> to vector<4x256xf32>
    %c0_92 = arith.constant 0 : index
    %c10 = arith.constant 10 : index
    %c0_93 = arith.constant 0 : index
    %c0_94 = arith.constant 0 : index
    %111 = vector.load %arg5[%c0_92, %c10, %c0_93, %c0_94] : memref<3x27x8x4xf32, #tpu.memory_space<vmem>>, vector<1x1x8x4xf32>
    %112 = vector.shape_cast %111 : vector<1x1x8x4xf32> to vector<8x4xf32>
    %cst_95 = arith.constant dense<0.000000e+00> : vector<8x256xf32>
    %113 = tpu.matmul %112, %110, %cst_95 {dimension_numbers = #tpu.dot_dimension_numbers<[1], [0], [0], [1], [0, 0, 1, 1], [], []>} : vector<8x4xf32>, vector<4x256xf32>, vector<8x256xf32> -> vector<8x256xf32>
    %114 = arith.addf %107, %113 : vector<8x256xf32>
    %c0_96 = arith.constant 0 : index
    %115 = arith.index_cast %97 : i32 to index
    %c0_97 = arith.constant 0 : index
    %c114_98 = arith.constant 114 : index
    %116 = vector.load %arg2[%c0_96, %115, %c0_97, %c114_98] : memref<1x32x4x544xf32, #tpu.memory_space<vmem>>, vector<1x1x4x256xf32>
    %117 = vector.shape_cast %116 : vector<1x1x4x256xf32> to vector<4x256xf32>
    %c0_99 = arith.constant 0 : index
    %c11 = arith.constant 11 : index
    %c0_100 = arith.constant 0 : index
    %c0_101 = arith.constant 0 : index
    %118 = vector.load %arg5[%c0_99, %c11, %c0_100, %c0_101] : memref<3x27x8x4xf32, #tpu.memory_space<vmem>>, vector<1x1x8x4xf32>
    %119 = vector.shape_cast %118 : vector<1x1x8x4xf32> to vector<8x4xf32>
    %cst_102 = arith.constant dense<0.000000e+00> : vector<8x256xf32>
    %120 = tpu.matmul %119, %117, %cst_102 {dimension_numbers = #tpu.dot_dimension_numbers<[1], [0], [0], [1], [0, 0, 1, 1], [], []>} : vector<8x4xf32>, vector<4x256xf32>, vector<8x256xf32> -> vector<8x256xf32>
    %c2_103 = arith.constant 2 : index
    %c0_104 = arith.constant 0 : index
    %121 = vector.load %arg8[%c2_103, %c0_104] : memref<9x256xf32, #tpu.memory_space<vmem>>, vector<1x256xf32>
    %122 = vector.broadcast %121 : vector<1x256xf32> to vector<8x256xf32>
    %123 = arith.mulf %120, %122 : vector<8x256xf32>
    %124 = arith.addf %114, %123 : vector<8x256xf32>
    %c0_105 = arith.constant 0 : index
    %125 = arith.index_cast %97 : i32 to index
    %c0_106 = arith.constant 0 : index
    %c142_107 = arith.constant 142 : index
    %126 = vector.load %arg2[%c0_105, %125, %c0_106, %c142_107] : memref<1x32x4x544xf32, #tpu.memory_space<vmem>>, vector<1x1x4x256xf32>
    %127 = vector.shape_cast %126 : vector<1x1x4x256xf32> to vector<4x256xf32>
    %c0_108 = arith.constant 0 : index
    %c12 = arith.constant 12 : index
    %c0_109 = arith.constant 0 : index
    %c0_110 = arith.constant 0 : index
    %128 = vector.load %arg5[%c0_108, %c12, %c0_109, %c0_110] : memref<3x27x8x4xf32, #tpu.memory_space<vmem>>, vector<1x1x8x4xf32>
    %129 = vector.shape_cast %128 : vector<1x1x8x4xf32> to vector<8x4xf32>
    %cst_111 = arith.constant dense<0.000000e+00> : vector<8x256xf32>
    %130 = tpu.matmul %129, %127, %cst_111 {dimension_numbers = #tpu.dot_dimension_numbers<[1], [0], [0], [1], [0, 0, 1, 1], [], []>} : vector<8x4xf32>, vector<4x256xf32>, vector<8x256xf32> -> vector<8x256xf32>
    %c0_112 = arith.constant 0 : index
    %c0_113 = arith.constant 0 : index
    %131 = vector.load %arg8[%c0_112, %c0_113] : memref<9x256xf32, #tpu.memory_space<vmem>>, vector<1x256xf32>
    %132 = vector.broadcast %131 : vector<1x256xf32> to vector<8x256xf32>
    %133 = arith.mulf %130, %132 : vector<8x256xf32>
    %134 = arith.addf %124, %133 : vector<8x256xf32>
    %c0_114 = arith.constant 0 : index
    %135 = arith.index_cast %97 : i32 to index
    %c0_115 = arith.constant 0 : index
    %c144_116 = arith.constant 144 : index
    %136 = vector.load %arg2[%c0_114, %135, %c0_115, %c144_116] : memref<1x32x4x544xf32, #tpu.memory_space<vmem>>, vector<1x1x4x256xf32>
    %137 = vector.shape_cast %136 : vector<1x1x4x256xf32> to vector<4x256xf32>
    %c0_117 = arith.constant 0 : index
    %c13 = arith.constant 13 : index
    %c0_118 = arith.constant 0 : index
    %c0_119 = arith.constant 0 : index
    %138 = vector.load %arg5[%c0_117, %c13, %c0_118, %c0_119] : memref<3x27x8x4xf32, #tpu.memory_space<vmem>>, vector<1x1x8x4xf32>
    %139 = vector.shape_cast %138 : vector<1x1x8x4xf32> to vector<8x4xf32>
    %cst_120 = arith.constant dense<0.000000e+00> : vector<8x256xf32>
    %140 = tpu.matmul %139, %137, %cst_120 {dimension_numbers = #tpu.dot_dimension_numbers<[1], [0], [0], [1], [0, 0, 1, 1], [], []>} : vector<8x4xf32>, vector<4x256xf32>, vector<8x256xf32> -> vector<8x256xf32>
    %141 = arith.addf %134, %140 : vector<8x256xf32>
    %c0_121 = arith.constant 0 : index
    %142 = arith.index_cast %97 : i32 to index
    %c0_122 = arith.constant 0 : index
    %c146_123 = arith.constant 146 : index
    %143 = vector.load %arg2[%c0_121, %142, %c0_122, %c146_123] : memref<1x32x4x544xf32, #tpu.memory_space<vmem>>, vector<1x1x4x256xf32>
    %144 = vector.shape_cast %143 : vector<1x1x4x256xf32> to vector<4x256xf32>
    %c0_124 = arith.constant 0 : index
    %c14 = arith.constant 14 : index
    %c0_125 = arith.constant 0 : index
    %c0_126 = arith.constant 0 : index
    %145 = vector.load %arg5[%c0_124, %c14, %c0_125, %c0_126] : memref<3x27x8x4xf32, #tpu.memory_space<vmem>>, vector<1x1x8x4xf32>
    %146 = vector.shape_cast %145 : vector<1x1x8x4xf32> to vector<8x4xf32>
    %cst_127 = arith.constant dense<0.000000e+00> : vector<8x256xf32>
    %147 = tpu.matmul %146, %144, %cst_127 {dimension_numbers = #tpu.dot_dimension_numbers<[1], [0], [0], [1], [0, 0, 1, 1], [], []>} : vector<8x4xf32>, vector<4x256xf32>, vector<8x256xf32> -> vector<8x256xf32>
    %c2_128 = arith.constant 2 : index
    %c0_129 = arith.constant 0 : index
    %148 = vector.load %arg8[%c2_128, %c0_129] : memref<9x256xf32, #tpu.memory_space<vmem>>, vector<1x256xf32>
    %149 = vector.broadcast %148 : vector<1x256xf32> to vector<8x256xf32>
    %150 = arith.mulf %147, %149 : vector<8x256xf32>
    %151 = arith.addf %141, %150 : vector<8x256xf32>
    %c0_130 = arith.constant 0 : index
    %152 = arith.index_cast %97 : i32 to index
    %c0_131 = arith.constant 0 : index
    %c174_132 = arith.constant 174 : index
    %153 = vector.load %arg2[%c0_130, %152, %c0_131, %c174_132] : memref<1x32x4x544xf32, #tpu.memory_space<vmem>>, vector<1x1x4x256xf32>
    %154 = vector.shape_cast %153 : vector<1x1x4x256xf32> to vector<4x256xf32>
    %c0_133 = arith.constant 0 : index
    %c15 = arith.constant 15 : index
    %c0_134 = arith.constant 0 : index
    %c0_135 = arith.constant 0 : index
    %155 = vector.load %arg5[%c0_133, %c15, %c0_134, %c0_135] : memref<3x27x8x4xf32, #tpu.memory_space<vmem>>, vector<1x1x8x4xf32>
    %156 = vector.shape_cast %155 : vector<1x1x8x4xf32> to vector<8x4xf32>
    %cst_136 = arith.constant dense<0.000000e+00> : vector<8x256xf32>
    %157 = tpu.matmul %156, %154, %cst_136 {dimension_numbers = #tpu.dot_dimension_numbers<[1], [0], [0], [1], [0, 0, 1, 1], [], []>} : vector<8x4xf32>, vector<4x256xf32>, vector<8x256xf32> -> vector<8x256xf32>
    %c0_137 = arith.constant 0 : index
    %c0_138 = arith.constant 0 : index
    %158 = vector.load %arg8[%c0_137, %c0_138] : memref<9x256xf32, #tpu.memory_space<vmem>>, vector<1x256xf32>
    %159 = vector.broadcast %158 : vector<1x256xf32> to vector<8x256xf32>
    %160 = arith.mulf %157, %159 : vector<8x256xf32>
    %161 = arith.addf %151, %160 : vector<8x256xf32>
    %c0_139 = arith.constant 0 : index
    %162 = arith.index_cast %97 : i32 to index
    %c0_140 = arith.constant 0 : index
    %c176_141 = arith.constant 176 : index
    %163 = vector.load %arg2[%c0_139, %162, %c0_140, %c176_141] : memref<1x32x4x544xf32, #tpu.memory_space<vmem>>, vector<1x1x4x256xf32>
    %164 = vector.shape_cast %163 : vector<1x1x4x256xf32> to vector<4x256xf32>
    %c0_142 = arith.constant 0 : index
    %c16 = arith.constant 16 : index
    %c0_143 = arith.constant 0 : index
    %c0_144 = arith.constant 0 : index
    %165 = vector.load %arg5[%c0_142, %c16, %c0_143, %c0_144] : memref<3x27x8x4xf32, #tpu.memory_space<vmem>>, vector<1x1x8x4xf32>
    %166 = vector.shape_cast %165 : vector<1x1x8x4xf32> to vector<8x4xf32>
    %cst_145 = arith.constant dense<0.000000e+00> : vector<8x256xf32>
    %167 = tpu.matmul %166, %164, %cst_145 {dimension_numbers = #tpu.dot_dimension_numbers<[1], [0], [0], [1], [0, 0, 1, 1], [], []>} : vector<8x4xf32>, vector<4x256xf32>, vector<8x256xf32> -> vector<8x256xf32>
    %168 = arith.addf %161, %167 : vector<8x256xf32>
    %c0_146 = arith.constant 0 : index
    %169 = arith.index_cast %97 : i32 to index
    %c0_147 = arith.constant 0 : index
    %c178_148 = arith.constant 178 : index
    %170 = vector.load %arg2[%c0_146, %169, %c0_147, %c178_148] : memref<1x32x4x544xf32, #tpu.memory_space<vmem>>, vector<1x1x4x256xf32>
    %171 = vector.shape_cast %170 : vector<1x1x4x256xf32> to vector<4x256xf32>
    %c0_149 = arith.constant 0 : index
    %c17 = arith.constant 17 : index
    %c0_150 = arith.constant 0 : index
    %c0_151 = arith.constant 0 : index
    %172 = vector.load %arg5[%c0_149, %c17, %c0_150, %c0_151] : memref<3x27x8x4xf32, #tpu.memory_space<vmem>>, vector<1x1x8x4xf32>
    %173 = vector.shape_cast %172 : vector<1x1x8x4xf32> to vector<8x4xf32>
    %cst_152 = arith.constant dense<0.000000e+00> : vector<8x256xf32>
    %174 = tpu.matmul %173, %171, %cst_152 {dimension_numbers = #tpu.dot_dimension_numbers<[1], [0], [0], [1], [0, 0, 1, 1], [], []>} : vector<8x4xf32>, vector<4x256xf32>, vector<8x256xf32> -> vector<8x256xf32>
    %c2_153 = arith.constant 2 : index
    %c0_154 = arith.constant 0 : index
    %175 = vector.load %arg8[%c2_153, %c0_154] : memref<9x256xf32, #tpu.memory_space<vmem>>, vector<1x256xf32>
    %176 = vector.broadcast %175 : vector<1x256xf32> to vector<8x256xf32>
    %177 = arith.mulf %174, %176 : vector<8x256xf32>
    %178 = arith.addf %168, %177 : vector<8x256xf32>
    %c8_i32_155 = arith.constant 8 : i32
    %179 = arith.addi %c8_i32_155, %arg1 : i32
    %c2_i32 = arith.constant 2 : i32
    %180 = arith.addi %179, %c2_i32 : i32
    %c0_156 = arith.constant 0 : index
    %181 = arith.index_cast %180 : i32 to index
    %c0_157 = arith.constant 0 : index
    %c110_158 = arith.constant 110 : index
    %182 = vector.load %arg2[%c0_156, %181, %c0_157, %c110_158] : memref<1x32x4x544xf32, #tpu.memory_space<vmem>>, vector<1x1x4x256xf32>
    %183 = vector.shape_cast %182 : vector<1x1x4x256xf32> to vector<4x256xf32>
    %c0_159 = arith.constant 0 : index
    %c18 = arith.constant 18 : index
    %c0_160 = arith.constant 0 : index
    %c0_161 = arith.constant 0 : index
    %184 = vector.load %arg5[%c0_159, %c18, %c0_160, %c0_161] : memref<3x27x8x4xf32, #tpu.memory_space<vmem>>, vector<1x1x8x4xf32>
    %185 = vector.shape_cast %184 : vector<1x1x8x4xf32> to vector<8x4xf32>
    %cst_162 = arith.constant dense<0.000000e+00> : vector<8x256xf32>
    %186 = tpu.matmul %185, %183, %cst_162 {dimension_numbers = #tpu.dot_dimension_numbers<[1], [0], [0], [1], [0, 0, 1, 1], [], []>} : vector<8x4xf32>, vector<4x256xf32>, vector<8x256xf32> -> vector<8x256xf32>
    %c0_163 = arith.constant 0 : index
    %c0_164 = arith.constant 0 : index
    %187 = vector.load %arg8[%c0_163, %c0_164] : memref<9x256xf32, #tpu.memory_space<vmem>>, vector<1x256xf32>
    %188 = vector.broadcast %187 : vector<1x256xf32> to vector<8x256xf32>
    %189 = arith.mulf %186, %188 : vector<8x256xf32>
    %190 = arith.addf %178, %189 : vector<8x256xf32>
    %c0_165 = arith.constant 0 : index
    %191 = arith.index_cast %180 : i32 to index
    %c0_166 = arith.constant 0 : index
    %c112_167 = arith.constant 112 : index
    %192 = vector.load %arg2[%c0_165, %191, %c0_166, %c112_167] : memref<1x32x4x544xf32, #tpu.memory_space<vmem>>, vector<1x1x4x256xf32>
    %193 = vector.shape_cast %192 : vector<1x1x4x256xf32> to vector<4x256xf32>
    %c0_168 = arith.constant 0 : index
    %c19 = arith.constant 19 : index
    %c0_169 = arith.constant 0 : index
    %c0_170 = arith.constant 0 : index
    %194 = vector.load %arg5[%c0_168, %c19, %c0_169, %c0_170] : memref<3x27x8x4xf32, #tpu.memory_space<vmem>>, vector<1x1x8x4xf32>
    %195 = vector.shape_cast %194 : vector<1x1x8x4xf32> to vector<8x4xf32>
    %cst_171 = arith.constant dense<0.000000e+00> : vector<8x256xf32>
    %196 = tpu.matmul %195, %193, %cst_171 {dimension_numbers = #tpu.dot_dimension_numbers<[1], [0], [0], [1], [0, 0, 1, 1], [], []>} : vector<8x4xf32>, vector<4x256xf32>, vector<8x256xf32> -> vector<8x256xf32>
    %197 = arith.addf %190, %196 : vector<8x256xf32>
    %c0_172 = arith.constant 0 : index
    %198 = arith.index_cast %180 : i32 to index
    %c0_173 = arith.constant 0 : index
    %c114_174 = arith.constant 114 : index
    %199 = vector.load %arg2[%c0_172, %198, %c0_173, %c114_174] : memref<1x32x4x544xf32, #tpu.memory_space<vmem>>, vector<1x1x4x256xf32>
    %200 = vector.shape_cast %199 : vector<1x1x4x256xf32> to vector<4x256xf32>
    %c0_175 = arith.constant 0 : index
    %c20 = arith.constant 20 : index
    %c0_176 = arith.constant 0 : index
    %c0_177 = arith.constant 0 : index
    %201 = vector.load %arg5[%c0_175, %c20, %c0_176, %c0_177] : memref<3x27x8x4xf32, #tpu.memory_space<vmem>>, vector<1x1x8x4xf32>
    %202 = vector.shape_cast %201 : vector<1x1x8x4xf32> to vector<8x4xf32>
    %cst_178 = arith.constant dense<0.000000e+00> : vector<8x256xf32>
    %203 = tpu.matmul %202, %200, %cst_178 {dimension_numbers = #tpu.dot_dimension_numbers<[1], [0], [0], [1], [0, 0, 1, 1], [], []>} : vector<8x4xf32>, vector<4x256xf32>, vector<8x256xf32> -> vector<8x256xf32>
    %c2_179 = arith.constant 2 : index
    %c0_180 = arith.constant 0 : index
    %204 = vector.load %arg8[%c2_179, %c0_180] : memref<9x256xf32, #tpu.memory_space<vmem>>, vector<1x256xf32>
    %205 = vector.broadcast %204 : vector<1x256xf32> to vector<8x256xf32>
    %206 = arith.mulf %203, %205 : vector<8x256xf32>
    %207 = arith.addf %197, %206 : vector<8x256xf32>
    %c0_181 = arith.constant 0 : index
    %208 = arith.index_cast %180 : i32 to index
    %c0_182 = arith.constant 0 : index
    %c142_183 = arith.constant 142 : index
    %209 = vector.load %arg2[%c0_181, %208, %c0_182, %c142_183] : memref<1x32x4x544xf32, #tpu.memory_space<vmem>>, vector<1x1x4x256xf32>
    %210 = vector.shape_cast %209 : vector<1x1x4x256xf32> to vector<4x256xf32>
    %c0_184 = arith.constant 0 : index
    %c21 = arith.constant 21 : index
    %c0_185 = arith.constant 0 : index
    %c0_186 = arith.constant 0 : index
    %211 = vector.load %arg5[%c0_184, %c21, %c0_185, %c0_186] : memref<3x27x8x4xf32, #tpu.memory_space<vmem>>, vector<1x1x8x4xf32>
    %212 = vector.shape_cast %211 : vector<1x1x8x4xf32> to vector<8x4xf32>
    %cst_187 = arith.constant dense<0.000000e+00> : vector<8x256xf32>
    %213 = tpu.matmul %212, %210, %cst_187 {dimension_numbers = #tpu.dot_dimension_numbers<[1], [0], [0], [1], [0, 0, 1, 1], [], []>} : vector<8x4xf32>, vector<4x256xf32>, vector<8x256xf32> -> vector<8x256xf32>
    %c0_188 = arith.constant 0 : index
    %c0_189 = arith.constant 0 : index
    %214 = vector.load %arg8[%c0_188, %c0_189] : memref<9x256xf32, #tpu.memory_space<vmem>>, vector<1x256xf32>
    %215 = vector.broadcast %214 : vector<1x256xf32> to vector<8x256xf32>
    %216 = arith.mulf %213, %215 : vector<8x256xf32>
    %217 = arith.addf %207, %216 : vector<8x256xf32>
    %c0_190 = arith.constant 0 : index
    %218 = arith.index_cast %180 : i32 to index
    %c0_191 = arith.constant 0 : index
    %c144_192 = arith.constant 144 : index
    %219 = vector.load %arg2[%c0_190, %218, %c0_191, %c144_192] : memref<1x32x4x544xf32, #tpu.memory_space<vmem>>, vector<1x1x4x256xf32>
    %220 = vector.shape_cast %219 : vector<1x1x4x256xf32> to vector<4x256xf32>
    %c0_193 = arith.constant 0 : index
    %c22 = arith.constant 22 : index
    %c0_194 = arith.constant 0 : index
    %c0_195 = arith.constant 0 : index
    %221 = vector.load %arg5[%c0_193, %c22, %c0_194, %c0_195] : memref<3x27x8x4xf32, #tpu.memory_space<vmem>>, vector<1x1x8x4xf32>
    %222 = vector.shape_cast %221 : vector<1x1x8x4xf32> to vector<8x4xf32>
    %cst_196 = arith.constant dense<0.000000e+00> : vector<8x256xf32>
    %223 = tpu.matmul %222, %220, %cst_196 {dimension_numbers = #tpu.dot_dimension_numbers<[1], [0], [0], [1], [0, 0, 1, 1], [], []>} : vector<8x4xf32>, vector<4x256xf32>, vector<8x256xf32> -> vector<8x256xf32>
    %224 = arith.addf %217, %223 : vector<8x256xf32>
    %c0_197 = arith.constant 0 : index
    %225 = arith.index_cast %180 : i32 to index
    %c0_198 = arith.constant 0 : index
    %c146_199 = arith.constant 146 : index
    %226 = vector.load %arg2[%c0_197, %225, %c0_198, %c146_199] : memref<1x32x4x544xf32, #tpu.memory_space<vmem>>, vector<1x1x4x256xf32>
    %227 = vector.shape_cast %226 : vector<1x1x4x256xf32> to vector<4x256xf32>
    %c0_200 = arith.constant 0 : index
    %c23 = arith.constant 23 : index
    %c0_201 = arith.constant 0 : index
    %c0_202 = arith.constant 0 : index
    %228 = vector.load %arg5[%c0_200, %c23, %c0_201, %c0_202] : memref<3x27x8x4xf32, #tpu.memory_space<vmem>>, vector<1x1x8x4xf32>
    %229 = vector.shape_cast %228 : vector<1x1x8x4xf32> to vector<8x4xf32>
    %cst_203 = arith.constant dense<0.000000e+00> : vector<8x256xf32>
    %230 = tpu.matmul %229, %227, %cst_203 {dimension_numbers = #tpu.dot_dimension_numbers<[1], [0], [0], [1], [0, 0, 1, 1], [], []>} : vector<8x4xf32>, vector<4x256xf32>, vector<8x256xf32> -> vector<8x256xf32>
    %c2_204 = arith.constant 2 : index
    %c0_205 = arith.constant 0 : index
    %231 = vector.load %arg8[%c2_204, %c0_205] : memref<9x256xf32, #tpu.memory_space<vmem>>, vector<1x256xf32>
    %232 = vector.broadcast %231 : vector<1x256xf32> to vector<8x256xf32>
    %233 = arith.mulf %230, %232 : vector<8x256xf32>
    %234 = arith.addf %224, %233 : vector<8x256xf32>
    %c0_206 = arith.constant 0 : index
    %235 = arith.index_cast %180 : i32 to index
    %c0_207 = arith.constant 0 : index
    %c174_208 = arith.constant 174 : index
    %236 = vector.load %arg2[%c0_206, %235, %c0_207, %c174_208] : memref<1x32x4x544xf32, #tpu.memory_space<vmem>>, vector<1x1x4x256xf32>
    %237 = vector.shape_cast %236 : vector<1x1x4x256xf32> to vector<4x256xf32>
    %c0_209 = arith.constant 0 : index
    %c24 = arith.constant 24 : index
    %c0_210 = arith.constant 0 : index
    %c0_211 = arith.constant 0 : index
    %238 = vector.load %arg5[%c0_209, %c24, %c0_210, %c0_211] : memref<3x27x8x4xf32, #tpu.memory_space<vmem>>, vector<1x1x8x4xf32>
    %239 = vector.shape_cast %238 : vector<1x1x8x4xf32> to vector<8x4xf32>
    %cst_212 = arith.constant dense<0.000000e+00> : vector<8x256xf32>
    %240 = tpu.matmul %239, %237, %cst_212 {dimension_numbers = #tpu.dot_dimension_numbers<[1], [0], [0], [1], [0, 0, 1, 1], [], []>} : vector<8x4xf32>, vector<4x256xf32>, vector<8x256xf32> -> vector<8x256xf32>
    %c0_213 = arith.constant 0 : index
    %c0_214 = arith.constant 0 : index
    %241 = vector.load %arg8[%c0_213, %c0_214] : memref<9x256xf32, #tpu.memory_space<vmem>>, vector<1x256xf32>
    %242 = vector.broadcast %241 : vector<1x256xf32> to vector<8x256xf32>
    %243 = arith.mulf %240, %242 : vector<8x256xf32>
    %244 = arith.addf %234, %243 : vector<8x256xf32>
    %c0_215 = arith.constant 0 : index
    %245 = arith.index_cast %180 : i32 to index
    %c0_216 = arith.constant 0 : index
    %c176_217 = arith.constant 176 : index
    %246 = vector.load %arg2[%c0_215, %245, %c0_216, %c176_217] : memref<1x32x4x544xf32, #tpu.memory_space<vmem>>, vector<1x1x4x256xf32>
    %247 = vector.shape_cast %246 : vector<1x1x4x256xf32> to vector<4x256xf32>
    %c0_218 = arith.constant 0 : index
    %c25 = arith.constant 25 : index
    %c0_219 = arith.constant 0 : index
    %c0_220 = arith.constant 0 : index
    %248 = vector.load %arg5[%c0_218, %c25, %c0_219, %c0_220] : memref<3x27x8x4xf32, #tpu.memory_space<vmem>>, vector<1x1x8x4xf32>
    %249 = vector.shape_cast %248 : vector<1x1x8x4xf32> to vector<8x4xf32>
    %cst_221 = arith.constant dense<0.000000e+00> : vector<8x256xf32>
    %250 = tpu.matmul %249, %247, %cst_221 {dimension_numbers = #tpu.dot_dimension_numbers<[1], [0], [0], [1], [0, 0, 1, 1], [], []>} : vector<8x4xf32>, vector<4x256xf32>, vector<8x256xf32> -> vector<8x256xf32>
    %251 = arith.addf %244, %250 : vector<8x256xf32>
    %c0_222 = arith.constant 0 : index
    %252 = arith.index_cast %180 : i32 to index
    %c0_223 = arith.constant 0 : index
    %c178_224 = arith.constant 178 : index
    %253 = vector.load %arg2[%c0_222, %252, %c0_223, %c178_224] : memref<1x32x4x544xf32, #tpu.memory_space<vmem>>, vector<1x1x4x256xf32>
    %254 = vector.shape_cast %253 : vector<1x1x4x256xf32> to vector<4x256xf32>
    %c0_225 = arith.constant 0 : index
    %c26 = arith.constant 26 : index
    %c0_226 = arith.constant 0 : index
    %c0_227 = arith.constant 0 : index
    %255 = vector.load %arg5[%c0_225, %c26, %c0_226, %c0_227] : memref<3x27x8x4xf32, #tpu.memory_space<vmem>>, vector<1x1x8x4xf32>
    %256 = vector.shape_cast %255 : vector<1x1x8x4xf32> to vector<8x4xf32>
    %cst_228 = arith.constant dense<0.000000e+00> : vector<8x256xf32>
    %257 = tpu.matmul %256, %254, %cst_228 {dimension_numbers = #tpu.dot_dimension_numbers<[1], [0], [0], [1], [0, 0, 1, 1], [], []>} : vector<8x4xf32>, vector<4x256xf32>, vector<8x256xf32> -> vector<8x256xf32>
    %c2_229 = arith.constant 2 : index
    %c0_230 = arith.constant 0 : index
    %258 = vector.load %arg8[%c2_229, %c0_230] : memref<9x256xf32, #tpu.memory_space<vmem>>, vector<1x256xf32>
    %259 = vector.broadcast %258 : vector<1x256xf32> to vector<8x256xf32>
    %260 = arith.mulf %257, %259 : vector<8x256xf32>
    %261 = arith.addf %251, %260 : vector<8x256xf32>
    %c0_231 = arith.constant 0 : index
    %c0_232 = arith.constant 0 : index
    %c0_233 = arith.constant 0 : index
    %262 = vector.load %arg6[%c0_231, %c0_232, %c0_233] : memref<3x8x1xf32, #tpu.memory_space<vmem>>, vector<1x8x1xf32>
    %263 = vector.shape_cast %262 : vector<1x8x1xf32> to vector<8x1xf32>
    %264 = vector.broadcast %263 : vector<8x1xf32> to vector<8x256xf32>
    %265 = arith.addf %261, %264 : vector<8x256xf32>
    %cst_234 = arith.constant 0.000000e+00 : f32
    %266 = vector.broadcast %cst_234 : f32 to vector<8x256xf32>
    %267 = arith.maximumf %265, %266 : vector<8x256xf32>
    %c1_235 = arith.constant 1 : index
    %c0_236 = arith.constant 0 : index
    %c0_237 = arith.constant 0 : index
    %268 = vector.load %arg7[%c1_235, %c0_236, %c0_237] : memref<4x8x8xf32, #tpu.memory_space<vmem>>, vector<1x8x8xf32>
    %269 = vector.shape_cast %268 : vector<1x8x8xf32> to vector<8x8xf32>
    %cst_238 = arith.constant dense<0.000000e+00> : vector<8x256xf32>
    %270 = tpu.matmul %269, %267, %cst_238 {dimension_numbers = #tpu.dot_dimension_numbers<[1], [0], [0], [1], [0, 0, 1, 1], [], []>} : vector<8x8xf32>, vector<8x256xf32>, vector<8x256xf32> -> vector<8x256xf32>
    %271 = arith.addf %13, %270 : vector<8x256xf32>
    %c8_i32_239 = arith.constant 8 : i32
    %272 = arith.addi %c8_i32_239, %arg1 : i32
    %c-4_i32 = arith.constant -4 : i32
    %273 = arith.addi %272, %c-4_i32 : i32
    %c0_240 = arith.constant 0 : index
    %274 = arith.index_cast %273 : i32 to index
    %c0_241 = arith.constant 0 : index
    %c76 = arith.constant 76 : index
    %275 = vector.load %arg2[%c0_240, %274, %c0_241, %c76] : memref<1x32x4x544xf32, #tpu.memory_space<vmem>>, vector<1x1x4x256xf32>
    %276 = vector.shape_cast %275 : vector<1x1x4x256xf32> to vector<4x256xf32>
    %c1_242 = arith.constant 1 : index
    %c0_243 = arith.constant 0 : index
    %c0_244 = arith.constant 0 : index
    %c0_245 = arith.constant 0 : index
    %277 = vector.load %arg5[%c1_242, %c0_243, %c0_244, %c0_245] : memref<3x27x8x4xf32, #tpu.memory_space<vmem>>, vector<1x1x8x4xf32>
    %278 = vector.shape_cast %277 : vector<1x1x8x4xf32> to vector<8x4xf32>
    %cst_246 = arith.constant dense<0.000000e+00> : vector<8x256xf32>
    %279 = tpu.matmul %278, %276, %cst_246 {dimension_numbers = #tpu.dot_dimension_numbers<[1], [0], [0], [1], [0, 0, 1, 1], [], []>} : vector<8x4xf32>, vector<4x256xf32>, vector<8x256xf32> -> vector<8x256xf32>
    %c3_247 = arith.constant 3 : index
    %c0_248 = arith.constant 0 : index
    %280 = vector.load %arg8[%c3_247, %c0_248] : memref<9x256xf32, #tpu.memory_space<vmem>>, vector<1x256xf32>
    %281 = vector.broadcast %280 : vector<1x256xf32> to vector<8x256xf32>
    %282 = arith.mulf %279, %281 : vector<8x256xf32>
    %c0_249 = arith.constant 0 : index
    %283 = arith.index_cast %273 : i32 to index
    %c0_250 = arith.constant 0 : index
    %c80 = arith.constant 80 : index
    %284 = vector.load %arg2[%c0_249, %283, %c0_250, %c80] : memref<1x32x4x544xf32, #tpu.memory_space<vmem>>, vector<1x1x4x256xf32>
    %285 = vector.shape_cast %284 : vector<1x1x4x256xf32> to vector<4x256xf32>
    %c1_251 = arith.constant 1 : index
    %c1_252 = arith.constant 1 : index
    %c0_253 = arith.constant 0 : index
    %c0_254 = arith.constant 0 : index
    %286 = vector.load %arg5[%c1_251, %c1_252, %c0_253, %c0_254] : memref<3x27x8x4xf32, #tpu.memory_space<vmem>>, vector<1x1x8x4xf32>
    %287 = vector.shape_cast %286 : vector<1x1x8x4xf32> to vector<8x4xf32>
    %cst_255 = arith.constant dense<0.000000e+00> : vector<8x256xf32>
    %288 = tpu.matmul %287, %285, %cst_255 {dimension_numbers = #tpu.dot_dimension_numbers<[1], [0], [0], [1], [0, 0, 1, 1], [], []>} : vector<8x4xf32>, vector<4x256xf32>, vector<8x256xf32> -> vector<8x256xf32>
    %289 = arith.addf %282, %288 : vector<8x256xf32>
    %c0_256 = arith.constant 0 : index
    %290 = arith.index_cast %273 : i32 to index
    %c0_257 = arith.constant 0 : index
    %c84 = arith.constant 84 : index
    %291 = vector.load %arg2[%c0_256, %290, %c0_257, %c84] : memref<1x32x4x544xf32, #tpu.memory_space<vmem>>, vector<1x1x4x256xf32>
    %292 = vector.shape_cast %291 : vector<1x1x4x256xf32> to vector<4x256xf32>
    %c1_258 = arith.constant 1 : index
    %c2_259 = arith.constant 2 : index
    %c0_260 = arith.constant 0 : index
    %c0_261 = arith.constant 0 : index
    %293 = vector.load %arg5[%c1_258, %c2_259, %c0_260, %c0_261] : memref<3x27x8x4xf32, #tpu.memory_space<vmem>>, vector<1x1x8x4xf32>
    %294 = vector.shape_cast %293 : vector<1x1x8x4xf32> to vector<8x4xf32>
    %cst_262 = arith.constant dense<0.000000e+00> : vector<8x256xf32>
    %295 = tpu.matmul %294, %292, %cst_262 {dimension_numbers = #tpu.dot_dimension_numbers<[1], [0], [0], [1], [0, 0, 1, 1], [], []>} : vector<8x4xf32>, vector<4x256xf32>, vector<8x256xf32> -> vector<8x256xf32>
    %c5_263 = arith.constant 5 : index
    %c0_264 = arith.constant 0 : index
    %296 = vector.load %arg8[%c5_263, %c0_264] : memref<9x256xf32, #tpu.memory_space<vmem>>, vector<1x256xf32>
    %297 = vector.broadcast %296 : vector<1x256xf32> to vector<8x256xf32>
    %298 = arith.mulf %295, %297 : vector<8x256xf32>
    %299 = arith.addf %289, %298 : vector<8x256xf32>
    %c0_265 = arith.constant 0 : index
    %300 = arith.index_cast %273 : i32 to index
    %c0_266 = arith.constant 0 : index
    %c140 = arith.constant 140 : index
    %301 = vector.load %arg2[%c0_265, %300, %c0_266, %c140] : memref<1x32x4x544xf32, #tpu.memory_space<vmem>>, vector<1x1x4x256xf32>
    %302 = vector.shape_cast %301 : vector<1x1x4x256xf32> to vector<4x256xf32>
    %c1_267 = arith.constant 1 : index
    %c3_268 = arith.constant 3 : index
    %c0_269 = arith.constant 0 : index
    %c0_270 = arith.constant 0 : index
    %303 = vector.load %arg5[%c1_267, %c3_268, %c0_269, %c0_270] : memref<3x27x8x4xf32, #tpu.memory_space<vmem>>, vector<1x1x8x4xf32>
    %304 = vector.shape_cast %303 : vector<1x1x8x4xf32> to vector<8x4xf32>
    %cst_271 = arith.constant dense<0.000000e+00> : vector<8x256xf32>
    %305 = tpu.matmul %304, %302, %cst_271 {dimension_numbers = #tpu.dot_dimension_numbers<[1], [0], [0], [1], [0, 0, 1, 1], [], []>} : vector<8x4xf32>, vector<4x256xf32>, vector<8x256xf32> -> vector<8x256xf32>
    %c3_272 = arith.constant 3 : index
    %c0_273 = arith.constant 0 : index
    %306 = vector.load %arg8[%c3_272, %c0_273] : memref<9x256xf32, #tpu.memory_space<vmem>>, vector<1x256xf32>
    %307 = vector.broadcast %306 : vector<1x256xf32> to vector<8x256xf32>
    %308 = arith.mulf %305, %307 : vector<8x256xf32>
    %309 = arith.addf %299, %308 : vector<8x256xf32>
    %c0_274 = arith.constant 0 : index
    %310 = arith.index_cast %273 : i32 to index
    %c0_275 = arith.constant 0 : index
    %c144_276 = arith.constant 144 : index
    %311 = vector.load %arg2[%c0_274, %310, %c0_275, %c144_276] : memref<1x32x4x544xf32, #tpu.memory_space<vmem>>, vector<1x1x4x256xf32>
    %312 = vector.shape_cast %311 : vector<1x1x4x256xf32> to vector<4x256xf32>
    %c1_277 = arith.constant 1 : index
    %c4_278 = arith.constant 4 : index
    %c0_279 = arith.constant 0 : index
    %c0_280 = arith.constant 0 : index
    %313 = vector.load %arg5[%c1_277, %c4_278, %c0_279, %c0_280] : memref<3x27x8x4xf32, #tpu.memory_space<vmem>>, vector<1x1x8x4xf32>
    %314 = vector.shape_cast %313 : vector<1x1x8x4xf32> to vector<8x4xf32>
    %cst_281 = arith.constant dense<0.000000e+00> : vector<8x256xf32>
    %315 = tpu.matmul %314, %312, %cst_281 {dimension_numbers = #tpu.dot_dimension_numbers<[1], [0], [0], [1], [0, 0, 1, 1], [], []>} : vector<8x4xf32>, vector<4x256xf32>, vector<8x256xf32> -> vector<8x256xf32>
    %316 = arith.addf %309, %315 : vector<8x256xf32>
    %c0_282 = arith.constant 0 : index
    %317 = arith.index_cast %273 : i32 to index
    %c0_283 = arith.constant 0 : index
    %c148 = arith.constant 148 : index
    %318 = vector.load %arg2[%c0_282, %317, %c0_283, %c148] : memref<1x32x4x544xf32, #tpu.memory_space<vmem>>, vector<1x1x4x256xf32>
    %319 = vector.shape_cast %318 : vector<1x1x4x256xf32> to vector<4x256xf32>
    %c1_284 = arith.constant 1 : index
    %c5_285 = arith.constant 5 : index
    %c0_286 = arith.constant 0 : index
    %c0_287 = arith.constant 0 : index
    %320 = vector.load %arg5[%c1_284, %c5_285, %c0_286, %c0_287] : memref<3x27x8x4xf32, #tpu.memory_space<vmem>>, vector<1x1x8x4xf32>
    %321 = vector.shape_cast %320 : vector<1x1x8x4xf32> to vector<8x4xf32>
    %cst_288 = arith.constant dense<0.000000e+00> : vector<8x256xf32>
    %322 = tpu.matmul %321, %319, %cst_288 {dimension_numbers = #tpu.dot_dimension_numbers<[1], [0], [0], [1], [0, 0, 1, 1], [], []>} : vector<8x4xf32>, vector<4x256xf32>, vector<8x256xf32> -> vector<8x256xf32>
    %c5_289 = arith.constant 5 : index
    %c0_290 = arith.constant 0 : index
    %323 = vector.load %arg8[%c5_289, %c0_290] : memref<9x256xf32, #tpu.memory_space<vmem>>, vector<1x256xf32>
    %324 = vector.broadcast %323 : vector<1x256xf32> to vector<8x256xf32>
    %325 = arith.mulf %322, %324 : vector<8x256xf32>
    %326 = arith.addf %316, %325 : vector<8x256xf32>
    %c0_291 = arith.constant 0 : index
    %327 = arith.index_cast %273 : i32 to index
    %c0_292 = arith.constant 0 : index
    %c204 = arith.constant 204 : index
    %328 = vector.load %arg2[%c0_291, %327, %c0_292, %c204] : memref<1x32x4x544xf32, #tpu.memory_space<vmem>>, vector<1x1x4x256xf32>
    %329 = vector.shape_cast %328 : vector<1x1x4x256xf32> to vector<4x256xf32>
    %c1_293 = arith.constant 1 : index
    %c6_294 = arith.constant 6 : index
    %c0_295 = arith.constant 0 : index
    %c0_296 = arith.constant 0 : index
    %330 = vector.load %arg5[%c1_293, %c6_294, %c0_295, %c0_296] : memref<3x27x8x4xf32, #tpu.memory_space<vmem>>, vector<1x1x8x4xf32>
    %331 = vector.shape_cast %330 : vector<1x1x8x4xf32> to vector<8x4xf32>
    %cst_297 = arith.constant dense<0.000000e+00> : vector<8x256xf32>
    %332 = tpu.matmul %331, %329, %cst_297 {dimension_numbers = #tpu.dot_dimension_numbers<[1], [0], [0], [1], [0, 0, 1, 1], [], []>} : vector<8x4xf32>, vector<4x256xf32>, vector<8x256xf32> -> vector<8x256xf32>
    %c3_298 = arith.constant 3 : index
    %c0_299 = arith.constant 0 : index
    %333 = vector.load %arg8[%c3_298, %c0_299] : memref<9x256xf32, #tpu.memory_space<vmem>>, vector<1x256xf32>
    %334 = vector.broadcast %333 : vector<1x256xf32> to vector<8x256xf32>
    %335 = arith.mulf %332, %334 : vector<8x256xf32>
    %336 = arith.addf %326, %335 : vector<8x256xf32>
    %c0_300 = arith.constant 0 : index
    %337 = arith.index_cast %273 : i32 to index
    %c0_301 = arith.constant 0 : index
    %c208 = arith.constant 208 : index
    %338 = vector.load %arg2[%c0_300, %337, %c0_301, %c208] : memref<1x32x4x544xf32, #tpu.memory_space<vmem>>, vector<1x1x4x256xf32>
    %339 = vector.shape_cast %338 : vector<1x1x4x256xf32> to vector<4x256xf32>
    %c1_302 = arith.constant 1 : index
    %c7_303 = arith.constant 7 : index
    %c0_304 = arith.constant 0 : index
    %c0_305 = arith.constant 0 : index
    %340 = vector.load %arg5[%c1_302, %c7_303, %c0_304, %c0_305] : memref<3x27x8x4xf32, #tpu.memory_space<vmem>>, vector<1x1x8x4xf32>
    %341 = vector.shape_cast %340 : vector<1x1x8x4xf32> to vector<8x4xf32>
    %cst_306 = arith.constant dense<0.000000e+00> : vector<8x256xf32>
    %342 = tpu.matmul %341, %339, %cst_306 {dimension_numbers = #tpu.dot_dimension_numbers<[1], [0], [0], [1], [0, 0, 1, 1], [], []>} : vector<8x4xf32>, vector<4x256xf32>, vector<8x256xf32> -> vector<8x256xf32>
    %343 = arith.addf %336, %342 : vector<8x256xf32>
    %c0_307 = arith.constant 0 : index
    %344 = arith.index_cast %273 : i32 to index
    %c0_308 = arith.constant 0 : index
    %c212 = arith.constant 212 : index
    %345 = vector.load %arg2[%c0_307, %344, %c0_308, %c212] : memref<1x32x4x544xf32, #tpu.memory_space<vmem>>, vector<1x1x4x256xf32>
    %346 = vector.shape_cast %345 : vector<1x1x4x256xf32> to vector<4x256xf32>
    %c1_309 = arith.constant 1 : index
    %c8_310 = arith.constant 8 : index
    %c0_311 = arith.constant 0 : index
    %c0_312 = arith.constant 0 : index
    %347 = vector.load %arg5[%c1_309, %c8_310, %c0_311, %c0_312] : memref<3x27x8x4xf32, #tpu.memory_space<vmem>>, vector<1x1x8x4xf32>
    %348 = vector.shape_cast %347 : vector<1x1x8x4xf32> to vector<8x4xf32>
    %cst_313 = arith.constant dense<0.000000e+00> : vector<8x256xf32>
    %349 = tpu.matmul %348, %346, %cst_313 {dimension_numbers = #tpu.dot_dimension_numbers<[1], [0], [0], [1], [0, 0, 1, 1], [], []>} : vector<8x4xf32>, vector<4x256xf32>, vector<8x256xf32> -> vector<8x256xf32>
    %c5_314 = arith.constant 5 : index
    %c0_315 = arith.constant 0 : index
    %350 = vector.load %arg8[%c5_314, %c0_315] : memref<9x256xf32, #tpu.memory_space<vmem>>, vector<1x256xf32>
    %351 = vector.broadcast %350 : vector<1x256xf32> to vector<8x256xf32>
    %352 = arith.mulf %349, %351 : vector<8x256xf32>
    %353 = arith.addf %343, %352 : vector<8x256xf32>
    %c8_i32_316 = arith.constant 8 : i32
    %354 = arith.addi %c8_i32_316, %arg1 : i32
    %c0_i32_317 = arith.constant 0 : i32
    %355 = arith.addi %354, %c0_i32_317 : i32
    %c0_318 = arith.constant 0 : index
    %356 = arith.index_cast %355 : i32 to index
    %c0_319 = arith.constant 0 : index
    %c76_320 = arith.constant 76 : index
    %357 = vector.load %arg2[%c0_318, %356, %c0_319, %c76_320] : memref<1x32x4x544xf32, #tpu.memory_space<vmem>>, vector<1x1x4x256xf32>
    %358 = vector.shape_cast %357 : vector<1x1x4x256xf32> to vector<4x256xf32>
    %c1_321 = arith.constant 1 : index
    %c9_322 = arith.constant 9 : index
    %c0_323 = arith.constant 0 : index
    %c0_324 = arith.constant 0 : index
    %359 = vector.load %arg5[%c1_321, %c9_322, %c0_323, %c0_324] : memref<3x27x8x4xf32, #tpu.memory_space<vmem>>, vector<1x1x8x4xf32>
    %360 = vector.shape_cast %359 : vector<1x1x8x4xf32> to vector<8x4xf32>
    %cst_325 = arith.constant dense<0.000000e+00> : vector<8x256xf32>
    %361 = tpu.matmul %360, %358, %cst_325 {dimension_numbers = #tpu.dot_dimension_numbers<[1], [0], [0], [1], [0, 0, 1, 1], [], []>} : vector<8x4xf32>, vector<4x256xf32>, vector<8x256xf32> -> vector<8x256xf32>
    %c3_326 = arith.constant 3 : index
    %c0_327 = arith.constant 0 : index
    %362 = vector.load %arg8[%c3_326, %c0_327] : memref<9x256xf32, #tpu.memory_space<vmem>>, vector<1x256xf32>
    %363 = vector.broadcast %362 : vector<1x256xf32> to vector<8x256xf32>
    %364 = arith.mulf %361, %363 : vector<8x256xf32>
    %365 = arith.addf %353, %364 : vector<8x256xf32>
    %c0_328 = arith.constant 0 : index
    %366 = arith.index_cast %355 : i32 to index
    %c0_329 = arith.constant 0 : index
    %c80_330 = arith.constant 80 : index
    %367 = vector.load %arg2[%c0_328, %366, %c0_329, %c80_330] : memref<1x32x4x544xf32, #tpu.memory_space<vmem>>, vector<1x1x4x256xf32>
    %368 = vector.shape_cast %367 : vector<1x1x4x256xf32> to vector<4x256xf32>
    %c1_331 = arith.constant 1 : index
    %c10_332 = arith.constant 10 : index
    %c0_333 = arith.constant 0 : index
    %c0_334 = arith.constant 0 : index
    %369 = vector.load %arg5[%c1_331, %c10_332, %c0_333, %c0_334] : memref<3x27x8x4xf32, #tpu.memory_space<vmem>>, vector<1x1x8x4xf32>
    %370 = vector.shape_cast %369 : vector<1x1x8x4xf32> to vector<8x4xf32>
    %cst_335 = arith.constant dense<0.000000e+00> : vector<8x256xf32>
    %371 = tpu.matmul %370, %368, %cst_335 {dimension_numbers = #tpu.dot_dimension_numbers<[1], [0], [0], [1], [0, 0, 1, 1], [], []>} : vector<8x4xf32>, vector<4x256xf32>, vector<8x256xf32> -> vector<8x256xf32>
    %372 = arith.addf %365, %371 : vector<8x256xf32>
    %c0_336 = arith.constant 0 : index
    %373 = arith.index_cast %355 : i32 to index
    %c0_337 = arith.constant 0 : index
    %c84_338 = arith.constant 84 : index
    %374 = vector.load %arg2[%c0_336, %373, %c0_337, %c84_338] : memref<1x32x4x544xf32, #tpu.memory_space<vmem>>, vector<1x1x4x256xf32>
    %375 = vector.shape_cast %374 : vector<1x1x4x256xf32> to vector<4x256xf32>
    %c1_339 = arith.constant 1 : index
    %c11_340 = arith.constant 11 : index
    %c0_341 = arith.constant 0 : index
    %c0_342 = arith.constant 0 : index
    %376 = vector.load %arg5[%c1_339, %c11_340, %c0_341, %c0_342] : memref<3x27x8x4xf32, #tpu.memory_space<vmem>>, vector<1x1x8x4xf32>
    %377 = vector.shape_cast %376 : vector<1x1x8x4xf32> to vector<8x4xf32>
    %cst_343 = arith.constant dense<0.000000e+00> : vector<8x256xf32>
    %378 = tpu.matmul %377, %375, %cst_343 {dimension_numbers = #tpu.dot_dimension_numbers<[1], [0], [0], [1], [0, 0, 1, 1], [], []>} : vector<8x4xf32>, vector<4x256xf32>, vector<8x256xf32> -> vector<8x256xf32>
    %c5_344 = arith.constant 5 : index
    %c0_345 = arith.constant 0 : index
    %379 = vector.load %arg8[%c5_344, %c0_345] : memref<9x256xf32, #tpu.memory_space<vmem>>, vector<1x256xf32>
    %380 = vector.broadcast %379 : vector<1x256xf32> to vector<8x256xf32>
    %381 = arith.mulf %378, %380 : vector<8x256xf32>
    %382 = arith.addf %372, %381 : vector<8x256xf32>
    %c0_346 = arith.constant 0 : index
    %383 = arith.index_cast %355 : i32 to index
    %c0_347 = arith.constant 0 : index
    %c140_348 = arith.constant 140 : index
    %384 = vector.load %arg2[%c0_346, %383, %c0_347, %c140_348] : memref<1x32x4x544xf32, #tpu.memory_space<vmem>>, vector<1x1x4x256xf32>
    %385 = vector.shape_cast %384 : vector<1x1x4x256xf32> to vector<4x256xf32>
    %c1_349 = arith.constant 1 : index
    %c12_350 = arith.constant 12 : index
    %c0_351 = arith.constant 0 : index
    %c0_352 = arith.constant 0 : index
    %386 = vector.load %arg5[%c1_349, %c12_350, %c0_351, %c0_352] : memref<3x27x8x4xf32, #tpu.memory_space<vmem>>, vector<1x1x8x4xf32>
    %387 = vector.shape_cast %386 : vector<1x1x8x4xf32> to vector<8x4xf32>
    %cst_353 = arith.constant dense<0.000000e+00> : vector<8x256xf32>
    %388 = tpu.matmul %387, %385, %cst_353 {dimension_numbers = #tpu.dot_dimension_numbers<[1], [0], [0], [1], [0, 0, 1, 1], [], []>} : vector<8x4xf32>, vector<4x256xf32>, vector<8x256xf32> -> vector<8x256xf32>
    %c3_354 = arith.constant 3 : index
    %c0_355 = arith.constant 0 : index
    %389 = vector.load %arg8[%c3_354, %c0_355] : memref<9x256xf32, #tpu.memory_space<vmem>>, vector<1x256xf32>
    %390 = vector.broadcast %389 : vector<1x256xf32> to vector<8x256xf32>
    %391 = arith.mulf %388, %390 : vector<8x256xf32>
    %392 = arith.addf %382, %391 : vector<8x256xf32>
    %c0_356 = arith.constant 0 : index
    %393 = arith.index_cast %355 : i32 to index
    %c0_357 = arith.constant 0 : index
    %c144_358 = arith.constant 144 : index
    %394 = vector.load %arg2[%c0_356, %393, %c0_357, %c144_358] : memref<1x32x4x544xf32, #tpu.memory_space<vmem>>, vector<1x1x4x256xf32>
    %395 = vector.shape_cast %394 : vector<1x1x4x256xf32> to vector<4x256xf32>
    %c1_359 = arith.constant 1 : index
    %c13_360 = arith.constant 13 : index
    %c0_361 = arith.constant 0 : index
    %c0_362 = arith.constant 0 : index
    %396 = vector.load %arg5[%c1_359, %c13_360, %c0_361, %c0_362] : memref<3x27x8x4xf32, #tpu.memory_space<vmem>>, vector<1x1x8x4xf32>
    %397 = vector.shape_cast %396 : vector<1x1x8x4xf32> to vector<8x4xf32>
    %cst_363 = arith.constant dense<0.000000e+00> : vector<8x256xf32>
    %398 = tpu.matmul %397, %395, %cst_363 {dimension_numbers = #tpu.dot_dimension_numbers<[1], [0], [0], [1], [0, 0, 1, 1], [], []>} : vector<8x4xf32>, vector<4x256xf32>, vector<8x256xf32> -> vector<8x256xf32>
    %399 = arith.addf %392, %398 : vector<8x256xf32>
    %c0_364 = arith.constant 0 : index
    %400 = arith.index_cast %355 : i32 to index
    %c0_365 = arith.constant 0 : index
    %c148_366 = arith.constant 148 : index
    %401 = vector.load %arg2[%c0_364, %400, %c0_365, %c148_366] : memref<1x32x4x544xf32, #tpu.memory_space<vmem>>, vector<1x1x4x256xf32>
    %402 = vector.shape_cast %401 : vector<1x1x4x256xf32> to vector<4x256xf32>
    %c1_367 = arith.constant 1 : index
    %c14_368 = arith.constant 14 : index
    %c0_369 = arith.constant 0 : index
    %c0_370 = arith.constant 0 : index
    %403 = vector.load %arg5[%c1_367, %c14_368, %c0_369, %c0_370] : memref<3x27x8x4xf32, #tpu.memory_space<vmem>>, vector<1x1x8x4xf32>
    %404 = vector.shape_cast %403 : vector<1x1x8x4xf32> to vector<8x4xf32>
    %cst_371 = arith.constant dense<0.000000e+00> : vector<8x256xf32>
    %405 = tpu.matmul %404, %402, %cst_371 {dimension_numbers = #tpu.dot_dimension_numbers<[1], [0], [0], [1], [0, 0, 1, 1], [], []>} : vector<8x4xf32>, vector<4x256xf32>, vector<8x256xf32> -> vector<8x256xf32>
    %c5_372 = arith.constant 5 : index
    %c0_373 = arith.constant 0 : index
    %406 = vector.load %arg8[%c5_372, %c0_373] : memref<9x256xf32, #tpu.memory_space<vmem>>, vector<1x256xf32>
    %407 = vector.broadcast %406 : vector<1x256xf32> to vector<8x256xf32>
    %408 = arith.mulf %405, %407 : vector<8x256xf32>
    %409 = arith.addf %399, %408 : vector<8x256xf32>
    %c0_374 = arith.constant 0 : index
    %410 = arith.index_cast %355 : i32 to index
    %c0_375 = arith.constant 0 : index
    %c204_376 = arith.constant 204 : index
    %411 = vector.load %arg2[%c0_374, %410, %c0_375, %c204_376] : memref<1x32x4x544xf32, #tpu.memory_space<vmem>>, vector<1x1x4x256xf32>
    %412 = vector.shape_cast %411 : vector<1x1x4x256xf32> to vector<4x256xf32>
    %c1_377 = arith.constant 1 : index
    %c15_378 = arith.constant 15 : index
    %c0_379 = arith.constant 0 : index
    %c0_380 = arith.constant 0 : index
    %413 = vector.load %arg5[%c1_377, %c15_378, %c0_379, %c0_380] : memref<3x27x8x4xf32, #tpu.memory_space<vmem>>, vector<1x1x8x4xf32>
    %414 = vector.shape_cast %413 : vector<1x1x8x4xf32> to vector<8x4xf32>
    %cst_381 = arith.constant dense<0.000000e+00> : vector<8x256xf32>
    %415 = tpu.matmul %414, %412, %cst_381 {dimension_numbers = #tpu.dot_dimension_numbers<[1], [0], [0], [1], [0, 0, 1, 1], [], []>} : vector<8x4xf32>, vector<4x256xf32>, vector<8x256xf32> -> vector<8x256xf32>
    %c3_382 = arith.constant 3 : index
    %c0_383 = arith.constant 0 : index
    %416 = vector.load %arg8[%c3_382, %c0_383] : memref<9x256xf32, #tpu.memory_space<vmem>>, vector<1x256xf32>
    %417 = vector.broadcast %416 : vector<1x256xf32> to vector<8x256xf32>
    %418 = arith.mulf %415, %417 : vector<8x256xf32>
    %419 = arith.addf %409, %418 : vector<8x256xf32>
    %c0_384 = arith.constant 0 : index
    %420 = arith.index_cast %355 : i32 to index
    %c0_385 = arith.constant 0 : index
    %c208_386 = arith.constant 208 : index
    %421 = vector.load %arg2[%c0_384, %420, %c0_385, %c208_386] : memref<1x32x4x544xf32, #tpu.memory_space<vmem>>, vector<1x1x4x256xf32>
    %422 = vector.shape_cast %421 : vector<1x1x4x256xf32> to vector<4x256xf32>
    %c1_387 = arith.constant 1 : index
    %c16_388 = arith.constant 16 : index
    %c0_389 = arith.constant 0 : index
    %c0_390 = arith.constant 0 : index
    %423 = vector.load %arg5[%c1_387, %c16_388, %c0_389, %c0_390] : memref<3x27x8x4xf32, #tpu.memory_space<vmem>>, vector<1x1x8x4xf32>
    %424 = vector.shape_cast %423 : vector<1x1x8x4xf32> to vector<8x4xf32>
    %cst_391 = arith.constant dense<0.000000e+00> : vector<8x256xf32>
    %425 = tpu.matmul %424, %422, %cst_391 {dimension_numbers = #tpu.dot_dimension_numbers<[1], [0], [0], [1], [0, 0, 1, 1], [], []>} : vector<8x4xf32>, vector<4x256xf32>, vector<8x256xf32> -> vector<8x256xf32>
    %426 = arith.addf %419, %425 : vector<8x256xf32>
    %c0_392 = arith.constant 0 : index
    %427 = arith.index_cast %355 : i32 to index
    %c0_393 = arith.constant 0 : index
    %c212_394 = arith.constant 212 : index
    %428 = vector.load %arg2[%c0_392, %427, %c0_393, %c212_394] : memref<1x32x4x544xf32, #tpu.memory_space<vmem>>, vector<1x1x4x256xf32>
    %429 = vector.shape_cast %428 : vector<1x1x4x256xf32> to vector<4x256xf32>
    %c1_395 = arith.constant 1 : index
    %c17_396 = arith.constant 17 : index
    %c0_397 = arith.constant 0 : index
    %c0_398 = arith.constant 0 : index
    %430 = vector.load %arg5[%c1_395, %c17_396, %c0_397, %c0_398] : memref<3x27x8x4xf32, #tpu.memory_space<vmem>>, vector<1x1x8x4xf32>
    %431 = vector.shape_cast %430 : vector<1x1x8x4xf32> to vector<8x4xf32>
    %cst_399 = arith.constant dense<0.000000e+00> : vector<8x256xf32>
    %432 = tpu.matmul %431, %429, %cst_399 {dimension_numbers = #tpu.dot_dimension_numbers<[1], [0], [0], [1], [0, 0, 1, 1], [], []>} : vector<8x4xf32>, vector<4x256xf32>, vector<8x256xf32> -> vector<8x256xf32>
    %c5_400 = arith.constant 5 : index
    %c0_401 = arith.constant 0 : index
    %433 = vector.load %arg8[%c5_400, %c0_401] : memref<9x256xf32, #tpu.memory_space<vmem>>, vector<1x256xf32>
    %434 = vector.broadcast %433 : vector<1x256xf32> to vector<8x256xf32>
    %435 = arith.mulf %432, %434 : vector<8x256xf32>
    %436 = arith.addf %426, %435 : vector<8x256xf32>
    %c8_i32_402 = arith.constant 8 : i32
    %437 = arith.addi %c8_i32_402, %arg1 : i32
    %c4_i32 = arith.constant 4 : i32
    %438 = arith.addi %437, %c4_i32 : i32
    %c0_403 = arith.constant 0 : index
    %439 = arith.index_cast %438 : i32 to index
    %c0_404 = arith.constant 0 : index
    %c76_405 = arith.constant 76 : index
    %440 = vector.load %arg2[%c0_403, %439, %c0_404, %c76_405] : memref<1x32x4x544xf32, #tpu.memory_space<vmem>>, vector<1x1x4x256xf32>
    %441 = vector.shape_cast %440 : vector<1x1x4x256xf32> to vector<4x256xf32>
    %c1_406 = arith.constant 1 : index
    %c18_407 = arith.constant 18 : index
    %c0_408 = arith.constant 0 : index
    %c0_409 = arith.constant 0 : index
    %442 = vector.load %arg5[%c1_406, %c18_407, %c0_408, %c0_409] : memref<3x27x8x4xf32, #tpu.memory_space<vmem>>, vector<1x1x8x4xf32>
    %443 = vector.shape_cast %442 : vector<1x1x8x4xf32> to vector<8x4xf32>
    %cst_410 = arith.constant dense<0.000000e+00> : vector<8x256xf32>
    %444 = tpu.matmul %443, %441, %cst_410 {dimension_numbers = #tpu.dot_dimension_numbers<[1], [0], [0], [1], [0, 0, 1, 1], [], []>} : vector<8x4xf32>, vector<4x256xf32>, vector<8x256xf32> -> vector<8x256xf32>
    %c3_411 = arith.constant 3 : index
    %c0_412 = arith.constant 0 : index
    %445 = vector.load %arg8[%c3_411, %c0_412] : memref<9x256xf32, #tpu.memory_space<vmem>>, vector<1x256xf32>
    %446 = vector.broadcast %445 : vector<1x256xf32> to vector<8x256xf32>
    %447 = arith.mulf %444, %446 : vector<8x256xf32>
    %448 = arith.addf %436, %447 : vector<8x256xf32>
    %c0_413 = arith.constant 0 : index
    %449 = arith.index_cast %438 : i32 to index
    %c0_414 = arith.constant 0 : index
    %c80_415 = arith.constant 80 : index
    %450 = vector.load %arg2[%c0_413, %449, %c0_414, %c80_415] : memref<1x32x4x544xf32, #tpu.memory_space<vmem>>, vector<1x1x4x256xf32>
    %451 = vector.shape_cast %450 : vector<1x1x4x256xf32> to vector<4x256xf32>
    %c1_416 = arith.constant 1 : index
    %c19_417 = arith.constant 19 : index
    %c0_418 = arith.constant 0 : index
    %c0_419 = arith.constant 0 : index
    %452 = vector.load %arg5[%c1_416, %c19_417, %c0_418, %c0_419] : memref<3x27x8x4xf32, #tpu.memory_space<vmem>>, vector<1x1x8x4xf32>
    %453 = vector.shape_cast %452 : vector<1x1x8x4xf32> to vector<8x4xf32>
    %cst_420 = arith.constant dense<0.000000e+00> : vector<8x256xf32>
    %454 = tpu.matmul %453, %451, %cst_420 {dimension_numbers = #tpu.dot_dimension_numbers<[1], [0], [0], [1], [0, 0, 1, 1], [], []>} : vector<8x4xf32>, vector<4x256xf32>, vector<8x256xf32> -> vector<8x256xf32>
    %455 = arith.addf %448, %454 : vector<8x256xf32>
    %c0_421 = arith.constant 0 : index
    %456 = arith.index_cast %438 : i32 to index
    %c0_422 = arith.constant 0 : index
    %c84_423 = arith.constant 84 : index
    %457 = vector.load %arg2[%c0_421, %456, %c0_422, %c84_423] : memref<1x32x4x544xf32, #tpu.memory_space<vmem>>, vector<1x1x4x256xf32>
    %458 = vector.shape_cast %457 : vector<1x1x4x256xf32> to vector<4x256xf32>
    %c1_424 = arith.constant 1 : index
    %c20_425 = arith.constant 20 : index
    %c0_426 = arith.constant 0 : index
    %c0_427 = arith.constant 0 : index
    %459 = vector.load %arg5[%c1_424, %c20_425, %c0_426, %c0_427] : memref<3x27x8x4xf32, #tpu.memory_space<vmem>>, vector<1x1x8x4xf32>
    %460 = vector.shape_cast %459 : vector<1x1x8x4xf32> to vector<8x4xf32>
    %cst_428 = arith.constant dense<0.000000e+00> : vector<8x256xf32>
    %461 = tpu.matmul %460, %458, %cst_428 {dimension_numbers = #tpu.dot_dimension_numbers<[1], [0], [0], [1], [0, 0, 1, 1], [], []>} : vector<8x4xf32>, vector<4x256xf32>, vector<8x256xf32> -> vector<8x256xf32>
    %c5_429 = arith.constant 5 : index
    %c0_430 = arith.constant 0 : index
    %462 = vector.load %arg8[%c5_429, %c0_430] : memref<9x256xf32, #tpu.memory_space<vmem>>, vector<1x256xf32>
    %463 = vector.broadcast %462 : vector<1x256xf32> to vector<8x256xf32>
    %464 = arith.mulf %461, %463 : vector<8x256xf32>
    %465 = arith.addf %455, %464 : vector<8x256xf32>
    %c0_431 = arith.constant 0 : index
    %466 = arith.index_cast %438 : i32 to index
    %c0_432 = arith.constant 0 : index
    %c140_433 = arith.constant 140 : index
    %467 = vector.load %arg2[%c0_431, %466, %c0_432, %c140_433] : memref<1x32x4x544xf32, #tpu.memory_space<vmem>>, vector<1x1x4x256xf32>
    %468 = vector.shape_cast %467 : vector<1x1x4x256xf32> to vector<4x256xf32>
    %c1_434 = arith.constant 1 : index
    %c21_435 = arith.constant 21 : index
    %c0_436 = arith.constant 0 : index
    %c0_437 = arith.constant 0 : index
    %469 = vector.load %arg5[%c1_434, %c21_435, %c0_436, %c0_437] : memref<3x27x8x4xf32, #tpu.memory_space<vmem>>, vector<1x1x8x4xf32>
    %470 = vector.shape_cast %469 : vector<1x1x8x4xf32> to vector<8x4xf32>
    %cst_438 = arith.constant dense<0.000000e+00> : vector<8x256xf32>
    %471 = tpu.matmul %470, %468, %cst_438 {dimension_numbers = #tpu.dot_dimension_numbers<[1], [0], [0], [1], [0, 0, 1, 1], [], []>} : vector<8x4xf32>, vector<4x256xf32>, vector<8x256xf32> -> vector<8x256xf32>
    %c3_439 = arith.constant 3 : index
    %c0_440 = arith.constant 0 : index
    %472 = vector.load %arg8[%c3_439, %c0_440] : memref<9x256xf32, #tpu.memory_space<vmem>>, vector<1x256xf32>
    %473 = vector.broadcast %472 : vector<1x256xf32> to vector<8x256xf32>
    %474 = arith.mulf %471, %473 : vector<8x256xf32>
    %475 = arith.addf %465, %474 : vector<8x256xf32>
    %c0_441 = arith.constant 0 : index
    %476 = arith.index_cast %438 : i32 to index
    %c0_442 = arith.constant 0 : index
    %c144_443 = arith.constant 144 : index
    %477 = vector.load %arg2[%c0_441, %476, %c0_442, %c144_443] : memref<1x32x4x544xf32, #tpu.memory_space<vmem>>, vector<1x1x4x256xf32>
    %478 = vector.shape_cast %477 : vector<1x1x4x256xf32> to vector<4x256xf32>
    %c1_444 = arith.constant 1 : index
    %c22_445 = arith.constant 22 : index
    %c0_446 = arith.constant 0 : index
    %c0_447 = arith.constant 0 : index
    %479 = vector.load %arg5[%c1_444, %c22_445, %c0_446, %c0_447] : memref<3x27x8x4xf32, #tpu.memory_space<vmem>>, vector<1x1x8x4xf32>
    %480 = vector.shape_cast %479 : vector<1x1x8x4xf32> to vector<8x4xf32>
    %cst_448 = arith.constant dense<0.000000e+00> : vector<8x256xf32>
    %481 = tpu.matmul %480, %478, %cst_448 {dimension_numbers = #tpu.dot_dimension_numbers<[1], [0], [0], [1], [0, 0, 1, 1], [], []>} : vector<8x4xf32>, vector<4x256xf32>, vector<8x256xf32> -> vector<8x256xf32>
    %482 = arith.addf %475, %481 : vector<8x256xf32>
    %c0_449 = arith.constant 0 : index
    %483 = arith.index_cast %438 : i32 to index
    %c0_450 = arith.constant 0 : index
    %c148_451 = arith.constant 148 : index
    %484 = vector.load %arg2[%c0_449, %483, %c0_450, %c148_451] : memref<1x32x4x544xf32, #tpu.memory_space<vmem>>, vector<1x1x4x256xf32>
    %485 = vector.shape_cast %484 : vector<1x1x4x256xf32> to vector<4x256xf32>
    %c1_452 = arith.constant 1 : index
    %c23_453 = arith.constant 23 : index
    %c0_454 = arith.constant 0 : index
    %c0_455 = arith.constant 0 : index
    %486 = vector.load %arg5[%c1_452, %c23_453, %c0_454, %c0_455] : memref<3x27x8x4xf32, #tpu.memory_space<vmem>>, vector<1x1x8x4xf32>
    %487 = vector.shape_cast %486 : vector<1x1x8x4xf32> to vector<8x4xf32>
    %cst_456 = arith.constant dense<0.000000e+00> : vector<8x256xf32>
    %488 = tpu.matmul %487, %485, %cst_456 {dimension_numbers = #tpu.dot_dimension_numbers<[1], [0], [0], [1], [0, 0, 1, 1], [], []>} : vector<8x4xf32>, vector<4x256xf32>, vector<8x256xf32> -> vector<8x256xf32>
    %c5_457 = arith.constant 5 : index
    %c0_458 = arith.constant 0 : index
    %489 = vector.load %arg8[%c5_457, %c0_458] : memref<9x256xf32, #tpu.memory_space<vmem>>, vector<1x256xf32>
    %490 = vector.broadcast %489 : vector<1x256xf32> to vector<8x256xf32>
    %491 = arith.mulf %488, %490 : vector<8x256xf32>
    %492 = arith.addf %482, %491 : vector<8x256xf32>
    %c0_459 = arith.constant 0 : index
    %493 = arith.index_cast %438 : i32 to index
    %c0_460 = arith.constant 0 : index
    %c204_461 = arith.constant 204 : index
    %494 = vector.load %arg2[%c0_459, %493, %c0_460, %c204_461] : memref<1x32x4x544xf32, #tpu.memory_space<vmem>>, vector<1x1x4x256xf32>
    %495 = vector.shape_cast %494 : vector<1x1x4x256xf32> to vector<4x256xf32>
    %c1_462 = arith.constant 1 : index
    %c24_463 = arith.constant 24 : index
    %c0_464 = arith.constant 0 : index
    %c0_465 = arith.constant 0 : index
    %496 = vector.load %arg5[%c1_462, %c24_463, %c0_464, %c0_465] : memref<3x27x8x4xf32, #tpu.memory_space<vmem>>, vector<1x1x8x4xf32>
    %497 = vector.shape_cast %496 : vector<1x1x8x4xf32> to vector<8x4xf32>
    %cst_466 = arith.constant dense<0.000000e+00> : vector<8x256xf32>
    %498 = tpu.matmul %497, %495, %cst_466 {dimension_numbers = #tpu.dot_dimension_numbers<[1], [0], [0], [1], [0, 0, 1, 1], [], []>} : vector<8x4xf32>, vector<4x256xf32>, vector<8x256xf32> -> vector<8x256xf32>
    %c3_467 = arith.constant 3 : index
    %c0_468 = arith.constant 0 : index
    %499 = vector.load %arg8[%c3_467, %c0_468] : memref<9x256xf32, #tpu.memory_space<vmem>>, vector<1x256xf32>
    %500 = vector.broadcast %499 : vector<1x256xf32> to vector<8x256xf32>
    %501 = arith.mulf %498, %500 : vector<8x256xf32>
    %502 = arith.addf %492, %501 : vector<8x256xf32>
    %c0_469 = arith.constant 0 : index
    %503 = arith.index_cast %438 : i32 to index
    %c0_470 = arith.constant 0 : index
    %c208_471 = arith.constant 208 : index
    %504 = vector.load %arg2[%c0_469, %503, %c0_470, %c208_471] : memref<1x32x4x544xf32, #tpu.memory_space<vmem>>, vector<1x1x4x256xf32>
    %505 = vector.shape_cast %504 : vector<1x1x4x256xf32> to vector<4x256xf32>
    %c1_472 = arith.constant 1 : index
    %c25_473 = arith.constant 25 : index
    %c0_474 = arith.constant 0 : index
    %c0_475 = arith.constant 0 : index
    %506 = vector.load %arg5[%c1_472, %c25_473, %c0_474, %c0_475] : memref<3x27x8x4xf32, #tpu.memory_space<vmem>>, vector<1x1x8x4xf32>
    %507 = vector.shape_cast %506 : vector<1x1x8x4xf32> to vector<8x4xf32>
    %cst_476 = arith.constant dense<0.000000e+00> : vector<8x256xf32>
    %508 = tpu.matmul %507, %505, %cst_476 {dimension_numbers = #tpu.dot_dimension_numbers<[1], [0], [0], [1], [0, 0, 1, 1], [], []>} : vector<8x4xf32>, vector<4x256xf32>, vector<8x256xf32> -> vector<8x256xf32>
    %509 = arith.addf %502, %508 : vector<8x256xf32>
    %c0_477 = arith.constant 0 : index
    %510 = arith.index_cast %438 : i32 to index
    %c0_478 = arith.constant 0 : index
    %c212_479 = arith.constant 212 : index
    %511 = vector.load %arg2[%c0_477, %510, %c0_478, %c212_479] : memref<1x32x4x544xf32, #tpu.memory_space<vmem>>, vector<1x1x4x256xf32>
    %512 = vector.shape_cast %511 : vector<1x1x4x256xf32> to vector<4x256xf32>
    %c1_480 = arith.constant 1 : index
    %c26_481 = arith.constant 26 : index
    %c0_482 = arith.constant 0 : index
    %c0_483 = arith.constant 0 : index
    %513 = vector.load %arg5[%c1_480, %c26_481, %c0_482, %c0_483] : memref<3x27x8x4xf32, #tpu.memory_space<vmem>>, vector<1x1x8x4xf32>
    %514 = vector.shape_cast %513 : vector<1x1x8x4xf32> to vector<8x4xf32>
    %cst_484 = arith.constant dense<0.000000e+00> : vector<8x256xf32>
    %515 = tpu.matmul %514, %512, %cst_484 {dimension_numbers = #tpu.dot_dimension_numbers<[1], [0], [0], [1], [0, 0, 1, 1], [], []>} : vector<8x4xf32>, vector<4x256xf32>, vector<8x256xf32> -> vector<8x256xf32>
    %c5_485 = arith.constant 5 : index
    %c0_486 = arith.constant 0 : index
    %516 = vector.load %arg8[%c5_485, %c0_486] : memref<9x256xf32, #tpu.memory_space<vmem>>, vector<1x256xf32>
    %517 = vector.broadcast %516 : vector<1x256xf32> to vector<8x256xf32>
    %518 = arith.mulf %515, %517 : vector<8x256xf32>
    %519 = arith.addf %509, %518 : vector<8x256xf32>
    %c1_487 = arith.constant 1 : index
    %c0_488 = arith.constant 0 : index
    %c0_489 = arith.constant 0 : index
    %520 = vector.load %arg6[%c1_487, %c0_488, %c0_489] : memref<3x8x1xf32, #tpu.memory_space<vmem>>, vector<1x8x1xf32>
    %521 = vector.shape_cast %520 : vector<1x8x1xf32> to vector<8x1xf32>
    %522 = vector.broadcast %521 : vector<8x1xf32> to vector<8x256xf32>
    %523 = arith.addf %519, %522 : vector<8x256xf32>
    %cst_490 = arith.constant 0.000000e+00 : f32
    %524 = vector.broadcast %cst_490 : f32 to vector<8x256xf32>
    %525 = arith.maximumf %523, %524 : vector<8x256xf32>
    %c2_491 = arith.constant 2 : index
    %c0_492 = arith.constant 0 : index
    %c0_493 = arith.constant 0 : index
    %526 = vector.load %arg7[%c2_491, %c0_492, %c0_493] : memref<4x8x8xf32, #tpu.memory_space<vmem>>, vector<1x8x8xf32>
    %527 = vector.shape_cast %526 : vector<1x8x8xf32> to vector<8x8xf32>
    %cst_494 = arith.constant dense<0.000000e+00> : vector<8x256xf32>
    %528 = tpu.matmul %527, %525, %cst_494 {dimension_numbers = #tpu.dot_dimension_numbers<[1], [0], [0], [1], [0, 0, 1, 1], [], []>} : vector<8x8xf32>, vector<8x256xf32>, vector<8x256xf32> -> vector<8x256xf32>
    %529 = arith.addf %271, %528 : vector<8x256xf32>
    %c8_i32_495 = arith.constant 8 : i32
    %530 = arith.addi %c8_i32_495, %arg1 : i32
    %c-8_i32 = arith.constant -8 : i32
    %531 = arith.addi %530, %c-8_i32 : i32
    %c0_496 = arith.constant 0 : index
    %532 = arith.index_cast %531 : i32 to index
    %c0_497 = arith.constant 0 : index
    %c8_498 = arith.constant 8 : index
    %533 = vector.load %arg2[%c0_496, %532, %c0_497, %c8_498] : memref<1x32x4x544xf32, #tpu.memory_space<vmem>>, vector<1x1x4x256xf32>
    %534 = vector.shape_cast %533 : vector<1x1x4x256xf32> to vector<4x256xf32>
    %c2_499 = arith.constant 2 : index
    %c0_500 = arith.constant 0 : index
    %c0_501 = arith.constant 0 : index
    %c0_502 = arith.constant 0 : index
    %535 = vector.load %arg5[%c2_499, %c0_500, %c0_501, %c0_502] : memref<3x27x8x4xf32, #tpu.memory_space<vmem>>, vector<1x1x8x4xf32>
    %536 = vector.shape_cast %535 : vector<1x1x8x4xf32> to vector<8x4xf32>
    %cst_503 = arith.constant dense<0.000000e+00> : vector<8x256xf32>
    %537 = tpu.matmul %536, %534, %cst_503 {dimension_numbers = #tpu.dot_dimension_numbers<[1], [0], [0], [1], [0, 0, 1, 1], [], []>} : vector<8x4xf32>, vector<4x256xf32>, vector<8x256xf32> -> vector<8x256xf32>
    %c6_504 = arith.constant 6 : index
    %c0_505 = arith.constant 0 : index
    %538 = vector.load %arg8[%c6_504, %c0_505] : memref<9x256xf32, #tpu.memory_space<vmem>>, vector<1x256xf32>
    %539 = vector.broadcast %538 : vector<1x256xf32> to vector<8x256xf32>
    %540 = arith.mulf %537, %539 : vector<8x256xf32>
    %c0_506 = arith.constant 0 : index
    %541 = arith.index_cast %531 : i32 to index
    %c0_507 = arith.constant 0 : index
    %c16_508 = arith.constant 16 : index
    %542 = vector.load %arg2[%c0_506, %541, %c0_507, %c16_508] : memref<1x32x4x544xf32, #tpu.memory_space<vmem>>, vector<1x1x4x256xf32>
    %543 = vector.shape_cast %542 : vector<1x1x4x256xf32> to vector<4x256xf32>
    %c2_509 = arith.constant 2 : index
    %c1_510 = arith.constant 1 : index
    %c0_511 = arith.constant 0 : index
    %c0_512 = arith.constant 0 : index
    %544 = vector.load %arg5[%c2_509, %c1_510, %c0_511, %c0_512] : memref<3x27x8x4xf32, #tpu.memory_space<vmem>>, vector<1x1x8x4xf32>
    %545 = vector.shape_cast %544 : vector<1x1x8x4xf32> to vector<8x4xf32>
    %cst_513 = arith.constant dense<0.000000e+00> : vector<8x256xf32>
    %546 = tpu.matmul %545, %543, %cst_513 {dimension_numbers = #tpu.dot_dimension_numbers<[1], [0], [0], [1], [0, 0, 1, 1], [], []>} : vector<8x4xf32>, vector<4x256xf32>, vector<8x256xf32> -> vector<8x256xf32>
    %547 = arith.addf %540, %546 : vector<8x256xf32>
    %c0_514 = arith.constant 0 : index
    %548 = arith.index_cast %531 : i32 to index
    %c0_515 = arith.constant 0 : index
    %c24_516 = arith.constant 24 : index
    %549 = vector.load %arg2[%c0_514, %548, %c0_515, %c24_516] : memref<1x32x4x544xf32, #tpu.memory_space<vmem>>, vector<1x1x4x256xf32>
    %550 = vector.shape_cast %549 : vector<1x1x4x256xf32> to vector<4x256xf32>
    %c2_517 = arith.constant 2 : index
    %c2_518 = arith.constant 2 : index
    %c0_519 = arith.constant 0 : index
    %c0_520 = arith.constant 0 : index
    %551 = vector.load %arg5[%c2_517, %c2_518, %c0_519, %c0_520] : memref<3x27x8x4xf32, #tpu.memory_space<vmem>>, vector<1x1x8x4xf32>
    %552 = vector.shape_cast %551 : vector<1x1x8x4xf32> to vector<8x4xf32>
    %cst_521 = arith.constant dense<0.000000e+00> : vector<8x256xf32>
    %553 = tpu.matmul %552, %550, %cst_521 {dimension_numbers = #tpu.dot_dimension_numbers<[1], [0], [0], [1], [0, 0, 1, 1], [], []>} : vector<8x4xf32>, vector<4x256xf32>, vector<8x256xf32> -> vector<8x256xf32>
    %c8_522 = arith.constant 8 : index
    %c0_523 = arith.constant 0 : index
    %554 = vector.load %arg8[%c8_522, %c0_523] : memref<9x256xf32, #tpu.memory_space<vmem>>, vector<1x256xf32>
    %555 = vector.broadcast %554 : vector<1x256xf32> to vector<8x256xf32>
    %556 = arith.mulf %553, %555 : vector<8x256xf32>
    %557 = arith.addf %547, %556 : vector<8x256xf32>
    %c0_524 = arith.constant 0 : index
    %558 = arith.index_cast %531 : i32 to index
    %c0_525 = arith.constant 0 : index
    %c136 = arith.constant 136 : index
    %559 = vector.load %arg2[%c0_524, %558, %c0_525, %c136] : memref<1x32x4x544xf32, #tpu.memory_space<vmem>>, vector<1x1x4x256xf32>
    %560 = vector.shape_cast %559 : vector<1x1x4x256xf32> to vector<4x256xf32>
    %c2_526 = arith.constant 2 : index
    %c3_527 = arith.constant 3 : index
    %c0_528 = arith.constant 0 : index
    %c0_529 = arith.constant 0 : index
    %561 = vector.load %arg5[%c2_526, %c3_527, %c0_528, %c0_529] : memref<3x27x8x4xf32, #tpu.memory_space<vmem>>, vector<1x1x8x4xf32>
    %562 = vector.shape_cast %561 : vector<1x1x8x4xf32> to vector<8x4xf32>
    %cst_530 = arith.constant dense<0.000000e+00> : vector<8x256xf32>
    %563 = tpu.matmul %562, %560, %cst_530 {dimension_numbers = #tpu.dot_dimension_numbers<[1], [0], [0], [1], [0, 0, 1, 1], [], []>} : vector<8x4xf32>, vector<4x256xf32>, vector<8x256xf32> -> vector<8x256xf32>
    %c6_531 = arith.constant 6 : index
    %c0_532 = arith.constant 0 : index
    %564 = vector.load %arg8[%c6_531, %c0_532] : memref<9x256xf32, #tpu.memory_space<vmem>>, vector<1x256xf32>
    %565 = vector.broadcast %564 : vector<1x256xf32> to vector<8x256xf32>
    %566 = arith.mulf %563, %565 : vector<8x256xf32>
    %567 = arith.addf %557, %566 : vector<8x256xf32>
    %c0_533 = arith.constant 0 : index
    %568 = arith.index_cast %531 : i32 to index
    %c0_534 = arith.constant 0 : index
    %c144_535 = arith.constant 144 : index
    %569 = vector.load %arg2[%c0_533, %568, %c0_534, %c144_535] : memref<1x32x4x544xf32, #tpu.memory_space<vmem>>, vector<1x1x4x256xf32>
    %570 = vector.shape_cast %569 : vector<1x1x4x256xf32> to vector<4x256xf32>
    %c2_536 = arith.constant 2 : index
    %c4_537 = arith.constant 4 : index
    %c0_538 = arith.constant 0 : index
    %c0_539 = arith.constant 0 : index
    %571 = vector.load %arg5[%c2_536, %c4_537, %c0_538, %c0_539] : memref<3x27x8x4xf32, #tpu.memory_space<vmem>>, vector<1x1x8x4xf32>
    %572 = vector.shape_cast %571 : vector<1x1x8x4xf32> to vector<8x4xf32>
    %cst_540 = arith.constant dense<0.000000e+00> : vector<8x256xf32>
    %573 = tpu.matmul %572, %570, %cst_540 {dimension_numbers = #tpu.dot_dimension_numbers<[1], [0], [0], [1], [0, 0, 1, 1], [], []>} : vector<8x4xf32>, vector<4x256xf32>, vector<8x256xf32> -> vector<8x256xf32>
    %574 = arith.addf %567, %573 : vector<8x256xf32>
    %c0_541 = arith.constant 0 : index
    %575 = arith.index_cast %531 : i32 to index
    %c0_542 = arith.constant 0 : index
    %c152 = arith.constant 152 : index
    %576 = vector.load %arg2[%c0_541, %575, %c0_542, %c152] : memref<1x32x4x544xf32, #tpu.memory_space<vmem>>, vector<1x1x4x256xf32>
    %577 = vector.shape_cast %576 : vector<1x1x4x256xf32> to vector<4x256xf32>
    %c2_543 = arith.constant 2 : index
    %c5_544 = arith.constant 5 : index
    %c0_545 = arith.constant 0 : index
    %c0_546 = arith.constant 0 : index
    %578 = vector.load %arg5[%c2_543, %c5_544, %c0_545, %c0_546] : memref<3x27x8x4xf32, #tpu.memory_space<vmem>>, vector<1x1x8x4xf32>
    %579 = vector.shape_cast %578 : vector<1x1x8x4xf32> to vector<8x4xf32>
    %cst_547 = arith.constant dense<0.000000e+00> : vector<8x256xf32>
    %580 = tpu.matmul %579, %577, %cst_547 {dimension_numbers = #tpu.dot_dimension_numbers<[1], [0], [0], [1], [0, 0, 1, 1], [], []>} : vector<8x4xf32>, vector<4x256xf32>, vector<8x256xf32> -> vector<8x256xf32>
    %c8_548 = arith.constant 8 : index
    %c0_549 = arith.constant 0 : index
    %581 = vector.load %arg8[%c8_548, %c0_549] : memref<9x256xf32, #tpu.memory_space<vmem>>, vector<1x256xf32>
    %582 = vector.broadcast %581 : vector<1x256xf32> to vector<8x256xf32>
    %583 = arith.mulf %580, %582 : vector<8x256xf32>
    %584 = arith.addf %574, %583 : vector<8x256xf32>
    %c0_550 = arith.constant 0 : index
    %585 = arith.index_cast %531 : i32 to index
    %c0_551 = arith.constant 0 : index
    %c264 = arith.constant 264 : index
    %586 = vector.load %arg2[%c0_550, %585, %c0_551, %c264] : memref<1x32x4x544xf32, #tpu.memory_space<vmem>>, vector<1x1x4x256xf32>
    %587 = vector.shape_cast %586 : vector<1x1x4x256xf32> to vector<4x256xf32>
    %c2_552 = arith.constant 2 : index
    %c6_553 = arith.constant 6 : index
    %c0_554 = arith.constant 0 : index
    %c0_555 = arith.constant 0 : index
    %588 = vector.load %arg5[%c2_552, %c6_553, %c0_554, %c0_555] : memref<3x27x8x4xf32, #tpu.memory_space<vmem>>, vector<1x1x8x4xf32>
    %589 = vector.shape_cast %588 : vector<1x1x8x4xf32> to vector<8x4xf32>
    %cst_556 = arith.constant dense<0.000000e+00> : vector<8x256xf32>
    %590 = tpu.matmul %589, %587, %cst_556 {dimension_numbers = #tpu.dot_dimension_numbers<[1], [0], [0], [1], [0, 0, 1, 1], [], []>} : vector<8x4xf32>, vector<4x256xf32>, vector<8x256xf32> -> vector<8x256xf32>
    %c6_557 = arith.constant 6 : index
    %c0_558 = arith.constant 0 : index
    %591 = vector.load %arg8[%c6_557, %c0_558] : memref<9x256xf32, #tpu.memory_space<vmem>>, vector<1x256xf32>
    %592 = vector.broadcast %591 : vector<1x256xf32> to vector<8x256xf32>
    %593 = arith.mulf %590, %592 : vector<8x256xf32>
    %594 = arith.addf %584, %593 : vector<8x256xf32>
    %c0_559 = arith.constant 0 : index
    %595 = arith.index_cast %531 : i32 to index
    %c0_560 = arith.constant 0 : index
    %c272 = arith.constant 272 : index
    %596 = vector.load %arg2[%c0_559, %595, %c0_560, %c272] : memref<1x32x4x544xf32, #tpu.memory_space<vmem>>, vector<1x1x4x256xf32>
    %597 = vector.shape_cast %596 : vector<1x1x4x256xf32> to vector<4x256xf32>
    %c2_561 = arith.constant 2 : index
    %c7_562 = arith.constant 7 : index
    %c0_563 = arith.constant 0 : index
    %c0_564 = arith.constant 0 : index
    %598 = vector.load %arg5[%c2_561, %c7_562, %c0_563, %c0_564] : memref<3x27x8x4xf32, #tpu.memory_space<vmem>>, vector<1x1x8x4xf32>
    %599 = vector.shape_cast %598 : vector<1x1x8x4xf32> to vector<8x4xf32>
    %cst_565 = arith.constant dense<0.000000e+00> : vector<8x256xf32>
    %600 = tpu.matmul %599, %597, %cst_565 {dimension_numbers = #tpu.dot_dimension_numbers<[1], [0], [0], [1], [0, 0, 1, 1], [], []>} : vector<8x4xf32>, vector<4x256xf32>, vector<8x256xf32> -> vector<8x256xf32>
    %601 = arith.addf %594, %600 : vector<8x256xf32>
    %c0_566 = arith.constant 0 : index
    %602 = arith.index_cast %531 : i32 to index
    %c0_567 = arith.constant 0 : index
    %c280 = arith.constant 280 : index
    %603 = vector.load %arg2[%c0_566, %602, %c0_567, %c280] : memref<1x32x4x544xf32, #tpu.memory_space<vmem>>, vector<1x1x4x256xf32>
    %604 = vector.shape_cast %603 : vector<1x1x4x256xf32> to vector<4x256xf32>
    %c2_568 = arith.constant 2 : index
    %c8_569 = arith.constant 8 : index
    %c0_570 = arith.constant 0 : index
    %c0_571 = arith.constant 0 : index
    %605 = vector.load %arg5[%c2_568, %c8_569, %c0_570, %c0_571] : memref<3x27x8x4xf32, #tpu.memory_space<vmem>>, vector<1x1x8x4xf32>
    %606 = vector.shape_cast %605 : vector<1x1x8x4xf32> to vector<8x4xf32>
    %cst_572 = arith.constant dense<0.000000e+00> : vector<8x256xf32>
    %607 = tpu.matmul %606, %604, %cst_572 {dimension_numbers = #tpu.dot_dimension_numbers<[1], [0], [0], [1], [0, 0, 1, 1], [], []>} : vector<8x4xf32>, vector<4x256xf32>, vector<8x256xf32> -> vector<8x256xf32>
    %c8_573 = arith.constant 8 : index
    %c0_574 = arith.constant 0 : index
    %608 = vector.load %arg8[%c8_573, %c0_574] : memref<9x256xf32, #tpu.memory_space<vmem>>, vector<1x256xf32>
    %609 = vector.broadcast %608 : vector<1x256xf32> to vector<8x256xf32>
    %610 = arith.mulf %607, %609 : vector<8x256xf32>
    %611 = arith.addf %601, %610 : vector<8x256xf32>
    %c8_i32_575 = arith.constant 8 : i32
    %612 = arith.addi %c8_i32_575, %arg1 : i32
    %c0_i32_576 = arith.constant 0 : i32
    %613 = arith.addi %612, %c0_i32_576 : i32
    %c0_577 = arith.constant 0 : index
    %614 = arith.index_cast %613 : i32 to index
    %c0_578 = arith.constant 0 : index
    %c8_579 = arith.constant 8 : index
    %615 = vector.load %arg2[%c0_577, %614, %c0_578, %c8_579] : memref<1x32x4x544xf32, #tpu.memory_space<vmem>>, vector<1x1x4x256xf32>
    %616 = vector.shape_cast %615 : vector<1x1x4x256xf32> to vector<4x256xf32>
    %c2_580 = arith.constant 2 : index
    %c9_581 = arith.constant 9 : index
    %c0_582 = arith.constant 0 : index
    %c0_583 = arith.constant 0 : index
    %617 = vector.load %arg5[%c2_580, %c9_581, %c0_582, %c0_583] : memref<3x27x8x4xf32, #tpu.memory_space<vmem>>, vector<1x1x8x4xf32>
    %618 = vector.shape_cast %617 : vector<1x1x8x4xf32> to vector<8x4xf32>
    %cst_584 = arith.constant dense<0.000000e+00> : vector<8x256xf32>
    %619 = tpu.matmul %618, %616, %cst_584 {dimension_numbers = #tpu.dot_dimension_numbers<[1], [0], [0], [1], [0, 0, 1, 1], [], []>} : vector<8x4xf32>, vector<4x256xf32>, vector<8x256xf32> -> vector<8x256xf32>
    %c6_585 = arith.constant 6 : index
    %c0_586 = arith.constant 0 : index
    %620 = vector.load %arg8[%c6_585, %c0_586] : memref<9x256xf32, #tpu.memory_space<vmem>>, vector<1x256xf32>
    %621 = vector.broadcast %620 : vector<1x256xf32> to vector<8x256xf32>
    %622 = arith.mulf %619, %621 : vector<8x256xf32>
    %623 = arith.addf %611, %622 : vector<8x256xf32>
    %c0_587 = arith.constant 0 : index
    %624 = arith.index_cast %613 : i32 to index
    %c0_588 = arith.constant 0 : index
    %c16_589 = arith.constant 16 : index
    %625 = vector.load %arg2[%c0_587, %624, %c0_588, %c16_589] : memref<1x32x4x544xf32, #tpu.memory_space<vmem>>, vector<1x1x4x256xf32>
    %626 = vector.shape_cast %625 : vector<1x1x4x256xf32> to vector<4x256xf32>
    %c2_590 = arith.constant 2 : index
    %c10_591 = arith.constant 10 : index
    %c0_592 = arith.constant 0 : index
    %c0_593 = arith.constant 0 : index
    %627 = vector.load %arg5[%c2_590, %c10_591, %c0_592, %c0_593] : memref<3x27x8x4xf32, #tpu.memory_space<vmem>>, vector<1x1x8x4xf32>
    %628 = vector.shape_cast %627 : vector<1x1x8x4xf32> to vector<8x4xf32>
    %cst_594 = arith.constant dense<0.000000e+00> : vector<8x256xf32>
    %629 = tpu.matmul %628, %626, %cst_594 {dimension_numbers = #tpu.dot_dimension_numbers<[1], [0], [0], [1], [0, 0, 1, 1], [], []>} : vector<8x4xf32>, vector<4x256xf32>, vector<8x256xf32> -> vector<8x256xf32>
    %630 = arith.addf %623, %629 : vector<8x256xf32>
    %c0_595 = arith.constant 0 : index
    %631 = arith.index_cast %613 : i32 to index
    %c0_596 = arith.constant 0 : index
    %c24_597 = arith.constant 24 : index
    %632 = vector.load %arg2[%c0_595, %631, %c0_596, %c24_597] : memref<1x32x4x544xf32, #tpu.memory_space<vmem>>, vector<1x1x4x256xf32>
    %633 = vector.shape_cast %632 : vector<1x1x4x256xf32> to vector<4x256xf32>
    %c2_598 = arith.constant 2 : index
    %c11_599 = arith.constant 11 : index
    %c0_600 = arith.constant 0 : index
    %c0_601 = arith.constant 0 : index
    %634 = vector.load %arg5[%c2_598, %c11_599, %c0_600, %c0_601] : memref<3x27x8x4xf32, #tpu.memory_space<vmem>>, vector<1x1x8x4xf32>
    %635 = vector.shape_cast %634 : vector<1x1x8x4xf32> to vector<8x4xf32>
    %cst_602 = arith.constant dense<0.000000e+00> : vector<8x256xf32>
    %636 = tpu.matmul %635, %633, %cst_602 {dimension_numbers = #tpu.dot_dimension_numbers<[1], [0], [0], [1], [0, 0, 1, 1], [], []>} : vector<8x4xf32>, vector<4x256xf32>, vector<8x256xf32> -> vector<8x256xf32>
    %c8_603 = arith.constant 8 : index
    %c0_604 = arith.constant 0 : index
    %637 = vector.load %arg8[%c8_603, %c0_604] : memref<9x256xf32, #tpu.memory_space<vmem>>, vector<1x256xf32>
    %638 = vector.broadcast %637 : vector<1x256xf32> to vector<8x256xf32>
    %639 = arith.mulf %636, %638 : vector<8x256xf32>
    %640 = arith.addf %630, %639 : vector<8x256xf32>
    %c0_605 = arith.constant 0 : index
    %641 = arith.index_cast %613 : i32 to index
    %c0_606 = arith.constant 0 : index
    %c136_607 = arith.constant 136 : index
    %642 = vector.load %arg2[%c0_605, %641, %c0_606, %c136_607] : memref<1x32x4x544xf32, #tpu.memory_space<vmem>>, vector<1x1x4x256xf32>
    %643 = vector.shape_cast %642 : vector<1x1x4x256xf32> to vector<4x256xf32>
    %c2_608 = arith.constant 2 : index
    %c12_609 = arith.constant 12 : index
    %c0_610 = arith.constant 0 : index
    %c0_611 = arith.constant 0 : index
    %644 = vector.load %arg5[%c2_608, %c12_609, %c0_610, %c0_611] : memref<3x27x8x4xf32, #tpu.memory_space<vmem>>, vector<1x1x8x4xf32>
    %645 = vector.shape_cast %644 : vector<1x1x8x4xf32> to vector<8x4xf32>
    %cst_612 = arith.constant dense<0.000000e+00> : vector<8x256xf32>
    %646 = tpu.matmul %645, %643, %cst_612 {dimension_numbers = #tpu.dot_dimension_numbers<[1], [0], [0], [1], [0, 0, 1, 1], [], []>} : vector<8x4xf32>, vector<4x256xf32>, vector<8x256xf32> -> vector<8x256xf32>
    %c6_613 = arith.constant 6 : index
    %c0_614 = arith.constant 0 : index
    %647 = vector.load %arg8[%c6_613, %c0_614] : memref<9x256xf32, #tpu.memory_space<vmem>>, vector<1x256xf32>
    %648 = vector.broadcast %647 : vector<1x256xf32> to vector<8x256xf32>
    %649 = arith.mulf %646, %648 : vector<8x256xf32>
    %650 = arith.addf %640, %649 : vector<8x256xf32>
    %c0_615 = arith.constant 0 : index
    %651 = arith.index_cast %613 : i32 to index
    %c0_616 = arith.constant 0 : index
    %c144_617 = arith.constant 144 : index
    %652 = vector.load %arg2[%c0_615, %651, %c0_616, %c144_617] : memref<1x32x4x544xf32, #tpu.memory_space<vmem>>, vector<1x1x4x256xf32>
    %653 = vector.shape_cast %652 : vector<1x1x4x256xf32> to vector<4x256xf32>
    %c2_618 = arith.constant 2 : index
    %c13_619 = arith.constant 13 : index
    %c0_620 = arith.constant 0 : index
    %c0_621 = arith.constant 0 : index
    %654 = vector.load %arg5[%c2_618, %c13_619, %c0_620, %c0_621] : memref<3x27x8x4xf32, #tpu.memory_space<vmem>>, vector<1x1x8x4xf32>
    %655 = vector.shape_cast %654 : vector<1x1x8x4xf32> to vector<8x4xf32>
    %cst_622 = arith.constant dense<0.000000e+00> : vector<8x256xf32>
    %656 = tpu.matmul %655, %653, %cst_622 {dimension_numbers = #tpu.dot_dimension_numbers<[1], [0], [0], [1], [0, 0, 1, 1], [], []>} : vector<8x4xf32>, vector<4x256xf32>, vector<8x256xf32> -> vector<8x256xf32>
    %657 = arith.addf %650, %656 : vector<8x256xf32>
    %c0_623 = arith.constant 0 : index
    %658 = arith.index_cast %613 : i32 to index
    %c0_624 = arith.constant 0 : index
    %c152_625 = arith.constant 152 : index
    %659 = vector.load %arg2[%c0_623, %658, %c0_624, %c152_625] : memref<1x32x4x544xf32, #tpu.memory_space<vmem>>, vector<1x1x4x256xf32>
    %660 = vector.shape_cast %659 : vector<1x1x4x256xf32> to vector<4x256xf32>
    %c2_626 = arith.constant 2 : index
    %c14_627 = arith.constant 14 : index
    %c0_628 = arith.constant 0 : index
    %c0_629 = arith.constant 0 : index
    %661 = vector.load %arg5[%c2_626, %c14_627, %c0_628, %c0_629] : memref<3x27x8x4xf32, #tpu.memory_space<vmem>>, vector<1x1x8x4xf32>
    %662 = vector.shape_cast %661 : vector<1x1x8x4xf32> to vector<8x4xf32>
    %cst_630 = arith.constant dense<0.000000e+00> : vector<8x256xf32>
    %663 = tpu.matmul %662, %660, %cst_630 {dimension_numbers = #tpu.dot_dimension_numbers<[1], [0], [0], [1], [0, 0, 1, 1], [], []>} : vector<8x4xf32>, vector<4x256xf32>, vector<8x256xf32> -> vector<8x256xf32>
    %c8_631 = arith.constant 8 : index
    %c0_632 = arith.constant 0 : index
    %664 = vector.load %arg8[%c8_631, %c0_632] : memref<9x256xf32, #tpu.memory_space<vmem>>, vector<1x256xf32>
    %665 = vector.broadcast %664 : vector<1x256xf32> to vector<8x256xf32>
    %666 = arith.mulf %663, %665 : vector<8x256xf32>
    %667 = arith.addf %657, %666 : vector<8x256xf32>
    %c0_633 = arith.constant 0 : index
    %668 = arith.index_cast %613 : i32 to index
    %c0_634 = arith.constant 0 : index
    %c264_635 = arith.constant 264 : index
    %669 = vector.load %arg2[%c0_633, %668, %c0_634, %c264_635] : memref<1x32x4x544xf32, #tpu.memory_space<vmem>>, vector<1x1x4x256xf32>
    %670 = vector.shape_cast %669 : vector<1x1x4x256xf32> to vector<4x256xf32>
    %c2_636 = arith.constant 2 : index
    %c15_637 = arith.constant 15 : index
    %c0_638 = arith.constant 0 : index
    %c0_639 = arith.constant 0 : index
    %671 = vector.load %arg5[%c2_636, %c15_637, %c0_638, %c0_639] : memref<3x27x8x4xf32, #tpu.memory_space<vmem>>, vector<1x1x8x4xf32>
    %672 = vector.shape_cast %671 : vector<1x1x8x4xf32> to vector<8x4xf32>
    %cst_640 = arith.constant dense<0.000000e+00> : vector<8x256xf32>
    %673 = tpu.matmul %672, %670, %cst_640 {dimension_numbers = #tpu.dot_dimension_numbers<[1], [0], [0], [1], [0, 0, 1, 1], [], []>} : vector<8x4xf32>, vector<4x256xf32>, vector<8x256xf32> -> vector<8x256xf32>
    %c6_641 = arith.constant 6 : index
    %c0_642 = arith.constant 0 : index
    %674 = vector.load %arg8[%c6_641, %c0_642] : memref<9x256xf32, #tpu.memory_space<vmem>>, vector<1x256xf32>
    %675 = vector.broadcast %674 : vector<1x256xf32> to vector<8x256xf32>
    %676 = arith.mulf %673, %675 : vector<8x256xf32>
    %677 = arith.addf %667, %676 : vector<8x256xf32>
    %c0_643 = arith.constant 0 : index
    %678 = arith.index_cast %613 : i32 to index
    %c0_644 = arith.constant 0 : index
    %c272_645 = arith.constant 272 : index
    %679 = vector.load %arg2[%c0_643, %678, %c0_644, %c272_645] : memref<1x32x4x544xf32, #tpu.memory_space<vmem>>, vector<1x1x4x256xf32>
    %680 = vector.shape_cast %679 : vector<1x1x4x256xf32> to vector<4x256xf32>
    %c2_646 = arith.constant 2 : index
    %c16_647 = arith.constant 16 : index
    %c0_648 = arith.constant 0 : index
    %c0_649 = arith.constant 0 : index
    %681 = vector.load %arg5[%c2_646, %c16_647, %c0_648, %c0_649] : memref<3x27x8x4xf32, #tpu.memory_space<vmem>>, vector<1x1x8x4xf32>
    %682 = vector.shape_cast %681 : vector<1x1x8x4xf32> to vector<8x4xf32>
    %cst_650 = arith.constant dense<0.000000e+00> : vector<8x256xf32>
    %683 = tpu.matmul %682, %680, %cst_650 {dimension_numbers = #tpu.dot_dimension_numbers<[1], [0], [0], [1], [0, 0, 1, 1], [], []>} : vector<8x4xf32>, vector<4x256xf32>, vector<8x256xf32> -> vector<8x256xf32>
    %684 = arith.addf %677, %683 : vector<8x256xf32>
    %c0_651 = arith.constant 0 : index
    %685 = arith.index_cast %613 : i32 to index
    %c0_652 = arith.constant 0 : index
    %c280_653 = arith.constant 280 : index
    %686 = vector.load %arg2[%c0_651, %685, %c0_652, %c280_653] : memref<1x32x4x544xf32, #tpu.memory_space<vmem>>, vector<1x1x4x256xf32>
    %687 = vector.shape_cast %686 : vector<1x1x4x256xf32> to vector<4x256xf32>
    %c2_654 = arith.constant 2 : index
    %c17_655 = arith.constant 17 : index
    %c0_656 = arith.constant 0 : index
    %c0_657 = arith.constant 0 : index
    %688 = vector.load %arg5[%c2_654, %c17_655, %c0_656, %c0_657] : memref<3x27x8x4xf32, #tpu.memory_space<vmem>>, vector<1x1x8x4xf32>
    %689 = vector.shape_cast %688 : vector<1x1x8x4xf32> to vector<8x4xf32>
    %cst_658 = arith.constant dense<0.000000e+00> : vector<8x256xf32>
    %690 = tpu.matmul %689, %687, %cst_658 {dimension_numbers = #tpu.dot_dimension_numbers<[1], [0], [0], [1], [0, 0, 1, 1], [], []>} : vector<8x4xf32>, vector<4x256xf32>, vector<8x256xf32> -> vector<8x256xf32>
    %c8_659 = arith.constant 8 : index
    %c0_660 = arith.constant 0 : index
    %691 = vector.load %arg8[%c8_659, %c0_660] : memref<9x256xf32, #tpu.memory_space<vmem>>, vector<1x256xf32>
    %692 = vector.broadcast %691 : vector<1x256xf32> to vector<8x256xf32>
    %693 = arith.mulf %690, %692 : vector<8x256xf32>
    %694 = arith.addf %684, %693 : vector<8x256xf32>
    %c8_i32_661 = arith.constant 8 : i32
    %695 = arith.addi %c8_i32_661, %arg1 : i32
    %c8_i32_662 = arith.constant 8 : i32
    %696 = arith.addi %695, %c8_i32_662 : i32
    %c0_663 = arith.constant 0 : index
    %697 = arith.index_cast %696 : i32 to index
    %c0_664 = arith.constant 0 : index
    %c8_665 = arith.constant 8 : index
    %698 = vector.load %arg2[%c0_663, %697, %c0_664, %c8_665] : memref<1x32x4x544xf32, #tpu.memory_space<vmem>>, vector<1x1x4x256xf32>
    %699 = vector.shape_cast %698 : vector<1x1x4x256xf32> to vector<4x256xf32>
    %c2_666 = arith.constant 2 : index
    %c18_667 = arith.constant 18 : index
    %c0_668 = arith.constant 0 : index
    %c0_669 = arith.constant 0 : index
    %700 = vector.load %arg5[%c2_666, %c18_667, %c0_668, %c0_669] : memref<3x27x8x4xf32, #tpu.memory_space<vmem>>, vector<1x1x8x4xf32>
    %701 = vector.shape_cast %700 : vector<1x1x8x4xf32> to vector<8x4xf32>
    %cst_670 = arith.constant dense<0.000000e+00> : vector<8x256xf32>
    %702 = tpu.matmul %701, %699, %cst_670 {dimension_numbers = #tpu.dot_dimension_numbers<[1], [0], [0], [1], [0, 0, 1, 1], [], []>} : vector<8x4xf32>, vector<4x256xf32>, vector<8x256xf32> -> vector<8x256xf32>
    %c6_671 = arith.constant 6 : index
    %c0_672 = arith.constant 0 : index
    %703 = vector.load %arg8[%c6_671, %c0_672] : memref<9x256xf32, #tpu.memory_space<vmem>>, vector<1x256xf32>
    %704 = vector.broadcast %703 : vector<1x256xf32> to vector<8x256xf32>
    %705 = arith.mulf %702, %704 : vector<8x256xf32>
    %706 = arith.addf %694, %705 : vector<8x256xf32>
    %c0_673 = arith.constant 0 : index
    %707 = arith.index_cast %696 : i32 to index
    %c0_674 = arith.constant 0 : index
    %c16_675 = arith.constant 16 : index
    %708 = vector.load %arg2[%c0_673, %707, %c0_674, %c16_675] : memref<1x32x4x544xf32, #tpu.memory_space<vmem>>, vector<1x1x4x256xf32>
    %709 = vector.shape_cast %708 : vector<1x1x4x256xf32> to vector<4x256xf32>
    %c2_676 = arith.constant 2 : index
    %c19_677 = arith.constant 19 : index
    %c0_678 = arith.constant 0 : index
    %c0_679 = arith.constant 0 : index
    %710 = vector.load %arg5[%c2_676, %c19_677, %c0_678, %c0_679] : memref<3x27x8x4xf32, #tpu.memory_space<vmem>>, vector<1x1x8x4xf32>
    %711 = vector.shape_cast %710 : vector<1x1x8x4xf32> to vector<8x4xf32>
    %cst_680 = arith.constant dense<0.000000e+00> : vector<8x256xf32>
    %712 = tpu.matmul %711, %709, %cst_680 {dimension_numbers = #tpu.dot_dimension_numbers<[1], [0], [0], [1], [0, 0, 1, 1], [], []>} : vector<8x4xf32>, vector<4x256xf32>, vector<8x256xf32> -> vector<8x256xf32>
    %713 = arith.addf %706, %712 : vector<8x256xf32>
    %c0_681 = arith.constant 0 : index
    %714 = arith.index_cast %696 : i32 to index
    %c0_682 = arith.constant 0 : index
    %c24_683 = arith.constant 24 : index
    %715 = vector.load %arg2[%c0_681, %714, %c0_682, %c24_683] : memref<1x32x4x544xf32, #tpu.memory_space<vmem>>, vector<1x1x4x256xf32>
    %716 = vector.shape_cast %715 : vector<1x1x4x256xf32> to vector<4x256xf32>
    %c2_684 = arith.constant 2 : index
    %c20_685 = arith.constant 20 : index
    %c0_686 = arith.constant 0 : index
    %c0_687 = arith.constant 0 : index
    %717 = vector.load %arg5[%c2_684, %c20_685, %c0_686, %c0_687] : memref<3x27x8x4xf32, #tpu.memory_space<vmem>>, vector<1x1x8x4xf32>
    %718 = vector.shape_cast %717 : vector<1x1x8x4xf32> to vector<8x4xf32>
    %cst_688 = arith.constant dense<0.000000e+00> : vector<8x256xf32>
    %719 = tpu.matmul %718, %716, %cst_688 {dimension_numbers = #tpu.dot_dimension_numbers<[1], [0], [0], [1], [0, 0, 1, 1], [], []>} : vector<8x4xf32>, vector<4x256xf32>, vector<8x256xf32> -> vector<8x256xf32>
    %c8_689 = arith.constant 8 : index
    %c0_690 = arith.constant 0 : index
    %720 = vector.load %arg8[%c8_689, %c0_690] : memref<9x256xf32, #tpu.memory_space<vmem>>, vector<1x256xf32>
    %721 = vector.broadcast %720 : vector<1x256xf32> to vector<8x256xf32>
    %722 = arith.mulf %719, %721 : vector<8x256xf32>
    %723 = arith.addf %713, %722 : vector<8x256xf32>
    %c0_691 = arith.constant 0 : index
    %724 = arith.index_cast %696 : i32 to index
    %c0_692 = arith.constant 0 : index
    %c136_693 = arith.constant 136 : index
    %725 = vector.load %arg2[%c0_691, %724, %c0_692, %c136_693] : memref<1x32x4x544xf32, #tpu.memory_space<vmem>>, vector<1x1x4x256xf32>
    %726 = vector.shape_cast %725 : vector<1x1x4x256xf32> to vector<4x256xf32>
    %c2_694 = arith.constant 2 : index
    %c21_695 = arith.constant 21 : index
    %c0_696 = arith.constant 0 : index
    %c0_697 = arith.constant 0 : index
    %727 = vector.load %arg5[%c2_694, %c21_695, %c0_696, %c0_697] : memref<3x27x8x4xf32, #tpu.memory_space<vmem>>, vector<1x1x8x4xf32>
    %728 = vector.shape_cast %727 : vector<1x1x8x4xf32> to vector<8x4xf32>
    %cst_698 = arith.constant dense<0.000000e+00> : vector<8x256xf32>
    %729 = tpu.matmul %728, %726, %cst_698 {dimension_numbers = #tpu.dot_dimension_numbers<[1], [0], [0], [1], [0, 0, 1, 1], [], []>} : vector<8x4xf32>, vector<4x256xf32>, vector<8x256xf32> -> vector<8x256xf32>
    %c6_699 = arith.constant 6 : index
    %c0_700 = arith.constant 0 : index
    %730 = vector.load %arg8[%c6_699, %c0_700] : memref<9x256xf32, #tpu.memory_space<vmem>>, vector<1x256xf32>
    %731 = vector.broadcast %730 : vector<1x256xf32> to vector<8x256xf32>
    %732 = arith.mulf %729, %731 : vector<8x256xf32>
    %733 = arith.addf %723, %732 : vector<8x256xf32>
    %c0_701 = arith.constant 0 : index
    %734 = arith.index_cast %696 : i32 to index
    %c0_702 = arith.constant 0 : index
    %c144_703 = arith.constant 144 : index
    %735 = vector.load %arg2[%c0_701, %734, %c0_702, %c144_703] : memref<1x32x4x544xf32, #tpu.memory_space<vmem>>, vector<1x1x4x256xf32>
    %736 = vector.shape_cast %735 : vector<1x1x4x256xf32> to vector<4x256xf32>
    %c2_704 = arith.constant 2 : index
    %c22_705 = arith.constant 22 : index
    %c0_706 = arith.constant 0 : index
    %c0_707 = arith.constant 0 : index
    %737 = vector.load %arg5[%c2_704, %c22_705, %c0_706, %c0_707] : memref<3x27x8x4xf32, #tpu.memory_space<vmem>>, vector<1x1x8x4xf32>
    %738 = vector.shape_cast %737 : vector<1x1x8x4xf32> to vector<8x4xf32>
    %cst_708 = arith.constant dense<0.000000e+00> : vector<8x256xf32>
    %739 = tpu.matmul %738, %736, %cst_708 {dimension_numbers = #tpu.dot_dimension_numbers<[1], [0], [0], [1], [0, 0, 1, 1], [], []>} : vector<8x4xf32>, vector<4x256xf32>, vector<8x256xf32> -> vector<8x256xf32>
    %740 = arith.addf %733, %739 : vector<8x256xf32>
    %c0_709 = arith.constant 0 : index
    %741 = arith.index_cast %696 : i32 to index
    %c0_710 = arith.constant 0 : index
    %c152_711 = arith.constant 152 : index
    %742 = vector.load %arg2[%c0_709, %741, %c0_710, %c152_711] : memref<1x32x4x544xf32, #tpu.memory_space<vmem>>, vector<1x1x4x256xf32>
    %743 = vector.shape_cast %742 : vector<1x1x4x256xf32> to vector<4x256xf32>
    %c2_712 = arith.constant 2 : index
    %c23_713 = arith.constant 23 : index
    %c0_714 = arith.constant 0 : index
    %c0_715 = arith.constant 0 : index
    %744 = vector.load %arg5[%c2_712, %c23_713, %c0_714, %c0_715] : memref<3x27x8x4xf32, #tpu.memory_space<vmem>>, vector<1x1x8x4xf32>
    %745 = vector.shape_cast %744 : vector<1x1x8x4xf32> to vector<8x4xf32>
    %cst_716 = arith.constant dense<0.000000e+00> : vector<8x256xf32>
    %746 = tpu.matmul %745, %743, %cst_716 {dimension_numbers = #tpu.dot_dimension_numbers<[1], [0], [0], [1], [0, 0, 1, 1], [], []>} : vector<8x4xf32>, vector<4x256xf32>, vector<8x256xf32> -> vector<8x256xf32>
    %c8_717 = arith.constant 8 : index
    %c0_718 = arith.constant 0 : index
    %747 = vector.load %arg8[%c8_717, %c0_718] : memref<9x256xf32, #tpu.memory_space<vmem>>, vector<1x256xf32>
    %748 = vector.broadcast %747 : vector<1x256xf32> to vector<8x256xf32>
    %749 = arith.mulf %746, %748 : vector<8x256xf32>
    %750 = arith.addf %740, %749 : vector<8x256xf32>
    %c0_719 = arith.constant 0 : index
    %751 = arith.index_cast %696 : i32 to index
    %c0_720 = arith.constant 0 : index
    %c264_721 = arith.constant 264 : index
    %752 = vector.load %arg2[%c0_719, %751, %c0_720, %c264_721] : memref<1x32x4x544xf32, #tpu.memory_space<vmem>>, vector<1x1x4x256xf32>
    %753 = vector.shape_cast %752 : vector<1x1x4x256xf32> to vector<4x256xf32>
    %c2_722 = arith.constant 2 : index
    %c24_723 = arith.constant 24 : index
    %c0_724 = arith.constant 0 : index
    %c0_725 = arith.constant 0 : index
    %754 = vector.load %arg5[%c2_722, %c24_723, %c0_724, %c0_725] : memref<3x27x8x4xf32, #tpu.memory_space<vmem>>, vector<1x1x8x4xf32>
    %755 = vector.shape_cast %754 : vector<1x1x8x4xf32> to vector<8x4xf32>
    %cst_726 = arith.constant dense<0.000000e+00> : vector<8x256xf32>
    %756 = tpu.matmul %755, %753, %cst_726 {dimension_numbers = #tpu.dot_dimension_numbers<[1], [0], [0], [1], [0, 0, 1, 1], [], []>} : vector<8x4xf32>, vector<4x256xf32>, vector<8x256xf32> -> vector<8x256xf32>
    %c6_727 = arith.constant 6 : index
    %c0_728 = arith.constant 0 : index
    %757 = vector.load %arg8[%c6_727, %c0_728] : memref<9x256xf32, #tpu.memory_space<vmem>>, vector<1x256xf32>
    %758 = vector.broadcast %757 : vector<1x256xf32> to vector<8x256xf32>
    %759 = arith.mulf %756, %758 : vector<8x256xf32>
    %760 = arith.addf %750, %759 : vector<8x256xf32>
    %c0_729 = arith.constant 0 : index
    %761 = arith.index_cast %696 : i32 to index
    %c0_730 = arith.constant 0 : index
    %c272_731 = arith.constant 272 : index
    %762 = vector.load %arg2[%c0_729, %761, %c0_730, %c272_731] : memref<1x32x4x544xf32, #tpu.memory_space<vmem>>, vector<1x1x4x256xf32>
    %763 = vector.shape_cast %762 : vector<1x1x4x256xf32> to vector<4x256xf32>
    %c2_732 = arith.constant 2 : index
    %c25_733 = arith.constant 25 : index
    %c0_734 = arith.constant 0 : index
    %c0_735 = arith.constant 0 : index
    %764 = vector.load %arg5[%c2_732, %c25_733, %c0_734, %c0_735] : memref<3x27x8x4xf32, #tpu.memory_space<vmem>>, vector<1x1x8x4xf32>
    %765 = vector.shape_cast %764 : vector<1x1x8x4xf32> to vector<8x4xf32>
    %cst_736 = arith.constant dense<0.000000e+00> : vector<8x256xf32>
    %766 = tpu.matmul %765, %763, %cst_736 {dimension_numbers = #tpu.dot_dimension_numbers<[1], [0], [0], [1], [0, 0, 1, 1], [], []>} : vector<8x4xf32>, vector<4x256xf32>, vector<8x256xf32> -> vector<8x256xf32>
    %767 = arith.addf %760, %766 : vector<8x256xf32>
    %c0_737 = arith.constant 0 : index
    %768 = arith.index_cast %696 : i32 to index
    %c0_738 = arith.constant 0 : index
    %c280_739 = arith.constant 280 : index
    %769 = vector.load %arg2[%c0_737, %768, %c0_738, %c280_739] : memref<1x32x4x544xf32, #tpu.memory_space<vmem>>, vector<1x1x4x256xf32>
    %770 = vector.shape_cast %769 : vector<1x1x4x256xf32> to vector<4x256xf32>
    %c2_740 = arith.constant 2 : index
    %c26_741 = arith.constant 26 : index
    %c0_742 = arith.constant 0 : index
    %c0_743 = arith.constant 0 : index
    %771 = vector.load %arg5[%c2_740, %c26_741, %c0_742, %c0_743] : memref<3x27x8x4xf32, #tpu.memory_space<vmem>>, vector<1x1x8x4xf32>
    %772 = vector.shape_cast %771 : vector<1x1x8x4xf32> to vector<8x4xf32>
    %cst_744 = arith.constant dense<0.000000e+00> : vector<8x256xf32>
    %773 = tpu.matmul %772, %770, %cst_744 {dimension_numbers = #tpu.dot_dimension_numbers<[1], [0], [0], [1], [0, 0, 1, 1], [], []>} : vector<8x4xf32>, vector<4x256xf32>, vector<8x256xf32> -> vector<8x256xf32>
    %c8_745 = arith.constant 8 : index
    %c0_746 = arith.constant 0 : index
    %774 = vector.load %arg8[%c8_745, %c0_746] : memref<9x256xf32, #tpu.memory_space<vmem>>, vector<1x256xf32>
    %775 = vector.broadcast %774 : vector<1x256xf32> to vector<8x256xf32>
    %776 = arith.mulf %773, %775 : vector<8x256xf32>
    %777 = arith.addf %767, %776 : vector<8x256xf32>
    %c2_747 = arith.constant 2 : index
    %c0_748 = arith.constant 0 : index
    %c0_749 = arith.constant 0 : index
    %778 = vector.load %arg6[%c2_747, %c0_748, %c0_749] : memref<3x8x1xf32, #tpu.memory_space<vmem>>, vector<1x8x1xf32>
    %779 = vector.shape_cast %778 : vector<1x8x1xf32> to vector<8x1xf32>
    %780 = vector.broadcast %779 : vector<8x1xf32> to vector<8x256xf32>
    %781 = arith.addf %777, %780 : vector<8x256xf32>
    %cst_750 = arith.constant 0.000000e+00 : f32
    %782 = vector.broadcast %cst_750 : f32 to vector<8x256xf32>
    %783 = arith.maximumf %781, %782 : vector<8x256xf32>
    %c3_751 = arith.constant 3 : index
    %c0_752 = arith.constant 0 : index
    %c0_753 = arith.constant 0 : index
    %784 = vector.load %arg7[%c3_751, %c0_752, %c0_753] : memref<4x8x8xf32, #tpu.memory_space<vmem>>, vector<1x8x8xf32>
    %785 = vector.shape_cast %784 : vector<1x8x8xf32> to vector<8x8xf32>
    %cst_754 = arith.constant dense<0.000000e+00> : vector<8x256xf32>
    %786 = tpu.matmul %785, %783, %cst_754 {dimension_numbers = #tpu.dot_dimension_numbers<[1], [0], [0], [1], [0, 0, 1, 1], [], []>} : vector<8x8xf32>, vector<8x256xf32>, vector<8x256xf32> -> vector<8x256xf32>
    %787 = arith.addf %529, %786 : vector<8x256xf32>
    %c0_755 = arith.constant 0 : index
    %c0_756 = arith.constant 0 : index
    %c0_757 = arith.constant 0 : index
    %788 = vector.load %arg9[%c0_755, %c0_756, %c0_757] : memref<1x8x1xf32, #tpu.memory_space<vmem>>, vector<1x8x1xf32>
    %789 = vector.shape_cast %788 : vector<1x8x1xf32> to vector<8x1xf32>
    %790 = vector.broadcast %789 : vector<8x1xf32> to vector<8x256xf32>
    %791 = arith.addf %787, %790 : vector<8x256xf32>
    %cst_758 = arith.constant 0.000000e+00 : f32
    %792 = vector.broadcast %cst_758 : f32 to vector<8x256xf32>
    %793 = arith.maximumf %791, %792 : vector<8x256xf32>
    %c0_759 = arith.constant 0 : index
    %c0_760 = arith.constant 0 : index
    %c0_761 = arith.constant 0 : index
    %c0_762 = arith.constant 0 : index
    %794 = vector.load %arg10[%c0_759, %c0_760, %c0_761, %c0_762] : memref<1x1x8x256xf32, #tpu.memory_space<vmem>>, vector<1x1x8x256xf32>
    %795 = vector.shape_cast %794 : vector<1x1x8x256xf32> to vector<8x256xf32>
    %796 = vector.shape_cast %793 : vector<8x256xf32> to vector<1x1x8x256xf32>
    tpu.vector_store %arg10[%c0_759, %c0_760, %c0_761, %c0_762], %796 {strides = array<i32>} : memref<1x1x8x256xf32, #tpu.memory_space<vmem>>, vector<1x1x8x256xf32>,
    return
  }
  func.func @transform_0(%arg0: i32, %arg1: i32) -> (i32, i32, i32, i32) {
    %c0_i32 = arith.constant 0 : i32
    %c0_i32_0 = arith.constant 0 : i32
    %c0_i32_1 = arith.constant 0 : i32
    %c0_i32_2 = arith.constant 0 : i32
    return %arg0, %c0_i32, %c0_i32_0, %c0_i32_1 : i32, i32, i32, i32
  }
  func.func @transform_1(%arg0: i32, %arg1: i32) -> (i32, i32) {
    %c0_i32 = arith.constant 0 : i32
    %c0_i32_0 = arith.constant 0 : i32
    %c0_i32_1 = arith.constant 0 : i32
    return %c0_i32, %c0_i32_0 : i32, i32
  }
  func.func @transform_2(%arg0: i32, %arg1: i32) -> (i32, i32) {
    %c0_i32 = arith.constant 0 : i32
    %c0_i32_0 = arith.constant 0 : i32
    %c0_i32_1 = arith.constant 0 : i32
    return %c0_i32, %c0_i32_0 : i32, i32
  }
  func.func @transform_3(%arg0: i32, %arg1: i32) -> (i32, i32, i32, i32) {
    %c0_i32 = arith.constant 0 : i32
    %c0_i32_0 = arith.constant 0 : i32
    %c0_i32_1 = arith.constant 0 : i32
    %c0_i32_2 = arith.constant 0 : i32
    %c0_i32_3 = arith.constant 0 : i32
    return %c0_i32, %c0_i32_0, %c0_i32_1, %c0_i32_2 : i32, i32, i32, i32
  }
  func.func @transform_4(%arg0: i32, %arg1: i32) -> (i32, i32, i32) {
    %c0_i32 = arith.constant 0 : i32
    %c0_i32_0 = arith.constant 0 : i32
    %c0_i32_1 = arith.constant 0 : i32
    %c0_i32_2 = arith.constant 0 : i32
    return %c0_i32, %c0_i32_0, %c0_i32_1 : i32, i32, i32
  }
  func.func @transform_5(%arg0: i32, %arg1: i32) -> (i32, i32, i32) {
    %c0_i32 = arith.constant 0 : i32
    %c0_i32_0 = arith.constant 0 : i32
    %c0_i32_1 = arith.constant 0 : i32
    %c0_i32_2 = arith.constant 0 : i32
    return %c0_i32, %c0_i32_0, %c0_i32_1 : i32, i32, i32
  }
  func.func @transform_6(%arg0: i32, %arg1: i32) -> (i32, i32) {
    %c0_i32 = arith.constant 0 : i32
    %c0_i32_0 = arith.constant 0 : i32
    %c0_i32_1 = arith.constant 0 : i32
    return %c0_i32, %c0_i32_0 : i32, i32
  }
  func.func @transform_7(%arg0: i32, %arg1: i32) -> (i32, i32, i32) {
    %c0_i32 = arith.constant 0 : i32
    %c0_i32_0 = arith.constant 0 : i32
    %c0_i32_1 = arith.constant 0 : i32
    return %arg0, %c0_i32, %c0_i32_0 : i32, i32, i32
  }
  func.func @transform_8(%arg0: i32, %arg1: i32) -> (i32, i32, i32, i32) {
    %c0_i32 = arith.constant 0 : i32
    %c0_i32_0 = arith.constant 0 : i32
    %c0_i32_1 = arith.constant 0 : i32
    return %arg0, %arg1, %c0_i32, %c0_i32_0 : i32, i32, i32, i32
  }
}

</mosaic_0001>

<llo_original>
// kernel: aspp_forward_pallas.1
$region0: #{aspp_forward_pallas.1}
  #allocation0 [shape = 'u32[]', space=smem, size = 0x4, offset = 0x4, fixed_abs, tag = 'smem constant byte address 0x4 - core index']
  #allocation1 [shape = 'u32[144,128]{1,0:T(1,128)}', space=vmem, size = 0x12000, scoped, tag = 'internal scratch']
  %s0 = inlined_call_operand.vmem [shape: f32[2,32,4,544], index: 0, kind: input, shape index: {}]
  %s1 = inlined_call_operand.vmem [shape: f32[8,4], index: 1, kind: input, shape index: {}]
  %s2 = inlined_call_operand.vmem [shape: f32[8,1], index: 2, kind: input, shape index: {}]
  %s3 = inlined_call_operand.vmem [shape: f32[3,27,8,4], index: 3, kind: input, shape index: {}]
  %s4 = inlined_call_operand.vmem [shape: f32[3,8,1], index: 4, kind: input, shape index: {}]
  %s5 = inlined_call_operand.vmem [shape: f32[4,8,8], index: 5, kind: input, shape index: {}]
  %s6 = inlined_call_operand.vmem [shape: f32[9,256], index: 6, kind: input, shape index: {}]
  %s7 = inlined_call_operand.vmem [shape: f32[2,8,1], index: 7, kind: input, shape index: {}]
  %s8 = inlined_call_operand.vmem [shape: f32[2,16,8,256], index: 8, kind: output, shape index: {}]
  %s9 = sld [smem:[#allocation0]]
  $region65: #{aspp_forward_pallas.1} parent=0
    _
  %s11 = ssub.s32 1, %s9
  %s12 = scalar_select 0, %s11, %s9
  loop: start=0, step=1, limit=34
  $region2: #{aspp_forward_pallas.1} parent=0 // loop_pre_header
    _
  $region3: #{aspp_forward_pallas.1} parent=0 // loop_header
    %s14 = sphi 0, %s18
    %p15 = scmp.ge.s32.totalorder %s14, 34
    %s21 = sphi 0, %s33
    %s22 = sphi 0, %s29
    %s23 = sphi 0, %s21
    %s24 = sphi 0, %s22
    %s25 = sphi 0, %s23
    %s26 = sphi 0, %s24
    %s36 = sphi 0, %s38
    %s39 = sphi 0, %s36
    %s40 = sphi 0, %s39
    %s56 = sphi 0, %s40
    %s60 = sphi 0, %s60
    %s62 = sphi 0, %s60
    %s63 = sphi 0, %s62
    %s77 = sphi 0, %s63
    %s81 = sphi 0, %s81
    %s83 = sphi 0, %s81
    %s84 = sphi 0, %s83
    %s98 = sphi 0, %s84
    %s102 = sphi 0, %s102
    %s104 = sphi 0, %s102
    %s105 = sphi 0, %s104
    %s119 = sphi 0, %s105
    %s123 = sphi 0, %s123
    %s125 = sphi 0, %s123
    %s126 = sphi 0, %s125
    %s140 = sphi 0, %s126
    %s144 = sphi 0, %s144
    %s146 = sphi 0, %s144
    %s147 = sphi 0, %s146
    %s161 = sphi 0, %s147
    %s165 = sphi 0, %s165
    %s167 = sphi 0, %s165
    %s168 = sphi 0, %s167
    %s182 = sphi 0, %s168
    %s188 = sphi 0, %s190
    %s191 = sphi 0, %s188
    %s192 = sphi 0, %s191
    %s208 = sphi 0, %s192
    %s216 = sphi 0, %s218
    %s219 = sphi 0, %s216
    %s220 = sphi 0, %s219
    %s236 = sphi 0, %s220
  $region4: #{aspp_forward_pallas.1} parent=0 // loop_header_branch
    %17 = sbr.rel (%p15) target = $region8
  $region5: #{aspp_forward_pallas.1} parent=0 // loop_body
    %s19 = ssub.s32 %s14, 1
    %s20 = ssub.s32 %s14, 2
    %s27 = sadd.s32 1, %s22
    %p28 = scmp.ge.s32.totalorder %s27, 16
    %s29 = scalar_select %p28, 0, %s27
    %s30 = sadd.s32 1, %s21
    %s31 = scalar_select %p28, %s30, %s21
    %p32 = scmp.ge.s32.totalorder %s31, 2
    %s33 = scalar_select %p32, 0, %s31
    %s34 = ssub.s32 %s21, %s33
    %p35 = scmp.eq.s32.totalorder %s34, 0
    %s37 = sadd.s32 %s36, 1
    %s38 = scalar_select %p35, %s36, %s37
    %p41 = pneg %p35
    %p42 = scmp.eq.s32.totalorder %s14, 31
    %p43 = por %p41, %p42
    %p44 = scmp.ne.s32.totalorder %s36, %s39
    %p45 = scmp.eq.s32.totalorder %s14, 0
    %p46 = por %p44, %p45
    %p47 = scmp.ne.s32.totalorder %s36, %s39
    %p48 = scmp.eq.s32.totalorder %s19, 31
    %p49 = por %p47, %p48
    %p50 = scmp.ne.s32.totalorder %s39, %s40
    %p51 = scmp.eq.s32.totalorder %s19, 0
    %p52 = por %p50, %p51
    %p53 = scmp.ne.s32.totalorder %s39, %s40
    %p54 = scmp.eq.s32.totalorder %s20, 31
    %p55 = por %p53, %p54
    %p57 = scmp.ne.s32.totalorder %s40, %s56
    %p58 = scmp.eq.s32.totalorder %s20, 0
    %p59 = por %p57, %p58
    %s61 = sadd.s32 %s60, 1
    %p64 = scmp.eq.s32.totalorder %s14, 31
    %p65 = scmp.ne.s32.totalorder %s60, %s62
    %p66 = scmp.eq.s32.totalorder %s14, 0
    %p67 = por %p65, %p66
    %p68 = scmp.ne.s32.totalorder %s60, %s62
    %p69 = scmp.eq.s32.totalorder %s19, 31
    %p70 = por %p68, %p69
    %p71 = scmp.ne.s32.totalorder %s62, %s63
    %p72 = scmp.eq.s32.totalorder %s19, 0
    %p73 = por %p71, %p72
    %p74 = scmp.ne.s32.totalorder %s62, %s63
    %p75 = scmp.eq.s32.totalorder %s20, 31
    %p76 = por %p74, %p75
    %p78 = scmp.ne.s32.totalorder %s63, %s77
    %p79 = scmp.eq.s32.totalorder %s20, 0
    %p80 = por %p78, %p79
    %s82 = sadd.s32 %s81, 1
    %p85 = scmp.eq.s32.totalorder %s14, 31
    %p86 = scmp.ne.s32.totalorder %s81, %s83
    %p87 = scmp.eq.s32.totalorder %s14, 0
    %p88 = por %p86, %p87
    %p89 = scmp.ne.s32.totalorder %s81, %s83
    %p90 = scmp.eq.s32.totalorder %s19, 31
    %p91 = por %p89, %p90
    %p92 = scmp.ne.s32.totalorder %s83, %s84
    %p93 = scmp.eq.s32.totalorder %s19, 0
    %p94 = por %p92, %p93
    %p95 = scmp.ne.s32.totalorder %s83, %s84
    %p96 = scmp.eq.s32.totalorder %s20, 31
    %p97 = por %p95, %p96
    %p99 = scmp.ne.s32.totalorder %s84, %s98
    %p100 = scmp.eq.s32.totalorder %s20, 0
    %p101 = por %p99, %p100
    %s103 = sadd.s32 %s102, 1
    %p106 = scmp.eq.s32.totalorder %s14, 31
    %p107 = scmp.ne.s32.totalorder %s102, %s104
    %p108 = scmp.eq.s32.totalorder %s14, 0
    %p109 = por %p107, %p108
    %p110 = scmp.ne.s32.totalorder %s102, %s104
    %p111 = scmp.eq.s32.totalorder %s19, 31
    %p112 = por %p110, %p111
    %p113 = scmp.ne.s32.totalorder %s104, %s105
    %p114 = scmp.eq.s32.totalorder %s19, 0
    %p115 = por %p113, %p114
    %p116 = scmp.ne.s32.totalorder %s104, %s105
    %p117 = scmp.eq.s32.totalorder %s20, 31
    %p118 = por %p116, %p117
    %p120 = scmp.ne.s32.totalorder %s105, %s119
    %p121 = scmp.eq.s32.totalorder %s20, 0
    %p122 = por %p120, %p121
    %s124 = sadd.s32 %s123, 1
    %p127 = scmp.eq.s32.totalorder %s14, 31
    %p128 = scmp.ne.s32.totalorder %s123, %s125
    %p129 = scmp.eq.s32.totalorder %s14, 0
    %p130 = por %p128, %p129
    %p131 = scmp.ne.s32.totalorder %s123, %s125
    %p132 = scmp.eq.s32.totalorder %s19, 31
    %p133 = por %p131, %p132
    %p134 = scmp.ne.s32.totalorder %s125, %s126
    %p135 = scmp.eq.s32.totalorder %s19, 0
    %p136 = por %p134, %p135
    %p137 = scmp.ne.s32.totalorder %s125, %s126
    %p138 = scmp.eq.s32.totalorder %s20, 31
    %p139 = por %p137, %p138
    %p141 = scmp.ne.s32.totalorder %s126, %s140
    %p142 = scmp.eq.s32.totalorder %s20, 0
    %p143 = por %p141, %p142
    %s145 = sadd.s32 %s144, 1
    %p148 = scmp.eq.s32.totalorder %s14, 31
    %p149 = scmp.ne.s32.totalorder %s144, %s146
    %p150 = scmp.eq.s32.totalorder %s14, 0
    %p151 = por %p149, %p150
    %p152 = scmp.ne.s32.totalorder %s144, %s146
    %p153 = scmp.eq.s32.totalorder %s19, 31
    %p154 = por %p152, %p153
    %p155 = scmp.ne.s32.totalorder %s146, %s147
    %p156 = scmp.eq.s32.totalorder %s19, 0
    %p157 = por %p155, %p156
    %p158 = scmp.ne.s32.totalorder %s146, %s147
    %p159 = scmp.eq.s32.totalorder %s20, 31
    %p160 = por %p158, %p159
    %p162 = scmp.ne.s32.totalorder %s147, %s161
    %p163 = scmp.eq.s32.totalorder %s20, 0
    %p164 = por %p162, %p163
    %s166 = sadd.s32 %s165, 1
    %p169 = scmp.eq.s32.totalorder %s14, 31
    %p170 = scmp.ne.s32.totalorder %s165, %s167
    %p171 = scmp.eq.s32.totalorder %s14, 0
    %p172 = por %p170, %p171
    %p173 = scmp.ne.s32.totalorder %s165, %s167
    %p174 = scmp.eq.s32.totalorder %s19, 31
    %p175 = por %p173, %p174
    %p176 = scmp.ne.s32.totalorder %s167, %s168
    %p177 = scmp.eq.s32.totalorder %s19, 0
    %p178 = por %p176, %p177
    %p179 = scmp.ne.s32.totalorder %s167, %s168
    %p180 = scmp.eq.s32.totalorder %s20, 31
    %p181 = por %p179, %p180
    %p183 = scmp.ne.s32.totalorder %s168, %s182
    %p184 = scmp.eq.s32.totalorder %s20, 0
    %p185 = por %p183, %p184
    %s186 = ssub.s32 %s21, %s33
    %p187 = scmp.eq.s32.totalorder %s186, 0
    %s189 = sadd.s32 %s188, 1
    %s190 = scalar_select %p187, %s188, %s189
    %p193 = pneg %p187
    %p194 = scmp.eq.s32.totalorder %s14, 31
    %p195 = por %p193, %p194
    %p196 = scmp.ne.s32.totalorder %s188, %s191
    %p197 = scmp.eq.s32.totalorder %s14, 0
    %p198 = por %p196, %p197
    %p199 = scmp.ne.s32.totalorder %s188, %s191
    %p200 = scmp.eq.s32.totalorder %s19, 31
    %p201 = por %p199, %p200
    %p202 = scmp.ne.s32.totalorder %s191, %s192
    %p203 = scmp.eq.s32.totalorder %s19, 0
    %p204 = por %p202, %p203
    %p205 = scmp.ne.s32.totalorder %s191, %s192
    %p206 = scmp.eq.s32.totalorder %s20, 31
    %p207 = por %p205, %p206
    %p209 = scmp.ne.s32.totalorder %s192, %s208
    %p210 = scmp.eq.s32.totalorder %s20, 0
    %p211 = por %p209, %p210
    %s212 = ssub.s32 %s21, %s33
    %s213 = ssub.s32 %s22, %s29
    %s214 = sor.u32 %s212, %s213
    %p215 = scmp.eq.s32.totalorder %s214, 0
    %s217 = sadd.s32 %s216, 1
    %s218 = scalar_select %p215, %s216, %s217
    %p221 = pneg %p215
    %p222 = scmp.eq.s32.totalorder %s14, 31
    %p223 = por %p221, %p222
    %p224 = scmp.ne.s32.totalorder %s216, %s219
    %p225 = scmp.eq.s32.totalorder %s14, 0
    %p226 = por %p224, %p225
    %p227 = scmp.ne.s32.totalorder %s216, %s219
    %p228 = scmp.eq.s32.totalorder %s19, 31
    %p229 = por %p227, %p228
    %p230 = scmp.ne.s32.totalorder %s219, %s220
    %p231 = scmp.eq.s32.totalorder %s19, 0
    %p232 = por %p230, %p231
    %p233 = scmp.ne.s32.totalorder %s219, %s220
    %p234 = scmp.eq.s32.totalorder %s20, 31
    %p235 = por %p233, %p234
    %p237 = scmp.ne.s32.totalorder %s220, %s236
    %p238 = scmp.eq.s32.totalorder %s20, 0
    %p239 = por %p237, %p238
    %p240 = scmp.le.s32.totalorder 1, %s14
    %p241 = scmp.lt.s32.totalorder %s14, 33
    %p242 = pnand %p240, %p241
    %p243 = pneg %p242
    // Predicated region
    $region9: #{aspp_forward_pallas.1} parent=5 // pred_check
      _
    $region10: #{aspp_forward_pallas.1} parent=5 // pred_check_branch
      %245 = sbr.rel (%p242) target = $region12
    $region11: #{aspp_forward_pallas.1} parent=5 // pred_region
      %s246 = ssub.s32 %s14, 1
      // Predicated region
      $region13: #{aspp_forward_pallas.1} parent=11 // pred_check
        %p247 = pneg %p73
      $region14: #{aspp_forward_pallas.1} parent=11 // pred_check_branch
        %249 = sbr.rel (%p247) target = $region16
      $region15: #{aspp_forward_pallas.1} parent=11 // pred_region
        _
      $region16: #{aspp_forward_pallas.1} parent=11 // pred_fallthru
        _
      // Predicated region
      $region17: #{aspp_forward_pallas.1} parent=11 // pred_check
        %p250 = pneg %p94
      $region18: #{aspp_forward_pallas.1} parent=11 // pred_check_branch
        %252 = sbr.rel (%p250) target = $region20
      $region19: #{aspp_forward_pallas.1} parent=11 // pred_region
        _
      $region20: #{aspp_forward_pallas.1} parent=11 // pred_fallthru
        _
      // Predicated region
      $region21: #{aspp_forward_pallas.1} parent=11 // pred_check
        %p253 = pneg %p115
      $region22: #{aspp_forward_pallas.1} parent=11 // pred_check_branch
        %255 = sbr.rel (%p253) target = $region24
      $region23: #{aspp_forward_pallas.1} parent=11 // pred_region
        _
      $region24: #{aspp_forward_pallas.1} parent=11 // pred_fallthru
        _
      // Predicated region
      $region25: #{aspp_forward_pallas.1} parent=11 // pred_check
        %p256 = pneg %p136
      $region26: #{aspp_forward_pallas.1} parent=11 // pred_check_branch
        %258 = sbr.rel (%p256) target = $region28
      $region27: #{aspp_forward_pallas.1} parent=11 // pred_region
        _
      $region28: #{aspp_forward_pallas.1} parent=11 // pred_fallthru
        _
      // Predicated region
      $region29: #{aspp_forward_pallas.1} parent=11 // pred_check
        %p259 = pneg %p157
      $region30: #{aspp_forward_pallas.1} parent=11 // pred_check_branch
        %261 = sbr.rel (%p259) target = $region32
      $region31: #{aspp_forward_pallas.1} parent=11 // pred_region
        _
      $region32: #{aspp_forward_pallas.1} parent=11 // pred_fallthru
        _
      // Predicated region
      $region33: #{aspp_forward_pallas.1} parent=11 // pred_check
        %p262 = pneg %p178
      $region34: #{aspp_forward_pallas.1} parent=11 // pred_check_branch
        %264 = sbr.rel (%p262) target = $region36
      $region35: #{aspp_forward_pallas.1} parent=11 // pred_region
        _
      $region36: #{aspp_forward_pallas.1} parent=11 // pred_fallthru
        _
    $region12: #{aspp_forward_pallas.1} parent=5 // pred_fallthru
      _
    %p265 = scmp.lt.s32.totalorder %s14, 32
    // Predicated region
    $region37: #{aspp_forward_pallas.1} parent=5 // pred_check
      %p266 = pneg %p265
    $region38: #{aspp_forward_pallas.1} parent=5 // pred_check_branch
      %268 = sbr.rel (%p266) target = $region40
    $region39: #{aspp_forward_pallas.1} parent=5 // pred_region
      // Predicated region
      $region41: #{aspp_forward_pallas.1} parent=39 // pred_check
        %p269 = pneg %p46
      $region42: #{aspp_forward_pallas.1} parent=39 // pred_check_branch
        %271 = sbr.rel (%p269) target = $region44
      $region43: #{aspp_forward_pallas.1} parent=39 // pred_region
        %p272 = scmp.lt.s32.totalorder %s21, 1
        %s273 = scalar_select %p272, %s21, 1
        %s274 = smul.addr %s273, 160
        %s275 = smul.addr %s274, 4
        %s276 = scalar_lea.vmem %s0, %s275
      $region44: #{aspp_forward_pallas.1} parent=39 // pred_fallthru
        _
      // Predicated region
      $region45: #{aspp_forward_pallas.1} parent=39 // pred_check
        %p277 = pneg %p198
      $region46: #{aspp_forward_pallas.1} parent=39 // pred_check_branch
        %279 = sbr.rel (%p277) target = $region48
      $region47: #{aspp_forward_pallas.1} parent=39 // pred_region
        %p280 = scmp.lt.s32.totalorder %s21, 1
        %s281 = scalar_select %p280, %s21, 1
        %s282 = smul.addr %s281, 8
        %s283 = scalar_lea.vmem %s7, %s282
      $region48: #{aspp_forward_pallas.1} parent=39 // pred_fallthru
        _
    $region40: #{aspp_forward_pallas.1} parent=5 // pred_fallthru
      _
    %p284 = scmp.le.s32.totalorder 1, %s14
    %p285 = scmp.lt.s32.totalorder %s14, 33
    %p286 = pnand %p284, %p285
    %p287 = pneg %p286
    // Predicated region
    $region49: #{aspp_forward_pallas.1} parent=5 // pred_check
      _
    $region50: #{aspp_forward_pallas.1} parent=5 // pred_check_branch
      %289 = sbr.rel (%p286) target = $region52
    $region51: #{aspp_forward_pallas.1} parent=5 // pred_region
      %s290 = ssub.s32 %s14, 1
      %p291 = scmp.lt.s32.totalorder %s23, 1
      %s292 = scalar_select %p291, %s23, 1
      %s293 = smul.addr %s292, 160
      %s294 = smul.addr %s293, 4
      %s295 = scalar_lea.vmem %s0, %s294
      %p296 = pneg %p52
      %p297 = pneg %p49
      %p298 = pneg %p73
      %p299 = pneg %p70
      %p300 = pneg %p94
      %p301 = pneg %p91
      %p302 = pneg %p115
      %p303 = pneg %p112
      %p304 = pneg %p136
      %p305 = pneg %p133
      %p306 = pneg %p157
      %p307 = pneg %p154
      %p308 = pneg %p178
      %p309 = pneg %p175
      %p310 = scmp.lt.s32.totalorder %s23, 1
      %s311 = scalar_select %p310, %s23, 1
      %s312 = smul.addr %s311, 8
      %s313 = scalar_lea.vmem %s7, %s312
      %p314 = pneg %p204
      %p315 = pneg %p201
      %p316 = pneg %p232
      %p317 = pneg %p229
      %p318 = scmp.lt.s32.totalorder %s23, 1
      %s319 = scalar_select %p318, %s23, 1
      %p320 = scmp.lt.s32.totalorder %s24, 15
      %s321 = scalar_select %p320, %s24, 15
      %s322 = smul.addr %s321, 2
      %s323 = smul.addr %s319, 32
      %s324 = sadd.s32 %s322, %s323
      %s325 = smul.addr %s324, 8
      %s326 = scalar_lea.vmem %s8, %s325
      %p327 = scmp.lt.s32.totalorder %s23, 1
      %s328 = scalar_select %p327, %s23, 1
      %s329 = smul.addr %s328, 160
      %s330 = smul.addr %s329, 4
      %s331 = scalar_lea.vmem %s0, %s330
      %p332 = scmp.lt.s32.totalorder %s23, 1
      %s333 = scalar_select %p332, %s23, 1
      %s334 = smul.addr %s333, 8
      %s335 = scalar_lea.vmem %s7, %s334
      %p336 = scmp.lt.s32.totalorder %s23, 1
      %s337 = scalar_select %p336, %s23, 1
      %p338 = scmp.lt.s32.totalorder %s24, 15
      %s339 = scalar_select %p338, %s24, 15
      %s340 = smul.addr %s339, 2
      %s341 = smul.addr %s337, 32
      %s342 = sadd.s32 %s340, %s341
      %s343 = smul.addr %s342, 8
      %s344 = scalar_lea.vmem %s8, %s343
      %s345 = sadd.s32 %s24, 8
      %s346 = smul.u32 %s345, 5
      %s347 = smul.addr %s346, 4
      %s348 = scalar_lea.vmem %s331, %s347
      %v349 = vld [vmem:[%s348 + $0x4] sm:$0xff]
      %v350 = vld [vmem:[%s348 + $0xc] sm:$0xf]
      %v351 = vld [vmem:[%s1] sm:$0xff]
      %v352 = vld [vmem:[%s2] sm:$0xff]
      %354 = vset.pattern.permute.xlu0 0
      %355 = vperm.xlu0 %354, %v352
      %v356 = vpop.permute.xlu0 %355
      %v360 = vcombine.high %v349, %v349
      %361 = vrot.lane.b32.xlu0 %v349, 112
      %v362 = vpop.permute.xlu0 %361
      %363 = vrot.lane.b32.xlu0 %v360, 112
      %v364 = vpop.permute.xlu0 %363
      %365 = vrot.lane.b32.xlu0 %v350, 112
      %v366 = vpop.permute.xlu0 %365
      %vm367 = vcmask 916480
      %v368 = vsel %vm367, %v362, %v364
      %v369 = vsel %vm367, %v364, %v366
      %vm370 = vcmask 31744
      %v372 = vsel %vm370, %v351, 0
      %vm374 = vcmask 1043456
      %v375 = vsel %vm374, %v368, 0
      %v377 = vsel %vm374, %v369, 0
      %379 = vmatprep.subr.mxu0 %v377
      %380 = vmatpush1.msra.mxu0 %v375
      %381 = vmatprep.subr.mxu0 0.0
      %382 = vmatpush1.msra.mxu0 0.0
      %383 = vmatprep.subr.mxu0 0.0
      %384 = vmatpush1.msra.mxu0 0.0
      %385 = vmatprep.subr.mxu0 0.0
      %386 = vmatpush1.msra.mxu0 0.0
      %387 = vmatprep.subr.mxu0 0.0
      %388 = vmatpush1.msra.mxu0 0.0
      %389 = vmatprep.subr.mxu0 0.0
      %390 = vmatpush1.msra.mxu0 0.0
      %391 = vmatprep.subr.mxu0 0.0
      %392 = vmatpush1.msra.mxu0 0.0
      %393 = vmatprep.subr.mxu0 0.0
      %394 = vmatpush1.msra.mxu0 0.0
      %395 = vmatprep.subr.mxu0 0.0
      %396 = vmatpush1.msra.mxu0 0.0
      %397 = vmatprep.subr.mxu0 0.0
      %398 = vmatpush1.msra.mxu0 0.0
      %399 = vmatprep.subr.mxu0 0.0
      %400 = vmatpush1.msra.mxu0 0.0
      %401 = vmatprep.subr.mxu0 0.0
      %402 = vmatpush1.msra.mxu0 0.0
      %403 = vmatprep.subr.mxu0 0.0
      %404 = vmatpush1.msra.mxu0 0.0
      %405 = vmatprep.subr.mxu0 0.0
      %406 = vmatpush1.msra.mxu0 0.0
      %407 = vmatprep.subr.mxu0 0.0
      %408 = vmatpush1.msra.mxu0 0.0
      %409 = vmatprep.subr.mxu0 0.0
      %410 = vmatpush1.msra.mxu0 0.0
      %411 = vmatprep.subr.mxu0 0.0
      %412 = vmatpush1.msra.mxu0 0.0
      %413 = vmatprep.subr.mxu0 0.0
      %414 = vmatpush1.msra.mxu0 0.0
      %415 = vmatprep.subr.mxu0 0.0
      %416 = vmatpush1.msra.mxu0 0.0
      %417 = vmatprep.subr.mxu0 0.0
      %418 = vmatpush1.msra.mxu0 0.0
      %419 = vmatprep.subr.mxu0 0.0
      %420 = vmatpush1.msra.mxu0 0.0
      %421 = vmatprep.subr.mxu0 0.0
      %422 = vmatpush1.msra.mxu0 0.0
      %423 = vmatprep.subr.mxu0 0.0
      %424 = vmatpush1.msra.mxu0 0.0
      %425 = vmatprep.subr.mxu0 0.0
      %426 = vmatpush1.msra.mxu0 0.0
      %427 = vmatprep.subr.mxu0 0.0
      %428 = vmatpush1.msra.mxu0 0.0
      %429 = vmatprep.subr.mxu0 0.0
      %430 = vmatpush1.msra.mxu0 0.0
      %431 = vmatprep.subr.mxu0 0.0
      %432 = vmatpush1.msra.mxu0 0.0
      %433 = vmatprep.subr.mxu0 0.0
      %434 = vmatpush1.msra.mxu0 0.0
      %435 = vmatprep.subr.mxu0 0.0
      %436 = vmatpush1.msra.mxu0 0.0
      %437 = vmatprep.subr.mxu0 0.0
      %438 = vmatpush1.msra.mxu0 0.0
      %439 = vmatprep.subr.mxu0 0.0
      %440 = vmatpush1.msra.mxu0 0.0
      %441 = vmatprep.subr.mxu0 0.0
      %442 = vmatpush1.msra.mxu0 0.0
      %443 = vmatprep.mubr.f32.mxu0 0.0
      %444 = vmatmul.mubr.f32.gmra.mrb[0].mxu0 %v372
      %v445 = vpop.f32.mrb[0].mxu0
      %v446 = vadd.f32 %v356, %v445
      %v447 = vpop.f32.mrb[0].mxu0
      %v448 = vadd.f32 %v356, %v447
      %449 = vdwg.mxu0
      %v450 = vmax.f32 %v446, 0.0
      %v451 = vmax.f32 %v448, 0.0
      %v452 = vld [vmem:[%s5] sm:$0xff]
      %s453 = sadd.s32 %s24, 6
      %s454 = smul.u32 %s453, 5
      %s455 = smul.addr %s454, 4
      %s456 = scalar_lea.vmem %s331, %s455
      %v457 = vld [vmem:[%s456] sm:$0xff]
      %v458 = vld [vmem:[%s456 + $0x8] sm:$0xf]
      %v459 = vld [vmem:[%s3] sm:$0xff]
      %v462 = vcombine.high %v457, %v457
      %463 = vrot.lane.b32.xlu0 %v457, 18
      %v464 = vpop.permute.xlu0 %463
      %465 = vrot.lane.b32.xlu0 %v462, 18
      %v466 = vpop.permute.xlu0 %465
      %467 = vrot.lane.b32.xlu0 %v458, 18
      %v468 = vpop.permute.xlu0 %467
      %vm469 = vcmask 146432
      %v470 = vsel %vm469, %v464, %v466
      %v471 = vsel %vm469, %v466, %v468
      %v473 = vsel %vm370, %v459, 0
      %v475 = vsel %vm374, %v470, 0
      %v477 = vsel %vm374, %v471, 0
      %479 = vmatprep.subr.mxu0 %v477
      %480 = vmatpush1.msra.mxu0 %v475
      %481 = vmatprep.subr.mxu0 0.0
      %482 = vmatpush1.msra.mxu0 0.0
      %483 = vmatprep.subr.mxu0 0.0
      %484 = vmatpush1.msra.mxu0 0.0
      %485 = vmatprep.subr.mxu0 0.0
      %486 = vmatpush1.msra.mxu0 0.0
      %487 = vmatprep.subr.mxu0 0.0
      %488 = vmatpush1.msra.mxu0 0.0
      %489 = vmatprep.subr.mxu0 0.0
      %490 = vmatpush1.msra.mxu0 0.0
      %491 = vmatprep.subr.mxu0 0.0
      %492 = vmatpush1.msra.mxu0 0.0
      %493 = vmatprep.subr.mxu0 0.0
      %494 = vmatpush1.msra.mxu0 0.0
      %495 = vmatprep.subr.mxu0 0.0
      %496 = vmatpush1.msra.mxu0 0.0
      %497 = vmatprep.subr.mxu0 0.0
      %498 = vmatpush1.msra.mxu0 0.0
      %499 = vmatprep.subr.mxu0 0.0
      %500 = vmatpush1.msra.mxu0 0.0
      %501 = vmatprep.subr.mxu0 0.0
      %502 = vmatpush1.msra.mxu0 0.0
      %503 = vmatprep.subr.mxu0 0.0
      %504 = vmatpush1.msra.mxu0 0.0
      %505 = vmatprep.subr.mxu0 0.0
      %506 = vmatpush1.msra.mxu0 0.0
      %507 = vmatprep.subr.mxu0 0.0
      %508 = vmatpush1.msra.mxu0 0.0
      %509 = vmatprep.subr.mxu0 0.0
      %510 = vmatpush1.msra.mxu0 0.0
      %511 = vmatprep.subr.mxu0 0.0
      %512 = vmatpush1.msra.mxu0 0.0
      %513 = vmatprep.subr.mxu0 0.0
      %514 = vmatpush1.msra.mxu0 0.0
      %515 = vmatprep.subr.mxu0 0.0
      %516 = vmatpush1.msra.mxu0 0.0
      %517 = vmatprep.subr.mxu0 0.0
      %518 = vmatpush1.msra.mxu0 0.0
      %519 = vmatprep.subr.mxu0 0.0
      %520 = vmatpush1.msra.mxu0 0.0
      %521 = vmatprep.subr.mxu0 0.0
      %522 = vmatpush1.msra.mxu0 0.0
      %523 = vmatprep.subr.mxu0 0.0
      %524 = vmatpush1.msra.mxu0 0.0
      %525 = vmatprep.subr.mxu0 0.0
      %526 = vmatpush1.msra.mxu0 0.0
      %527 = vmatprep.subr.mxu0 0.0
      %528 = vmatpush1.msra.mxu0 0.0
      %529 = vmatprep.subr.mxu0 0.0
      %530 = vmatpush1.msra.mxu0 0.0
      %531 = vmatprep.subr.mxu0 0.0
      %532 = vmatpush1.msra.mxu0 0.0
      %533 = vmatprep.subr.mxu0 0.0
      %534 = vmatpush1.msra.mxu0 0.0
      %535 = vmatprep.subr.mxu0 0.0
      %536 = vmatpush1.msra.mxu0 0.0
      %537 = vmatprep.subr.mxu0 0.0
      %538 = vmatpush1.msra.mxu0 0.0
      %539 = vmatprep.subr.mxu0 0.0
      %540 = vmatpush1.msra.mxu0 0.0
      %541 = vmatprep.subr.mxu0 0.0
      %542 = vmatpush1.msra.mxu0 0.0
      %543 = vmatprep.mubr.f32.mxu0 0.0
      %544 = vmatmul.mubr.f32.gmra.mrb[0].mxu0 %v473
      %v545 = vpop.f32.mrb[0].mxu0
      %v546 = vadd.f32 0.0, %v545
      %v547 = vpop.f32.mrb[0].mxu0
      %v548 = vadd.f32 0.0, %v547
      %549 = vdwg.mxu0
      %v550 = vld [vmem:[%s6] ss:$8 sm:$0x3]
      %v552 = vlaneseq
      %v553 = vshrl.u32 %v552, 7
      %v554 = vsub.s32 0, %v553
      %v555 = vrot.slane %v550, %v554
      %v556 = vlaneseq
      %v557 = vshrl.u32 %v556, 7
      %v558 = vsub.s32 1, %v557
      %v559 = vrot.slane %v550, %v558
      %v562 = vmul.f32 %v546, %v555
      %v563 = vmul.f32 %v548, %v559
      %v564 = vld [vmem:[%s456] sm:$0xff]
      %v565 = vld [vmem:[%s456 + $0x8] sm:$0xf]
      %s566 = scalar_lea.vmem %s3, 8
      %v567 = vld [vmem:[%s566] sm:$0xff]
      %v570 = vcombine.high %v564, %v564
      %571 = vrot.lane.b32.xlu0 %v564, 16
      %v572 = vpop.permute.xlu0 %571
      %573 = vrot.lane.b32.xlu0 %v570, 16
      %v574 = vpop.permute.xlu0 %573
      %575 = vrot.lane.b32.xlu0 %v565, 16
      %v576 = vpop.permute.xlu0 %575
      %vm577 = vcmask 130048
      %v578 = vsel %vm577, %v572, %v574
      %v579 = vsel %vm577, %v574, %v576
      %v581 = vsel %vm370, %v567, 0
      %v583 = vsel %vm374, %v578, 0
      %v585 = vsel %vm374, %v579, 0
      %587 = vmatprep.subr.mxu0 %v585
      %588 = vmatpush1.msra.mxu0 %v583
      %589 = vmatprep.subr.mxu0 0.0
      %590 = vmatpush1.msra.mxu0 0.0
      %591 = vmatprep.subr.mxu0 0.0
      %592 = vmatpush1.msra.mxu0 0.0
      %593 = vmatprep.subr.mxu0 0.0
      %594 = vmatpush1.msra.mxu0 0.0
      %595 = vmatprep.subr.mxu0 0.0
      %596 = vmatpush1.msra.mxu0 0.0
      %597 = vmatprep.subr.mxu0 0.0
      %598 = vmatpush1.msra.mxu0 0.0
      %599 = vmatprep.subr.mxu0 0.0
      %600 = vmatpush1.msra.mxu0 0.0
      %601 = vmatprep.subr.mxu0 0.0
      %602 = vmatpush1.msra.mxu0 0.0
      %603 = vmatprep.subr.mxu0 0.0
      %604 = vmatpush1.msra.mxu0 0.0
      %605 = vmatprep.subr.mxu0 0.0
      %606 = vmatpush1.msra.mxu0 0.0
      %607 = vmatprep.subr.mxu0 0.0
      %608 = vmatpush1.msra.mxu0 0.0
      %609 = vmatprep.subr.mxu0 0.0
      %610 = vmatpush1.msra.mxu0 0.0
      %611 = vmatprep.subr.mxu0 0.0
      %612 = vmatpush1.msra.mxu0 0.0
      %613 = vmatprep.subr.mxu0 0.0
      %614 = vmatpush1.msra.mxu0 0.0
      %615 = vmatprep.subr.mxu0 0.0
      %616 = vmatpush1.msra.mxu0 0.0
      %617 = vmatprep.subr.mxu0 0.0
      %618 = vmatpush1.msra.mxu0 0.0
      %619 = vmatprep.subr.mxu0 0.0
      %620 = vmatpush1.msra.mxu0 0.0
      %621 = vmatprep.subr.mxu0 0.0
      %622 = vmatpush1.msra.mxu0 0.0
      %623 = vmatprep.subr.mxu0 0.0
      %624 = vmatpush1.msra.mxu0 0.0
      %625 = vmatprep.subr.mxu0 0.0
      %626 = vmatpush1.msra.mxu0 0.0
      %627 = vmatprep.subr.mxu0 0.0
      %628 = vmatpush1.msra.mxu0 0.0
      %629 = vmatprep.subr.mxu0 0.0
      %630 = vmatpush1.msra.mxu0 0.0
      %631 = vmatprep.subr.mxu0 0.0
      %632 = vmatpush1.msra.mxu0 0.0
      %633 = vmatprep.subr.mxu0 0.0
      %634 = vmatpush1.msra.mxu0 0.0
      %635 = vmatprep.subr.mxu0 0.0
      %636 = vmatpush1.msra.mxu0 0.0
      %637 = vmatprep.subr.mxu0 0.0
      %638 = vmatpush1.msra.mxu0 0.0
      %639 = vmatprep.subr.mxu0 0.0
      %640 = vmatpush1.msra.mxu0 0.0
      %641 = vmatprep.subr.mxu0 0.0
      %642 = vmatpush1.msra.mxu0 0.0
      %643 = vmatprep.subr.mxu0 0.0
      %644 = vmatpush1.msra.mxu0 0.0
      %645 = vmatprep.subr.mxu0 0.0
      %646 = vmatpush1.msra.mxu0 0.0
      %647 = vmatprep.subr.mxu0 0.0
      %648 = vmatpush1.msra.mxu0 0.0
      %649 = vmatprep.subr.mxu0 0.0
      %650 = vmatpush1.msra.mxu0 0.0
      %651 = vmatprep.mubr.f32.mxu0 0.0
      %652 = vmatmul.mubr.f32.gmra.mrb[0].mxu0 %v581
      %v653 = vpop.f32.mrb[0].mxu0
      %v654 = vadd.f32 0.0, %v653
      %v655 = vpop.f32.mrb[0].mxu0
      %v656 = vadd.f32 0.0, %v655
      %657 = vdwg.mxu0
      %v658 = vadd.f32 %v562, %v654
      %v659 = vadd.f32 %v563, %v656
      %v660 = vld [vmem:[%s456] sm:$0xff]
      %v661 = vld [vmem:[%s456 + $0x8] sm:$0xf]
      %s662 = scalar_lea.vmem %s3, 16
      %v663 = vld [vmem:[%s662] sm:$0xff]
      %v666 = vcombine.high %v660, %v660
      %667 = vrot.lane.b32.xlu0 %v660, 14
      %v668 = vpop.permute.xlu0 %667
      %669 = vrot.lane.b32.xlu0 %v666, 14
      %v670 = vpop.permute.xlu0 %669
      %671 = vrot.lane.b32.xlu0 %v661, 14
      %v672 = vpop.permute.xlu0 %671
      %vm673 = vcmask 113664
      %v674 = vsel %vm673, %v668, %v670
      %v675 = vsel %vm673, %v670, %v672
      %v677 = vsel %vm370, %v663, 0
      %v679 = vsel %vm374, %v674, 0
      %v681 = vsel %vm374, %v675, 0
      %683 = vmatprep.subr.mxu0 %v681
      %684 = vmatpush1.msra.mxu0 %v679
      %685 = vmatprep.subr.mxu0 0.0
      %686 = vmatpush1.msra.mxu0 0.0
      %687 = vmatprep.subr.mxu0 0.0
      %688 = vmatpush1.msra.mxu0 0.0
      %689 = vmatprep.subr.mxu0 0.0
      %690 = vmatpush1.msra.mxu0 0.0
      %691 = vmatprep.subr.mxu0 0.0
      %692 = vmatpush1.msra.mxu0 0.0
      %693 = vmatprep.subr.mxu0 0.0
      %694 = vmatpush1.msra.mxu0 0.0
      %695 = vmatprep.subr.mxu0 0.0
      %696 = vmatpush1.msra.mxu0 0.0
      %697 = vmatprep.subr.mxu0 0.0
      %698 = vmatpush1.msra.mxu0 0.0
      %699 = vmatprep.subr.mxu0 0.0
      %700 = vmatpush1.msra.mxu0 0.0
      %701 = vmatprep.subr.mxu0 0.0
      %702 = vmatpush1.msra.mxu0 0.0
      %703 = vmatprep.subr.mxu0 0.0
      %704 = vmatpush1.msra.mxu0 0.0
      %705 = vmatprep.subr.mxu0 0.0
      %706 = vmatpush1.msra.mxu0 0.0
      %707 = vmatprep.subr.mxu0 0.0
      %708 = vmatpush1.msra.mxu0 0.0
      %709 = vmatprep.subr.mxu0 0.0
      %710 = vmatpush1.msra.mxu0 0.0
      %711 = vmatprep.subr.mxu0 0.0
      %712 = vmatpush1.msra.mxu0 0.0
      %713 = vmatprep.subr.mxu0 0.0
      %714 = vmatpush1.msra.mxu0 0.0
      %715 = vmatprep.subr.mxu0 0.0
      %716 = vmatpush1.msra.mxu0 0.0
      %717 = vmatprep.subr.mxu0 0.0
      %718 = vmatpush1.msra.mxu0 0.0
      %719 = vmatprep.subr.mxu0 0.0
      %720 = vmatpush1.msra.mxu0 0.0
      %721 = vmatprep.subr.mxu0 0.0
      %722 = vmatpush1.msra.mxu0 0.0
      %723 = vmatprep.subr.mxu0 0.0
      %724 = vmatpush1.msra.mxu0 0.0
      %725 = vmatprep.subr.mxu0 0.0
      %726 = vmatpush1.msra.mxu0 0.0
      %727 = vmatprep.subr.mxu0 0.0
      %728 = vmatpush1.msra.mxu0 0.0
      %729 = vmatprep.subr.mxu0 0.0
      %730 = vmatpush1.msra.mxu0 0.0
      %731 = vmatprep.subr.mxu0 0.0
      %732 = vmatpush1.msra.mxu0 0.0
      %733 = vmatprep.subr.mxu0 0.0
      %734 = vmatpush1.msra.mxu0 0.0
      %735 = vmatprep.subr.mxu0 0.0
      %736 = vmatpush1.msra.mxu0 0.0
      %737 = vmatprep.subr.mxu0 0.0
      %738 = vmatpush1.msra.mxu0 0.0
      %739 = vmatprep.subr.mxu0 0.0
      %740 = vmatpush1.msra.mxu0 0.0
      %741 = vmatprep.subr.mxu0 0.0
      %742 = vmatpush1.msra.mxu0 0.0
      %743 = vmatprep.subr.mxu0 0.0
      %744 = vmatpush1.msra.mxu0 0.0
      %745 = vmatprep.subr.mxu0 0.0
      %746 = vmatpush1.msra.mxu0 0.0
      %747 = vmatprep.mubr.f32.mxu0 0.0
      %748 = vmatmul.mubr.f32.gmra.mrb[0].mxu0 %v677
      %v749 = vpop.f32.mrb[0].mxu0
      %v750 = vadd.f32 0.0, %v749
      %v751 = vpop.f32.mrb[0].mxu0
      %v752 = vadd.f32 0.0, %v751
      %753 = vdwg.mxu0
      %s754 = scalar_lea.vmem %s6, 2
      %v755 = vld [vmem:[%s754] ss:$8 sm:$0x3]
      %v757 = vlaneseq
      %v758 = vshrl.u32 %v757, 7
      %v759 = vsub.s32 0, %v758
      %v760 = vrot.slane %v755, %v759
      %v761 = vlaneseq
      %v762 = vshrl.u32 %v761, 7
      %v763 = vsub.s32 1, %v762
      %v764 = vrot.slane %v755, %v763
      %v767 = vmul.f32 %v750, %v760
      %v768 = vmul.f32 %v752, %v764
      %v769 = vadd.f32 %v658, %v767
      %v770 = vadd.f32 %v659, %v768
      %v771 = vld [vmem:[%s456 + $0x4] sm:$0xff]
      %v772 = vld [vmem:[%s456 + $0xc] sm:$0xf]
      %s773 = scalar_lea.vmem %s3, 24
      %v774 = vld [vmem:[%s773] sm:$0xff]
      %v777 = vcombine.high %v771, %v771
      %778 = vrot.lane.b32.xlu0 %v771, 114
      %v779 = vpop.permute.xlu0 %778
      %780 = vrot.lane.b32.xlu0 %v777, 114
      %v781 = vpop.permute.xlu0 %780
      %782 = vrot.lane.b32.xlu0 %v772, 114
      %v783 = vpop.permute.xlu0 %782
      %vm784 = vcmask 932864
      %v785 = vsel %vm784, %v779, %v781
      %v786 = vsel %vm784, %v781, %v783
      %v788 = vsel %vm370, %v774, 0
      %v790 = vsel %vm374, %v785, 0
      %v792 = vsel %vm374, %v786, 0
      %794 = vmatprep.subr.mxu0 %v792
      %795 = vmatpush1.msra.mxu0 %v790
      %796 = vmatprep.subr.mxu0 0.0
      %797 = vmatpush1.msra.mxu0 0.0
      %798 = vmatprep.subr.mxu0 0.0
      %799 = vmatpush1.msra.mxu0 0.0
      %800 = vmatprep.subr.mxu0 0.0
      %801 = vmatpush1.msra.mxu0 0.0
      %802 = vmatprep.subr.mxu0 0.0
      %803 = vmatpush1.msra.mxu0 0.0
      %804 = vmatprep.subr.mxu0 0.0
      %805 = vmatpush1.msra.mxu0 0.0
      %806 = vmatprep.subr.mxu0 0.0
      %807 = vmatpush1.msra.mxu0 0.0
      %808 = vmatprep.subr.mxu0 0.0
      %809 = vmatpush1.msra.mxu0 0.0
      %810 = vmatprep.subr.mxu0 0.0
      %811 = vmatpush1.msra.mxu0 0.0
      %812 = vmatprep.subr.mxu0 0.0
      %813 = vmatpush1.msra.mxu0 0.0
      %814 = vmatprep.subr.mxu0 0.0
      %815 = vmatpush1.msra.mxu0 0.0
      %816 = vmatprep.subr.mxu0 0.0
      %817 = vmatpush1.msra.mxu0 0.0
      %818 = vmatprep.subr.mxu0 0.0
      %819 = vmatpush1.msra.mxu0 0.0
      %820 = vmatprep.subr.mxu0 0.0
      %821 = vmatpush1.msra.mxu0 0.0
      %822 = vmatprep.subr.mxu0 0.0
      %823 = vmatpush1.msra.mxu0 0.0
      %824 = vmatprep.subr.mxu0 0.0
      %825 = vmatpush1.msra.mxu0 0.0
      %826 = vmatprep.subr.mxu0 0.0
      %827 = vmatpush1.msra.mxu0 0.0
      %828 = vmatprep.subr.mxu0 0.0
      %829 = vmatpush1.msra.mxu0 0.0
      %830 = vmatprep.subr.mxu0 0.0
      %831 = vmatpush1.msra.mxu0 0.0
      %832 = vmatprep.subr.mxu0 0.0
      %833 = vmatpush1.msra.mxu0 0.0
      %834 = vmatprep.subr.mxu0 0.0
      %835 = vmatpush1.msra.mxu0 0.0
      %836 = vmatprep.subr.mxu0 0.0
      %837 = vmatpush1.msra.mxu0 0.0
      %838 = vmatprep.subr.mxu0 0.0
      %839 = vmatpush1.msra.mxu0 0.0
      %840 = vmatprep.subr.mxu0 0.0
      %841 = vmatpush1.msra.mxu0 0.0
      %842 = vmatprep.subr.mxu0 0.0
      %843 = vmatpush1.msra.mxu0 0.0
      %844 = vmatprep.subr.mxu0 0.0
      %845 = vmatpush1.msra.mxu0 0.0
      %846 = vmatprep.subr.mxu0 0.0
      %847 = vmatpush1.msra.mxu0 0.0
      %848 = vmatprep.subr.mxu0 0.0
      %849 = vmatpush1.msra.mxu0 0.0
      %850 = vmatprep.subr.mxu0 0.0
      %851 = vmatpush1.msra.mxu0 0.0
      %852 = vmatprep.subr.mxu0 0.0
      %853 = vmatpush1.msra.mxu0 0.0
      %854 = vmatprep.subr.mxu0 0.0
      %855 = vmatpush1.msra.mxu0 0.0
      %856 = vmatprep.subr.mxu0 0.0
      %857 = vmatpush1.msra.mxu0 0.0
      %858 = vmatprep.mubr.f32.mxu0 0.0
      %859 = vmatmul.mubr.f32.gmra.mrb[0].mxu0 %v788
      %v860 = vpop.f32.mrb[0].mxu0
      %v861 = vadd.f32 0.0, %v860
      %v862 = vpop.f32.mrb[0].mxu0
      %v863 = vadd.f32 0.0, %v862
      %864 = vdwg.mxu0
      %v865 = vmul.f32 %v861, %v555
      %v866 = vmul.f32 %v863, %v559
      %v867 = vadd.f32 %v769, %v865
      %v868 = vadd.f32 %v770, %v866
      %v869 = vld [vmem:[%s456 + $0x4] sm:$0xff]
      %v870 = vld [vmem:[%s456 + $0xc] sm:$0xf]
      %s871 = scalar_lea.vmem %s3, 32
      %v872 = vld [vmem:[%s871] sm:$0xff]
      %v875 = vcombine.high %v869, %v869
      %876 = vrot.lane.b32.xlu0 %v869, 112
      %v877 = vpop.permute.xlu0 %876
      %878 = vrot.lane.b32.xlu0 %v875, 112
      %v879 = vpop.permute.xlu0 %878
      %880 = vrot.lane.b32.xlu0 %v870, 112
      %v881 = vpop.permute.xlu0 %880
      %v882 = vsel %vm367, %v877, %v879
      %v883 = vsel %vm367, %v879, %v881
      %v885 = vsel %vm370, %v872, 0
      %v887 = vsel %vm374, %v882, 0
      %v889 = vsel %vm374, %v883, 0
      %891 = vmatprep.subr.mxu0 %v889
      %892 = vmatpush1.msra.mxu0 %v887
      %893 = vmatprep.subr.mxu0 0.0
      %894 = vmatpush1.msra.mxu0 0.0
      %895 = vmatprep.subr.mxu0 0.0
      %896 = vmatpush1.msra.mxu0 0.0
      %897 = vmatprep.subr.mxu0 0.0
      %898 = vmatpush1.msra.mxu0 0.0
      %899 = vmatprep.subr.mxu0 0.0
      %900 = vmatpush1.msra.mxu0 0.0
      %901 = vmatprep.subr.mxu0 0.0
      %902 = vmatpush1.msra.mxu0 0.0
      %903 = vmatprep.subr.mxu0 0.0
      %904 = vmatpush1.msra.mxu0 0.0
      %905 = vmatprep.subr.mxu0 0.0
      %906 = vmatpush1.msra.mxu0 0.0
      %907 = vmatprep.subr.mxu0 0.0
      %908 = vmatpush1.msra.mxu0 0.0
      %909 = vmatprep.subr.mxu0 0.0
      %910 = vmatpush1.msra.mxu0 0.0
      %911 = vmatprep.subr.mxu0 0.0
      %912 = vmatpush1.msra.mxu0 0.0
      %913 = vmatprep.subr.mxu0 0.0
      %914 = vmatpush1.msra.mxu0 0.0
      %915 = vmatprep.subr.mxu0 0.0
      %916 = vmatpush1.msra.mxu0 0.0
      %917 = vmatprep.subr.mxu0 0.0
      %918 = vmatpush1.msra.mxu0 0.0
      %919 = vmatprep.subr.mxu0 0.0
      %920 = vmatpush1.msra.mxu0 0.0
      %921 = vmatprep.subr.mxu0 0.0
      %922 = vmatpush1.msra.mxu0 0.0
      %923 = vmatprep.subr.mxu0 0.0
      %924 = vmatpush1.msra.mxu0 0.0
      %925 = vmatprep.subr.mxu0 0.0
      %926 = vmatpush1.msra.mxu0 0.0
      %927 = vmatprep.subr.mxu0 0.0
      %928 = vmatpush1.msra.mxu0 0.0
      %929 = vmatprep.subr.mxu0 0.0
      %930 = vmatpush1.msra.mxu0 0.0
      %931 = vmatprep.subr.mxu0 0.0
      %932 = vmatpush1.msra.mxu0 0.0
      %933 = vmatprep.subr.mxu0 0.0
      %934 = vmatpush1.msra.mxu0 0.0
      %935 = vmatprep.subr.mxu0 0.0
      %936 = vmatpush1.msra.mxu0 0.0
      %937 = vmatprep.subr.mxu0 0.0
      %938 = vmatpush1.msra.mxu0 0.0
      %939 = vmatprep.subr.mxu0 0.0
      %940 = vmatpush1.msra.mxu0 0.0
      %941 = vmatprep.subr.mxu0 0.0
      %942 = vmatpush1.msra.mxu0 0.0
      %943 = vmatprep.subr.mxu0 0.0
      %944 = vmatpush1.msra.mxu0 0.0
      %945 = vmatprep.subr.mxu0 0.0
      %946 = vmatpush1.msra.mxu0 0.0
      %947 = vmatprep.subr.mxu0 0.0
      %948 = vmatpush1.msra.mxu0 0.0
      %949 = vmatprep.subr.mxu0 0.0
      %950 = vmatpush1.msra.mxu0 0.0
      %951 = vmatprep.subr.mxu0 0.0
      %952 = vmatpush1.msra.mxu0 0.0
      %953 = vmatprep.subr.mxu0 0.0
      %954 = vmatpush1.msra.mxu0 0.0
      %955 = vmatprep.mubr.f32.mxu0 0.0
      %956 = vmatmul.mubr.f32.gmra.mrb[0].mxu0 %v885
      %v957 = vpop.f32.mrb[0].mxu0
      %v958 = vadd.f32 0.0, %v957
      %v959 = vpop.f32.mrb[0].mxu0
      %v960 = vadd.f32 0.0, %v959
      %961 = vdwg.mxu0
      %v962 = vadd.f32 %v867, %v958
      %v963 = vadd.f32 %v868, %v960
      %v964 = vld [vmem:[%s456 + $0x4] sm:$0xff]
      %v965 = vld [vmem:[%s456 + $0xc] sm:$0xf]
      %s966 = scalar_lea.vmem %s3, 40
      %v967 = vld [vmem:[%s966] sm:$0xff]
      %v970 = vcombine.high %v964, %v964
      %971 = vrot.lane.b32.xlu0 %v964, 110
      %v972 = vpop.permute.xlu0 %971
      %973 = vrot.lane.b32.xlu0 %v970, 110
      %v974 = vpop.permute.xlu0 %973
      %975 = vrot.lane.b32.xlu0 %v965, 110
      %v976 = vpop.permute.xlu0 %975
      %vm977 = vcmask 900096
      %v978 = vsel %vm977, %v972, %v974
      %v979 = vsel %vm977, %v974, %v976
      %v981 = vsel %vm370, %v967, 0
      %v983 = vsel %vm374, %v978, 0
      %v985 = vsel %vm374, %v979, 0
      %987 = vmatprep.subr.mxu0 %v985
      %988 = vmatpush1.msra.mxu0 %v983
      %989 = vmatprep.subr.mxu0 0.0
      %990 = vmatpush1.msra.mxu0 0.0
      %991 = vmatprep.subr.mxu0 0.0
      %992 = vmatpush1.msra.mxu0 0.0
      %993 = vmatprep.subr.mxu0 0.0
      %994 = vmatpush1.msra.mxu0 0.0
      %995 = vmatprep.subr.mxu0 0.0
      %996 = vmatpush1.msra.mxu0 0.0
      %997 = vmatprep.subr.mxu0 0.0
      %998 = vmatpush1.msra.mxu0 0.0
      %999 = vmatprep.subr.mxu0 0.0
      %1000 = vmatpush1.msra.mxu0 0.0
      %1001 = vmatprep.subr.mxu0 0.0
      %1002 = vmatpush1.msra.mxu0 0.0
      %1003 = vmatprep.subr.mxu0 0.0
      %1004 = vmatpush1.msra.mxu0 0.0
      %1005 = vmatprep.subr.mxu0 0.0
      %1006 = vmatpush1.msra.mxu0 0.0
      %1007 = vmatprep.subr.mxu0 0.0
      %1008 = vmatpush1.msra.mxu0 0.0
      %1009 = vmatprep.subr.mxu0 0.0
      %1010 = vmatpush1.msra.mxu0 0.0
      %1011 = vmatprep.subr.mxu0 0.0
      %1012 = vmatpush1.msra.mxu0 0.0
      %1013 = vmatprep.subr.mxu0 0.0
      %1014 = vmatpush1.msra.mxu0 0.0
      %1015 = vmatprep.subr.mxu0 0.0
      %1016 = vmatpush1.msra.mxu0 0.0
      %1017 = vmatprep.subr.mxu0 0.0
      %1018 = vmatpush1.msra.mxu0 0.0
      %1019 = vmatprep.subr.mxu0 0.0
      %1020 = vmatpush1.msra.mxu0 0.0
      %1021 = vmatprep.subr.mxu0 0.0
      %1022 = vmatpush1.msra.mxu0 0.0
      %1023 = vmatprep.subr.mxu0 0.0
      %1024 = vmatpush1.msra.mxu0 0.0
      %1025 = vmatprep.subr.mxu0 0.0
      %1026 = vmatpush1.msra.mxu0 0.0
      %1027 = vmatprep.subr.mxu0 0.0
      %1028 = vmatpush1.msra.mxu0 0.0
      %1029 = vmatprep.subr.mxu0 0.0
      %1030 = vmatpush1.msra.mxu0 0.0
      %1031 = vmatprep.subr.mxu0 0.0
      %1032 = vmatpush1.msra.mxu0 0.0
      %1033 = vmatprep.subr.mxu0 0.0
      %1034 = vmatpush1.msra.mxu0 0.0
      %1035 = vmatprep.subr.mxu0 0.0
      %1036 = vmatpush1.msra.mxu0 0.0
      %1037 = vmatprep.subr.mxu0 0.0
      %1038 = vmatpush1.msra.mxu0 0.0
      %1039 = vmatprep.subr.mxu0 0.0
      %1040 = vmatpush1.msra.mxu0 0.0
      %1041 = vmatprep.subr.mxu0 0.0
      %1042 = vmatpush1.msra.mxu0 0.0
      %1043 = vmatprep.subr.mxu0 0.0
      %1044 = vmatpush1.msra.mxu0 0.0
      %1045 = vmatprep.subr.mxu0 0.0
      %1046 = vmatpush1.msra.mxu0 0.0
      %1047 = vmatprep.subr.mxu0 0.0
      %1048 = vmatpush1.msra.mxu0 0.0
      %1049 = vmatprep.subr.mxu0 0.0
      %1050 = vmatpush1.msra.mxu0 0.0
      %1051 = vmatprep.mubr.f32.mxu0 0.0
      %1052 = vmatmul.mubr.f32.gmra.mrb[0].mxu0 %v981
      %v1053 = vpop.f32.mrb[0].mxu0
      %v1054 = vadd.f32 0.0, %v1053
      %v1055 = vpop.f32.mrb[0].mxu0
      %v1056 = vadd.f32 0.0, %v1055
      %1057 = vdwg.mxu0
      %v1058 = vmul.f32 %v1054, %v760
      %v1059 = vmul.f32 %v1056, %v764
      %v1060 = vadd.f32 %v962, %v1058
      %v1061 = vadd.f32 %v963, %v1059
      %v1062 = vld [vmem:[%s456 + $0x4] sm:$0xff]
      %v1063 = vld [vmem:[%s456 + $0xc] sm:$0xf]
      %s1064 = scalar_lea.vmem %s3, 48
      %v1065 = vld [vmem:[%s1064] sm:$0xff]
      %v1068 = vcombine.high %v1062, %v1062
      %1069 = vrot.lane.b32.xlu0 %v1062, 82
      %v1070 = vpop.permute.xlu0 %1069
      %1071 = vrot.lane.b32.xlu0 %v1068, 82
      %v1072 = vpop.permute.xlu0 %1071
      %1073 = vrot.lane.b32.xlu0 %v1063, 82
      %v1074 = vpop.permute.xlu0 %1073
      %vm1075 = vcmask 670720
      %v1076 = vsel %vm1075, %v1070, %v1072
      %v1077 = vsel %vm1075, %v1072, %v1074
      %v1079 = vsel %vm370, %v1065, 0
      %v1081 = vsel %vm374, %v1076, 0
      %v1083 = vsel %vm374, %v1077, 0
      %1085 = vmatprep.subr.mxu0 %v1083
      %1086 = vmatpush1.msra.mxu0 %v1081
      %1087 = vmatprep.subr.mxu0 0.0
      %1088 = vmatpush1.msra.mxu0 0.0
      %1089 = vmatprep.subr.mxu0 0.0
      %1090 = vmatpush1.msra.mxu0 0.0
      %1091 = vmatprep.subr.mxu0 0.0
      %1092 = vmatpush1.msra.mxu0 0.0
      %1093 = vmatprep.subr.mxu0 0.0
      %1094 = vmatpush1.msra.mxu0 0.0
      %1095 = vmatprep.subr.mxu0 0.0
      %1096 = vmatpush1.msra.mxu0 0.0
      %1097 = vmatprep.subr.mxu0 0.0
      %1098 = vmatpush1.msra.mxu0 0.0
      %1099 = vmatprep.subr.mxu0 0.0
      %1100 = vmatpush1.msra.mxu0 0.0
      %1101 = vmatprep.subr.mxu0 0.0
      %1102 = vmatpush1.msra.mxu0 0.0
      %1103 = vmatprep.subr.mxu0 0.0
      %1104 = vmatpush1.msra.mxu0 0.0
      %1105 = vmatprep.subr.mxu0 0.0
      %1106 = vmatpush1.msra.mxu0 0.0
      %1107 = vmatprep.subr.mxu0 0.0
      %1108 = vmatpush1.msra.mxu0 0.0
      %1109 = vmatprep.subr.mxu0 0.0
      %1110 = vmatpush1.msra.mxu0 0.0
      %1111 = vmatprep.subr.mxu0 0.0
      %1112 = vmatpush1.msra.mxu0 0.0
      %1113 = vmatprep.subr.mxu0 0.0
      %1114 = vmatpush1.msra.mxu0 0.0
      %1115 = vmatprep.subr.mxu0 0.0
      %1116 = vmatpush1.msra.mxu0 0.0
      %1117 = vmatprep.subr.mxu0 0.0
      %1118 = vmatpush1.msra.mxu0 0.0
      %1119 = vmatprep.subr.mxu0 0.0
      %1120 = vmatpush1.msra.mxu0 0.0
      %1121 = vmatprep.subr.mxu0 0.0
      %1122 = vmatpush1.msra.mxu0 0.0
      %1123 = vmatprep.subr.mxu0 0.0
      %1124 = vmatpush1.msra.mxu0 0.0
      %1125 = vmatprep.subr.mxu0 0.0
      %1126 = vmatpush1.msra.mxu0 0.0
      %1127 = vmatprep.subr.mxu0 0.0
      %1128 = vmatpush1.msra.mxu0 0.0
      %1129 = vmatprep.subr.mxu0 0.0
      %1130 = vmatpush1.msra.mxu0 0.0
      %1131 = vmatprep.subr.mxu0 0.0
      %1132 = vmatpush1.msra.mxu0 0.0
      %1133 = vmatprep.subr.mxu0 0.0
      %1134 = vmatpush1.msra.mxu0 0.0
      %1135 = vmatprep.subr.mxu0 0.0
      %1136 = vmatpush1.msra.mxu0 0.0
      %1137 = vmatprep.subr.mxu0 0.0
      %1138 = vmatpush1.msra.mxu0 0.0
      %1139 = vmatprep.subr.mxu0 0.0
      %1140 = vmatpush1.msra.mxu0 0.0
      %1141 = vmatprep.subr.mxu0 0.0
      %1142 = vmatpush1.msra.mxu0 0.0
      %1143 = vmatprep.subr.mxu0 0.0
      %1144 = vmatpush1.msra.mxu0 0.0
      %1145 = vmatprep.subr.mxu0 0.0
      %1146 = vmatpush1.msra.mxu0 0.0
      %1147 = vmatprep.subr.mxu0 0.0
      %1148 = vmatpush1.msra.mxu0 0.0
      %1149 = vmatprep.mubr.f32.mxu0 0.0
      %1150 = vmatmul.mubr.f32.gmra.mrb[0].mxu0 %v1079
      %v1151 = vpop.f32.mrb[0].mxu0
      %v1152 = vadd.f32 0.0, %v1151
      %v1153 = vpop.f32.mrb[0].mxu0
      %v1154 = vadd.f32 0.0, %v1153
      %1155 = vdwg.mxu0
      %v1156 = vmul.f32 %v1152, %v555
      %v1157 = vmul.f32 %v1154, %v559
      %v1158 = vadd.f32 %v1060, %v1156
      %v1159 = vadd.f32 %v1061, %v1157
      %v1160 = vld [vmem:[%s456 + $0x4] sm:$0xff]
      %v1161 = vld [vmem:[%s456 + $0xc] sm:$0xf]
      %s1162 = scalar_lea.vmem %s3, 56
      %v1163 = vld [vmem:[%s1162] sm:$0xff]
      %v1166 = vcombine.high %v1160, %v1160
      %1167 = vrot.lane.b32.xlu0 %v1160, 80
      %v1168 = vpop.permute.xlu0 %1167
      %1169 = vrot.lane.b32.xlu0 %v1166, 80
      %v1170 = vpop.permute.xlu0 %1169
      %1171 = vrot.lane.b32.xlu0 %v1161, 80
      %v1172 = vpop.permute.xlu0 %1171
      %vm1173 = vcmask 654336
      %v1174 = vsel %vm1173, %v1168, %v1170
      %v1175 = vsel %vm1173, %v1170, %v1172
      %v1177 = vsel %vm370, %v1163, 0
      %v1179 = vsel %vm374, %v1174, 0
      %v1181 = vsel %vm374, %v1175, 0
      %1183 = vmatprep.subr.mxu0 %v1181
      %1184 = vmatpush1.msra.mxu0 %v1179
      %1185 = vmatprep.subr.mxu0 0.0
      %1186 = vmatpush1.msra.mxu0 0.0
      %1187 = vmatprep.subr.mxu0 0.0
      %1188 = vmatpush1.msra.mxu0 0.0
      %1189 = vmatprep.subr.mxu0 0.0
      %1190 = vmatpush1.msra.mxu0 0.0
      %1191 = vmatprep.subr.mxu0 0.0
      %1192 = vmatpush1.msra.mxu0 0.0
      %1193 = vmatprep.subr.mxu0 0.0
      %1194 = vmatpush1.msra.mxu0 0.0
      %1195 = vmatprep.subr.mxu0 0.0
      %1196 = vmatpush1.msra.mxu0 0.0
      %1197 = vmatprep.subr.mxu0 0.0
      %1198 = vmatpush1.msra.mxu0 0.0
      %1199 = vmatprep.subr.mxu0 0.0
      %1200 = vmatpush1.msra.mxu0 0.0
      %1201 = vmatprep.subr.mxu0 0.0
      %1202 = vmatpush1.msra.mxu0 0.0
      %1203 = vmatprep.subr.mxu0 0.0
      %1204 = vmatpush1.msra.mxu0 0.0
      %1205 = vmatprep.subr.mxu0 0.0
      %1206 = vmatpush1.msra.mxu0 0.0
      %1207 = vmatprep.subr.mxu0 0.0
      %1208 = vmatpush1.msra.mxu0 0.0
      %1209 = vmatprep.subr.mxu0 0.0
      %1210 = vmatpush1.msra.mxu0 0.0
      %1211 = vmatprep.subr.mxu0 0.0
      %1212 = vmatpush1.msra.mxu0 0.0
      %1213 = vmatprep.subr.mxu0 0.0
      %1214 = vmatpush1.msra.mxu0 0.0
      %1215 = vmatprep.subr.mxu0 0.0
      %1216 = vmatpush1.msra.mxu0 0.0
      %1217 = vmatprep.subr.mxu0 0.0
      %1218 = vmatpush1.msra.mxu0 0.0
      %1219 = vmatprep.subr.mxu0 0.0
      %1220 = vmatpush1.msra.mxu0 0.0
      %1221 = vmatprep.subr.mxu0 0.0
      %1222 = vmatpush1.msra.mxu0 0.0
      %1223 = vmatprep.subr.mxu0 0.0
      %1224 = vmatpush1.msra.mxu0 0.0
      %1225 = vmatprep.subr.mxu0 0.0
      %1226 = vmatpush1.msra.mxu0 0.0
      %1227 = vmatprep.subr.mxu0 0.0
      %1228 = vmatpush1.msra.mxu0 0.0
      %1229 = vmatprep.subr.mxu0 0.0
      %1230 = vmatpush1.msra.mxu0 0.0
      %1231 = vmatprep.subr.mxu0 0.0
      %1232 = vmatpush1.msra.mxu0 0.0
      %1233 = vmatprep.subr.mxu0 0.0
      %1234 = vmatpush1.msra.mxu0 0.0
      %1235 = vmatprep.subr.mxu0 0.0
      %1236 = vmatpush1.msra.mxu0 0.0
      %1237 = vmatprep.subr.mxu0 0.0
      %1238 = vmatpush1.msra.mxu0 0.0
      %1239 = vmatprep.subr.mxu0 0.0
      %1240 = vmatpush1.msra.mxu0 0.0
      %1241 = vmatprep.subr.mxu0 0.0
      %1242 = vmatpush1.msra.mxu0 0.0
      %1243 = vmatprep.subr.mxu0 0.0
      %1244 = vmatpush1.msra.mxu0 0.0
      %1245 = vmatprep.subr.mxu0 0.0
      %1246 = vmatpush1.msra.mxu0 0.0
      %1247 = vmatprep.mubr.f32.mxu0 0.0
      %1248 = vmatmul.mubr.f32.gmra.mrb[0].mxu0 %v1177
      %v1249 = vpop.f32.mrb[0].mxu0
      %v1250 = vadd.f32 0.0, %v1249
      %v1251 = vpop.f32.mrb[0].mxu0
      %v1252 = vadd.f32 0.0, %v1251
      %1253 = vdwg.mxu0
      %v1254 = vadd.f32 %v1158, %v1250
      %v1255 = vadd.f32 %v1159, %v1252
      %v1256 = vld [vmem:[%s456 + $0x4] sm:$0xff]
      %v1257 = vld [vmem:[%s456 + $0xc] sm:$0xf]
      %s1258 = scalar_lea.vmem %s3, 64
      %v1259 = vld [vmem:[%s1258] sm:$0xff]
      %v1262 = vcombine.high %v1256, %v1256
      %1263 = vrot.lane.b32.xlu0 %v1256, 78
      %v1264 = vpop.permute.xlu0 %1263
      %1265 = vrot.lane.b32.xlu0 %v1262, 78
      %v1266 = vpop.permute.xlu0 %1265
      %1267 = vrot.lane.b32.xlu0 %v1257, 78
      %v1268 = vpop.permute.xlu0 %1267
      %vm1269 = vcmask 637952
      %v1270 = vsel %vm1269, %v1264, %v1266
      %v1271 = vsel %vm1269, %v1266, %v1268
      %v1273 = vsel %vm370, %v1259, 0
      %v1275 = vsel %vm374, %v1270, 0
      %v1277 = vsel %vm374, %v1271, 0
      %1279 = vmatprep.subr.mxu0 %v1277
      %1280 = vmatpush1.msra.mxu0 %v1275
      %1281 = vmatprep.subr.mxu0 0.0
      %1282 = vmatpush1.msra.mxu0 0.0
      %1283 = vmatprep.subr.mxu0 0.0
      %1284 = vmatpush1.msra.mxu0 0.0
      %1285 = vmatprep.subr.mxu0 0.0
      %1286 = vmatpush1.msra.mxu0 0.0
      %1287 = vmatprep.subr.mxu0 0.0
      %1288 = vmatpush1.msra.mxu0 0.0
      %1289 = vmatprep.subr.mxu0 0.0
      %1290 = vmatpush1.msra.mxu0 0.0
      %1291 = vmatprep.subr.mxu0 0.0
      %1292 = vmatpush1.msra.mxu0 0.0
      %1293 = vmatprep.subr.mxu0 0.0
      %1294 = vmatpush1.msra.mxu0 0.0
      %1295 = vmatprep.subr.mxu0 0.0
      %1296 = vmatpush1.msra.mxu0 0.0
      %1297 = vmatprep.subr.mxu0 0.0
      %1298 = vmatpush1.msra.mxu0 0.0
      %1299 = vmatprep.subr.mxu0 0.0
      %1300 = vmatpush1.msra.mxu0 0.0
      %1301 = vmatprep.subr.mxu0 0.0
      %1302 = vmatpush1.msra.mxu0 0.0
      %1303 = vmatprep.subr.mxu0 0.0
      %1304 = vmatpush1.msra.mxu0 0.0
      %1305 = vmatprep.subr.mxu0 0.0
      %1306 = vmatpush1.msra.mxu0 0.0
      %1307 = vmatprep.subr.mxu0 0.0
      %1308 = vmatpush1.msra.mxu0 0.0
      %1309 = vmatprep.subr.mxu0 0.0
      %1310 = vmatpush1.msra.mxu0 0.0
      %1311 = vmatprep.subr.mxu0 0.0
      %1312 = vmatpush1.msra.mxu0 0.0
      %1313 = vmatprep.subr.mxu0 0.0
      %1314 = vmatpush1.msra.mxu0 0.0
      %1315 = vmatprep.subr.mxu0 0.0
      %1316 = vmatpush1.msra.mxu0 0.0
      %1317 = vmatprep.subr.mxu0 0.0
      %1318 = vmatpush1.msra.mxu0 0.0
      %1319 = vmatprep.subr.mxu0 0.0
      %1320 = vmatpush1.msra.mxu0 0.0
      %1321 = vmatprep.subr.mxu0 0.0
      %1322 = vmatpush1.msra.mxu0 0.0
      %1323 = vmatprep.subr.mxu0 0.0
      %1324 = vmatpush1.msra.mxu0 0.0
      %1325 = vmatprep.subr.mxu0 0.0
      %1326 = vmatpush1.msra.mxu0 0.0
      %1327 = vmatprep.subr.mxu0 0.0
      %1328 = vmatpush1.msra.mxu0 0.0
      %1329 = vmatprep.subr.mxu0 0.0
      %1330 = vmatpush1.msra.mxu0 0.0
      %1331 = vmatprep.subr.mxu0 0.0
      %1332 = vmatpush1.msra.mxu0 0.0
      %1333 = vmatprep.subr.mxu0 0.0
      %1334 = vmatpush1.msra.mxu0 0.0
      %1335 = vmatprep.subr.mxu0 0.0
      %1336 = vmatpush1.msra.mxu0 0.0
      %1337 = vmatprep.subr.mxu0 0.0
      %1338 = vmatpush1.msra.mxu0 0.0
      %1339 = vmatprep.subr.mxu0 0.0
      %1340 = vmatpush1.msra.mxu0 0.0
      %1341 = vmatprep.subr.mxu0 0.0
      %1342 = vmatpush1.msra.mxu0 0.0
      %1343 = vmatprep.mubr.f32.mxu0 0.0
      %1344 = vmatmul.mubr.f32.gmra.mrb[0].mxu0 %v1273
      %v1345 = vpop.f32.mrb[0].mxu0
      %v1346 = vadd.f32 0.0, %v1345
      %v1347 = vpop.f32.mrb[0].mxu0
      %v1348 = vadd.f32 0.0, %v1347
      %1349 = vdwg.mxu0
      %v1350 = vmul.f32 %v1346, %v760
      %v1351 = vmul.f32 %v1348, %v764
      %v1352 = vadd.f32 %v1254, %v1350
      %v1353 = vadd.f32 %v1255, %v1351
      %v1354 = vld [vmem:[%s348] sm:$0xff]
      %v1355 = vld [vmem:[%s348 + $0x8] sm:$0xf]
      %s1356 = scalar_lea.vmem %s3, 72
      %v1357 = vld [vmem:[%s1356] sm:$0xff]
      %v1360 = vcombine.high %v1354, %v1354
      %1361 = vrot.lane.b32.xlu0 %v1354, 18
      %v1362 = vpop.permute.xlu0 %1361
      %1363 = vrot.lane.b32.xlu0 %v1360, 18
      %v1364 = vpop.permute.xlu0 %1363
      %1365 = vrot.lane.b32.xlu0 %v1355, 18
      %v1366 = vpop.permute.xlu0 %1365
      %v1367 = vsel %vm469, %v1362, %v1364
      %v1368 = vsel %vm469, %v1364, %v1366
      %v1370 = vsel %vm370, %v1357, 0
      %v1372 = vsel %vm374, %v1367, 0
      %v1374 = vsel %vm374, %v1368, 0
      %1376 = vmatprep.subr.mxu0 %v1374
      %1377 = vmatpush1.msra.mxu0 %v1372
      %1378 = vmatprep.subr.mxu0 0.0
      %1379 = vmatpush1.msra.mxu0 0.0
      %1380 = vmatprep.subr.mxu0 0.0
      %1381 = vmatpush1.msra.mxu0 0.0
      %1382 = vmatprep.subr.mxu0 0.0
      %1383 = vmatpush1.msra.mxu0 0.0
      %1384 = vmatprep.subr.mxu0 0.0
      %1385 = vmatpush1.msra.mxu0 0.0
      %1386 = vmatprep.subr.mxu0 0.0
      %1387 = vmatpush1.msra.mxu0 0.0
      %1388 = vmatprep.subr.mxu0 0.0
      %1389 = vmatpush1.msra.mxu0 0.0
      %1390 = vmatprep.subr.mxu0 0.0
      %1391 = vmatpush1.msra.mxu0 0.0
      %1392 = vmatprep.subr.mxu0 0.0
      %1393 = vmatpush1.msra.mxu0 0.0
      %1394 = vmatprep.subr.mxu0 0.0
      %1395 = vmatpush1.msra.mxu0 0.0
      %1396 = vmatprep.subr.mxu0 0.0
      %1397 = vmatpush1.msra.mxu0 0.0
      %1398 = vmatprep.subr.mxu0 0.0
      %1399 = vmatpush1.msra.mxu0 0.0
      %1400 = vmatprep.subr.mxu0 0.0
      %1401 = vmatpush1.msra.mxu0 0.0
      %1402 = vmatprep.subr.mxu0 0.0
      %1403 = vmatpush1.msra.mxu0 0.0
      %1404 = vmatprep.subr.mxu0 0.0
      %1405 = vmatpush1.msra.mxu0 0.0
      %1406 = vmatprep.subr.mxu0 0.0
      %1407 = vmatpush1.msra.mxu0 0.0
      %1408 = vmatprep.subr.mxu0 0.0
      %1409 = vmatpush1.msra.mxu0 0.0
      %1410 = vmatprep.subr.mxu0 0.0
      %1411 = vmatpush1.msra.mxu0 0.0
      %1412 = vmatprep.subr.mxu0 0.0
      %1413 = vmatpush1.msra.mxu0 0.0
      %1414 = vmatprep.subr.mxu0 0.0
      %1415 = vmatpush1.msra.mxu0 0.0
      %1416 = vmatprep.subr.mxu0 0.0
      %1417 = vmatpush1.msra.mxu0 0.0
      %1418 = vmatprep.subr.mxu0 0.0
      %1419 = vmatpush1.msra.mxu0 0.0
      %1420 = vmatprep.subr.mxu0 0.0
      %1421 = vmatpush1.msra.mxu0 0.0
      %1422 = vmatprep.subr.mxu0 0.0
      %1423 = vmatpush1.msra.mxu0 0.0
      %1424 = vmatprep.subr.mxu0 0.0
      %1425 = vmatpush1.msra.mxu0 0.0
      %1426 = vmatprep.subr.mxu0 0.0
      %1427 = vmatpush1.msra.mxu0 0.0
      %1428 = vmatprep.subr.mxu0 0.0
      %1429 = vmatpush1.msra.mxu0 0.0
      %1430 = vmatprep.subr.mxu0 0.0
      %1431 = vmatpush1.msra.mxu0 0.0
      %1432 = vmatprep.subr.mxu0 0.0
      %1433 = vmatpush1.msra.mxu0 0.0
      %1434 = vmatprep.subr.mxu0 0.0
      %1435 = vmatpush1.msra.mxu0 0.0
      %1436 = vmatprep.subr.mxu0 0.0
      %1437 = vmatpush1.msra.mxu0 0.0
      %1438 = vmatprep.subr.mxu0 0.0
      %1439 = vmatpush1.msra.mxu0 0.0
      %1440 = vmatprep.mubr.f32.mxu0 0.0
      %1441 = vmatmul.mubr.f32.gmra.mrb[0].mxu0 %v1370
      %v1442 = vpop.f32.mrb[0].mxu0
      %v1443 = vadd.f32 0.0, %v1442
      %v1444 = vpop.f32.mrb[0].mxu0
      %v1445 = vadd.f32 0.0, %v1444
      %1446 = vdwg.mxu0
      %v1447 = vmul.f32 %v1443, %v555
      %v1448 = vmul.f32 %v1445, %v559
      %v1449 = vadd.f32 %v1352, %v1447
      %v1450 = vadd.f32 %v1353, %v1448
      %v1451 = vld [vmem:[%s348] sm:$0xff]
      %v1452 = vld [vmem:[%s348 + $0x8] sm:$0xf]
      %s1453 = scalar_lea.vmem %s3, 80
      %v1454 = vld [vmem:[%s1453] sm:$0xff]
      %v1457 = vcombine.high %v1451, %v1451
      %1458 = vrot.lane.b32.xlu0 %v1451, 16
      %v1459 = vpop.permute.xlu0 %1458
      %1460 = vrot.lane.b32.xlu0 %v1457, 16
      %v1461 = vpop.permute.xlu0 %1460
      %1462 = vrot.lane.b32.xlu0 %v1452, 16
      %v1463 = vpop.permute.xlu0 %1462
      %v1464 = vsel %vm577, %v1459, %v1461
      %v1465 = vsel %vm577, %v1461, %v1463
      %v1467 = vsel %vm370, %v1454, 0
      %v1469 = vsel %vm374, %v1464, 0
      %v1471 = vsel %vm374, %v1465, 0
      %1473 = vmatprep.subr.mxu0 %v1471
      %1474 = vmatpush1.msra.mxu0 %v1469
      %1475 = vmatprep.subr.mxu0 0.0
      %1476 = vmatpush1.msra.mxu0 0.0
      %1477 = vmatprep.subr.mxu0 0.0
      %1478 = vmatpush1.msra.mxu0 0.0
      %1479 = vmatprep.subr.mxu0 0.0
      %1480 = vmatpush1.msra.mxu0 0.0
      %1481 = vmatprep.subr.mxu0 0.0
      %1482 = vmatpush1.msra.mxu0 0.0
      %1483 = vmatprep.subr.mxu0 0.0
      %1484 = vmatpush1.msra.mxu0 0.0
      %1485 = vmatprep.subr.mxu0 0.0
      %1486 = vmatpush1.msra.mxu0 0.0
      %1487 = vmatprep.subr.mxu0 0.0
      %1488 = vmatpush1.msra.mxu0 0.0
      %1489 = vmatprep.subr.mxu0 0.0
      %1490 = vmatpush1.msra.mxu0 0.0
      %1491 = vmatprep.subr.mxu0 0.0
      %1492 = vmatpush1.msra.mxu0 0.0
      %1493 = vmatprep.subr.mxu0 0.0
      %1494 = vmatpush1.msra.mxu0 0.0
      %1495 = vmatprep.subr.mxu0 0.0
      %1496 = vmatpush1.msra.mxu0 0.0
      %1497 = vmatprep.subr.mxu0 0.0
      %1498 = vmatpush1.msra.mxu0 0.0
      %1499 = vmatprep.subr.mxu0 0.0
      %1500 = vmatpush1.msra.mxu0 0.0
      %1501 = vmatprep.subr.mxu0 0.0
      %1502 = vmatpush1.msra.mxu0 0.0
      %1503 = vmatprep.subr.mxu0 0.0
      %1504 = vmatpush1.msra.mxu0 0.0
      %1505 = vmatprep.subr.mxu0 0.0
      %1506 = vmatpush1.msra.mxu0 0.0
      %1507 = vmatprep.subr.mxu0 0.0
      %1508 = vmatpush1.msra.mxu0 0.0
      %1509 = vmatprep.subr.mxu0 0.0
      %1510 = vmatpush1.msra.mxu0 0.0
      %1511 = vmatprep.subr.mxu0 0.0
      %1512 = vmatpush1.msra.mxu0 0.0
      %1513 = vmatprep.subr.mxu0 0.0
      %1514 = vmatpush1.msra.mxu0 0.0
      %1515 = vmatprep.subr.mxu0 0.0
      %1516 = vmatpush1.msra.mxu0 0.0
      %1517 = vmatprep.subr.mxu0 0.0
      %1518 = vmatpush1.msra.mxu0 0.0
      %1519 = vmatprep.subr.mxu0 0.0
      %1520 = vmatpush1.msra.mxu0 0.0
      %1521 = vmatprep.subr.mxu0 0.0
      %1522 = vmatpush1.msra.mxu0 0.0
      %1523 = vmatprep.subr.mxu0 0.0
      %1524 = vmatpush1.msra.mxu0 0.0
      %1525 = vmatprep.subr.mxu0 0.0
      %1526 = vmatpush1.msra.mxu0 0.0
      %1527 = vmatprep.subr.mxu0 0.0
      %1528 = vmatpush1.msra.mxu0 0.0
      %1529 = vmatprep.subr.mxu0 0.0
      %1530 = vmatpush1.msra.mxu0 0.0
      %1531 = vmatprep.subr.mxu0 0.0
      %1532 = vmatpush1.msra.mxu0 0.0
      %1533 = vmatprep.subr.mxu0 0.0
      %1534 = vmatpush1.msra.mxu0 0.0
      %1535 = vmatprep.subr.mxu0 0.0
      %1536 = vmatpush1.msra.mxu0 0.0
      %1537 = vmatprep.mubr.f32.mxu0 0.0
      %1538 = vmatmul.mubr.f32.gmra.mrb[0].mxu0 %v1467
      %v1539 = vpop.f32.mrb[0].mxu0
      %v1540 = vadd.f32 0.0, %v1539
      %v1541 = vpop.f32.mrb[0].mxu0
      %v1542 = vadd.f32 0.0, %v1541
      %1543 = vdwg.mxu0
      %v1544 = vadd.f32 %v1449, %v1540
      %v1545 = vadd.f32 %v1450, %v1542
      %v1546 = vld [vmem:[%s348] sm:$0xff]
      %v1547 = vld [vmem:[%s348 + $0x8] sm:$0xf]
      %s1548 = scalar_lea.vmem %s3, 88
      %v1549 = vld [vmem:[%s1548] sm:$0xff]
      %v1552 = vcombine.high %v1546, %v1546
      %1553 = vrot.lane.b32.xlu0 %v1546, 14
      %v1554 = vpop.permute.xlu0 %1553
      %1555 = vrot.lane.b32.xlu0 %v1552, 14
      %v1556 = vpop.permute.xlu0 %1555
      %1557 = vrot.lane.b32.xlu0 %v1547, 14
      %v1558 = vpop.permute.xlu0 %1557
      %v1559 = vsel %vm673, %v1554, %v1556
      %v1560 = vsel %vm673, %v1556, %v1558
      %v1562 = vsel %vm370, %v1549, 0
      %v1564 = vsel %vm374, %v1559, 0
      %v1566 = vsel %vm374, %v1560, 0
      %1568 = vmatprep.subr.mxu0 %v1566
      %1569 = vmatpush1.msra.mxu0 %v1564
      %1570 = vmatprep.subr.mxu0 0.0
      %1571 = vmatpush1.msra.mxu0 0.0
      %1572 = vmatprep.subr.mxu0 0.0
      %1573 = vmatpush1.msra.mxu0 0.0
      %1574 = vmatprep.subr.mxu0 0.0
      %1575 = vmatpush1.msra.mxu0 0.0
      %1576 = vmatprep.subr.mxu0 0.0
      %1577 = vmatpush1.msra.mxu0 0.0
      %1578 = vmatprep.subr.mxu0 0.0
      %1579 = vmatpush1.msra.mxu0 0.0
      %1580 = vmatprep.subr.mxu0 0.0
      %1581 = vmatpush1.msra.mxu0 0.0
      %1582 = vmatprep.subr.mxu0 0.0
      %1583 = vmatpush1.msra.mxu0 0.0
      %1584 = vmatprep.subr.mxu0 0.0
      %1585 = vmatpush1.msra.mxu0 0.0
      %1586 = vmatprep.subr.mxu0 0.0
      %1587 = vmatpush1.msra.mxu0 0.0
      %1588 = vmatprep.subr.mxu0 0.0
      %1589 = vmatpush1.msra.mxu0 0.0
      %1590 = vmatprep.subr.mxu0 0.0
      %1591 = vmatpush1.msra.mxu0 0.0
      %1592 = vmatprep.subr.mxu0 0.0
      %1593 = vmatpush1.msra.mxu0 0.0
      %1594 = vmatprep.subr.mxu0 0.0
      %1595 = vmatpush1.msra.mxu0 0.0
      %1596 = vmatprep.subr.mxu0 0.0
      %1597 = vmatpush1.msra.mxu0 0.0
      %1598 = vmatprep.subr.mxu0 0.0
      %1599 = vmatpush1.msra.mxu0 0.0
      %1600 = vmatprep.subr.mxu0 0.0
      %1601 = vmatpush1.msra.mxu0 0.0
      %1602 = vmatprep.subr.mxu0 0.0
      %1603 = vmatpush1.msra.mxu0 0.0
      %1604 = vmatprep.subr.mxu0 0.0
      %1605 = vmatpush1.msra.mxu0 0.0
      %1606 = vmatprep.subr.mxu0 0.0
      %1607 = vmatpush1.msra.mxu0 0.0
      %1608 = vmatprep.subr.mxu0 0.0
      %1609 = vmatpush1.msra.mxu0 0.0
      %1610 = vmatprep.subr.mxu0 0.0
      %1611 = vmatpush1.msra.mxu0 0.0
      %1612 = vmatprep.subr.mxu0 0.0
      %1613 = vmatpush1.msra.mxu0 0.0
      %1614 = vmatprep.subr.mxu0 0.0
      %1615 = vmatpush1.msra.mxu0 0.0
      %1616 = vmatprep.subr.mxu0 0.0
      %1617 = vmatpush1.msra.mxu0 0.0
      %1618 = vmatprep.subr.mxu0 0.0
      %1619 = vmatpush1.msra.mxu0 0.0
      %1620 = vmatprep.subr.mxu0 0.0
      %1621 = vmatpush1.msra.mxu0 0.0
      %1622 = vmatprep.subr.mxu0 0.0
      %1623 = vmatpush1.msra.mxu0 0.0
      %1624 = vmatprep.subr.mxu0 0.0
      %1625 = vmatpush1.msra.mxu0 0.0
      %1626 = vmatprep.subr.mxu0 0.0
      %1627 = vmatpush1.msra.mxu0 0.0
      %1628 = vmatprep.subr.mxu0 0.0
      %1629 = vmatpush1.msra.mxu0 0.0
      %1630 = vmatprep.subr.mxu0 0.0
      %1631 = vmatpush1.msra.mxu0 0.0
      %1632 = vmatprep.mubr.f32.mxu0 0.0
      %1633 = vmatmul.mubr.f32.gmra.mrb[0].mxu0 %v1562
      %v1634 = vpop.f32.mrb[0].mxu0
      %v1635 = vadd.f32 0.0, %v1634
      %v1636 = vpop.f32.mrb[0].mxu0
      %v1637 = vadd.f32 0.0, %v1636
      %1638 = vdwg.mxu0
      %v1639 = vmul.f32 %v1635, %v760
      %v1640 = vmul.f32 %v1637, %v764
      %v1641 = vadd.f32 %v1544, %v1639
      %v1642 = vadd.f32 %v1545, %v1640
      %v1643 = vld [vmem:[%s348 + $0x4] sm:$0xff]
      %v1644 = vld [vmem:[%s348 + $0xc] sm:$0xf]
      %s1645 = scalar_lea.vmem %s3, 96
      %v1646 = vld [vmem:[%s1645] sm:$0xff]
      %v1649 = vcombine.high %v1643, %v1643
      %1650 = vrot.lane.b32.xlu0 %v1643, 114
      %v1651 = vpop.permute.xlu0 %1650
      %1652 = vrot.lane.b32.xlu0 %v1649, 114
      %v1653 = vpop.permute.xlu0 %1652
      %1654 = vrot.lane.b32.xlu0 %v1644, 114
      %v1655 = vpop.permute.xlu0 %1654
      %v1656 = vsel %vm784, %v1651, %v1653
      %v1657 = vsel %vm784, %v1653, %v1655
      %v1659 = vsel %vm370, %v1646, 0
      %v1661 = vsel %vm374, %v1656, 0
      %v1663 = vsel %vm374, %v1657, 0
      %1665 = vmatprep.subr.mxu0 %v1663
      %1666 = vmatpush1.msra.mxu0 %v1661
      %1667 = vmatprep.subr.mxu0 0.0
      %1668 = vmatpush1.msra.mxu0 0.0
      %1669 = vmatprep.subr.mxu0 0.0
      %1670 = vmatpush1.msra.mxu0 0.0
      %1671 = vmatprep.subr.mxu0 0.0
      %1672 = vmatpush1.msra.mxu0 0.0
      %1673 = vmatprep.subr.mxu0 0.0
      %1674 = vmatpush1.msra.mxu0 0.0
      %1675 = vmatprep.subr.mxu0 0.0
      %1676 = vmatpush1.msra.mxu0 0.0
      %1677 = vmatprep.subr.mxu0 0.0
      %1678 = vmatpush1.msra.mxu0 0.0
      %1679 = vmatprep.subr.mxu0 0.0
      %1680 = vmatpush1.msra.mxu0 0.0
      %1681 = vmatprep.subr.mxu0 0.0
      %1682 = vmatpush1.msra.mxu0 0.0
      %1683 = vmatprep.subr.mxu0 0.0
      %1684 = vmatpush1.msra.mxu0 0.0
      %1685 = vmatprep.subr.mxu0 0.0
      %1686 = vmatpush1.msra.mxu0 0.0
      %1687 = vmatprep.subr.mxu0 0.0
      %1688 = vmatpush1.msra.mxu0 0.0
      %1689 = vmatprep.subr.mxu0 0.0
      %1690 = vmatpush1.msra.mxu0 0.0
      %1691 = vmatprep.subr.mxu0 0.0
      %1692 = vmatpush1.msra.mxu0 0.0
      %1693 = vmatprep.subr.mxu0 0.0
      %1694 = vmatpush1.msra.mxu0 0.0
      %1695 = vmatprep.subr.mxu0 0.0
      %1696 = vmatpush1.msra.mxu0 0.0
      %1697 = vmatprep.subr.mxu0 0.0
      %1698 = vmatpush1.msra.mxu0 0.0
      %1699 = vmatprep.subr.mxu0 0.0
      %1700 = vmatpush1.msra.mxu0 0.0
      %1701 = vmatprep.subr.mxu0 0.0
      %1702 = vmatpush1.msra.mxu0 0.0
      %1703 = vmatprep.subr.mxu0 0.0
      %1704 = vmatpush1.msra.mxu0 0.0
      %1705 = vmatprep.subr.mxu0 0.0
      %1706 = vmatpush1.msra.mxu0 0.0
      %1707 = vmatprep.subr.mxu0 0.0
      %1708 = vmatpush1.msra.mxu0 0.0
      %1709 = vmatprep.subr.mxu0 0.0
      %1710 = vmatpush1.msra.mxu0 0.0
      %1711 = vmatprep.subr.mxu0 0.0
      %1712 = vmatpush1.msra.mxu0 0.0
      %1713 = vmatprep.subr.mxu0 0.0
      %1714 = vmatpush1.msra.mxu0 0.0
      %1715 = vmatprep.subr.mxu0 0.0
      %1716 = vmatpush1.msra.mxu0 0.0
      %1717 = vmatprep.subr.mxu0 0.0
      %1718 = vmatpush1.msra.mxu0 0.0
      %1719 = vmatprep.subr.mxu0 0.0
      %1720 = vmatpush1.msra.mxu0 0.0
      %1721 = vmatprep.subr.mxu0 0.0
      %1722 = vmatpush1.msra.mxu0 0.0
      %1723 = vmatprep.subr.mxu0 0.0
      %1724 = vmatpush1.msra.mxu0 0.0
      %1725 = vmatprep.subr.mxu0 0.0
      %1726 = vmatpush1.msra.mxu0 0.0
      %1727 = vmatprep.subr.mxu0 0.0
      %1728 = vmatpush1.msra.mxu0 0.0
      %1729 = vmatprep.mubr.f32.mxu0 0.0
      %1730 = vmatmul.mubr.f32.gmra.mrb[0].mxu0 %v1659
      %v1731 = vpop.f32.mrb[0].mxu0
      %v1732 = vadd.f32 0.0, %v1731
      %v1733 = vpop.f32.mrb[0].mxu0
      %v1734 = vadd.f32 0.0, %v1733
      %1735 = vdwg.mxu0
      %v1736 = vmul.f32 %v1732, %v555
      %v1737 = vmul.f32 %v1734, %v559
      %v1738 = vadd.f32 %v1641, %v1736
      %v1739 = vadd.f32 %v1642, %v1737
      %s1740 = scalar_lea.vmem %s3, 104
      %v1741 = vld [vmem:[%s1740] sm:$0xff]
      %v1743 = vsel %vm370, %v1741, 0
      %1745 = vmatprep.subr.mxu0 %v377
      %1746 = vmatpush1.msra.mxu0 %v375
      %1747 = vmatprep.subr.mxu0 0.0
      %1748 = vmatpush1.msra.mxu0 0.0
      %1749 = vmatprep.subr.mxu0 0.0
      %1750 = vmatpush1.msra.mxu0 0.0
      %1751 = vmatprep.subr.mxu0 0.0
      %1752 = vmatpush1.msra.mxu0 0.0
      %1753 = vmatprep.subr.mxu0 0.0
      %1754 = vmatpush1.msra.mxu0 0.0
      %1755 = vmatprep.subr.mxu0 0.0
      %1756 = vmatpush1.msra.mxu0 0.0
      %1757 = vmatprep.subr.mxu0 0.0
      %1758 = vmatpush1.msra.mxu0 0.0
      %1759 = vmatprep.subr.mxu0 0.0
      %1760 = vmatpush1.msra.mxu0 0.0
      %1761 = vmatprep.subr.mxu0 0.0
      %1762 = vmatpush1.msra.mxu0 0.0
      %1763 = vmatprep.subr.mxu0 0.0
      %1764 = vmatpush1.msra.mxu0 0.0
      %1765 = vmatprep.subr.mxu0 0.0
      %1766 = vmatpush1.msra.mxu0 0.0
      %1767 = vmatprep.subr.mxu0 0.0
      %1768 = vmatpush1.msra.mxu0 0.0
      %1769 = vmatprep.subr.mxu0 0.0
      %1770 = vmatpush1.msra.mxu0 0.0
      %1771 = vmatprep.subr.mxu0 0.0
      %1772 = vmatpush1.msra.mxu0 0.0
      %1773 = vmatprep.subr.mxu0 0.0
      %1774 = vmatpush1.msra.mxu0 0.0
      %1775 = vmatprep.subr.mxu0 0.0
      %1776 = vmatpush1.msra.mxu0 0.0
      %1777 = vmatprep.subr.mxu0 0.0
      %1778 = vmatpush1.msra.mxu0 0.0
      %1779 = vmatprep.subr.mxu0 0.0
      %1780 = vmatpush1.msra.mxu0 0.0
      %1781 = vmatprep.subr.mxu0 0.0
      %1782 = vmatpush1.msra.mxu0 0.0
      %1783 = vmatprep.subr.mxu0 0.0
      %1784 = vmatpush1.msra.mxu0 0.0
      %1785 = vmatprep.subr.mxu0 0.0
      %1786 = vmatpush1.msra.mxu0 0.0
      %1787 = vmatprep.subr.mxu0 0.0
      %1788 = vmatpush1.msra.mxu0 0.0
      %1789 = vmatprep.subr.mxu0 0.0
      %1790 = vmatpush1.msra.mxu0 0.0
      %1791 = vmatprep.subr.mxu0 0.0
      %1792 = vmatpush1.msra.mxu0 0.0
      %1793 = vmatprep.subr.mxu0 0.0
      %1794 = vmatpush1.msra.mxu0 0.0
      %1795 = vmatprep.subr.mxu0 0.0
      %1796 = vmatpush1.msra.mxu0 0.0
      %1797 = vmatprep.subr.mxu0 0.0
      %1798 = vmatpush1.msra.mxu0 0.0
      %1799 = vmatprep.subr.mxu0 0.0
      %1800 = vmatpush1.msra.mxu0 0.0
      %1801 = vmatprep.subr.mxu0 0.0
      %1802 = vmatpush1.msra.mxu0 0.0
      %1803 = vmatprep.subr.mxu0 0.0
      %1804 = vmatpush1.msra.mxu0 0.0
      %1805 = vmatprep.subr.mxu0 0.0
      %1806 = vmatpush1.msra.mxu0 0.0
      %1807 = vmatprep.subr.mxu0 0.0
      %1808 = vmatpush1.msra.mxu0 0.0
      %1809 = vmatprep.mubr.f32.mxu0 0.0
      %1810 = vmatmul.mubr.f32.gmra.mrb[0].mxu0 %v1743
      %v1811 = vpop.f32.mrb[0].mxu0
      %v1812 = vadd.f32 0.0, %v1811
      %v1813 = vpop.f32.mrb[0].mxu0
      %v1814 = vadd.f32 0.0, %v1813
      %1815 = vdwg.mxu0
      %v1816 = vadd.f32 %v1738, %v1812
      %v1817 = vadd.f32 %v1739, %v1814
      %v1818 = vld [vmem:[%s348 + $0x4] sm:$0xff]
      %v1819 = vld [vmem:[%s348 + $0xc] sm:$0xf]
      %s1820 = scalar_lea.vmem %s3, 112
      %v1821 = vld [vmem:[%s1820] sm:$0xff]
      %v1824 = vcombine.high %v1818, %v1818
      %1825 = vrot.lane.b32.xlu0 %v1818, 110
      %v1826 = vpop.permute.xlu0 %1825
      %1827 = vrot.lane.b32.xlu0 %v1824, 110
      %v1828 = vpop.permute.xlu0 %1827
      %1829 = vrot.lane.b32.xlu0 %v1819, 110
      %v1830 = vpop.permute.xlu0 %1829
      %v1831 = vsel %vm977, %v1826, %v1828
      %v1832 = vsel %vm977, %v1828, %v1830
      %v1834 = vsel %vm370, %v1821, 0
      %v1836 = vsel %vm374, %v1831, 0
      %v1838 = vsel %vm374, %v1832, 0
      %1840 = vmatprep.subr.mxu0 %v1838
      %1841 = vmatpush1.msra.mxu0 %v1836
      %1842 = vmatprep.subr.mxu0 0.0
      %1843 = vmatpush1.msra.mxu0 0.0
      %1844 = vmatprep.subr.mxu0 0.0
      %1845 = vmatpush1.msra.mxu0 0.0
      %1846 = vmatprep.subr.mxu0 0.0
      %1847 = vmatpush1.msra.mxu0 0.0
      %1848 = vmatprep.subr.mxu0 0.0
      %1849 = vmatpush1.msra.mxu0 0.0
      %1850 = vmatprep.subr.mxu0 0.0
      %1851 = vmatpush1.msra.mxu0 0.0
      %1852 = vmatprep.subr.mxu0 0.0
      %1853 = vmatpush1.msra.mxu0 0.0
      %1854 = vmatprep.subr.mxu0 0.0
      %1855 = vmatpush1.msra.mxu0 0.0
      %1856 = vmatprep.subr.mxu0 0.0
      %1857 = vmatpush1.msra.mxu0 0.0
      %1858 = vmatprep.subr.mxu0 0.0
      %1859 = vmatpush1.msra.mxu0 0.0
      %1860 = vmatprep.subr.mxu0 0.0
      %1861 = vmatpush1.msra.mxu0 0.0
      %1862 = vmatprep.subr.mxu0 0.0
      %1863 = vmatpush1.msra.mxu0 0.0
      %1864 = vmatprep.subr.mxu0 0.0
      %1865 = vmatpush1.msra.mxu0 0.0
      %1866 = vmatprep.subr.mxu0 0.0
      %1867 = vmatpush1.msra.mxu0 0.0
      %1868 = vmatprep.subr.mxu0 0.0
      %1869 = vmatpush1.msra.mxu0 0.0
      %1870 = vmatprep.subr.mxu0 0.0
      %1871 = vmatpush1.msra.mxu0 0.0
      %1872 = vmatprep.subr.mxu0 0.0
      %1873 = vmatpush1.msra.mxu0 0.0
      %1874 = vmatprep.subr.mxu0 0.0
      %1875 = vmatpush1.msra.mxu0 0.0
      %1876 = vmatprep.subr.mxu0 0.0
      %1877 = vmatpush1.msra.mxu0 0.0
      %1878 = vmatprep.subr.mxu0 0.0
      %1879 = vmatpush1.msra.mxu0 0.0
      %1880 = vmatprep.subr.mxu0 0.0
      %1881 = vmatpush1.msra.mxu0 0.0
      %1882 = vmatprep.subr.mxu0 0.0
      %1883 = vmatpush1.msra.mxu0 0.0
      %1884 = vmatprep.subr.mxu0 0.0
      %1885 = vmatpush1.msra.mxu0 0.0
      %1886 = vmatprep.subr.mxu0 0.0
      %1887 = vmatpush1.msra.mxu0 0.0
      %1888 = vmatprep.subr.mxu0 0.0
      %1889 = vmatpush1.msra.mxu0 0.0
      %1890 = vmatprep.subr.mxu0 0.0
      %1891 = vmatpush1.msra.mxu0 0.0
      %1892 = vmatprep.subr.mxu0 0.0
      %1893 = vmatpush1.msra.mxu0 0.0
      %1894 = vmatprep.subr.mxu0 0.0
      %1895 = vmatpush1.msra.mxu0 0.0
      %1896 = vmatprep.subr.mxu0 0.0
      %1897 = vmatpush1.msra.mxu0 0.0
      %1898 = vmatprep.subr.mxu0 0.0
      %1899 = vmatpush1.msra.mxu0 0.0
      %1900 = vmatprep.subr.mxu0 0.0
      %1901 = vmatpush1.msra.mxu0 0.0
      %1902 = vmatprep.subr.mxu0 0.0
      %1903 = vmatpush1.msra.mxu0 0.0
      %1904 = vmatprep.mubr.f32.mxu0 0.0
      %1905 = vmatmul.mubr.f32.gmra.mrb[0].mxu0 %v1834
      %v1906 = vpop.f32.mrb[0].mxu0
      %v1907 = vadd.f32 0.0, %v1906
      %v1908 = vpop.f32.mrb[0].mxu0
      %v1909 = vadd.f32 0.0, %v1908
      %1910 = vdwg.mxu0
      %v1911 = vmul.f32 %v1907, %v760
      %v1912 = vmul.f32 %v1909, %v764
      %v1913 = vadd.f32 %v1816, %v1911
      %v1914 = vadd.f32 %v1817, %v1912
      %v1915 = vld [vmem:[%s348 + $0x4] sm:$0xff]
      %v1916 = vld [vmem:[%s348 + $0xc] sm:$0xf]
      %s1917 = scalar_lea.vmem %s3, 120
      %v1918 = vld [vmem:[%s1917] sm:$0xff]
      %v1921 = vcombine.high %v1915, %v1915
      %1922 = vrot.lane.b32.xlu0 %v1915, 82
      %v1923 = vpop.permute.xlu0 %1922
      %1924 = vrot.lane.b32.xlu0 %v1921, 82
      %v1925 = vpop.permute.xlu0 %1924
      %1926 = vrot.lane.b32.xlu0 %v1916, 82
      %v1927 = vpop.permute.xlu0 %1926
      %v1928 = vsel %vm1075, %v1923, %v1925
      %v1929 = vsel %vm1075, %v1925, %v1927
      %v1931 = vsel %vm370, %v1918, 0
      %v1933 = vsel %vm374, %v1928, 0
      %v1935 = vsel %vm374, %v1929, 0
      %1937 = vmatprep.subr.mxu0 %v1935
      %1938 = vmatpush1.msra.mxu0 %v1933
      %1939 = vmatprep.subr.mxu0 0.0
      %1940 = vmatpush1.msra.mxu0 0.0
      %1941 = vmatprep.subr.mxu0 0.0
      %1942 = vmatpush1.msra.mxu0 0.0
      %1943 = vmatprep.subr.mxu0 0.0
      %1944 = vmatpush1.msra.mxu0 0.0
      %1945 = vmatprep.subr.mxu0 0.0
      %1946 = vmatpush1.msra.mxu0 0.0
      %1947 = vmatprep.subr.mxu0 0.0
      %1948 = vmatpush1.msra.mxu0 0.0
      %1949 = vmatprep.subr.mxu0 0.0
      %1950 = vmatpush1.msra.mxu0 0.0
      %1951 = vmatprep.subr.mxu0 0.0
      %1952 = vmatpush1.msra.mxu0 0.0
      %1953 = vmatprep.subr.mxu0 0.0
      %1954 = vmatpush1.msra.mxu0 0.0
      %1955 = vmatprep.subr.mxu0 0.0
      %1956 = vmatpush1.msra.mxu0 0.0
      %1957 = vmatprep.subr.mxu0 0.0
      %1958 = vmatpush1.msra.mxu0 0.0
      %1959 = vmatprep.subr.mxu0 0.0
      %1960 = vmatpush1.msra.mxu0 0.0
      %1961 = vmatprep.subr.mxu0 0.0
      %1962 = vmatpush1.msra.mxu0 0.0
      %1963 = vmatprep.subr.mxu0 0.0
      %1964 = vmatpush1.msra.mxu0 0.0
      %1965 = vmatprep.subr.mxu0 0.0
      %1966 = vmatpush1.msra.mxu0 0.0
      %1967 = vmatprep.subr.mxu0 0.0
      %1968 = vmatpush1.msra.mxu0 0.0
      %1969 = vmatprep.subr.mxu0 0.0
      %1970 = vmatpush1.msra.mxu0 0.0
      %1971 = vmatprep.subr.mxu0 0.0
      %1972 = vmatpush1.msra.mxu0 0.0
      %1973 = vmatprep.subr.mxu0 0.0
      %1974 = vmatpush1.msra.mxu0 0.0
      %1975 = vmatprep.subr.mxu0 0.0
      %1976 = vmatpush1.msra.mxu0 0.0
      %1977 = vmatprep.subr.mxu0 0.0
      %1978 = vmatpush1.msra.mxu0 0.0
      %1979 = vmatprep.subr.mxu0 0.0
      %1980 = vmatpush1.msra.mxu0 0.0
      %1981 = vmatprep.subr.mxu0 0.0
      %1982 = vmatpush1.msra.mxu0 0.0
      %1983 = vmatprep.subr.mxu0 0.0
      %1984 = vmatpush1.msra.mxu0 0.0
      %1985 = vmatprep.subr.mxu0 0.0
      %1986 = vmatpush1.msra.mxu0 0.0
      %1987 = vmatprep.subr.mxu0 0.0
      %1988 = vmatpush1.msra.mxu0 0.0
      %1989 = vmatprep.subr.mxu0 0.0
      %1990 = vmatpush1.msra.mxu0 0.0
      %1991 = vmatprep.subr.mxu0 0.0
      %1992 = vmatpush1.msra.mxu0 0.0
      %1993 = vmatprep.subr.mxu0 0.0
      %1994 = vmatpush1.msra.mxu0 0.0
      %1995 = vmatprep.subr.mxu0 0.0
      %1996 = vmatpush1.msra.mxu0 0.0
      %1997 = vmatprep.subr.mxu0 0.0
      %1998 = vmatpush1.msra.mxu0 0.0
      %1999 = vmatprep.subr.mxu0 0.0
      %2000 = vmatpush1.msra.mxu0 0.0
      %2001 = vmatprep.mubr.f32.mxu0 0.0
      %2002 = vmatmul.mubr.f32.gmra.mrb[0].mxu0 %v1931
      %v2003 = vpop.f32.mrb[0].mxu0
      %v2004 = vadd.f32 0.0, %v2003
      %v2005 = vpop.f32.mrb[0].mxu0
      %v2006 = vadd.f32 0.0, %v2005
      %2007 = vdwg.mxu0
      %v2008 = vmul.f32 %v2004, %v555
      %v2009 = vmul.f32 %v2006, %v559
      %v2010 = vadd.f32 %v1913, %v2008
      %v2011 = vadd.f32 %v1914, %v2009
      %v2012 = vld [vmem:[%s348 + $0x4] sm:$0xff]
      %v2013 = vld [vmem:[%s348 + $0xc] sm:$0xf]
      %s2014 = scalar_lea.vmem %s3, 128
      %v2015 = vld [vmem:[%s2014] sm:$0xff]
      %v2018 = vcombine.high %v2012, %v2012
      %2019 = vrot.lane.b32.xlu0 %v2012, 80
      %v2020 = vpop.permute.xlu0 %2019
      %2021 = vrot.lane.b32.xlu0 %v2018, 80
      %v2022 = vpop.permute.xlu0 %2021
      %2023 = vrot.lane.b32.xlu0 %v2013, 80
      %v2024 = vpop.permute.xlu0 %2023
      %v2025 = vsel %vm1173, %v2020, %v2022
      %v2026 = vsel %vm1173, %v2022, %v2024
      %v2028 = vsel %vm370, %v2015, 0
      %v2030 = vsel %vm374, %v2025, 0
      %v2032 = vsel %vm374, %v2026, 0
      %2034 = vmatprep.subr.mxu0 %v2032
      %2035 = vmatpush1.msra.mxu0 %v2030
      %2036 = vmatprep.subr.mxu0 0.0
      %2037 = vmatpush1.msra.mxu0 0.0
      %2038 = vmatprep.subr.mxu0 0.0
      %2039 = vmatpush1.msra.mxu0 0.0
      %2040 = vmatprep.subr.mxu0 0.0
      %2041 = vmatpush1.msra.mxu0 0.0
      %2042 = vmatprep.subr.mxu0 0.0
      %2043 = vmatpush1.msra.mxu0 0.0
      %2044 = vmatprep.subr.mxu0 0.0
      %2045 = vmatpush1.msra.mxu0 0.0
      %2046 = vmatprep.subr.mxu0 0.0
      %2047 = vmatpush1.msra.mxu0 0.0
      %2048 = vmatprep.subr.mxu0 0.0
      %2049 = vmatpush1.msra.mxu0 0.0
      %2050 = vmatprep.subr.mxu0 0.0
      %2051 = vmatpush1.msra.mxu0 0.0
      %2052 = vmatprep.subr.mxu0 0.0
      %2053 = vmatpush1.msra.mxu0 0.0
      %2054 = vmatprep.subr.mxu0 0.0
      %2055 = vmatpush1.msra.mxu0 0.0
      %2056 = vmatprep.subr.mxu0 0.0
      %2057 = vmatpush1.msra.mxu0 0.0
      %2058 = vmatprep.subr.mxu0 0.0
      %2059 = vmatpush1.msra.mxu0 0.0
      %2060 = vmatprep.subr.mxu0 0.0
      %2061 = vmatpush1.msra.mxu0 0.0
      %2062 = vmatprep.subr.mxu0 0.0
      %2063 = vmatpush1.msra.mxu0 0.0
      %2064 = vmatprep.subr.mxu0 0.0
      %2065 = vmatpush1.msra.mxu0 0.0
      %2066 = vmatprep.subr.mxu0 0.0
      %2067 = vmatpush1.msra.mxu0 0.0
      %2068 = vmatprep.subr.mxu0 0.0
      %2069 = vmatpush1.msra.mxu0 0.0
      %2070 = vmatprep.subr.mxu0 0.0
      %2071 = vmatpush1.msra.mxu0 0.0
      %2072 = vmatprep.subr.mxu0 0.0
      %2073 = vmatpush1.msra.mxu0 0.0
      %2074 = vmatprep.subr.mxu0 0.0
      %2075 = vmatpush1.msra.mxu0 0.0
      %2076 = vmatprep.subr.mxu0 0.0
      %2077 = vmatpush1.msra.mxu0 0.0
      %2078 = vmatprep.subr.mxu0 0.0
      %2079 = vmatpush1.msra.mxu0 0.0
      %2080 = vmatprep.subr.mxu0 0.0
      %2081 = vmatpush1.msra.mxu0 0.0
      %2082 = vmatprep.subr.mxu0 0.0
      %2083 = vmatpush1.msra.mxu0 0.0
      %2084 = vmatprep.subr.mxu0 0.0
      %2085 = vmatpush1.msra.mxu0 0.0
      %2086 = vmatprep.subr.mxu0 0.0
      %2087 = vmatpush1.msra.mxu0 0.0
      %2088 = vmatprep.subr.mxu0 0.0
      %2089 = vmatpush1.msra.mxu0 0.0
      %2090 = vmatprep.subr.mxu0 0.0
      %2091 = vmatpush1.msra.mxu0 0.0
      %2092 = vmatprep.subr.mxu0 0.0
      %2093 = vmatpush1.msra.mxu0 0.0
      %2094 = vmatprep.subr.mxu0 0.0
      %2095 = vmatpush1.msra.mxu0 0.0
      %2096 = vmatprep.subr.mxu0 0.0
      %2097 = vmatpush1.msra.mxu0 0.0
      %2098 = vmatprep.mubr.f32.mxu0 0.0
      %2099 = vmatmul.mubr.f32.gmra.mrb[0].mxu0 %v2028
      %v2100 = vpop.f32.mrb[0].mxu0
      %v2101 = vadd.f32 0.0, %v2100
      %v2102 = vpop.f32.mrb[0].mxu0
      %v2103 = vadd.f32 0.0, %v2102
      %2104 = vdwg.mxu0
      %v2105 = vadd.f32 %v2010, %v2101
      %v2106 = vadd.f32 %v2011, %v2103
      %v2107 = vld [vmem:[%s348 + $0x4] sm:$0xff]
      %v2108 = vld [vmem:[%s348 + $0xc] sm:$0xf]
      %s2109 = scalar_lea.vmem %s3, 136
      %v2110 = vld [vmem:[%s2109] sm:$0xff]
      %v2113 = vcombine.high %v2107, %v2107
      %2114 = vrot.lane.b32.xlu0 %v2107, 78
      %v2115 = vpop.permute.xlu0 %2114
      %2116 = vrot.lane.b32.xlu0 %v2113, 78
      %v2117 = vpop.permute.xlu0 %2116
      %2118 = vrot.lane.b32.xlu0 %v2108, 78
      %v2119 = vpop.permute.xlu0 %2118
      %v2120 = vsel %vm1269, %v2115, %v2117
      %v2121 = vsel %vm1269, %v2117, %v2119
      %v2123 = vsel %vm370, %v2110, 0
      %v2125 = vsel %vm374, %v2120, 0
      %v2127 = vsel %vm374, %v2121, 0
      %2129 = vmatprep.subr.mxu0 %v2127
      %2130 = vmatpush1.msra.mxu0 %v2125
      %2131 = vmatprep.subr.mxu0 0.0
      %2132 = vmatpush1.msra.mxu0 0.0
      %2133 = vmatprep.subr.mxu0 0.0
      %2134 = vmatpush1.msra.mxu0 0.0
      %2135 = vmatprep.subr.mxu0 0.0
      %2136 = vmatpush1.msra.mxu0 0.0
      %2137 = vmatprep.subr.mxu0 0.0
      %2138 = vmatpush1.msra.mxu0 0.0
      %2139 = vmatprep.subr.mxu0 0.0
      %2140 = vmatpush1.msra.mxu0 0.0
      %2141 = vmatprep.subr.mxu0 0.0
      %2142 = vmatpush1.msra.mxu0 0.0
      %2143 = vmatprep.subr.mxu0 0.0
      %2144 = vmatpush1.msra.mxu0 0.0
      %2145 = vmatprep.subr.mxu0 0.0
      %2146 = vmatpush1.msra.mxu0 0.0
      %2147 = vmatprep.subr.mxu0 0.0
      %2148 = vmatpush1.msra.mxu0 0.0
      %2149 = vmatprep.subr.mxu0 0.0
      %2150 = vmatpush1.msra.mxu0 0.0
      %2151 = vmatprep.subr.mxu0 0.0
      %2152 = vmatpush1.msra.mxu0 0.0
      %2153 = vmatprep.subr.mxu0 0.0
      %2154 = vmatpush1.msra.mxu0 0.0
      %2155 = vmatprep.subr.mxu0 0.0
      %2156 = vmatpush1.msra.mxu0 0.0
      %2157 = vmatprep.subr.mxu0 0.0
      %2158 = vmatpush1.msra.mxu0 0.0
      %2159 = vmatprep.subr.mxu0 0.0
      %2160 = vmatpush1.msra.mxu0 0.0
      %2161 = vmatprep.subr.mxu0 0.0
      %2162 = vmatpush1.msra.mxu0 0.0
      %2163 = vmatprep.subr.mxu0 0.0
      %2164 = vmatpush1.msra.mxu0 0.0
      %2165 = vmatprep.subr.mxu0 0.0
      %2166 = vmatpush1.msra.mxu0 0.0
      %2167 = vmatprep.subr.mxu0 0.0
      %2168 = vmatpush1.msra.mxu0 0.0
      %2169 = vmatprep.subr.mxu0 0.0
      %2170 = vmatpush1.msra.mxu0 0.0
      %2171 = vmatprep.subr.mxu0 0.0
      %2172 = vmatpush1.msra.mxu0 0.0
      %2173 = vmatprep.subr.mxu0 0.0
      %2174 = vmatpush1.msra.mxu0 0.0
      %2175 = vmatprep.subr.mxu0 0.0
      %2176 = vmatpush1.msra.mxu0 0.0
      %2177 = vmatprep.subr.mxu0 0.0
      %2178 = vmatpush1.msra.mxu0 0.0
      %2179 = vmatprep.subr.mxu0 0.0
      %2180 = vmatpush1.msra.mxu0 0.0
      %2181 = vmatprep.subr.mxu0 0.0
      %2182 = vmatpush1.msra.mxu0 0.0
      %2183 = vmatprep.subr.mxu0 0.0
      %2184 = vmatpush1.msra.mxu0 0.0
      %2185 = vmatprep.subr.mxu0 0.0
      %2186 = vmatpush1.msra.mxu0 0.0
      %2187 = vmatprep.subr.mxu0 0.0
      %2188 = vmatpush1.msra.mxu0 0.0
      %2189 = vmatprep.subr.mxu0 0.0
      %2190 = vmatpush1.msra.mxu0 0.0
      %2191 = vmatprep.subr.mxu0 0.0
      %2192 = vmatpush1.msra.mxu0 0.0
      %2193 = vmatprep.mubr.f32.mxu0 0.0
      %2194 = vmatmul.mubr.f32.gmra.mrb[0].mxu0 %v2123
      %v2195 = vpop.f32.mrb[0].mxu0
      %v2196 = vadd.f32 0.0, %v2195
      %v2197 = vpop.f32.mrb[0].mxu0
      %v2198 = vadd.f32 0.0, %v2197
      %2199 = vdwg.mxu0
      %v2200 = vmul.f32 %v2196, %v760
      %v2201 = vmul.f32 %v2198, %v764
      %v2202 = vadd.f32 %v2105, %v2200
      %v2203 = vadd.f32 %v2106, %v2201
      %s2204 = sadd.s32 %s24, 10
      %s2205 = smul.u32 %s2204, 5
      %s2206 = smul.addr %s2205, 4
      %s2207 = scalar_lea.vmem %s331, %s2206
      %v2208 = vld [vmem:[%s2207] sm:$0xff]
      %v2209 = vld [vmem:[%s2207 + $0x8] sm:$0xf]
      %s2210 = scalar_lea.vmem %s3, 144
      %v2211 = vld [vmem:[%s2210] sm:$0xff]
      %v2214 = vcombine.high %v2208, %v2208
      %2215 = vrot.lane.b32.xlu0 %v2208, 18
      %v2216 = vpop.permute.xlu0 %2215
      %2217 = vrot.lane.b32.xlu0 %v2214, 18
      %v2218 = vpop.permute.xlu0 %2217
      %2219 = vrot.lane.b32.xlu0 %v2209, 18
      %v2220 = vpop.permute.xlu0 %2219
      %v2221 = vsel %vm469, %v2216, %v2218
      %v2222 = vsel %vm469, %v2218, %v2220
      %v2224 = vsel %vm370, %v2211, 0
      %v2226 = vsel %vm374, %v2221, 0
      %v2228 = vsel %vm374, %v2222, 0
      %2230 = vmatprep.subr.mxu0 %v2228
      %2231 = vmatpush1.msra.mxu0 %v2226
      %2232 = vmatprep.subr.mxu0 0.0
      %2233 = vmatpush1.msra.mxu0 0.0
      %2234 = vmatprep.subr.mxu0 0.0
      %2235 = vmatpush1.msra.mxu0 0.0
      %2236 = vmatprep.subr.mxu0 0.0
      %2237 = vmatpush1.msra.mxu0 0.0
      %2238 = vmatprep.subr.mxu0 0.0
      %2239 = vmatpush1.msra.mxu0 0.0
      %2240 = vmatprep.subr.mxu0 0.0
      %2241 = vmatpush1.msra.mxu0 0.0
      %2242 = vmatprep.subr.mxu0 0.0
      %2243 = vmatpush1.msra.mxu0 0.0
      %2244 = vmatprep.subr.mxu0 0.0
      %2245 = vmatpush1.msra.mxu0 0.0
      %2246 = vmatprep.subr.mxu0 0.0
      %2247 = vmatpush1.msra.mxu0 0.0
      %2248 = vmatprep.subr.mxu0 0.0
      %2249 = vmatpush1.msra.mxu0 0.0
      %2250 = vmatprep.subr.mxu0 0.0
      %2251 = vmatpush1.msra.mxu0 0.0
      %2252 = vmatprep.subr.mxu0 0.0
      %2253 = vmatpush1.msra.mxu0 0.0
      %2254 = vmatprep.subr.mxu0 0.0
      %2255 = vmatpush1.msra.mxu0 0.0
      %2256 = vmatprep.subr.mxu0 0.0
      %2257 = vmatpush1.msra.mxu0 0.0
      %2258 = vmatprep.subr.mxu0 0.0
      %2259 = vmatpush1.msra.mxu0 0.0
      %2260 = vmatprep.subr.mxu0 0.0
      %2261 = vmatpush1.msra.mxu0 0.0
      %2262 = vmatprep.subr.mxu0 0.0
      %2263 = vmatpush1.msra.mxu0 0.0
      %2264 = vmatprep.subr.mxu0 0.0
      %2265 = vmatpush1.msra.mxu0 0.0
      %2266 = vmatprep.subr.mxu0 0.0
      %2267 = vmatpush1.msra.mxu0 0.0
      %2268 = vmatprep.subr.mxu0 0.0
      %2269 = vmatpush1.msra.mxu0 0.0
      %2270 = vmatprep.subr.mxu0 0.0
      %2271 = vmatpush1.msra.mxu0 0.0
      %2272 = vmatprep.subr.mxu0 0.0
      %2273 = vmatpush1.msra.mxu0 0.0
      %2274 = vmatprep.subr.mxu0 0.0
      %2275 = vmatpush1.msra.mxu0 0.0
      %2276 = vmatprep.subr.mxu0 0.0
      %2277 = vmatpush1.msra.mxu0 0.0
      %2278 = vmatprep.subr.mxu0 0.0
      %2279 = vmatpush1.msra.mxu0 0.0
      %2280 = vmatprep.subr.mxu0 0.0
      %2281 = vmatpush1.msra.mxu0 0.0
      %2282 = vmatprep.subr.mxu0 0.0
      %2283 = vmatpush1.msra.mxu0 0.0
      %2284 = vmatprep.subr.mxu0 0.0
      %2285 = vmatpush1.msra.mxu0 0.0
      %2286 = vmatprep.subr.mxu0 0.0
      %2287 = vmatpush1.msra.mxu0 0.0
      %2288 = vmatprep.subr.mxu0 0.0
      %2289 = vmatpush1.msra.mxu0 0.0
      %2290 = vmatprep.subr.mxu0 0.0
      %2291 = vmatpush1.msra.mxu0 0.0
      %2292 = vmatprep.subr.mxu0 0.0
      %2293 = vmatpush1.msra.mxu0 0.0
      %2294 = vmatprep.mubr.f32.mxu0 0.0
      %2295 = vmatmul.mubr.f32.gmra.mrb[0].mxu0 %v2224
      %v2296 = vpop.f32.mrb[0].mxu0
      %v2297 = vadd.f32 0.0, %v2296
      %v2298 = vpop.f32.mrb[0].mxu0
      %v2299 = vadd.f32 0.0, %v2298
      %2300 = vdwg.mxu0
      %v2301 = vmul.f32 %v2297, %v555
      %v2302 = vmul.f32 %v2299, %v559
      %v2303 = vadd.f32 %v2202, %v2301
      %v2304 = vadd.f32 %v2203, %v2302
      %v2305 = vld [vmem:[%s2207] sm:$0xff]
      %v2306 = vld [vmem:[%s2207 + $0x8] sm:$0xf]
      %s2307 = scalar_lea.vmem %s3, 152
      %v2308 = vld [vmem:[%s2307] sm:$0xff]
      %v2311 = vcombine.high %v2305, %v2305
      %2312 = vrot.lane.b32.xlu0 %v2305, 16
      %v2313 = vpop.permute.xlu0 %2312
      %2314 = vrot.lane.b32.xlu0 %v2311, 16
      %v2315 = vpop.permute.xlu0 %2314
      %2316 = vrot.lane.b32.xlu0 %v2306, 16
      %v2317 = vpop.permute.xlu0 %2316
      %v2318 = vsel %vm577, %v2313, %v2315
      %v2319 = vsel %vm577, %v2315, %v2317
      %v2321 = vsel %vm370, %v2308, 0
      %v2323 = vsel %vm374, %v2318, 0
      %v2325 = vsel %vm374, %v2319, 0
      %2327 = vmatprep.subr.mxu0 %v2325
      %2328 = vmatpush1.msra.mxu0 %v2323
      %2329 = vmatprep.subr.mxu0 0.0
      %2330 = vmatpush1.msra.mxu0 0.0
      %2331 = vmatprep.subr.mxu0 0.0
      %2332 = vmatpush1.msra.mxu0 0.0
      %2333 = vmatprep.subr.mxu0 0.0
      %2334 = vmatpush1.msra.mxu0 0.0
      %2335 = vmatprep.subr.mxu0 0.0
      %2336 = vmatpush1.msra.mxu0 0.0
      %2337 = vmatprep.subr.mxu0 0.0
      %2338 = vmatpush1.msra.mxu0 0.0
      %2339 = vmatprep.subr.mxu0 0.0
      %2340 = vmatpush1.msra.mxu0 0.0
      %2341 = vmatprep.subr.mxu0 0.0
      %2342 = vmatpush1.msra.mxu0 0.0
      %2343 = vmatprep.subr.mxu0 0.0
      %2344 = vmatpush1.msra.mxu0 0.0
      %2345 = vmatprep.subr.mxu0 0.0
      %2346 = vmatpush1.msra.mxu0 0.0
      %2347 = vmatprep.subr.mxu0 0.0
      %2348 = vmatpush1.msra.mxu0 0.0
      %2349 = vmatprep.subr.mxu0 0.0
      %2350 = vmatpush1.msra.mxu0 0.0
      %2351 = vmatprep.subr.mxu0 0.0
      %2352 = vmatpush1.msra.mxu0 0.0
      %2353 = vmatprep.subr.mxu0 0.0
      %2354 = vmatpush1.msra.mxu0 0.0
      %2355 = vmatprep.subr.mxu0 0.0
      %2356 = vmatpush1.msra.mxu0 0.0
      %2357 = vmatprep.subr.mxu0 0.0
      %2358 = vmatpush1.msra.mxu0 0.0
      %2359 = vmatprep.subr.mxu0 0.0
      %2360 = vmatpush1.msra.mxu0 0.0
      %2361 = vmatprep.subr.mxu0 0.0
      %2362 = vmatpush1.msra.mxu0 0.0
      %2363 = vmatprep.subr.mxu0 0.0
      %2364 = vmatpush1.msra.mxu0 0.0
      %2365 = vmatprep.subr.mxu0 0.0
      %2366 = vmatpush1.msra.mxu0 0.0
      %2367 = vmatprep.subr.mxu0 0.0
      %2368 = vmatpush1.msra.mxu0 0.0
      %2369 = vmatprep.subr.mxu0 0.0
      %2370 = vmatpush1.msra.mxu0 0.0
      %2371 = vmatprep.subr.mxu0 0.0
      %2372 = vmatpush1.msra.mxu0 0.0
      %2373 = vmatprep.subr.mxu0 0.0
      %2374 = vmatpush1.msra.mxu0 0.0
      %2375 = vmatprep.subr.mxu0 0.0
      %2376 = vmatpush1.msra.mxu0 0.0
      %2377 = vmatprep.subr.mxu0 0.0
      %2378 = vmatpush1.msra.mxu0 0.0
      %2379 = vmatprep.subr.mxu0 0.0
      %2380 = vmatpush1.msra.mxu0 0.0
      %2381 = vmatprep.subr.mxu0 0.0
      %2382 = vmatpush1.msra.mxu0 0.0
      %2383 = vmatprep.subr.mxu0 0.0
      %2384 = vmatpush1.msra.mxu0 0.0
      %2385 = vmatprep.subr.mxu0 0.0
      %2386 = vmatpush1.msra.mxu0 0.0
      %2387 = vmatprep.subr.mxu0 0.0
      %2388 = vmatpush1.msra.mxu0 0.0
      %2389 = vmatprep.subr.mxu0 0.0
      %2390 = vmatpush1.msra.mxu0 0.0
      %2391 = vmatprep.mubr.f32.mxu0 0.0
      %2392 = vmatmul.mubr.f32.gmra.mrb[0].mxu0 %v2321
      %v2393 = vpop.f32.mrb[0].mxu0
      %v2394 = vadd.f32 0.0, %v2393
      %v2395 = vpop.f32.mrb[0].mxu0
      %v2396 = vadd.f32 0.0, %v2395
      %2397 = vdwg.mxu0
      %v2398 = vadd.f32 %v2303, %v2394
      %v2399 = vadd.f32 %v2304, %v2396
      %v2400 = vld [vmem:[%s2207] sm:$0xff]
      %v2401 = vld [vmem:[%s2207 + $0x8] sm:$0xf]
      %s2402 = scalar_lea.vmem %s3, 160
      %v2403 = vld [vmem:[%s2402] sm:$0xff]
      %v2406 = vcombine.high %v2400, %v2400
      %2407 = vrot.lane.b32.xlu0 %v2400, 14
      %v2408 = vpop.permute.xlu0 %2407
      %2409 = vrot.lane.b32.xlu0 %v2406, 14
      %v2410 = vpop.permute.xlu0 %2409
      %2411 = vrot.lane.b32.xlu0 %v2401, 14
      %v2412 = vpop.permute.xlu0 %2411
      %v2413 = vsel %vm673, %v2408, %v2410
      %v2414 = vsel %vm673, %v2410, %v2412
      %v2416 = vsel %vm370, %v2403, 0
      %v2418 = vsel %vm374, %v2413, 0
      %v2420 = vsel %vm374, %v2414, 0
      %2422 = vmatprep.subr.mxu0 %v2420
      %2423 = vmatpush1.msra.mxu0 %v2418
      %2424 = vmatprep.subr.mxu0 0.0
      %2425 = vmatpush1.msra.mxu0 0.0
      %2426 = vmatprep.subr.mxu0 0.0
      %2427 = vmatpush1.msra.mxu0 0.0
      %2428 = vmatprep.subr.mxu0 0.0
      %2429 = vmatpush1.msra.mxu0 0.0
      %2430 = vmatprep.subr.mxu0 0.0
      %2431 = vmatpush1.msra.mxu0 0.0
      %2432 = vmatprep.subr.mxu0 0.0
      %2433 = vmatpush1.msra.mxu0 0.0
      %2434 = vmatprep.subr.mxu0 0.0
      %2435 = vmatpush1.msra.mxu0 0.0
      %2436 = vmatprep.subr.mxu0 0.0
      %2437 = vmatpush1.msra.mxu0 0.0
      %2438 = vmatprep.subr.mxu0 0.0
      %2439 = vmatpush1.msra.mxu0 0.0
      %2440 = vmatprep.subr.mxu0 0.0
      %2441 = vmatpush1.msra.mxu0 0.0
      %2442 = vmatprep.subr.mxu0 0.0
      %2443 = vmatpush1.msra.mxu0 0.0
      %2444 = vmatprep.subr.mxu0 0.0
      %2445 = vmatpush1.msra.mxu0 0.0
      %2446 = vmatprep.subr.mxu0 0.0
      %2447 = vmatpush1.msra.mxu0 0.0
      %2448 = vmatprep.subr.mxu0 0.0
      %2449 = vmatpush1.msra.mxu0 0.0
      %2450 = vmatprep.subr.mxu0 0.0
      %2451 = vmatpush1.msra.mxu0 0.0
      %2452 = vmatprep.subr.mxu0 0.0
      %2453 = vmatpush1.msra.mxu0 0.0
      %2454 = vmatprep.subr.mxu0 0.0
      %2455 = vmatpush1.msra.mxu0 0.0
      %2456 = vmatprep.subr.mxu0 0.0
      %2457 = vmatpush1.msra.mxu0 0.0
      %2458 = vmatprep.subr.mxu0 0.0
      %2459 = vmatpush1.msra.mxu0 0.0
      %2460 = vmatprep.subr.mxu0 0.0
      %2461 = vmatpush1.msra.mxu0 0.0
      %2462 = vmatprep.subr.mxu0 0.0
      %2463 = vmatpush1.msra.mxu0 0.0
      %2464 = vmatprep.subr.mxu0 0.0
      %2465 = vmatpush1.msra.mxu0 0.0
      %2466 = vmatprep.subr.mxu0 0.0
      %2467 = vmatpush1.msra.mxu0 0.0
      %2468 = vmatprep.subr.mxu0 0.0
      %2469 = vmatpush1.msra.mxu0 0.0
      %2470 = vmatprep.subr.mxu0 0.0
      %2471 = vmatpush1.msra.mxu0 0.0
      %2472 = vmatprep.subr.mxu0 0.0
      %2473 = vmatpush1.msra.mxu0 0.0
      %2474 = vmatprep.subr.mxu0 0.0
      %2475 = vmatpush1.msra.mxu0 0.0
      %2476 = vmatprep.subr.mxu0 0.0
      %2477 = vmatpush1.msra.mxu0 0.0
      %2478 = vmatprep.subr.mxu0 0.0
      %2479 = vmatpush1.msra.mxu0 0.0
      %2480 = vmatprep.subr.mxu0 0.0
      %2481 = vmatpush1.msra.mxu0 0.0
      %2482 = vmatprep.subr.mxu0 0.0
      %2483 = vmatpush1.msra.mxu0 0.0
      %2484 = vmatprep.subr.mxu0 0.0
      %2485 = vmatpush1.msra.mxu0 0.0
      %2486 = vmatprep.mubr.f32.mxu0 0.0
      %2487 = vmatmul.mubr.f32.gmra.mrb[0].mxu0 %v2416
      %v2488 = vpop.f32.mrb[0].mxu0
      %v2489 = vadd.f32 0.0, %v2488
      %v2490 = vpop.f32.mrb[0].mxu0
      %v2491 = vadd.f32 0.0, %v2490
      %2492 = vdwg.mxu0
      %v2493 = vmul.f32 %v2489, %v760
      %v2494 = vmul.f32 %v2491, %v764
      %v2495 = vadd.f32 %v2398, %v2493
      %v2496 = vadd.f32 %v2399, %v2494
      %v2497 = vld [vmem:[%s2207 + $0x4] sm:$0xff]
      %v2498 = vld [vmem:[%s2207 + $0xc] sm:$0xf]
      %s2499 = scalar_lea.vmem %s3, 168
      %v2500 = vld [vmem:[%s2499] sm:$0xff]
      %v2503 = vcombine.high %v2497, %v2497
      %2504 = vrot.lane.b32.xlu0 %v2497, 114
      %v2505 = vpop.permute.xlu0 %2504
      %2506 = vrot.lane.b32.xlu0 %v2503, 114
      %v2507 = vpop.permute.xlu0 %2506
      %2508 = vrot.lane.b32.xlu0 %v2498, 114
      %v2509 = vpop.permute.xlu0 %2508
      %v2510 = vsel %vm784, %v2505, %v2507
      %v2511 = vsel %vm784, %v2507, %v2509
      %v2513 = vsel %vm370, %v2500, 0
      %v2515 = vsel %vm374, %v2510, 0
      %v2517 = vsel %vm374, %v2511, 0
      %2519 = vmatprep.subr.mxu0 %v2517
      %2520 = vmatpush1.msra.mxu0 %v2515
      %2521 = vmatprep.subr.mxu0 0.0
      %2522 = vmatpush1.msra.mxu0 0.0
      %2523 = vmatprep.subr.mxu0 0.0
      %2524 = vmatpush1.msra.mxu0 0.0
      %2525 = vmatprep.subr.mxu0 0.0
      %2526 = vmatpush1.msra.mxu0 0.0
      %2527 = vmatprep.subr.mxu0 0.0
      %2528 = vmatpush1.msra.mxu0 0.0
      %2529 = vmatprep.subr.mxu0 0.0
      %2530 = vmatpush1.msra.mxu0 0.0
      %2531 = vmatprep.subr.mxu0 0.0
      %2532 = vmatpush1.msra.mxu0 0.0
      %2533 = vmatprep.subr.mxu0 0.0
      %2534 = vmatpush1.msra.mxu0 0.0
      %2535 = vmatprep.subr.mxu0 0.0
      %2536 = vmatpush1.msra.mxu0 0.0
      %2537 = vmatprep.subr.mxu0 0.0
      %2538 = vmatpush1.msra.mxu0 0.0
      %2539 = vmatprep.subr.mxu0 0.0
      %2540 = vmatpush1.msra.mxu0 0.0
      %2541 = vmatprep.subr.mxu0 0.0
      %2542 = vmatpush1.msra.mxu0 0.0
      %2543 = vmatprep.subr.mxu0 0.0
      %2544 = vmatpush1.msra.mxu0 0.0
      %2545 = vmatprep.subr.mxu0 0.0
      %2546 = vmatpush1.msra.mxu0 0.0
      %2547 = vmatprep.subr.mxu0 0.0
      %2548 = vmatpush1.msra.mxu0 0.0
      %2549 = vmatprep.subr.mxu0 0.0
      %2550 = vmatpush1.msra.mxu0 0.0
      %2551 = vmatprep.subr.mxu0 0.0
      %2552 = vmatpush1.msra.mxu0 0.0
      %2553 = vmatprep.subr.mxu0 0.0
      %2554 = vmatpush1.msra.mxu0 0.0
      %2555 = vmatprep.subr.mxu0 0.0
      %2556 = vmatpush1.msra.mxu0 0.0
      %2557 = vmatprep.subr.mxu0 0.0
      %2558 = vmatpush1.msra.mxu0 0.0
      %2559 = vmatprep.subr.mxu0 0.0
      %2560 = vmatpush1.msra.mxu0 0.0
      %2561 = vmatprep.subr.mxu0 0.0
      %2562 = vmatpush1.msra.mxu0 0.0
      %2563 = vmatprep.subr.mxu0 0.0
      %2564 = vmatpush1.msra.mxu0 0.0
      %2565 = vmatprep.subr.mxu0 0.0
      %2566 = vmatpush1.msra.mxu0 0.0
      %2567 = vmatprep.subr.mxu0 0.0
      %2568 = vmatpush1.msra.mxu0 0.0
      %2569 = vmatprep.subr.mxu0 0.0
      %2570 = vmatpush1.msra.mxu0 0.0
      %2571 = vmatprep.subr.mxu0 0.0
      %2572 = vmatpush1.msra.mxu0 0.0
      %2573 = vmatprep.subr.mxu0 0.0
      %2574 = vmatpush1.msra.mxu0 0.0
      %2575 = vmatprep.subr.mxu0 0.0
      %2576 = vmatpush1.msra.mxu0 0.0
      %2577 = vmatprep.subr.mxu0 0.0
      %2578 = vmatpush1.msra.mxu0 0.0
      %2579 = vmatprep.subr.mxu0 0.0
      %2580 = vmatpush1.msra.mxu0 0.0
      %2581 = vmatprep.subr.mxu0 0.0
      %2582 = vmatpush1.msra.mxu0 0.0
      %2583 = vmatprep.mubr.f32.mxu0 0.0
      %2584 = vmatmul.mubr.f32.gmra.mrb[0].mxu0 %v2513
      %v2585 = vpop.f32.mrb[0].mxu0
      %v2586 = vadd.f32 0.0, %v2585
      %v2587 = vpop.f32.mrb[0].mxu0
      %v2588 = vadd.f32 0.0, %v2587
      %2589 = vdwg.mxu0
      %v2590 = vmul.f32 %v2586, %v555
      %v2591 = vmul.f32 %v2588, %v559
      %v2592 = vadd.f32 %v2495, %v2590
      %v2593 = vadd.f32 %v2496, %v2591
      %v2594 = vld [vmem:[%s2207 + $0x4] sm:$0xff]
      %v2595 = vld [vmem:[%s2207 + $0xc] sm:$0xf]
      %s2596 = scalar_lea.vmem %s3, 176
      %v2597 = vld [vmem:[%s2596] sm:$0xff]
      %v2600 = vcombine.high %v2594, %v2594
      %2601 = vrot.lane.b32.xlu0 %v2594, 112
      %v2602 = vpop.permute.xlu0 %2601
      %2603 = vrot.lane.b32.xlu0 %v2600, 112
      %v2604 = vpop.permute.xlu0 %2603
      %2605 = vrot.lane.b32.xlu0 %v2595, 112
      %v2606 = vpop.permute.xlu0 %2605
      %v2607 = vsel %vm367, %v2602, %v2604
      %v2608 = vsel %vm367, %v2604, %v2606
      %v2610 = vsel %vm370, %v2597, 0
      %v2612 = vsel %vm374, %v2607, 0
      %v2614 = vsel %vm374, %v2608, 0
      %2616 = vmatprep.subr.mxu0 %v2614
      %2617 = vmatpush1.msra.mxu0 %v2612
      %2618 = vmatprep.subr.mxu0 0.0
      %2619 = vmatpush1.msra.mxu0 0.0
      %2620 = vmatprep.subr.mxu0 0.0
      %2621 = vmatpush1.msra.mxu0 0.0
      %2622 = vmatprep.subr.mxu0 0.0
      %2623 = vmatpush1.msra.mxu0 0.0
      %2624 = vmatprep.subr.mxu0 0.0
      %2625 = vmatpush1.msra.mxu0 0.0
      %2626 = vmatprep.subr.mxu0 0.0
      %2627 = vmatpush1.msra.mxu0 0.0
      %2628 = vmatprep.subr.mxu0 0.0
      %2629 = vmatpush1.msra.mxu0 0.0
      %2630 = vmatprep.subr.mxu0 0.0
      %2631 = vmatpush1.msra.mxu0 0.0
      %2632 = vmatprep.subr.mxu0 0.0
      %2633 = vmatpush1.msra.mxu0 0.0
      %2634 = vmatprep.subr.mxu0 0.0
      %2635 = vmatpush1.msra.mxu0 0.0
      %2636 = vmatprep.subr.mxu0 0.0
      %2637 = vmatpush1.msra.mxu0 0.0
      %2638 = vmatprep.subr.mxu0 0.0
      %2639 = vmatpush1.msra.mxu0 0.0
      %2640 = vmatprep.subr.mxu0 0.0
      %2641 = vmatpush1.msra.mxu0 0.0
      %2642 = vmatprep.subr.mxu0 0.0
      %2643 = vmatpush1.msra.mxu0 0.0
      %2644 = vmatprep.subr.mxu0 0.0
      %2645 = vmatpush1.msra.mxu0 0.0
      %2646 = vmatprep.subr.mxu0 0.0
      %2647 = vmatpush1.msra.mxu0 0.0
      %2648 = vmatprep.subr.mxu0 0.0
      %2649 = vmatpush1.msra.mxu0 0.0
      %2650 = vmatprep.subr.mxu0 0.0
      %2651 = vmatpush1.msra.mxu0 0.0
      %2652 = vmatprep.subr.mxu0 0.0
      %2653 = vmatpush1.msra.mxu0 0.0
      %2654 = vmatprep.subr.mxu0 0.0
      %2655 = vmatpush1.msra.mxu0 0.0
      %2656 = vmatprep.subr.mxu0 0.0
      %2657 = vmatpush1.msra.mxu0 0.0
      %2658 = vmatprep.subr.mxu0 0.0
      %2659 = vmatpush1.msra.mxu0 0.0
      %2660 = vmatprep.subr.mxu0 0.0
      %2661 = vmatpush1.msra.mxu0 0.0
      %2662 = vmatprep.subr.mxu0 0.0
      %2663 = vmatpush1.msra.mxu0 0.0
      %2664 = vmatprep.subr.mxu0 0.0
      %2665 = vmatpush1.msra.mxu0 0.0
      %2666 = vmatprep.subr.mxu0 0.0
      %2667 = vmatpush1.msra.mxu0 0.0
      %2668 = vmatprep.subr.mxu0 0.0
      %2669 = vmatpush1.msra.mxu0 0.0
      %2670 = vmatprep.subr.mxu0 0.0
      %2671 = vmatpush1.msra.mxu0 0.0
      %2672 = vmatprep.subr.mxu0 0.0
      %2673 = vmatpush1.msra.mxu0 0.0
      %2674 = vmatprep.subr.mxu0 0.0
      %2675 = vmatpush1.msra.mxu0 0.0
      %2676 = vmatprep.subr.mxu0 0.0
      %2677 = vmatpush1.msra.mxu0 0.0
      %2678 = vmatprep.subr.mxu0 0.0
      %2679 = vmatpush1.msra.mxu0 0.0
      %2680 = vmatprep.mubr.f32.mxu0 0.0
      %2681 = vmatmul.mubr.f32.gmra.mrb[0].mxu0 %v2610
      %v2682 = vpop.f32.mrb[0].mxu0
      %v2683 = vadd.f32 0.0, %v2682
      %v2684 = vpop.f32.mrb[0].mxu0
      %v2685 = vadd.f32 0.0, %v2684
      %2686 = vdwg.mxu0
      %v2687 = vadd.f32 %v2592, %v2683
      %v2688 = vadd.f32 %v2593, %v2685
      %v2689 = vld [vmem:[%s2207 + $0x4] sm:$0xff]
      %v2690 = vld [vmem:[%s2207 + $0xc] sm:$0xf]
      %s2691 = scalar_lea.vmem %s3, 184
      %v2692 = vld [vmem:[%s2691] sm:$0xff]
      %v2695 = vcombine.high %v2689, %v2689
      %2696 = vrot.lane.b32.xlu0 %v2689, 110
      %v2697 = vpop.permute.xlu0 %2696
      %2698 = vrot.lane.b32.xlu0 %v2695, 110
      %v2699 = vpop.permute.xlu0 %2698
      %2700 = vrot.lane.b32.xlu0 %v2690, 110
      %v2701 = vpop.permute.xlu0 %2700
      %v2702 = vsel %vm977, %v2697, %v2699
      %v2703 = vsel %vm977, %v2699, %v2701
      %v2705 = vsel %vm370, %v2692, 0
      %v2707 = vsel %vm374, %v2702, 0
      %v2709 = vsel %vm374, %v2703, 0
      %2711 = vmatprep.subr.mxu0 %v2709
      %2712 = vmatpush1.msra.mxu0 %v2707
      %2713 = vmatprep.subr.mxu0 0.0
      %2714 = vmatpush1.msra.mxu0 0.0
      %2715 = vmatprep.subr.mxu0 0.0
      %2716 = vmatpush1.msra.mxu0 0.0
      %2717 = vmatprep.subr.mxu0 0.0
      %2718 = vmatpush1.msra.mxu0 0.0
      %2719 = vmatprep.subr.mxu0 0.0
      %2720 = vmatpush1.msra.mxu0 0.0
      %2721 = vmatprep.subr.mxu0 0.0
      %2722 = vmatpush1.msra.mxu0 0.0
      %2723 = vmatprep.subr.mxu0 0.0
      %2724 = vmatpush1.msra.mxu0 0.0
      %2725 = vmatprep.subr.mxu0 0.0
      %2726 = vmatpush1.msra.mxu0 0.0
      %2727 = vmatprep.subr.mxu0 0.0
      %2728 = vmatpush1.msra.mxu0 0.0
      %2729 = vmatprep.subr.mxu0 0.0
      %2730 = vmatpush1.msra.mxu0 0.0
      %2731 = vmatprep.subr.mxu0 0.0
      %2732 = vmatpush1.msra.mxu0 0.0
      %2733 = vmatprep.subr.mxu0 0.0
      %2734 = vmatpush1.msra.mxu0 0.0
      %2735 = vmatprep.subr.mxu0 0.0
      %2736 = vmatpush1.msra.mxu0 0.0
      %2737 = vmatprep.subr.mxu0 0.0
      %2738 = vmatpush1.msra.mxu0 0.0
      %2739 = vmatprep.subr.mxu0 0.0
      %2740 = vmatpush1.msra.mxu0 0.0
      %2741 = vmatprep.subr.mxu0 0.0
      %2742 = vmatpush1.msra.mxu0 0.0
      %2743 = vmatprep.subr.mxu0 0.0
      %2744 = vmatpush1.msra.mxu0 0.0
      %2745 = vmatprep.subr.mxu0 0.0
      %2746 = vmatpush1.msra.mxu0 0.0
      %2747 = vmatprep.subr.mxu0 0.0
      %2748 = vmatpush1.msra.mxu0 0.0
      %2749 = vmatprep.subr.mxu0 0.0
      %2750 = vmatpush1.msra.mxu0 0.0
      %2751 = vmatprep.subr.mxu0 0.0
      %2752 = vmatpush1.msra.mxu0 0.0
      %2753 = vmatprep.subr.mxu0 0.0
      %2754 = vmatpush1.msra.mxu0 0.0
      %2755 = vmatprep.subr.mxu0 0.0
      %2756 = vmatpush1.msra.mxu0 0.0
      %2757 = vmatprep.subr.mxu0 0.0
      %2758 = vmatpush1.msra.mxu0 0.0
      %2759 = vmatprep.subr.mxu0 0.0
      %2760 = vmatpush1.msra.mxu0 0.0
      %2761 = vmatprep.subr.mxu0 0.0
      %2762 = vmatpush1.msra.mxu0 0.0
      %2763 = vmatprep.subr.mxu0 0.0
      %2764 = vmatpush1.msra.mxu0 0.0
      %2765 = vmatprep.subr.mxu0 0.0
      %2766 = vmatpush1.msra.mxu0 0.0
      %2767 = vmatprep.subr.mxu0 0.0
      %2768 = vmatpush1.msra.mxu0 0.0
      %2769 = vmatprep.subr.mxu0 0.0
      %2770 = vmatpush1.msra.mxu0 0.0
      %2771 = vmatprep.subr.mxu0 0.0
      %2772 = vmatpush1.msra.mxu0 0.0
      %2773 = vmatprep.subr.mxu0 0.0
      %2774 = vmatpush1.msra.mxu0 0.0
      %2775 = vmatprep.mubr.f32.mxu0 0.0
      %2776 = vmatmul.mubr.f32.gmra.mrb[0].mxu0 %v2705
      %v2777 = vpop.f32.mrb[0].mxu0
      %v2778 = vadd.f32 0.0, %v2777
      %v2779 = vpop.f32.mrb[0].mxu0
      %v2780 = vadd.f32 0.0, %v2779
      %2781 = vdwg.mxu0
      %v2782 = vmul.f32 %v2778, %v760
      %v2783 = vmul.f32 %v2780, %v764
      %v2784 = vadd.f32 %v2687, %v2782
      %v2785 = vadd.f32 %v2688, %v2783
      %v2786 = vld [vmem:[%s2207 + $0x4] sm:$0xff]
      %v2787 = vld [vmem:[%s2207 + $0xc] sm:$0xf]
      %s2788 = scalar_lea.vmem %s3, 192
      %v2789 = vld [vmem:[%s2788] sm:$0xff]
      %v2792 = vcombine.high %v2786, %v2786
      %2793 = vrot.lane.b32.xlu0 %v2786, 82
      %v2794 = vpop.permute.xlu0 %2793
      %2795 = vrot.lane.b32.xlu0 %v2792, 82
      %v2796 = vpop.permute.xlu0 %2795
      %2797 = vrot.lane.b32.xlu0 %v2787, 82
      %v2798 = vpop.permute.xlu0 %2797
      %v2799 = vsel %vm1075, %v2794, %v2796
      %v2800 = vsel %vm1075, %v2796, %v2798
      %v2802 = vsel %vm370, %v2789, 0
      %v2804 = vsel %vm374, %v2799, 0
      %v2806 = vsel %vm374, %v2800, 0
      %2808 = vmatprep.subr.mxu0 %v2806
      %2809 = vmatpush1.msra.mxu0 %v2804
      %2810 = vmatprep.subr.mxu0 0.0
      %2811 = vmatpush1.msra.mxu0 0.0
      %2812 = vmatprep.subr.mxu0 0.0
      %2813 = vmatpush1.msra.mxu0 0.0
      %2814 = vmatprep.subr.mxu0 0.0
      %2815 = vmatpush1.msra.mxu0 0.0
      %2816 = vmatprep.subr.mxu0 0.0
      %2817 = vmatpush1.msra.mxu0 0.0
      %2818 = vmatprep.subr.mxu0 0.0
      %2819 = vmatpush1.msra.mxu0 0.0
      %2820 = vmatprep.subr.mxu0 0.0
      %2821 = vmatpush1.msra.mxu0 0.0
      %2822 = vmatprep.subr.mxu0 0.0
      %2823 = vmatpush1.msra.mxu0 0.0
      %2824 = vmatprep.subr.mxu0 0.0
      %2825 = vmatpush1.msra.mxu0 0.0
      %2826 = vmatprep.subr.mxu0 0.0
      %2827 = vmatpush1.msra.mxu0 0.0
      %2828 = vmatprep.subr.mxu0 0.0
      %2829 = vmatpush1.msra.mxu0 0.0
      %2830 = vmatprep.subr.mxu0 0.0
      %2831 = vmatpush1.msra.mxu0 0.0
      %2832 = vmatprep.subr.mxu0 0.0
      %2833 = vmatpush1.msra.mxu0 0.0
      %2834 = vmatprep.subr.mxu0 0.0
      %2835 = vmatpush1.msra.mxu0 0.0
      %2836 = vmatprep.subr.mxu0 0.0
      %2837 = vmatpush1.msra.mxu0 0.0
      %2838 = vmatprep.subr.mxu0 0.0
      %2839 = vmatpush1.msra.mxu0 0.0
      %2840 = vmatprep.subr.mxu0 0.0
      %2841 = vmatpush1.msra.mxu0 0.0
      %2842 = vmatprep.subr.mxu0 0.0
      %2843 = vmatpush1.msra.mxu0 0.0
      %2844 = vmatprep.subr.mxu0 0.0
      %2845 = vmatpush1.msra.mxu0 0.0
      %2846 = vmatprep.subr.mxu0 0.0
      %2847 = vmatpush1.msra.mxu0 0.0
      %2848 = vmatprep.subr.mxu0 0.0
      %2849 = vmatpush1.msra.mxu0 0.0
      %2850 = vmatprep.subr.mxu0 0.0
      %2851 = vmatpush1.msra.mxu0 0.0
      %2852 = vmatprep.subr.mxu0 0.0
      %2853 = vmatpush1.msra.mxu0 0.0
      %2854 = vmatprep.subr.mxu0 0.0
      %2855 = vmatpush1.msra.mxu0 0.0
      %2856 = vmatprep.subr.mxu0 0.0
      %2857 = vmatpush1.msra.mxu0 0.0
      %2858 = vmatprep.subr.mxu0 0.0
      %2859 = vmatpush1.msra.mxu0 0.0
      %2860 = vmatprep.subr.mxu0 0.0
      %2861 = vmatpush1.msra.mxu0 0.0
      %2862 = vmatprep.subr.mxu0 0.0
      %2863 = vmatpush1.msra.mxu0 0.0
      %2864 = vmatprep.subr.mxu0 0.0
      %2865 = vmatpush1.msra.mxu0 0.0
      %2866 = vmatprep.subr.mxu0 0.0
      %2867 = vmatpush1.msra.mxu0 0.0
      %2868 = vmatprep.subr.mxu0 0.0
      %2869 = vmatpush1.msra.mxu0 0.0
      %2870 = vmatprep.subr.mxu0 0.0
      %2871 = vmatpush1.msra.mxu0 0.0
      %2872 = vmatprep.mubr.f32.mxu0 0.0
      %2873 = vmatmul.mubr.f32.gmra.mrb[0].mxu0 %v2802
      %v2874 = vpop.f32.mrb[0].mxu0
      %v2875 = vadd.f32 0.0, %v2874
      %v2876 = vpop.f32.mrb[0].mxu0
      %v2877 = vadd.f32 0.0, %v2876
      %2878 = vdwg.mxu0
      %v2879 = vmul.f32 %v2875, %v555
      %v2880 = vmul.f32 %v2877, %v559
      %v2881 = vadd.f32 %v2784, %v2879
      %v2882 = vadd.f32 %v2785, %v2880
      %v2883 = vld [vmem:[%s2207 + $0x4] sm:$0xff]
      %v2884 = vld [vmem:[%s2207 + $0xc] sm:$0xf]
      %s2885 = scalar_lea.vmem %s3, 200
      %v2886 = vld [vmem:[%s2885] sm:$0xff]
      %v2889 = vcombine.high %v2883, %v2883
      %2890 = vrot.lane.b32.xlu0 %v2883, 80
      %v2891 = vpop.permute.xlu0 %2890
      %2892 = vrot.lane.b32.xlu0 %v2889, 80
      %v2893 = vpop.permute.xlu0 %2892
      %2894 = vrot.lane.b32.xlu0 %v2884, 80
      %v2895 = vpop.permute.xlu0 %2894
      %v2896 = vsel %vm1173, %v2891, %v2893
      %v2897 = vsel %vm1173, %v2893, %v2895
      %v2899 = vsel %vm370, %v2886, 0
      %v2901 = vsel %vm374, %v2896, 0
      %v2903 = vsel %vm374, %v2897, 0
      %2905 = vmatprep.subr.mxu0 %v2903
      %2906 = vmatpush1.msra.mxu0 %v2901
      %2907 = vmatprep.subr.mxu0 0.0
      %2908 = vmatpush1.msra.mxu0 0.0
      %2909 = vmatprep.subr.mxu0 0.0
      %2910 = vmatpush1.msra.mxu0 0.0
      %2911 = vmatprep.subr.mxu0 0.0
      %2912 = vmatpush1.msra.mxu0 0.0
      %2913 = vmatprep.subr.mxu0 0.0
      %2914 = vmatpush1.msra.mxu0 0.0
      %2915 = vmatprep.subr.mxu0 0.0
      %2916 = vmatpush1.msra.mxu0 0.0
      %2917 = vmatprep.subr.mxu0 0.0
      %2918 = vmatpush1.msra.mxu0 0.0
      %2919 = vmatprep.subr.mxu0 0.0
      %2920 = vmatpush1.msra.mxu0 0.0
      %2921 = vmatprep.subr.mxu0 0.0
      %2922 = vmatpush1.msra.mxu0 0.0
      %2923 = vmatprep.subr.mxu0 0.0
      %2924 = vmatpush1.msra.mxu0 0.0
      %2925 = vmatprep.subr.mxu0 0.0
      %2926 = vmatpush1.msra.mxu0 0.0
      %2927 = vmatprep.subr.mxu0 0.0
      %2928 = vmatpush1.msra.mxu0 0.0
      %2929 = vmatprep.subr.mxu0 0.0
      %2930 = vmatpush1.msra.mxu0 0.0
      %2931 = vmatprep.subr.mxu0 0.0
      %2932 = vmatpush1.msra.mxu0 0.0
      %2933 = vmatprep.subr.mxu0 0.0
      %2934 = vmatpush1.msra.mxu0 0.0
      %2935 = vmatprep.subr.mxu0 0.0
      %2936 = vmatpush1.msra.mxu0 0.0
      %2937 = vmatprep.subr.mxu0 0.0
      %2938 = vmatpush1.msra.mxu0 0.0
      %2939 = vmatprep.subr.mxu0 0.0
      %2940 = vmatpush1.msra.mxu0 0.0
      %2941 = vmatprep.subr.mxu0 0.0
      %2942 = vmatpush1.msra.mxu0 0.0
      %2943 = vmatprep.subr.mxu0 0.0
      %2944 = vmatpush1.msra.mxu0 0.0
      %2945 = vmatprep.subr.mxu0 0.0
      %2946 = vmatpush1.msra.mxu0 0.0
      %2947 = vmatprep.subr.mxu0 0.0
      %2948 = vmatpush1.msra.mxu0 0.0
      %2949 = vmatprep.subr.mxu0 0.0
      %2950 = vmatpush1.msra.mxu0 0.0
      %2951 = vmatprep.subr.mxu0 0.0
      %2952 = vmatpush1.msra.mxu0 0.0
      %2953 = vmatprep.subr.mxu0 0.0
      %2954 = vmatpush1.msra.mxu0 0.0
      %2955 = vmatprep.subr.mxu0 0.0
      %2956 = vmatpush1.msra.mxu0 0.0
      %2957 = vmatprep.subr.mxu0 0.0
      %2958 = vmatpush1.msra.mxu0 0.0
      %2959 = vmatprep.subr.mxu0 0.0
      %2960 = vmatpush1.msra.mxu0 0.0
      %2961 = vmatprep.subr.mxu0 0.0
      %2962 = vmatpush1.msra.mxu0 0.0
      %2963 = vmatprep.subr.mxu0 0.0
      %2964 = vmatpush1.msra.mxu0 0.0
      %2965 = vmatprep.subr.mxu0 0.0
      %2966 = vmatpush1.msra.mxu0 0.0
      %2967 = vmatprep.subr.mxu0 0.0
      %2968 = vmatpush1.msra.mxu0 0.0
      %2969 = vmatprep.mubr.f32.mxu0 0.0
      %2970 = vmatmul.mubr.f32.gmra.mrb[0].mxu0 %v2899
      %v2971 = vpop.f32.mrb[0].mxu0
      %v2972 = vadd.f32 0.0, %v2971
      %v2973 = vpop.f32.mrb[0].mxu0
      %v2974 = vadd.f32 0.0, %v2973
      %2975 = vdwg.mxu0
      %v2976 = vadd.f32 %v2881, %v2972
      %v2977 = vadd.f32 %v2882, %v2974
      %v2978 = vld [vmem:[%s2207 + $0x4] sm:$0xff]
      %v2979 = vld [vmem:[%s2207 + $0xc] sm:$0xf]
      %s2980 = scalar_lea.vmem %s3, 208
      %v2981 = vld [vmem:[%s2980] sm:$0xff]
      %v2984 = vcombine.high %v2978, %v2978
      %2985 = vrot.lane.b32.xlu0 %v2978, 78
      %v2986 = vpop.permute.xlu0 %2985
      %2987 = vrot.lane.b32.xlu0 %v2984, 78
      %v2988 = vpop.permute.xlu0 %2987
      %2989 = vrot.lane.b32.xlu0 %v2979, 78
      %v2990 = vpop.permute.xlu0 %2989
      %v2991 = vsel %vm1269, %v2986, %v2988
      %v2992 = vsel %vm1269, %v2988, %v2990
      %v2994 = vsel %vm370, %v2981, 0
      %v2996 = vsel %vm374, %v2991, 0
      %v2998 = vsel %vm374, %v2992, 0
      %3000 = vmatprep.subr.mxu0 %v2998
      %3001 = vmatpush1.msra.mxu0 %v2996
      %3002 = vmatprep.subr.mxu0 0.0
      %3003 = vmatpush1.msra.mxu0 0.0
      %3004 = vmatprep.subr.mxu0 0.0
      %3005 = vmatpush1.msra.mxu0 0.0
      %3006 = vmatprep.subr.mxu0 0.0
      %3007 = vmatpush1.msra.mxu0 0.0
      %3008 = vmatprep.subr.mxu0 0.0
      %3009 = vmatpush1.msra.mxu0 0.0
      %3010 = vmatprep.subr.mxu0 0.0
      %3011 = vmatpush1.msra.mxu0 0.0
      %3012 = vmatprep.subr.mxu0 0.0
      %3013 = vmatpush1.msra.mxu0 0.0
      %3014 = vmatprep.subr.mxu0 0.0
      %3015 = vmatpush1.msra.mxu0 0.0
      %3016 = vmatprep.subr.mxu0 0.0
      %3017 = vmatpush1.msra.mxu0 0.0
      %3018 = vmatprep.subr.mxu0 0.0
      %3019 = vmatpush1.msra.mxu0 0.0
      %3020 = vmatprep.subr.mxu0 0.0
      %3021 = vmatpush1.msra.mxu0 0.0
      %3022 = vmatprep.subr.mxu0 0.0
      %3023 = vmatpush1.msra.mxu0 0.0
      %3024 = vmatprep.subr.mxu0 0.0
      %3025 = vmatpush1.msra.mxu0 0.0
      %3026 = vmatprep.subr.mxu0 0.0
      %3027 = vmatpush1.msra.mxu0 0.0
      %3028 = vmatprep.subr.mxu0 0.0
      %3029 = vmatpush1.msra.mxu0 0.0
      %3030 = vmatprep.subr.mxu0 0.0
      %3031 = vmatpush1.msra.mxu0 0.0
      %3032 = vmatprep.subr.mxu0 0.0
      %3033 = vmatpush1.msra.mxu0 0.0
      %3034 = vmatprep.subr.mxu0 0.0
      %3035 = vmatpush1.msra.mxu0 0.0
      %3036 = vmatprep.subr.mxu0 0.0
      %3037 = vmatpush1.msra.mxu0 0.0
      %3038 = vmatprep.subr.mxu0 0.0
      %3039 = vmatpush1.msra.mxu0 0.0
      %3040 = vmatprep.subr.mxu0 0.0
      %3041 = vmatpush1.msra.mxu0 0.0
      %3042 = vmatprep.subr.mxu0 0.0
      %3043 = vmatpush1.msra.mxu0 0.0
      %3044 = vmatprep.subr.mxu0 0.0
      %3045 = vmatpush1.msra.mxu0 0.0
      %3046 = vmatprep.subr.mxu0 0.0
      %3047 = vmatpush1.msra.mxu0 0.0
      %3048 = vmatprep.subr.mxu0 0.0
      %3049 = vmatpush1.msra.mxu0 0.0
      %3050 = vmatprep.subr.mxu0 0.0
      %3051 = vmatpush1.msra.mxu0 0.0
      %3052 = vmatprep.subr.mxu0 0.0
      %3053 = vmatpush1.msra.mxu0 0.0
      %3054 = vmatprep.subr.mxu0 0.0
      %3055 = vmatpush1.msra.mxu0 0.0
      %3056 = vmatprep.subr.mxu0 0.0
      %3057 = vmatpush1.msra.mxu0 0.0
      %3058 = vmatprep.subr.mxu0 0.0
      %3059 = vmatpush1.msra.mxu0 0.0
      %3060 = vmatprep.subr.mxu0 0.0
      %3061 = vmatpush1.msra.mxu0 0.0
      %3062 = vmatprep.subr.mxu0 0.0
      %3063 = vmatpush1.msra.mxu0 0.0
      %3064 = vmatprep.mubr.f32.mxu0 0.0
      %3065 = vmatmul.mubr.f32.gmra.mrb[0].mxu0 %v2994
      %v3066 = vpop.f32.mrb[0].mxu0
      %v3067 = vadd.f32 0.0, %v3066
      %v3068 = vpop.f32.mrb[0].mxu0
      %v3069 = vadd.f32 0.0, %v3068
      %3070 = vdwg.mxu0
      %v3071 = vmul.f32 %v3067, %v760
      %v3072 = vmul.f32 %v3069, %v764
      %v3073 = vadd.f32 %v2976, %v3071
      %v3074 = vadd.f32 %v2977, %v3072
      %v3075 = vld [vmem:[%s4] sm:$0xff]
      %3077 = vset.pattern.permute.xlu0 0
      %3078 = vperm.xlu0 %3077, %v3075
      %v3079 = vpop.permute.xlu0 %3078
      %v3081 = vadd.f32 %v3073, %v3079
      %v3082 = vadd.f32 %v3074, %v3079
      %v3083 = vmax.f32 %v3081, 0.0
      %v3084 = vmax.f32 %v3082, 0.0
      %s3085 = scalar_lea.vmem %s5, 8
      %v3086 = vld [vmem:[%s3085] sm:$0xff]
      %vm3087 = vcmask 64512
      %v3089 = vsel %vm3087, %v3086, 0
      %3091 = vmatprep.subr.mxu0 %v3084
      %3092 = vmatpush1.msra.mxu0 %v3083
      %3093 = vmatprep.subr.mxu0 0.0
      %3094 = vmatpush1.msra.mxu0 0.0
      %3095 = vmatprep.subr.mxu0 0.0
      %3096 = vmatpush1.msra.mxu0 0.0
      %3097 = vmatprep.subr.mxu0 0.0
      %3098 = vmatpush1.msra.mxu0 0.0
      %3099 = vmatprep.subr.mxu0 0.0
      %3100 = vmatpush1.msra.mxu0 0.0
      %3101 = vmatprep.subr.mxu0 0.0
      %3102 = vmatpush1.msra.mxu0 0.0
      %3103 = vmatprep.subr.mxu0 0.0
      %3104 = vmatpush1.msra.mxu0 0.0
      %3105 = vmatprep.subr.mxu0 0.0
      %3106 = vmatpush1.msra.mxu0 0.0
      %3107 = vmatprep.subr.mxu0 0.0
      %3108 = vmatpush1.msra.mxu0 0.0
      %3109 = vmatprep.subr.mxu0 0.0
      %3110 = vmatpush1.msra.mxu0 0.0
      %3111 = vmatprep.subr.mxu0 0.0
      %3112 = vmatpush1.msra.mxu0 0.0
      %3113 = vmatprep.subr.mxu0 0.0
      %3114 = vmatpush1.msra.mxu0 0.0
      %3115 = vmatprep.subr.mxu0 0.0
      %3116 = vmatpush1.msra.mxu0 0.0
      %3117 = vmatprep.subr.mxu0 0.0
      %3118 = vmatpush1.msra.mxu0 0.0
      %3119 = vmatprep.subr.mxu0 0.0
      %3120 = vmatpush1.msra.mxu0 0.0
      %3121 = vmatprep.subr.mxu0 0.0
      %3122 = vmatpush1.msra.mxu0 0.0
      %3123 = vmatprep.subr.mxu0 0.0
      %3124 = vmatpush1.msra.mxu0 0.0
      %3125 = vmatprep.subr.mxu0 0.0
      %3126 = vmatpush1.msra.mxu0 0.0
      %3127 = vmatprep.subr.mxu0 0.0
      %3128 = vmatpush1.msra.mxu0 0.0
      %3129 = vmatprep.subr.mxu0 0.0
      %3130 = vmatpush1.msra.mxu0 0.0
      %3131 = vmatprep.subr.mxu0 0.0
      %3132 = vmatpush1.msra.mxu0 0.0
      %3133 = vmatprep.subr.mxu0 0.0
      %3134 = vmatpush1.msra.mxu0 0.0
      %3135 = vmatprep.subr.mxu0 0.0
      %3136 = vmatpush1.msra.mxu0 0.0
      %3137 = vmatprep.subr.mxu0 0.0
      %3138 = vmatpush1.msra.mxu0 0.0
      %3139 = vmatprep.subr.mxu0 0.0
      %3140 = vmatpush1.msra.mxu0 0.0
      %3141 = vmatprep.subr.mxu0 0.0
      %3142 = vmatpush1.msra.mxu0 0.0
      %3143 = vmatprep.subr.mxu0 0.0
      %3144 = vmatpush1.msra.mxu0 0.0
      %3145 = vmatprep.subr.mxu0 0.0
      %3146 = vmatpush1.msra.mxu0 0.0
      %3147 = vmatprep.subr.mxu0 0.0
      %3148 = vmatpush1.msra.mxu0 0.0
      %3149 = vmatprep.subr.mxu0 0.0
      %3150 = vmatpush1.msra.mxu0 0.0
      %3151 = vmatprep.subr.mxu0 0.0
      %3152 = vmatpush1.msra.mxu0 0.0
      %3153 = vmatprep.subr.mxu0 0.0
      %3154 = vmatpush1.msra.mxu0 0.0
      %3155 = vmatprep.mubr.f32.mxu0 0.0
      %3156 = vmatmul.mubr.f32.gmra.mrb[0].mxu0 %v3089
      %v3157 = vpop.f32.mrb[0].mxu0
      %v3158 = vadd.f32 0.0, %v3157
      %v3159 = vpop.f32.mrb[0].mxu0
      %v3160 = vadd.f32 0.0, %v3159
      %3161 = vdwg.mxu0
      %v3163 = vsel %vm3087, %v452, 0
      %3165 = vmatprep.subr.mxu0 %v451
      %3166 = vmatpush1.msra.mxu0 %v450
      %3167 = vmatprep.subr.mxu0 0.0
      %3168 = vmatpush1.msra.mxu0 0.0
      %3169 = vmatprep.subr.mxu0 0.0
      %3170 = vmatpush1.msra.mxu0 0.0
      %3171 = vmatprep.subr.mxu0 0.0
      %3172 = vmatpush1.msra.mxu0 0.0
      %3173 = vmatprep.subr.mxu0 0.0
      %3174 = vmatpush1.msra.mxu0 0.0
      %3175 = vmatprep.subr.mxu0 0.0
      %3176 = vmatpush1.msra.mxu0 0.0
      %3177 = vmatprep.subr.mxu0 0.0
      %3178 = vmatpush1.msra.mxu0 0.0
      %3179 = vmatprep.subr.mxu0 0.0
      %3180 = vmatpush1.msra.mxu0 0.0
      %3181 = vmatprep.subr.mxu0 0.0
      %3182 = vmatpush1.msra.mxu0 0.0
      %3183 = vmatprep.subr.mxu0 0.0
      %3184 = vmatpush1.msra.mxu0 0.0
      %3185 = vmatprep.subr.mxu0 0.0
      %3186 = vmatpush1.msra.mxu0 0.0
      %3187 = vmatprep.subr.mxu0 0.0
      %3188 = vmatpush1.msra.mxu0 0.0
      %3189 = vmatprep.subr.mxu0 0.0
      %3190 = vmatpush1.msra.mxu0 0.0
      %3191 = vmatprep.subr.mxu0 0.0
      %3192 = vmatpush1.msra.mxu0 0.0
      %3193 = vmatprep.subr.mxu0 0.0
      %3194 = vmatpush1.msra.mxu0 0.0
      %3195 = vmatprep.subr.mxu0 0.0
      %3196 = vmatpush1.msra.mxu0 0.0
      %3197 = vmatprep.subr.mxu0 0.0
      %3198 = vmatpush1.msra.mxu0 0.0
      %3199 = vmatprep.subr.mxu0 0.0
      %3200 = vmatpush1.msra.mxu0 0.0
      %3201 = vmatprep.subr.mxu0 0.0
      %3202 = vmatpush1.msra.mxu0 0.0
      %3203 = vmatprep.subr.mxu0 0.0
      %3204 = vmatpush1.msra.mxu0 0.0
      %3205 = vmatprep.subr.mxu0 0.0
      %3206 = vmatpush1.msra.mxu0 0.0
      %3207 = vmatprep.subr.mxu0 0.0
      %3208 = vmatpush1.msra.mxu0 0.0
      %3209 = vmatprep.subr.mxu0 0.0
      %3210 = vmatpush1.msra.mxu0 0.0
      %3211 = vmatprep.subr.mxu0 0.0
      %3212 = vmatpush1.msra.mxu0 0.0
      %3213 = vmatprep.subr.mxu0 0.0
      %3214 = vmatpush1.msra.mxu0 0.0
      %3215 = vmatprep.subr.mxu0 0.0
      %3216 = vmatpush1.msra.mxu0 0.0
      %3217 = vmatprep.subr.mxu0 0.0
      %3218 = vmatpush1.msra.mxu0 0.0
      %3219 = vmatprep.subr.mxu0 0.0
      %3220 = vmatpush1.msra.mxu0 0.0
      %3221 = vmatprep.subr.mxu0 0.0
      %3222 = vmatpush1.msra.mxu0 0.0
      %3223 = vmatprep.subr.mxu0 0.0
      %3224 = vmatpush1.msra.mxu0 0.0
      %3225 = vmatprep.subr.mxu0 0.0
      %3226 = vmatpush1.msra.mxu0 0.0
      %3227 = vmatprep.subr.mxu0 0.0
      %3228 = vmatpush1.msra.mxu0 0.0
      %3229 = vmatprep.mubr.f32.mxu0 0.0
      %3230 = vmatmul.mubr.f32.gmra.mrb[0].mxu0 %v3163
      %v3231 = vpop.f32.mrb[0].mxu0
      %v3232 = vadd.f32 %v3158, %v3231
      %v3233 = vpop.f32.mrb[0].mxu0
      %v3234 = vadd.f32 %v3160, %v3233
      %3235 = vdwg.mxu0
      %s3236 = sadd.s32 %s24, 4
      %s3237 = smul.u32 %s3236, 5
      %s3238 = smul.addr %s3237, 4
      %s3239 = scalar_lea.vmem %s331, %s3238
      %v3240 = vld [vmem:[%s3239] sm:$0xff]
      %v3241 = vld [vmem:[%s3239 + $0x8] sm:$0xf]
      %s3242 = scalar_lea.vmem %s3, 216
      %v3243 = vld [vmem:[%s3242] sm:$0xff]
      %v3246 = vcombine.high %v3240, %v3240
      %3247 = vrot.lane.b32.xlu0 %v3240, 52
      %v3248 = vpop.permute.xlu0 %3247
      %3249 = vrot.lane.b32.xlu0 %v3246, 52
      %v3250 = vpop.permute.xlu0 %3249
      %3251 = vrot.lane.b32.xlu0 %v3241, 52
      %v3252 = vpop.permute.xlu0 %3251
      %vm3253 = vcmask 424960
      %v3254 = vsel %vm3253, %v3248, %v3250
      %v3255 = vsel %vm3253, %v3250, %v3252
      %v3257 = vsel %vm370, %v3243, 0
      %v3259 = vsel %vm374, %v3254, 0
      %v3261 = vsel %vm374, %v3255, 0
      %3263 = vmatprep.subr.mxu0 %v3261
      %3264 = vmatpush1.msra.mxu0 %v3259
      %3265 = vmatprep.subr.mxu0 0.0
      %3266 = vmatpush1.msra.mxu0 0.0
      %3267 = vmatprep.subr.mxu0 0.0
      %3268 = vmatpush1.msra.mxu0 0.0
      %3269 = vmatprep.subr.mxu0 0.0
      %3270 = vmatpush1.msra.mxu0 0.0
      %3271 = vmatprep.subr.mxu0 0.0
      %3272 = vmatpush1.msra.mxu0 0.0
      %3273 = vmatprep.subr.mxu0 0.0
      %3274 = vmatpush1.msra.mxu0 0.0
      %3275 = vmatprep.subr.mxu0 0.0
      %3276 = vmatpush1.msra.mxu0 0.0
      %3277 = vmatprep.subr.mxu0 0.0
      %3278 = vmatpush1.msra.mxu0 0.0
      %3279 = vmatprep.subr.mxu0 0.0
      %3280 = vmatpush1.msra.mxu0 0.0
      %3281 = vmatprep.subr.mxu0 0.0
      %3282 = vmatpush1.msra.mxu0 0.0
      %3283 = vmatprep.subr.mxu0 0.0
      %3284 = vmatpush1.msra.mxu0 0.0
      %3285 = vmatprep.subr.mxu0 0.0
      %3286 = vmatpush1.msra.mxu0 0.0
      %3287 = vmatprep.subr.mxu0 0.0
      %3288 = vmatpush1.msra.mxu0 0.0
      %3289 = vmatprep.subr.mxu0 0.0
      %3290 = vmatpush1.msra.mxu0 0.0
      %3291 = vmatprep.subr.mxu0 0.0
      %3292 = vmatpush1.msra.mxu0 0.0
      %3293 = vmatprep.subr.mxu0 0.0
      %3294 = vmatpush1.msra.mxu0 0.0
      %3295 = vmatprep.subr.mxu0 0.0
      %3296 = vmatpush1.msra.mxu0 0.0
      %3297 = vmatprep.subr.mxu0 0.0
      %3298 = vmatpush1.msra.mxu0 0.0
      %3299 = vmatprep.subr.mxu0 0.0
      %3300 = vmatpush1.msra.mxu0 0.0
      %3301 = vmatprep.subr.mxu0 0.0
      %3302 = vmatpush1.msra.mxu0 0.0
      %3303 = vmatprep.subr.mxu0 0.0
      %3304 = vmatpush1.msra.mxu0 0.0
      %3305 = vmatprep.subr.mxu0 0.0
      %3306 = vmatpush1.msra.mxu0 0.0
      %3307 = vmatprep.subr.mxu0 0.0
      %3308 = vmatpush1.msra.mxu0 0.0
      %3309 = vmatprep.subr.mxu0 0.0
      %3310 = vmatpush1.msra.mxu0 0.0
      %3311 = vmatprep.subr.mxu0 0.0
      %3312 = vmatpush1.msra.mxu0 0.0
      %3313 = vmatprep.subr.mxu0 0.0
      %3314 = vmatpush1.msra.mxu0 0.0
      %3315 = vmatprep.subr.mxu0 0.0
      %3316 = vmatpush1.msra.mxu0 0.0
      %3317 = vmatprep.subr.mxu0 0.0
      %3318 = vmatpush1.msra.mxu0 0.0
      %3319 = vmatprep.subr.mxu0 0.0
      %3320 = vmatpush1.msra.mxu0 0.0
      %3321 = vmatprep.subr.mxu0 0.0
      %3322 = vmatpush1.msra.mxu0 0.0
      %3323 = vmatprep.subr.mxu0 0.0
      %3324 = vmatpush1.msra.mxu0 0.0
      %3325 = vmatprep.subr.mxu0 0.0
      %3326 = vmatpush1.msra.mxu0 0.0
      %3327 = vmatprep.mubr.f32.mxu0 0.0
      %3328 = vmatmul.mubr.f32.gmra.mrb[0].mxu0 %v3257
      %v3329 = vpop.f32.mrb[0].mxu0
      %v3330 = vadd.f32 0.0, %v3329
      %v3331 = vpop.f32.mrb[0].mxu0
      %v3332 = vadd.f32 0.0, %v3331
      %3333 = vdwg.mxu0
      %s3334 = scalar_lea.vmem %s6, 3
      %v3335 = vld [vmem:[%s3334] ss:$8 sm:$0x3]
      %v3337 = vlaneseq
      %v3338 = vshrl.u32 %v3337, 7
      %v3339 = vsub.s32 0, %v3338
      %v3340 = vrot.slane %v3335, %v3339
      %v3341 = vlaneseq
      %v3342 = vshrl.u32 %v3341, 7
      %v3343 = vsub.s32 1, %v3342
      %v3344 = vrot.slane %v3335, %v3343
      %v3347 = vmul.f32 %v3330, %v3340
      %v3348 = vmul.f32 %v3332, %v3344
      %v3349 = vld [vmem:[%s3239] sm:$0xff]
      %v3350 = vld [vmem:[%s3239 + $0x8] sm:$0xf]
      %s3351 = scalar_lea.vmem %s3, 224
      %v3352 = vld [vmem:[%s3351] sm:$0xff]
      %v3355 = vcombine.high %v3349, %v3349
      %3356 = vrot.lane.b32.xlu0 %v3349, 48
      %v3357 = vpop.permute.xlu0 %3356
      %3358 = vrot.lane.b32.xlu0 %v3355, 48
      %v3359 = vpop.permute.xlu0 %3358
      %3360 = vrot.lane.b32.xlu0 %v3350, 48
      %v3361 = vpop.permute.xlu0 %3360
      %vm3362 = vcmask 392192
      %v3363 = vsel %vm3362, %v3357, %v3359
      %v3364 = vsel %vm3362, %v3359, %v3361
      %v3366 = vsel %vm370, %v3352, 0
      %v3368 = vsel %vm374, %v3363, 0
      %v3370 = vsel %vm374, %v3364, 0
      %3372 = vmatprep.subr.mxu0 %v3370
      %3373 = vmatpush1.msra.mxu0 %v3368
      %3374 = vmatprep.subr.mxu0 0.0
      %3375 = vmatpush1.msra.mxu0 0.0
      %3376 = vmatprep.subr.mxu0 0.0
      %3377 = vmatpush1.msra.mxu0 0.0
      %3378 = vmatprep.subr.mxu0 0.0
      %3379 = vmatpush1.msra.mxu0 0.0
      %3380 = vmatprep.subr.mxu0 0.0
      %3381 = vmatpush1.msra.mxu0 0.0
      %3382 = vmatprep.subr.mxu0 0.0
      %3383 = vmatpush1.msra.mxu0 0.0
      %3384 = vmatprep.subr.mxu0 0.0
      %3385 = vmatpush1.msra.mxu0 0.0
      %3386 = vmatprep.subr.mxu0 0.0
      %3387 = vmatpush1.msra.mxu0 0.0
      %3388 = vmatprep.subr.mxu0 0.0
      %3389 = vmatpush1.msra.mxu0 0.0
      %3390 = vmatprep.subr.mxu0 0.0
      %3391 = vmatpush1.msra.mxu0 0.0
      %3392 = vmatprep.subr.mxu0 0.0
      %3393 = vmatpush1.msra.mxu0 0.0
      %3394 = vmatprep.subr.mxu0 0.0
      %3395 = vmatpush1.msra.mxu0 0.0
      %3396 = vmatprep.subr.mxu0 0.0
      %3397 = vmatpush1.msra.mxu0 0.0
      %3398 = vmatprep.subr.mxu0 0.0
      %3399 = vmatpush1.msra.mxu0 0.0
      %3400 = vmatprep.subr.mxu0 0.0
      %3401 = vmatpush1.msra.mxu0 0.0
      %3402 = vmatprep.subr.mxu0 0.0
      %3403 = vmatpush1.msra.mxu0 0.0
      %3404 = vmatprep.subr.mxu0 0.0
      %3405 = vmatpush1.msra.mxu0 0.0
      %3406 = vmatprep.subr.mxu0 0.0
      %3407 = vmatpush1.msra.mxu0 0.0
      %3408 = vmatprep.subr.mxu0 0.0
      %3409 = vmatpush1.msra.mxu0 0.0
      %3410 = vmatprep.subr.mxu0 0.0
      %3411 = vmatpush1.msra.mxu0 0.0
      %3412 = vmatprep.subr.mxu0 0.0
      %3413 = vmatpush1.msra.mxu0 0.0
      %3414 = vmatprep.subr.mxu0 0.0
      %3415 = vmatpush1.msra.mxu0 0.0
      %3416 = vmatprep.subr.mxu0 0.0
      %3417 = vmatpush1.msra.mxu0 0.0
      %3418 = vmatprep.subr.mxu0 0.0
      %3419 = vmatpush1.msra.mxu0 0.0
      %3420 = vmatprep.subr.mxu0 0.0
      %3421 = vmatpush1.msra.mxu0 0.0
      %3422 = vmatprep.subr.mxu0 0.0
      %3423 = vmatpush1.msra.mxu0 0.0
      %3424 = vmatprep.subr.mxu0 0.0
      %3425 = vmatpush1.msra.mxu0 0.0
      %3426 = vmatprep.subr.mxu0 0.0
      %3427 = vmatpush1.msra.mxu0 0.0
      %3428 = vmatprep.subr.mxu0 0.0
      %3429 = vmatpush1.msra.mxu0 0.0
      %3430 = vmatprep.subr.mxu0 0.0
      %3431 = vmatpush1.msra.mxu0 0.0
      %3432 = vmatprep.subr.mxu0 0.0
      %3433 = vmatpush1.msra.mxu0 0.0
      %3434 = vmatprep.subr.mxu0 0.0
      %3435 = vmatpush1.msra.mxu0 0.0
      %3436 = vmatprep.mubr.f32.mxu0 0.0
      %3437 = vmatmul.mubr.f32.gmra.mrb[0].mxu0 %v3366
      %v3438 = vpop.f32.mrb[0].mxu0
      %v3439 = vadd.f32 0.0, %v3438
      %v3440 = vpop.f32.mrb[0].mxu0
      %v3441 = vadd.f32 0.0, %v3440
      %3442 = vdwg.mxu0
      %v3443 = vadd.f32 %v3347, %v3439
      %v3444 = vadd.f32 %v3348, %v3441
      %v3445 = vld [vmem:[%s3239] sm:$0xff]
      %v3446 = vld [vmem:[%s3239 + $0x8] sm:$0xf]
      %s3447 = scalar_lea.vmem %s3, 232
      %v3448 = vld [vmem:[%s3447] sm:$0xff]
      %v3451 = vcombine.high %v3445, %v3445
      %3452 = vrot.lane.b32.xlu0 %v3445, 44
      %v3453 = vpop.permute.xlu0 %3452
      %3454 = vrot.lane.b32.xlu0 %v3451, 44
      %v3455 = vpop.permute.xlu0 %3454
      %3456 = vrot.lane.b32.xlu0 %v3446, 44
      %v3457 = vpop.permute.xlu0 %3456
      %vm3458 = vcmask 359424
      %v3459 = vsel %vm3458, %v3453, %v3455
      %v3460 = vsel %vm3458, %v3455, %v3457
      %v3462 = vsel %vm370, %v3448, 0
      %v3464 = vsel %vm374, %v3459, 0
      %v3466 = vsel %vm374, %v3460, 0
      %3468 = vmatprep.subr.mxu0 %v3466
      %3469 = vmatpush1.msra.mxu0 %v3464
      %3470 = vmatprep.subr.mxu0 0.0
      %3471 = vmatpush1.msra.mxu0 0.0
      %3472 = vmatprep.subr.mxu0 0.0
      %3473 = vmatpush1.msra.mxu0 0.0
      %3474 = vmatprep.subr.mxu0 0.0
      %3475 = vmatpush1.msra.mxu0 0.0
      %3476 = vmatprep.subr.mxu0 0.0
      %3477 = vmatpush1.msra.mxu0 0.0
      %3478 = vmatprep.subr.mxu0 0.0
      %3479 = vmatpush1.msra.mxu0 0.0
      %3480 = vmatprep.subr.mxu0 0.0
      %3481 = vmatpush1.msra.mxu0 0.0
      %3482 = vmatprep.subr.mxu0 0.0
      %3483 = vmatpush1.msra.mxu0 0.0
      %3484 = vmatprep.subr.mxu0 0.0
      %3485 = vmatpush1.msra.mxu0 0.0
      %3486 = vmatprep.subr.mxu0 0.0
      %3487 = vmatpush1.msra.mxu0 0.0
      %3488 = vmatprep.subr.mxu0 0.0
      %3489 = vmatpush1.msra.mxu0 0.0
      %3490 = vmatprep.subr.mxu0 0.0
      %3491 = vmatpush1.msra.mxu0 0.0
      %3492 = vmatprep.subr.mxu0 0.0
      %3493 = vmatpush1.msra.mxu0 0.0
      %3494 = vmatprep.subr.mxu0 0.0
      %3495 = vmatpush1.msra.mxu0 0.0
      %3496 = vmatprep.subr.mxu0 0.0
      %3497 = vmatpush1.msra.mxu0 0.0
      %3498 = vmatprep.subr.mxu0 0.0
      %3499 = vmatpush1.msra.mxu0 0.0
      %3500 = vmatprep.subr.mxu0 0.0
      %3501 = vmatpush1.msra.mxu0 0.0
      %3502 = vmatprep.subr.mxu0 0.0
      %3503 = vmatpush1.msra.mxu0 0.0
      %3504 = vmatprep.subr.mxu0 0.0
      %3505 = vmatpush1.msra.mxu0 0.0
      %3506 = vmatprep.subr.mxu0 0.0
      %3507 = vmatpush1.msra.mxu0 0.0
      %3508 = vmatprep.subr.mxu0 0.0
      %3509 = vmatpush1.msra.mxu0 0.0
      %3510 = vmatprep.subr.mxu0 0.0
      %3511 = vmatpush1.msra.mxu0 0.0
      %3512 = vmatprep.subr.mxu0 0.0
      %3513 = vmatpush1.msra.mxu0 0.0
      %3514 = vmatprep.subr.mxu0 0.0
      %3515 = vmatpush1.msra.mxu0 0.0
      %3516 = vmatprep.subr.mxu0 0.0
      %3517 = vmatpush1.msra.mxu0 0.0
      %3518 = vmatprep.subr.mxu0 0.0
      %3519 = vmatpush1.msra.mxu0 0.0
      %3520 = vmatprep.subr.mxu0 0.0
      %3521 = vmatpush1.msra.mxu0 0.0
      %3522 = vmatprep.subr.mxu0 0.0
      %3523 = vmatpush1.msra.mxu0 0.0
      %3524 = vmatprep.subr.mxu0 0.0
      %3525 = vmatpush1.msra.mxu0 0.0
      %3526 = vmatprep.subr.mxu0 0.0
      %3527 = vmatpush1.msra.mxu0 0.0
      %3528 = vmatprep.subr.mxu0 0.0
      %3529 = vmatpush1.msra.mxu0 0.0
      %3530 = vmatprep.subr.mxu0 0.0
      %3531 = vmatpush1.msra.mxu0 0.0
      %3532 = vmatprep.mubr.f32.mxu0 0.0
      %3533 = vmatmul.mubr.f32.gmra.mrb[0].mxu0 %v3462
      %v3534 = vpop.f32.mrb[0].mxu0
      %v3535 = vadd.f32 0.0, %v3534
      %v3536 = vpop.f32.mrb[0].mxu0
      %v3537 = vadd.f32 0.0, %v3536
      %3538 = vdwg.mxu0
      %s3539 = scalar_lea.vmem %s6, 5
      %v3540 = vld [vmem:[%s3539] ss:$8 sm:$0x3]
      %v3542 = vlaneseq
      %v3543 = vshrl.u32 %v3542, 7
      %v3544 = vsub.s32 0, %v3543
      %v3545 = vrot.slane %v3540, %v3544
      %v3546 = vlaneseq
      %v3547 = vshrl.u32 %v3546, 7
      %v3548 = vsub.s32 1, %v3547
      %v3549 = vrot.slane %v3540, %v3548
      %v3552 = vmul.f32 %v3535, %v3545
      %v3553 = vmul.f32 %v3537, %v3549
      %v3554 = vadd.f32 %v3443, %v3552
      %v3555 = vadd.f32 %v3444, %v3553
      %v3556 = vld [vmem:[%s3239 + $0x4] sm:$0xff]
      %v3557 = vld [vmem:[%s3239 + $0xc] sm:$0xf]
      %s3558 = scalar_lea.vmem %s3, 240
      %v3559 = vld [vmem:[%s3558] sm:$0xff]
      %v3562 = vcombine.high %v3556, %v3556
      %3563 = vrot.lane.b32.xlu0 %v3556, 116
      %v3564 = vpop.permute.xlu0 %3563
      %3565 = vrot.lane.b32.xlu0 %v3562, 116
      %v3566 = vpop.permute.xlu0 %3565
      %3567 = vrot.lane.b32.xlu0 %v3557, 116
      %v3568 = vpop.permute.xlu0 %3567
      %vm3569 = vcmask 949248
      %v3570 = vsel %vm3569, %v3564, %v3566
      %v3571 = vsel %vm3569, %v3566, %v3568
      %v3573 = vsel %vm370, %v3559, 0
      %v3575 = vsel %vm374, %v3570, 0
      %v3577 = vsel %vm374, %v3571, 0
      %3579 = vmatprep.subr.mxu0 %v3577
      %3580 = vmatpush1.msra.mxu0 %v3575
      %3581 = vmatprep.subr.mxu0 0.0
      %3582 = vmatpush1.msra.mxu0 0.0
      %3583 = vmatprep.subr.mxu0 0.0
      %3584 = vmatpush1.msra.mxu0 0.0
      %3585 = vmatprep.subr.mxu0 0.0
      %3586 = vmatpush1.msra.mxu0 0.0
      %3587 = vmatprep.subr.mxu0 0.0
      %3588 = vmatpush1.msra.mxu0 0.0
      %3589 = vmatprep.subr.mxu0 0.0
      %3590 = vmatpush1.msra.mxu0 0.0
      %3591 = vmatprep.subr.mxu0 0.0
      %3592 = vmatpush1.msra.mxu0 0.0
      %3593 = vmatprep.subr.mxu0 0.0
      %3594 = vmatpush1.msra.mxu0 0.0
      %3595 = vmatprep.subr.mxu0 0.0
      %3596 = vmatpush1.msra.mxu0 0.0
      %3597 = vmatprep.subr.mxu0 0.0
      %3598 = vmatpush1.msra.mxu0 0.0
      %3599 = vmatprep.subr.mxu0 0.0
      %3600 = vmatpush1.msra.mxu0 0.0
      %3601 = vmatprep.subr.mxu0 0.0
      %3602 = vmatpush1.msra.mxu0 0.0
      %3603 = vmatprep.subr.mxu0 0.0
      %3604 = vmatpush1.msra.mxu0 0.0
      %3605 = vmatprep.subr.mxu0 0.0
      %3606 = vmatpush1.msra.mxu0 0.0
      %3607 = vmatprep.subr.mxu0 0.0
      %3608 = vmatpush1.msra.mxu0 0.0
      %3609 = vmatprep.subr.mxu0 0.0
      %3610 = vmatpush1.msra.mxu0 0.0
      %3611 = vmatprep.subr.mxu0 0.0
      %3612 = vmatpush1.msra.mxu0 0.0
      %3613 = vmatprep.subr.mxu0 0.0
      %3614 = vmatpush1.msra.mxu0 0.0
      %3615 = vmatprep.subr.mxu0 0.0
      %3616 = vmatpush1.msra.mxu0 0.0
      %3617 = vmatprep.subr.mxu0 0.0
      %3618 = vmatpush1.msra.mxu0 0.0
      %3619 = vmatprep.subr.mxu0 0.0
      %3620 = vmatpush1.msra.mxu0 0.0
      %3621 = vmatprep.subr.mxu0 0.0
      %3622 = vmatpush1.msra.mxu0 0.0
      %3623 = vmatprep.subr.mxu0 0.0
      %3624 = vmatpush1.msra.mxu0 0.0
      %3625 = vmatprep.subr.mxu0 0.0
      %3626 = vmatpush1.msra.mxu0 0.0
      %3627 = vmatprep.subr.mxu0 0.0
      %3628 = vmatpush1.msra.mxu0 0.0
      %3629 = vmatprep.subr.mxu0 0.0
      %3630 = vmatpush1.msra.mxu0 0.0
      %3631 = vmatprep.subr.mxu0 0.0
      %3632 = vmatpush1.msra.mxu0 0.0
      %3633 = vmatprep.subr.mxu0 0.0
      %3634 = vmatpush1.msra.mxu0 0.0
      %3635 = vmatprep.subr.mxu0 0.0
      %3636 = vmatpush1.msra.mxu0 0.0
      %3637 = vmatprep.subr.mxu0 0.0
      %3638 = vmatpush1.msra.mxu0 0.0
      %3639 = vmatprep.subr.mxu0 0.0
      %3640 = vmatpush1.msra.mxu0 0.0
      %3641 = vmatprep.subr.mxu0 0.0
      %3642 = vmatpush1.msra.mxu0 0.0
      %3643 = vmatprep.mubr.f32.mxu0 0.0
      %3644 = vmatmul.mubr.f32.gmra.mrb[0].mxu0 %v3573
      %v3645 = vpop.f32.mrb[0].mxu0
      %v3646 = vadd.f32 0.0, %v3645
      %v3647 = vpop.f32.mrb[0].mxu0
      %v3648 = vadd.f32 0.0, %v3647
      %3649 = vdwg.mxu0
      %v3650 = vmul.f32 %v3646, %v3340
      %v3651 = vmul.f32 %v3648, %v3344
      %v3652 = vadd.f32 %v3554, %v3650
      %v3653 = vadd.f32 %v3555, %v3651
      %v3654 = vld [vmem:[%s3239 + $0x4] sm:$0xff]
      %v3655 = vld [vmem:[%s3239 + $0xc] sm:$0xf]
      %s3656 = scalar_lea.vmem %s3, 248
      %v3657 = vld [vmem:[%s3656] sm:$0xff]
      %v3660 = vcombine.high %v3654, %v3654
      %3661 = vrot.lane.b32.xlu0 %v3654, 112
      %v3662 = vpop.permute.xlu0 %3661
      %3663 = vrot.lane.b32.xlu0 %v3660, 112
      %v3664 = vpop.permute.xlu0 %3663
      %3665 = vrot.lane.b32.xlu0 %v3655, 112
      %v3666 = vpop.permute.xlu0 %3665
      %v3667 = vsel %vm367, %v3662, %v3664
      %v3668 = vsel %vm367, %v3664, %v3666
      %v3670 = vsel %vm370, %v3657, 0
      %v3672 = vsel %vm374, %v3667, 0
      %v3674 = vsel %vm374, %v3668, 0
      %3676 = vmatprep.subr.mxu0 %v3674
      %3677 = vmatpush1.msra.mxu0 %v3672
      %3678 = vmatprep.subr.mxu0 0.0
      %3679 = vmatpush1.msra.mxu0 0.0
      %3680 = vmatprep.subr.mxu0 0.0
      %3681 = vmatpush1.msra.mxu0 0.0
      %3682 = vmatprep.subr.mxu0 0.0
      %3683 = vmatpush1.msra.mxu0 0.0
      %3684 = vmatprep.subr.mxu0 0.0
      %3685 = vmatpush1.msra.mxu0 0.0
      %3686 = vmatprep.subr.mxu0 0.0
      %3687 = vmatpush1.msra.mxu0 0.0
      %3688 = vmatprep.subr.mxu0 0.0
      %3689 = vmatpush1.msra.mxu0 0.0
      %3690 = vmatprep.subr.mxu0 0.0
      %3691 = vmatpush1.msra.mxu0 0.0
      %3692 = vmatprep.subr.mxu0 0.0
      %3693 = vmatpush1.msra.mxu0 0.0
      %3694 = vmatprep.subr.mxu0 0.0
      %3695 = vmatpush1.msra.mxu0 0.0
      %3696 = vmatprep.subr.mxu0 0.0
      %3697 = vmatpush1.msra.mxu0 0.0
      %3698 = vmatprep.subr.mxu0 0.0
      %3699 = vmatpush1.msra.mxu0 0.0
      %3700 = vmatprep.subr.mxu0 0.0
      %3701 = vmatpush1.msra.mxu0 0.0
      %3702 = vmatprep.subr.mxu0 0.0
      %3703 = vmatpush1.msra.mxu0 0.0
      %3704 = vmatprep.subr.mxu0 0.0
      %3705 = vmatpush1.msra.mxu0 0.0
      %3706 = vmatprep.subr.mxu0 0.0
      %3707 = vmatpush1.msra.mxu0 0.0
      %3708 = vmatprep.subr.mxu0 0.0
      %3709 = vmatpush1.msra.mxu0 0.0
      %3710 = vmatprep.subr.mxu0 0.0
      %3711 = vmatpush1.msra.mxu0 0.0
      %3712 = vmatprep.subr.mxu0 0.0
      %3713 = vmatpush1.msra.mxu0 0.0
      %3714 = vmatprep.subr.mxu0 0.0
      %3715 = vmatpush1.msra.mxu0 0.0
      %3716 = vmatprep.subr.mxu0 0.0
      %3717 = vmatpush1.msra.mxu0 0.0
      %3718 = vmatprep.subr.mxu0 0.0
      %3719 = vmatpush1.msra.mxu0 0.0
      %3720 = vmatprep.subr.mxu0 0.0
      %3721 = vmatpush1.msra.mxu0 0.0
      %3722 = vmatprep.subr.mxu0 0.0
      %3723 = vmatpush1.msra.mxu0 0.0
      %3724 = vmatprep.subr.mxu0 0.0
      %3725 = vmatpush1.msra.mxu0 0.0
      %3726 = vmatprep.subr.mxu0 0.0
      %3727 = vmatpush1.msra.mxu0 0.0
      %3728 = vmatprep.subr.mxu0 0.0
      %3729 = vmatpush1.msra.mxu0 0.0
      %3730 = vmatprep.subr.mxu0 0.0
      %3731 = vmatpush1.msra.mxu0 0.0
      %3732 = vmatprep.subr.mxu0 0.0
      %3733 = vmatpush1.msra.mxu0 0.0
      %3734 = vmatprep.subr.mxu0 0.0
      %3735 = vmatpush1.msra.mxu0 0.0
      %3736 = vmatprep.subr.mxu0 0.0
      %3737 = vmatpush1.msra.mxu0 0.0
      %3738 = vmatprep.subr.mxu0 0.0
      %3739 = vmatpush1.msra.mxu0 0.0
      %3740 = vmatprep.mubr.f32.mxu0 0.0
      %3741 = vmatmul.mubr.f32.gmra.mrb[0].mxu0 %v3670
      %v3742 = vpop.f32.mrb[0].mxu0
      %v3743 = vadd.f32 0.0, %v3742
      %v3744 = vpop.f32.mrb[0].mxu0
      %v3745 = vadd.f32 0.0, %v3744
      %3746 = vdwg.mxu0
      %v3747 = vadd.f32 %v3652, %v3743
      %v3748 = vadd.f32 %v3653, %v3745
      %v3749 = vld [vmem:[%s3239 + $0x4] sm:$0xff]
      %v3750 = vld [vmem:[%s3239 + $0xc] sm:$0xf]
      %s3751 = scalar_lea.vmem %s3, 256
      %v3752 = vld [vmem:[%s3751] sm:$0xff]
      %v3755 = vcombine.high %v3749, %v3749
      %3756 = vrot.lane.b32.xlu0 %v3749, 108
      %v3757 = vpop.permute.xlu0 %3756
      %3758 = vrot.lane.b32.xlu0 %v3755, 108
      %v3759 = vpop.permute.xlu0 %3758
      %3760 = vrot.lane.b32.xlu0 %v3750, 108
      %v3761 = vpop.permute.xlu0 %3760
      %vm3762 = vcmask 883712
      %v3763 = vsel %vm3762, %v3757, %v3759
      %v3764 = vsel %vm3762, %v3759, %v3761
      %v3766 = vsel %vm370, %v3752, 0
      %v3768 = vsel %vm374, %v3763, 0
      %v3770 = vsel %vm374, %v3764, 0
      %3772 = vmatprep.subr.mxu0 %v3770
      %3773 = vmatpush1.msra.mxu0 %v3768
      %3774 = vmatprep.subr.mxu0 0.0
      %3775 = vmatpush1.msra.mxu0 0.0
      %3776 = vmatprep.subr.mxu0 0.0
      %3777 = vmatpush1.msra.mxu0 0.0
      %3778 = vmatprep.subr.mxu0 0.0
      %3779 = vmatpush1.msra.mxu0 0.0
      %3780 = vmatprep.subr.mxu0 0.0
      %3781 = vmatpush1.msra.mxu0 0.0
      %3782 = vmatprep.subr.mxu0 0.0
      %3783 = vmatpush1.msra.mxu0 0.0
      %3784 = vmatprep.subr.mxu0 0.0
      %3785 = vmatpush1.msra.mxu0 0.0
      %3786 = vmatprep.subr.mxu0 0.0
      %3787 = vmatpush1.msra.mxu0 0.0
      %3788 = vmatprep.subr.mxu0 0.0
      %3789 = vmatpush1.msra.mxu0 0.0
      %3790 = vmatprep.subr.mxu0 0.0
      %3791 = vmatpush1.msra.mxu0 0.0
      %3792 = vmatprep.subr.mxu0 0.0
      %3793 = vmatpush1.msra.mxu0 0.0
      %3794 = vmatprep.subr.mxu0 0.0
      %3795 = vmatpush1.msra.mxu0 0.0
      %3796 = vmatprep.subr.mxu0 0.0
      %3797 = vmatpush1.msra.mxu0 0.0
      %3798 = vmatprep.subr.mxu0 0.0
      %3799 = vmatpush1.msra.mxu0 0.0
      %3800 = vmatprep.subr.mxu0 0.0
      %3801 = vmatpush1.msra.mxu0 0.0
      %3802 = vmatprep.subr.mxu0 0.0
      %3803 = vmatpush1.msra.mxu0 0.0
      %3804 = vmatprep.subr.mxu0 0.0
      %3805 = vmatpush1.msra.mxu0 0.0
      %3806 = vmatprep.subr.mxu0 0.0
      %3807 = vmatpush1.msra.mxu0 0.0
      %3808 = vmatprep.subr.mxu0 0.0
      %3809 = vmatpush1.msra.mxu0 0.0
      %3810 = vmatprep.subr.mxu0 0.0
      %3811 = vmatpush1.msra.mxu0 0.0
      %3812 = vmatprep.subr.mxu0 0.0
      %3813 = vmatpush1.msra.mxu0 0.0
      %3814 = vmatprep.subr.mxu0 0.0
      %3815 = vmatpush1.msra.mxu0 0.0
      %3816 = vmatprep.subr.mxu0 0.0
      %3817 = vmatpush1.msra.mxu0 0.0
      %3818 = vmatprep.subr.mxu0 0.0
      %3819 = vmatpush1.msra.mxu0 0.0
      %3820 = vmatprep.subr.mxu0 0.0
      %3821 = vmatpush1.msra.mxu0 0.0
      %3822 = vmatprep.subr.mxu0 0.0
      %3823 = vmatpush1.msra.mxu0 0.0
      %3824 = vmatprep.subr.mxu0 0.0
      %3825 = vmatpush1.msra.mxu0 0.0
      %3826 = vmatprep.subr.mxu0 0.0
      %3827 = vmatpush1.msra.mxu0 0.0
      %3828 = vmatprep.subr.mxu0 0.0
      %3829 = vmatpush1.msra.mxu0 0.0
      %3830 = vmatprep.subr.mxu0 0.0
      %3831 = vmatpush1.msra.mxu0 0.0
      %3832 = vmatprep.subr.mxu0 0.0
      %3833 = vmatpush1.msra.mxu0 0.0
      %3834 = vmatprep.subr.mxu0 0.0
      %3835 = vmatpush1.msra.mxu0 0.0
      %3836 = vmatprep.mubr.f32.mxu0 0.0
      %3837 = vmatmul.mubr.f32.gmra.mrb[0].mxu0 %v3766
      %v3838 = vpop.f32.mrb[0].mxu0
      %v3839 = vadd.f32 0.0, %v3838
      %v3840 = vpop.f32.mrb[0].mxu0
      %v3841 = vadd.f32 0.0, %v3840
      %3842 = vdwg.mxu0
      %v3843 = vmul.f32 %v3839, %v3545
      %v3844 = vmul.f32 %v3841, %v3549
      %v3845 = vadd.f32 %v3747, %v3843
      %v3846 = vadd.f32 %v3748, %v3844
      %v3847 = vld [vmem:[%s3239 + $0x4] sm:$0xff]
      %v3848 = vld [vmem:[%s3239 + $0xc] sm:$0xf]
      %s3849 = scalar_lea.vmem %s3, 264
      %v3850 = vld [vmem:[%s3849] sm:$0xff]
      %v3853 = vcombine.high %v3847, %v3847
      %3854 = vrot.lane.b32.xlu0 %v3847, 52
      %v3855 = vpop.permute.xlu0 %3854
      %3856 = vrot.lane.b32.xlu0 %v3853, 52
      %v3857 = vpop.permute.xlu0 %3856
      %3858 = vrot.lane.b32.xlu0 %v3848, 52
      %v3859 = vpop.permute.xlu0 %3858
      %v3860 = vsel %vm3253, %v3855, %v3857
      %v3861 = vsel %vm3253, %v3857, %v3859
      %v3863 = vsel %vm370, %v3850, 0
      %v3865 = vsel %vm374, %v3860, 0
      %v3867 = vsel %vm374, %v3861, 0
      %3869 = vmatprep.subr.mxu0 %v3867
      %3870 = vmatpush1.msra.mxu0 %v3865
      %3871 = vmatprep.subr.mxu0 0.0
      %3872 = vmatpush1.msra.mxu0 0.0
      %3873 = vmatprep.subr.mxu0 0.0
      %3874 = vmatpush1.msra.mxu0 0.0
      %3875 = vmatprep.subr.mxu0 0.0
      %3876 = vmatpush1.msra.mxu0 0.0
      %3877 = vmatprep.subr.mxu0 0.0
      %3878 = vmatpush1.msra.mxu0 0.0
      %3879 = vmatprep.subr.mxu0 0.0
      %3880 = vmatpush1.msra.mxu0 0.0
      %3881 = vmatprep.subr.mxu0 0.0
      %3882 = vmatpush1.msra.mxu0 0.0
      %3883 = vmatprep.subr.mxu0 0.0
      %3884 = vmatpush1.msra.mxu0 0.0
      %3885 = vmatprep.subr.mxu0 0.0
      %3886 = vmatpush1.msra.mxu0 0.0
      %3887 = vmatprep.subr.mxu0 0.0
      %3888 = vmatpush1.msra.mxu0 0.0
      %3889 = vmatprep.subr.mxu0 0.0
      %3890 = vmatpush1.msra.mxu0 0.0
      %3891 = vmatprep.subr.mxu0 0.0
      %3892 = vmatpush1.msra.mxu0 0.0
      %3893 = vmatprep.subr.mxu0 0.0
      %3894 = vmatpush1.msra.mxu0 0.0
      %3895 = vmatprep.subr.mxu0 0.0
      %3896 = vmatpush1.msra.mxu0 0.0
      %3897 = vmatprep.subr.mxu0 0.0
      %3898 = vmatpush1.msra.mxu0 0.0
      %3899 = vmatprep.subr.mxu0 0.0
      %3900 = vmatpush1.msra.mxu0 0.0
      %3901 = vmatprep.subr.mxu0 0.0
      %3902 = vmatpush1.msra.mxu0 0.0
      %3903 = vmatprep.subr.mxu0 0.0
      %3904 = vmatpush1.msra.mxu0 0.0
      %3905 = vmatprep.subr.mxu0 0.0
      %3906 = vmatpush1.msra.mxu0 0.0
      %3907 = vmatprep.subr.mxu0 0.0
      %3908 = vmatpush1.msra.mxu0 0.0
      %3909 = vmatprep.subr.mxu0 0.0
      %3910 = vmatpush1.msra.mxu0 0.0
      %3911 = vmatprep.subr.mxu0 0.0
      %3912 = vmatpush1.msra.mxu0 0.0
      %3913 = vmatprep.subr.mxu0 0.0
      %3914 = vmatpush1.msra.mxu0 0.0
      %3915 = vmatprep.subr.mxu0 0.0
      %3916 = vmatpush1.msra.mxu0 0.0
      %3917 = vmatprep.subr.mxu0 0.0
      %3918 = vmatpush1.msra.mxu0 0.0
      %3919 = vmatprep.subr.mxu0 0.0
      %3920 = vmatpush1.msra.mxu0 0.0
      %3921 = vmatprep.subr.mxu0 0.0
      %3922 = vmatpush1.msra.mxu0 0.0
      %3923 = vmatprep.subr.mxu0 0.0
      %3924 = vmatpush1.msra.mxu0 0.0
      %3925 = vmatprep.subr.mxu0 0.0
      %3926 = vmatpush1.msra.mxu0 0.0
      %3927 = vmatprep.subr.mxu0 0.0
      %3928 = vmatpush1.msra.mxu0 0.0
      %3929 = vmatprep.subr.mxu0 0.0
      %3930 = vmatpush1.msra.mxu0 0.0
      %3931 = vmatprep.subr.mxu0 0.0
      %3932 = vmatpush1.msra.mxu0 0.0
      %3933 = vmatprep.mubr.f32.mxu0 0.0
      %3934 = vmatmul.mubr.f32.gmra.mrb[0].mxu0 %v3863
      %v3935 = vpop.f32.mrb[0].mxu0
      %v3936 = vadd.f32 0.0, %v3935
      %v3937 = vpop.f32.mrb[0].mxu0
      %v3938 = vadd.f32 0.0, %v3937
      %3939 = vdwg.mxu0
      %v3940 = vmul.f32 %v3936, %v3340
      %v3941 = vmul.f32 %v3938, %v3344
      %v3942 = vadd.f32 %v3845, %v3940
      %v3943 = vadd.f32 %v3846, %v3941
      %v3944 = vld [vmem:[%s3239 + $0x4] sm:$0xff]
      %v3945 = vld [vmem:[%s3239 + $0xc] sm:$0xf]
      %s3946 = scalar_lea.vmem %s3, 272
      %v3947 = vld [vmem:[%s3946] sm:$0xff]
      %v3950 = vcombine.high %v3944, %v3944
      %3951 = vrot.lane.b32.xlu0 %v3944, 48
      %v3952 = vpop.permute.xlu0 %3951
      %3953 = vrot.lane.b32.xlu0 %v3950, 48
      %v3954 = vpop.permute.xlu0 %3953
      %3955 = vrot.lane.b32.xlu0 %v3945, 48
      %v3956 = vpop.permute.xlu0 %3955
      %v3957 = vsel %vm3362, %v3952, %v3954
      %v3958 = vsel %vm3362, %v3954, %v3956
      %v3960 = vsel %vm370, %v3947, 0
      %v3962 = vsel %vm374, %v3957, 0
      %v3964 = vsel %vm374, %v3958, 0
      %3966 = vmatprep.subr.mxu0 %v3964
      %3967 = vmatpush1.msra.mxu0 %v3962
      %3968 = vmatprep.subr.mxu0 0.0
      %3969 = vmatpush1.msra.mxu0 0.0
      %3970 = vmatprep.subr.mxu0 0.0
      %3971 = vmatpush1.msra.mxu0 0.0
      %3972 = vmatprep.subr.mxu0 0.0
      %3973 = vmatpush1.msra.mxu0 0.0
      %3974 = vmatprep.subr.mxu0 0.0
      %3975 = vmatpush1.msra.mxu0 0.0
      %3976 = vmatprep.subr.mxu0 0.0
      %3977 = vmatpush1.msra.mxu0 0.0
      %3978 = vmatprep.subr.mxu0 0.0
      %3979 = vmatpush1.msra.mxu0 0.0
      %3980 = vmatprep.subr.mxu0 0.0
      %3981 = vmatpush1.msra.mxu0 0.0
      %3982 = vmatprep.subr.mxu0 0.0
      %3983 = vmatpush1.msra.mxu0 0.0
      %3984 = vmatprep.subr.mxu0 0.0
      %3985 = vmatpush1.msra.mxu0 0.0
      %3986 = vmatprep.subr.mxu0 0.0
      %3987 = vmatpush1.msra.mxu0 0.0
      %3988 = vmatprep.subr.mxu0 0.0
      %3989 = vmatpush1.msra.mxu0 0.0
      %3990 = vmatprep.subr.mxu0 0.0
      %3991 = vmatpush1.msra.mxu0 0.0
      %3992 = vmatprep.subr.mxu0 0.0
      %3993 = vmatpush1.msra.mxu0 0.0
      %3994 = vmatprep.subr.mxu0 0.0
      %3995 = vmatpush1.msra.mxu0 0.0
      %3996 = vmatprep.subr.mxu0 0.0
      %3997 = vmatpush1.msra.mxu0 0.0
      %3998 = vmatprep.subr.mxu0 0.0
      %3999 = vmatpush1.msra.mxu0 0.0
      %4000 = vmatprep.subr.mxu0 0.0
      %4001 = vmatpush1.msra.mxu0 0.0
      %4002 = vmatprep.subr.mxu0 0.0
      %4003 = vmatpush1.msra.mxu0 0.0
      %4004 = vmatprep.subr.mxu0 0.0
      %4005 = vmatpush1.msra.mxu0 0.0
      %4006 = vmatprep.subr.mxu0 0.0
      %4007 = vmatpush1.msra.mxu0 0.0
      %4008 = vmatprep.subr.mxu0 0.0
      %4009 = vmatpush1.msra.mxu0 0.0
      %4010 = vmatprep.subr.mxu0 0.0
      %4011 = vmatpush1.msra.mxu0 0.0
      %4012 = vmatprep.subr.mxu0 0.0
      %4013 = vmatpush1.msra.mxu0 0.0
      %4014 = vmatprep.subr.mxu0 0.0
      %4015 = vmatpush1.msra.mxu0 0.0
      %4016 = vmatprep.subr.mxu0 0.0
      %4017 = vmatpush1.msra.mxu0 0.0
      %4018 = vmatprep.subr.mxu0 0.0
      %4019 = vmatpush1.msra.mxu0 0.0
      %4020 = vmatprep.subr.mxu0 0.0
      %4021 = vmatpush1.msra.mxu0 0.0
      %4022 = vmatprep.subr.mxu0 0.0
      %4023 = vmatpush1.msra.mxu0 0.0
      %4024 = vmatprep.subr.mxu0 0.0
      %4025 = vmatpush1.msra.mxu0 0.0
      %4026 = vmatprep.subr.mxu0 0.0
      %4027 = vmatpush1.msra.mxu0 0.0
      %4028 = vmatprep.subr.mxu0 0.0
      %4029 = vmatpush1.msra.mxu0 0.0
      %4030 = vmatprep.mubr.f32.mxu0 0.0
      %4031 = vmatmul.mubr.f32.gmra.mrb[0].mxu0 %v3960
      %v4032 = vpop.f32.mrb[0].mxu0
      %v4033 = vadd.f32 0.0, %v4032
      %v4034 = vpop.f32.mrb[0].mxu0
      %v4035 = vadd.f32 0.0, %v4034
      %4036 = vdwg.mxu0
      %v4037 = vadd.f32 %v3942, %v4033
      %v4038 = vadd.f32 %v3943, %v4035
      %v4039 = vld [vmem:[%s3239 + $0x4] sm:$0xff]
      %v4040 = vld [vmem:[%s3239 + $0xc] sm:$0xf]
      %s4041 = scalar_lea.vmem %s3, 280
      %v4042 = vld [vmem:[%s4041] sm:$0xff]
      %v4045 = vcombine.high %v4039, %v4039
      %4046 = vrot.lane.b32.xlu0 %v4039, 44
      %v4047 = vpop.permute.xlu0 %4046
      %4048 = vrot.lane.b32.xlu0 %v4045, 44
      %v4049 = vpop.permute.xlu0 %4048
      %4050 = vrot.lane.b32.xlu0 %v4040, 44
      %v4051 = vpop.permute.xlu0 %4050
      %v4052 = vsel %vm3458, %v4047, %v4049
      %v4053 = vsel %vm3458, %v4049, %v4051
      %v4055 = vsel %vm370, %v4042, 0
      %v4057 = vsel %vm374, %v4052, 0
      %v4059 = vsel %vm374, %v4053, 0
      %4061 = vmatprep.subr.mxu0 %v4059
      %4062 = vmatpush1.msra.mxu0 %v4057
      %4063 = vmatprep.subr.mxu0 0.0
      %4064 = vmatpush1.msra.mxu0 0.0
      %4065 = vmatprep.subr.mxu0 0.0
      %4066 = vmatpush1.msra.mxu0 0.0
      %4067 = vmatprep.subr.mxu0 0.0
      %4068 = vmatpush1.msra.mxu0 0.0
      %4069 = vmatprep.subr.mxu0 0.0
      %4070 = vmatpush1.msra.mxu0 0.0
      %4071 = vmatprep.subr.mxu0 0.0
      %4072 = vmatpush1.msra.mxu0 0.0
      %4073 = vmatprep.subr.mxu0 0.0
      %4074 = vmatpush1.msra.mxu0 0.0
      %4075 = vmatprep.subr.mxu0 0.0
      %4076 = vmatpush1.msra.mxu0 0.0
      %4077 = vmatprep.subr.mxu0 0.0
      %4078 = vmatpush1.msra.mxu0 0.0
      %4079 = vmatprep.subr.mxu0 0.0
      %4080 = vmatpush1.msra.mxu0 0.0
      %4081 = vmatprep.subr.mxu0 0.0
      %4082 = vmatpush1.msra.mxu0 0.0
      %4083 = vmatprep.subr.mxu0 0.0
      %4084 = vmatpush1.msra.mxu0 0.0
      %4085 = vmatprep.subr.mxu0 0.0
      %4086 = vmatpush1.msra.mxu0 0.0
      %4087 = vmatprep.subr.mxu0 0.0
      %4088 = vmatpush1.msra.mxu0 0.0
      %4089 = vmatprep.subr.mxu0 0.0
      %4090 = vmatpush1.msra.mxu0 0.0
      %4091 = vmatprep.subr.mxu0 0.0
      %4092 = vmatpush1.msra.mxu0 0.0
      %4093 = vmatprep.subr.mxu0 0.0
      %4094 = vmatpush1.msra.mxu0 0.0
      %4095 = vmatprep.subr.mxu0 0.0
      %4096 = vmatpush1.msra.mxu0 0.0
      %4097 = vmatprep.subr.mxu0 0.0
      %4098 = vmatpush1.msra.mxu0 0.0
      %4099 = vmatprep.subr.mxu0 0.0
      %4100 = vmatpush1.msra.mxu0 0.0
      %4101 = vmatprep.subr.mxu0 0.0
      %4102 = vmatpush1.msra.mxu0 0.0
      %4103 = vmatprep.subr.mxu0 0.0
      %4104 = vmatpush1.msra.mxu0 0.0
      %4105 = vmatprep.subr.mxu0 0.0
      %4106 = vmatpush1.msra.mxu0 0.0
      %4107 = vmatprep.subr.mxu0 0.0
      %4108 = vmatpush1.msra.mxu0 0.0
      %4109 = vmatprep.subr.mxu0 0.0
      %4110 = vmatpush1.msra.mxu0 0.0
      %4111 = vmatprep.subr.mxu0 0.0
      %4112 = vmatpush1.msra.mxu0 0.0
      %4113 = vmatprep.subr.mxu0 0.0
      %4114 = vmatpush1.msra.mxu0 0.0
      %4115 = vmatprep.subr.mxu0 0.0
      %4116 = vmatpush1.msra.mxu0 0.0
      %4117 = vmatprep.subr.mxu0 0.0
      %4118 = vmatpush1.msra.mxu0 0.0
      %4119 = vmatprep.subr.mxu0 0.0
      %4120 = vmatpush1.msra.mxu0 0.0
      %4121 = vmatprep.subr.mxu0 0.0
      %4122 = vmatpush1.msra.mxu0 0.0
      %4123 = vmatprep.subr.mxu0 0.0
      %4124 = vmatpush1.msra.mxu0 0.0
      %4125 = vmatprep.mubr.f32.mxu0 0.0
      %4126 = vmatmul.mubr.f32.gmra.mrb[0].mxu0 %v4055
      %v4127 = vpop.f32.mrb[0].mxu0
      %v4128 = vadd.f32 0.0, %v4127
      %v4129 = vpop.f32.mrb[0].mxu0
      %v4130 = vadd.f32 0.0, %v4129
      %4131 = vdwg.mxu0
      %v4132 = vmul.f32 %v4128, %v3545
      %v4133 = vmul.f32 %v4130, %v3549
      %v4134 = vadd.f32 %v4037, %v4132
      %v4135 = vadd.f32 %v4038, %v4133
      %v4136 = vld [vmem:[%s348] sm:$0xff]
      %v4137 = vld [vmem:[%s348 + $0x8] sm:$0xf]
      %s4138 = scalar_lea.vmem %s3, 288
      %v4139 = vld [vmem:[%s4138] sm:$0xff]
      %v4142 = vcombine.high %v4136, %v4136
      %4143 = vrot.lane.b32.xlu0 %v4136, 52
      %v4144 = vpop.permute.xlu0 %4143
      %4145 = vrot.lane.b32.xlu0 %v4142, 52
      %v4146 = vpop.permute.xlu0 %4145
      %4147 = vrot.lane.b32.xlu0 %v4137, 52
      %v4148 = vpop.permute.xlu0 %4147
      %v4149 = vsel %vm3253, %v4144, %v4146
      %v4150 = vsel %vm3253, %v4146, %v4148
      %v4152 = vsel %vm370, %v4139, 0
      %v4154 = vsel %vm374, %v4149, 0
      %v4156 = vsel %vm374, %v4150, 0
      %4158 = vmatprep.subr.mxu0 %v4156
      %4159 = vmatpush1.msra.mxu0 %v4154
      %4160 = vmatprep.subr.mxu0 0.0
      %4161 = vmatpush1.msra.mxu0 0.0
      %4162 = vmatprep.subr.mxu0 0.0
      %4163 = vmatpush1.msra.mxu0 0.0
      %4164 = vmatprep.subr.mxu0 0.0
      %4165 = vmatpush1.msra.mxu0 0.0
      %4166 = vmatprep.subr.mxu0 0.0
      %4167 = vmatpush1.msra.mxu0 0.0
      %4168 = vmatprep.subr.mxu0 0.0
      %4169 = vmatpush1.msra.mxu0 0.0
      %4170 = vmatprep.subr.mxu0 0.0
      %4171 = vmatpush1.msra.mxu0 0.0
      %4172 = vmatprep.subr.mxu0 0.0
      %4173 = vmatpush1.msra.mxu0 0.0
      %4174 = vmatprep.subr.mxu0 0.0
      %4175 = vmatpush1.msra.mxu0 0.0
      %4176 = vmatprep.subr.mxu0 0.0
      %4177 = vmatpush1.msra.mxu0 0.0
      %4178 = vmatprep.subr.mxu0 0.0
      %4179 = vmatpush1.msra.mxu0 0.0
      %4180 = vmatprep.subr.mxu0 0.0
      %4181 = vmatpush1.msra.mxu0 0.0
      %4182 = vmatprep.subr.mxu0 0.0
      %4183 = vmatpush1.msra.mxu0 0.0
      %4184 = vmatprep.subr.mxu0 0.0
      %4185 = vmatpush1.msra.mxu0 0.0
      %4186 = vmatprep.subr.mxu0 0.0
      %4187 = vmatpush1.msra.mxu0 0.0
      %4188 = vmatprep.subr.mxu0 0.0
      %4189 = vmatpush1.msra.mxu0 0.0
      %4190 = vmatprep.subr.mxu0 0.0
      %4191 = vmatpush1.msra.mxu0 0.0
      %4192 = vmatprep.subr.mxu0 0.0
      %4193 = vmatpush1.msra.mxu0 0.0
      %4194 = vmatprep.subr.mxu0 0.0
      %4195 = vmatpush1.msra.mxu0 0.0
      %4196 = vmatprep.subr.mxu0 0.0
      %4197 = vmatpush1.msra.mxu0 0.0
      %4198 = vmatprep.subr.mxu0 0.0
      %4199 = vmatpush1.msra.mxu0 0.0
      %4200 = vmatprep.subr.mxu0 0.0
      %4201 = vmatpush1.msra.mxu0 0.0
      %4202 = vmatprep.subr.mxu0 0.0
      %4203 = vmatpush1.msra.mxu0 0.0
      %4204 = vmatprep.subr.mxu0 0.0
      %4205 = vmatpush1.msra.mxu0 0.0
      %4206 = vmatprep.subr.mxu0 0.0
      %4207 = vmatpush1.msra.mxu0 0.0
      %4208 = vmatprep.subr.mxu0 0.0
      %4209 = vmatpush1.msra.mxu0 0.0
      %4210 = vmatprep.subr.mxu0 0.0
      %4211 = vmatpush1.msra.mxu0 0.0
      %4212 = vmatprep.subr.mxu0 0.0
      %4213 = vmatpush1.msra.mxu0 0.0
      %4214 = vmatprep.subr.mxu0 0.0
      %4215 = vmatpush1.msra.mxu0 0.0
      %4216 = vmatprep.subr.mxu0 0.0
      %4217 = vmatpush1.msra.mxu0 0.0
      %4218 = vmatprep.subr.mxu0 0.0
      %4219 = vmatpush1.msra.mxu0 0.0
      %4220 = vmatprep.subr.mxu0 0.0
      %4221 = vmatpush1.msra.mxu0 0.0
      %4222 = vmatprep.mubr.f32.mxu0 0.0
      %4223 = vmatmul.mubr.f32.gmra.mrb[0].mxu0 %v4152
      %v4224 = vpop.f32.mrb[0].mxu0
      %v4225 = vadd.f32 0.0, %v4224
      %v4226 = vpop.f32.mrb[0].mxu0
      %v4227 = vadd.f32 0.0, %v4226
      %4228 = vdwg.mxu0
      %v4229 = vmul.f32 %v4225, %v3340
      %v4230 = vmul.f32 %v4227, %v3344
      %v4231 = vadd.f32 %v4134, %v4229
      %v4232 = vadd.f32 %v4135, %v4230
      %v4233 = vld [vmem:[%s348] sm:$0xff]
      %v4234 = vld [vmem:[%s348 + $0x8] sm:$0xf]
      %s4235 = scalar_lea.vmem %s3, 296
      %v4236 = vld [vmem:[%s4235] sm:$0xff]
      %v4239 = vcombine.high %v4233, %v4233
      %4240 = vrot.lane.b32.xlu0 %v4233, 48
      %v4241 = vpop.permute.xlu0 %4240
      %4242 = vrot.lane.b32.xlu0 %v4239, 48
      %v4243 = vpop.permute.xlu0 %4242
      %4244 = vrot.lane.b32.xlu0 %v4234, 48
      %v4245 = vpop.permute.xlu0 %4244
      %v4246 = vsel %vm3362, %v4241, %v4243
      %v4247 = vsel %vm3362, %v4243, %v4245
      %v4249 = vsel %vm370, %v4236, 0
      %v4251 = vsel %vm374, %v4246, 0
      %v4253 = vsel %vm374, %v4247, 0
      %4255 = vmatprep.subr.mxu0 %v4253
      %4256 = vmatpush1.msra.mxu0 %v4251
      %4257 = vmatprep.subr.mxu0 0.0
      %4258 = vmatpush1.msra.mxu0 0.0
      %4259 = vmatprep.subr.mxu0 0.0
      %4260 = vmatpush1.msra.mxu0 0.0
      %4261 = vmatprep.subr.mxu0 0.0
      %4262 = vmatpush1.msra.mxu0 0.0
      %4263 = vmatprep.subr.mxu0 0.0
      %4264 = vmatpush1.msra.mxu0 0.0
      %4265 = vmatprep.subr.mxu0 0.0
      %4266 = vmatpush1.msra.mxu0 0.0
      %4267 = vmatprep.subr.mxu0 0.0
      %4268 = vmatpush1.msra.mxu0 0.0
      %4269 = vmatprep.subr.mxu0 0.0
      %4270 = vmatpush1.msra.mxu0 0.0
      %4271 = vmatprep.subr.mxu0 0.0
      %4272 = vmatpush1.msra.mxu0 0.0
      %4273 = vmatprep.subr.mxu0 0.0
      %4274 = vmatpush1.msra.mxu0 0.0
      %4275 = vmatprep.subr.mxu0 0.0
      %4276 = vmatpush1.msra.mxu0 0.0
      %4277 = vmatprep.subr.mxu0 0.0
      %4278 = vmatpush1.msra.mxu0 0.0
      %4279 = vmatprep.subr.mxu0 0.0
      %4280 = vmatpush1.msra.mxu0 0.0
      %4281 = vmatprep.subr.mxu0 0.0
      %4282 = vmatpush1.msra.mxu0 0.0
      %4283 = vmatprep.subr.mxu0 0.0
      %4284 = vmatpush1.msra.mxu0 0.0
      %4285 = vmatprep.subr.mxu0 0.0
      %4286 = vmatpush1.msra.mxu0 0.0
      %4287 = vmatprep.subr.mxu0 0.0
      %4288 = vmatpush1.msra.mxu0 0.0
      %4289 = vmatprep.subr.mxu0 0.0
      %4290 = vmatpush1.msra.mxu0 0.0
      %4291 = vmatprep.subr.mxu0 0.0
      %4292 = vmatpush1.msra.mxu0 0.0
      %4293 = vmatprep.subr.mxu0 0.0
      %4294 = vmatpush1.msra.mxu0 0.0
      %4295 = vmatprep.subr.mxu0 0.0
      %4296 = vmatpush1.msra.mxu0 0.0
      %4297 = vmatprep.subr.mxu0 0.0
      %4298 = vmatpush1.msra.mxu0 0.0
      %4299 = vmatprep.subr.mxu0 0.0
      %4300 = vmatpush1.msra.mxu0 0.0
      %4301 = vmatprep.subr.mxu0 0.0
      %4302 = vmatpush1.msra.mxu0 0.0
      %4303 = vmatprep.subr.mxu0 0.0
      %4304 = vmatpush1.msra.mxu0 0.0
      %4305 = vmatprep.subr.mxu0 0.0
      %4306 = vmatpush1.msra.mxu0 0.0
      %4307 = vmatprep.subr.mxu0 0.0
      %4308 = vmatpush1.msra.mxu0 0.0
      %4309 = vmatprep.subr.mxu0 0.0
      %4310 = vmatpush1.msra.mxu0 0.0
      %4311 = vmatprep.subr.mxu0 0.0
      %4312 = vmatpush1.msra.mxu0 0.0
      %4313 = vmatprep.subr.mxu0 0.0
      %4314 = vmatpush1.msra.mxu0 0.0
      %4315 = vmatprep.subr.mxu0 0.0
      %4316 = vmatpush1.msra.mxu0 0.0
      %4317 = vmatprep.subr.mxu0 0.0
      %4318 = vmatpush1.msra.mxu0 0.0
      %4319 = vmatprep.mubr.f32.mxu0 0.0
      %4320 = vmatmul.mubr.f32.gmra.mrb[0].mxu0 %v4249
      %v4321 = vpop.f32.mrb[0].mxu0
      %v4322 = vadd.f32 0.0, %v4321
      %v4323 = vpop.f32.mrb[0].mxu0
      %v4324 = vadd.f32 0.0, %v4323
      %4325 = vdwg.mxu0
      %v4326 = vadd.f32 %v4231, %v4322
      %v4327 = vadd.f32 %v4232, %v4324
      %v4328 = vld [vmem:[%s348] sm:$0xff]
      %v4329 = vld [vmem:[%s348 + $0x8] sm:$0xf]
      %s4330 = scalar_lea.vmem %s3, 304
      %v4331 = vld [vmem:[%s4330] sm:$0xff]
      %v4334 = vcombine.high %v4328, %v4328
      %4335 = vrot.lane.b32.xlu0 %v4328, 44
      %v4336 = vpop.permute.xlu0 %4335
      %4337 = vrot.lane.b32.xlu0 %v4334, 44
      %v4338 = vpop.permute.xlu0 %4337
      %4339 = vrot.lane.b32.xlu0 %v4329, 44
      %v4340 = vpop.permute.xlu0 %4339
      %v4341 = vsel %vm3458, %v4336, %v4338
      %v4342 = vsel %vm3458, %v4338, %v4340
      %v4344 = vsel %vm370, %v4331, 0
      %v4346 = vsel %vm374, %v4341, 0
      %v4348 = vsel %vm374, %v4342, 0
      %4350 = vmatprep.subr.mxu0 %v4348
      %4351 = vmatpush1.msra.mxu0 %v4346
      %4352 = vmatprep.subr.mxu0 0.0
      %4353 = vmatpush1.msra.mxu0 0.0
      %4354 = vmatprep.subr.mxu0 0.0
      %4355 = vmatpush1.msra.mxu0 0.0
      %4356 = vmatprep.subr.mxu0 0.0
      %4357 = vmatpush1.msra.mxu0 0.0
      %4358 = vmatprep.subr.mxu0 0.0
      %4359 = vmatpush1.msra.mxu0 0.0
      %4360 = vmatprep.subr.mxu0 0.0
      %4361 = vmatpush1.msra.mxu0 0.0
      %4362 = vmatprep.subr.mxu0 0.0
      %4363 = vmatpush1.msra.mxu0 0.0
      %4364 = vmatprep.subr.mxu0 0.0
      %4365 = vmatpush1.msra.mxu0 0.0
      %4366 = vmatprep.subr.mxu0 0.0
      %4367 = vmatpush1.msra.mxu0 0.0
      %4368 = vmatprep.subr.mxu0 0.0
      %4369 = vmatpush1.msra.mxu0 0.0
      %4370 = vmatprep.subr.mxu0 0.0
      %4371 = vmatpush1.msra.mxu0 0.0
      %4372 = vmatprep.subr.mxu0 0.0
      %4373 = vmatpush1.msra.mxu0 0.0
      %4374 = vmatprep.subr.mxu0 0.0
      %4375 = vmatpush1.msra.mxu0 0.0
      %4376 = vmatprep.subr.mxu0 0.0
      %4377 = vmatpush1.msra.mxu0 0.0
      %4378 = vmatprep.subr.mxu0 0.0
      %4379 = vmatpush1.msra.mxu0 0.0
      %4380 = vmatprep.subr.mxu0 0.0
      %4381 = vmatpush1.msra.mxu0 0.0
      %4382 = vmatprep.subr.mxu0 0.0
      %4383 = vmatpush1.msra.mxu0 0.0
      %4384 = vmatprep.subr.mxu0 0.0
      %4385 = vmatpush1.msra.mxu0 0.0
      %4386 = vmatprep.subr.mxu0 0.0
      %4387 = vmatpush1.msra.mxu0 0.0
      %4388 = vmatprep.subr.mxu0 0.0
      %4389 = vmatpush1.msra.mxu0 0.0
      %4390 = vmatprep.subr.mxu0 0.0
      %4391 = vmatpush1.msra.mxu0 0.0
      %4392 = vmatprep.subr.mxu0 0.0
      %4393 = vmatpush1.msra.mxu0 0.0
      %4394 = vmatprep.subr.mxu0 0.0
      %4395 = vmatpush1.msra.mxu0 0.0
      %4396 = vmatprep.subr.mxu0 0.0
      %4397 = vmatpush1.msra.mxu0 0.0
      %4398 = vmatprep.subr.mxu0 0.0
      %4399 = vmatpush1.msra.mxu0 0.0
      %4400 = vmatprep.subr.mxu0 0.0
      %4401 = vmatpush1.msra.mxu0 0.0
      %4402 = vmatprep.subr.mxu0 0.0
      %4403 = vmatpush1.msra.mxu0 0.0
      %4404 = vmatprep.subr.mxu0 0.0
      %4405 = vmatpush1.msra.mxu0 0.0
      %4406 = vmatprep.subr.mxu0 0.0
      %4407 = vmatpush1.msra.mxu0 0.0
      %4408 = vmatprep.subr.mxu0 0.0
      %4409 = vmatpush1.msra.mxu0 0.0
      %4410 = vmatprep.subr.mxu0 0.0
      %4411 = vmatpush1.msra.mxu0 0.0
      %4412 = vmatprep.subr.mxu0 0.0
      %4413 = vmatpush1.msra.mxu0 0.0
      %4414 = vmatprep.mubr.f32.mxu0 0.0
      %4415 = vmatmul.mubr.f32.gmra.mrb[0].mxu0 %v4344
      %v4416 = vpop.f32.mrb[0].mxu0
      %v4417 = vadd.f32 0.0, %v4416
      %v4418 = vpop.f32.mrb[0].mxu0
      %v4419 = vadd.f32 0.0, %v4418
      %4420 = vdwg.mxu0
      %v4421 = vmul.f32 %v4417, %v3545
      %v4422 = vmul.f32 %v4419, %v3549
      %v4423 = vadd.f32 %v4326, %v4421
      %v4424 = vadd.f32 %v4327, %v4422
      %v4425 = vld [vmem:[%s348 + $0x4] sm:$0xff]
      %v4426 = vld [vmem:[%s348 + $0xc] sm:$0xf]
      %s4427 = scalar_lea.vmem %s3, 312
      %v4428 = vld [vmem:[%s4427] sm:$0xff]
      %v4431 = vcombine.high %v4425, %v4425
      %4432 = vrot.lane.b32.xlu0 %v4425, 116
      %v4433 = vpop.permute.xlu0 %4432
      %4434 = vrot.lane.b32.xlu0 %v4431, 116
      %v4435 = vpop.permute.xlu0 %4434
      %4436 = vrot.lane.b32.xlu0 %v4426, 116
      %v4437 = vpop.permute.xlu0 %4436
      %v4438 = vsel %vm3569, %v4433, %v4435
      %v4439 = vsel %vm3569, %v4435, %v4437
      %v4441 = vsel %vm370, %v4428, 0
      %v4443 = vsel %vm374, %v4438, 0
      %v4445 = vsel %vm374, %v4439, 0
      %4447 = vmatprep.subr.mxu0 %v4445
      %4448 = vmatpush1.msra.mxu0 %v4443
      %4449 = vmatprep.subr.mxu0 0.0
      %4450 = vmatpush1.msra.mxu0 0.0
      %4451 = vmatprep.subr.mxu0 0.0
      %4452 = vmatpush1.msra.mxu0 0.0
      %4453 = vmatprep.subr.mxu0 0.0
      %4454 = vmatpush1.msra.mxu0 0.0
      %4455 = vmatprep.subr.mxu0 0.0
      %4456 = vmatpush1.msra.mxu0 0.0
      %4457 = vmatprep.subr.mxu0 0.0
      %4458 = vmatpush1.msra.mxu0 0.0
      %4459 = vmatprep.subr.mxu0 0.0
      %4460 = vmatpush1.msra.mxu0 0.0
      %4461 = vmatprep.subr.mxu0 0.0
      %4462 = vmatpush1.msra.mxu0 0.0
      %4463 = vmatprep.subr.mxu0 0.0
      %4464 = vmatpush1.msra.mxu0 0.0
      %4465 = vmatprep.subr.mxu0 0.0
      %4466 = vmatpush1.msra.mxu0 0.0
      %4467 = vmatprep.subr.mxu0 0.0
      %4468 = vmatpush1.msra.mxu0 0.0
      %4469 = vmatprep.subr.mxu0 0.0
      %4470 = vmatpush1.msra.mxu0 0.0
      %4471 = vmatprep.subr.mxu0 0.0
      %4472 = vmatpush1.msra.mxu0 0.0
      %4473 = vmatprep.subr.mxu0 0.0
      %4474 = vmatpush1.msra.mxu0 0.0
      %4475 = vmatprep.subr.mxu0 0.0
      %4476 = vmatpush1.msra.mxu0 0.0
      %4477 = vmatprep.subr.mxu0 0.0
      %4478 = vmatpush1.msra.mxu0 0.0
      %4479 = vmatprep.subr.mxu0 0.0
      %4480 = vmatpush1.msra.mxu0 0.0
      %4481 = vmatprep.subr.mxu0 0.0
      %4482 = vmatpush1.msra.mxu0 0.0
      %4483 = vmatprep.subr.mxu0 0.0
      %4484 = vmatpush1.msra.mxu0 0.0
      %4485 = vmatprep.subr.mxu0 0.0
      %4486 = vmatpush1.msra.mxu0 0.0
      %4487 = vmatprep.subr.mxu0 0.0
      %4488 = vmatpush1.msra.mxu0 0.0
      %4489 = vmatprep.subr.mxu0 0.0
      %4490 = vmatpush1.msra.mxu0 0.0
      %4491 = vmatprep.subr.mxu0 0.0
      %4492 = vmatpush1.msra.mxu0 0.0
      %4493 = vmatprep.subr.mxu0 0.0
      %4494 = vmatpush1.msra.mxu0 0.0
      %4495 = vmatprep.subr.mxu0 0.0
      %4496 = vmatpush1.msra.mxu0 0.0
      %4497 = vmatprep.subr.mxu0 0.0
      %4498 = vmatpush1.msra.mxu0 0.0
      %4499 = vmatprep.subr.mxu0 0.0
      %4500 = vmatpush1.msra.mxu0 0.0
      %4501 = vmatprep.subr.mxu0 0.0
      %4502 = vmatpush1.msra.mxu0 0.0
      %4503 = vmatprep.subr.mxu0 0.0
      %4504 = vmatpush1.msra.mxu0 0.0
      %4505 = vmatprep.subr.mxu0 0.0
      %4506 = vmatpush1.msra.mxu0 0.0
      %4507 = vmatprep.subr.mxu0 0.0
      %4508 = vmatpush1.msra.mxu0 0.0
      %4509 = vmatprep.subr.mxu0 0.0
      %4510 = vmatpush1.msra.mxu0 0.0
      %4511 = vmatprep.mubr.f32.mxu0 0.0
      %4512 = vmatmul.mubr.f32.gmra.mrb[0].mxu0 %v4441
      %v4513 = vpop.f32.mrb[0].mxu0
      %v4514 = vadd.f32 0.0, %v4513
      %v4515 = vpop.f32.mrb[0].mxu0
      %v4516 = vadd.f32 0.0, %v4515
      %4517 = vdwg.mxu0
      %v4518 = vmul.f32 %v4514, %v3340
      %v4519 = vmul.f32 %v4516, %v3344
      %v4520 = vadd.f32 %v4423, %v4518
      %v4521 = vadd.f32 %v4424, %v4519
      %s4522 = scalar_lea.vmem %s3, 320
      %v4523 = vld [vmem:[%s4522] sm:$0xff]
      %v4525 = vsel %vm370, %v4523, 0
      %4527 = vmatprep.subr.mxu0 %v377
      %4528 = vmatpush1.msra.mxu0 %v375
      %4529 = vmatprep.subr.mxu0 0.0
      %4530 = vmatpush1.msra.mxu0 0.0
      %4531 = vmatprep.subr.mxu0 0.0
      %4532 = vmatpush1.msra.mxu0 0.0
      %4533 = vmatprep.subr.mxu0 0.0
      %4534 = vmatpush1.msra.mxu0 0.0
      %4535 = vmatprep.subr.mxu0 0.0
      %4536 = vmatpush1.msra.mxu0 0.0
      %4537 = vmatprep.subr.mxu0 0.0
      %4538 = vmatpush1.msra.mxu0 0.0
      %4539 = vmatprep.subr.mxu0 0.0
      %4540 = vmatpush1.msra.mxu0 0.0
      %4541 = vmatprep.subr.mxu0 0.0
      %4542 = vmatpush1.msra.mxu0 0.0
      %4543 = vmatprep.subr.mxu0 0.0
      %4544 = vmatpush1.msra.mxu0 0.0
      %4545 = vmatprep.subr.mxu0 0.0
      %4546 = vmatpush1.msra.mxu0 0.0
      %4547 = vmatprep.subr.mxu0 0.0
      %4548 = vmatpush1.msra.mxu0 0.0
      %4549 = vmatprep.subr.mxu0 0.0
      %4550 = vmatpush1.msra.mxu0 0.0
      %4551 = vmatprep.subr.mxu0 0.0
      %4552 = vmatpush1.msra.mxu0 0.0
      %4553 = vmatprep.subr.mxu0 0.0
      %4554 = vmatpush1.msra.mxu0 0.0
      %4555 = vmatprep.subr.mxu0 0.0
      %4556 = vmatpush1.msra.mxu0 0.0
      %4557 = vmatprep.subr.mxu0 0.0
      %4558 = vmatpush1.msra.mxu0 0.0
      %4559 = vmatprep.subr.mxu0 0.0
      %4560 = vmatpush1.msra.mxu0 0.0
      %4561 = vmatprep.subr.mxu0 0.0
      %4562 = vmatpush1.msra.mxu0 0.0
      %4563 = vmatprep.subr.mxu0 0.0
      %4564 = vmatpush1.msra.mxu0 0.0
      %4565 = vmatprep.subr.mxu0 0.0
      %4566 = vmatpush1.msra.mxu0 0.0
      %4567 = vmatprep.subr.mxu0 0.0
      %4568 = vmatpush1.msra.mxu0 0.0
      %4569 = vmatprep.subr.mxu0 0.0
      %4570 = vmatpush1.msra.mxu0 0.0
      %4571 = vmatprep.subr.mxu0 0.0
      %4572 = vmatpush1.msra.mxu0 0.0
      %4573 = vmatprep.subr.mxu0 0.0
      %4574 = vmatpush1.msra.mxu0 0.0
      %4575 = vmatprep.subr.mxu0 0.0
      %4576 = vmatpush1.msra.mxu0 0.0
      %4577 = vmatprep.subr.mxu0 0.0
      %4578 = vmatpush1.msra.mxu0 0.0
      %4579 = vmatprep.subr.mxu0 0.0
      %4580 = vmatpush1.msra.mxu0 0.0
      %4581 = vmatprep.subr.mxu0 0.0
      %4582 = vmatpush1.msra.mxu0 0.0
      %4583 = vmatprep.subr.mxu0 0.0
      %4584 = vmatpush1.msra.mxu0 0.0
      %4585 = vmatprep.subr.mxu0 0.0
      %4586 = vmatpush1.msra.mxu0 0.0
      %4587 = vmatprep.subr.mxu0 0.0
      %4588 = vmatpush1.msra.mxu0 0.0
      %4589 = vmatprep.subr.mxu0 0.0
      %4590 = vmatpush1.msra.mxu0 0.0
      %4591 = vmatprep.mubr.f32.mxu0 0.0
      %4592 = vmatmul.mubr.f32.gmra.mrb[0].mxu0 %v4525
      %v4593 = vpop.f32.mrb[0].mxu0
      %v4594 = vadd.f32 0.0, %v4593
      %v4595 = vpop.f32.mrb[0].mxu0
      %v4596 = vadd.f32 0.0, %v4595
      %4597 = vdwg.mxu0
      %v4598 = vadd.f32 %v4520, %v4594
      %v4599 = vadd.f32 %v4521, %v4596
      %v4600 = vld [vmem:[%s348 + $0x4] sm:$0xff]
      %v4601 = vld [vmem:[%s348 + $0xc] sm:$0xf]
      %s4602 = scalar_lea.vmem %s3, 328
      %v4603 = vld [vmem:[%s4602] sm:$0xff]
      %v4606 = vcombine.high %v4600, %v4600
      %4607 = vrot.lane.b32.xlu0 %v4600, 108
      %v4608 = vpop.permute.xlu0 %4607
      %4609 = vrot.lane.b32.xlu0 %v4606, 108
      %v4610 = vpop.permute.xlu0 %4609
      %4611 = vrot.lane.b32.xlu0 %v4601, 108
      %v4612 = vpop.permute.xlu0 %4611
      %v4613 = vsel %vm3762, %v4608, %v4610
      %v4614 = vsel %vm3762, %v4610, %v4612
      %v4616 = vsel %vm370, %v4603, 0
      %v4618 = vsel %vm374, %v4613, 0
      %v4620 = vsel %vm374, %v4614, 0
      %4622 = vmatprep.subr.mxu0 %v4620
      %4623 = vmatpush1.msra.mxu0 %v4618
      %4624 = vmatprep.subr.mxu0 0.0
      %4625 = vmatpush1.msra.mxu0 0.0
      %4626 = vmatprep.subr.mxu0 0.0
      %4627 = vmatpush1.msra.mxu0 0.0
      %4628 = vmatprep.subr.mxu0 0.0
      %4629 = vmatpush1.msra.mxu0 0.0
      %4630 = vmatprep.subr.mxu0 0.0
      %4631 = vmatpush1.msra.mxu0 0.0
      %4632 = vmatprep.subr.mxu0 0.0
      %4633 = vmatpush1.msra.mxu0 0.0
      %4634 = vmatprep.subr.mxu0 0.0
      %4635 = vmatpush1.msra.mxu0 0.0
      %4636 = vmatprep.subr.mxu0 0.0
      %4637 = vmatpush1.msra.mxu0 0.0
      %4638 = vmatprep.subr.mxu0 0.0
      %4639 = vmatpush1.msra.mxu0 0.0
      %4640 = vmatprep.subr.mxu0 0.0
      %4641 = vmatpush1.msra.mxu0 0.0
      %4642 = vmatprep.subr.mxu0 0.0
      %4643 = vmatpush1.msra.mxu0 0.0
      %4644 = vmatprep.subr.mxu0 0.0
      %4645 = vmatpush1.msra.mxu0 0.0
      %4646 = vmatprep.subr.mxu0 0.0
      %4647 = vmatpush1.msra.mxu0 0.0
      %4648 = vmatprep.subr.mxu0 0.0
      %4649 = vmatpush1.msra.mxu0 0.0
      %4650 = vmatprep.subr.mxu0 0.0
      %4651 = vmatpush1.msra.mxu0 0.0
      %4652 = vmatprep.subr.mxu0 0.0
      %4653 = vmatpush1.msra.mxu0 0.0
      %4654 = vmatprep.subr.mxu0 0.0
      %4655 = vmatpush1.msra.mxu0 0.0
      %4656 = vmatprep.subr.mxu0 0.0
      %4657 = vmatpush1.msra.mxu0 0.0
      %4658 = vmatprep.subr.mxu0 0.0
      %4659 = vmatpush1.msra.mxu0 0.0
      %4660 = vmatprep.subr.mxu0 0.0
      %4661 = vmatpush1.msra.mxu0 0.0
      %4662 = vmatprep.subr.mxu0 0.0
      %4663 = vmatpush1.msra.mxu0 0.0
      %4664 = vmatprep.subr.mxu0 0.0
      %4665 = vmatpush1.msra.mxu0 0.0
      %4666 = vmatprep.subr.mxu0 0.0
      %4667 = vmatpush1.msra.mxu0 0.0
      %4668 = vmatprep.subr.mxu0 0.0
      %4669 = vmatpush1.msra.mxu0 0.0
      %4670 = vmatprep.subr.mxu0 0.0
      %4671 = vmatpush1.msra.mxu0 0.0
      %4672 = vmatprep.subr.mxu0 0.0
      %4673 = vmatpush1.msra.mxu0 0.0
      %4674 = vmatprep.subr.mxu0 0.0
      %4675 = vmatpush1.msra.mxu0 0.0
      %4676 = vmatprep.subr.mxu0 0.0
      %4677 = vmatpush1.msra.mxu0 0.0
      %4678 = vmatprep.subr.mxu0 0.0
      %4679 = vmatpush1.msra.mxu0 0.0
      %4680 = vmatprep.subr.mxu0 0.0
      %4681 = vmatpush1.msra.mxu0 0.0
      %4682 = vmatprep.subr.mxu0 0.0
      %4683 = vmatpush1.msra.mxu0 0.0
      %4684 = vmatprep.subr.mxu0 0.0
      %4685 = vmatpush1.msra.mxu0 0.0
      %4686 = vmatprep.mubr.f32.mxu0 0.0
      %4687 = vmatmul.mubr.f32.gmra.mrb[0].mxu0 %v4616
      %v4688 = vpop.f32.mrb[0].mxu0
      %v4689 = vadd.f32 0.0, %v4688
      %v4690 = vpop.f32.mrb[0].mxu0
      %v4691 = vadd.f32 0.0, %v4690
      %4692 = vdwg.mxu0
      %v4693 = vmul.f32 %v4689, %v3545
      %v4694 = vmul.f32 %v4691, %v3549
      %v4695 = vadd.f32 %v4598, %v4693
      %v4696 = vadd.f32 %v4599, %v4694
      %v4697 = vld [vmem:[%s348 + $0x4] sm:$0xff]
      %v4698 = vld [vmem:[%s348 + $0xc] sm:$0xf]
      %s4699 = scalar_lea.vmem %s3, 336
      %v4700 = vld [vmem:[%s4699] sm:$0xff]
      %v4703 = vcombine.high %v4697, %v4697
      %4704 = vrot.lane.b32.xlu0 %v4697, 52
      %v4705 = vpop.permute.xlu0 %4704
      %4706 = vrot.lane.b32.xlu0 %v4703, 52
      %v4707 = vpop.permute.xlu0 %4706
      %4708 = vrot.lane.b32.xlu0 %v4698, 52
      %v4709 = vpop.permute.xlu0 %4708
      %v4710 = vsel %vm3253, %v4705, %v4707
      %v4711 = vsel %vm3253, %v4707, %v4709
      %v4713 = vsel %vm370, %v4700, 0
      %v4715 = vsel %vm374, %v4710, 0
      %v4717 = vsel %vm374, %v4711, 0
      %4719 = vmatprep.subr.mxu0 %v4717
      %4720 = vmatpush1.msra.mxu0 %v4715
      %4721 = vmatprep.subr.mxu0 0.0
      %4722 = vmatpush1.msra.mxu0 0.0
      %4723 = vmatprep.subr.mxu0 0.0
      %4724 = vmatpush1.msra.mxu0 0.0
      %4725 = vmatprep.subr.mxu0 0.0
      %4726 = vmatpush1.msra.mxu0 0.0
      %4727 = vmatprep.subr.mxu0 0.0
      %4728 = vmatpush1.msra.mxu0 0.0
      %4729 = vmatprep.subr.mxu0 0.0
      %4730 = vmatpush1.msra.mxu0 0.0
      %4731 = vmatprep.subr.mxu0 0.0
      %4732 = vmatpush1.msra.mxu0 0.0
      %4733 = vmatprep.subr.mxu0 0.0
      %4734 = vmatpush1.msra.mxu0 0.0
      %4735 = vmatprep.subr.mxu0 0.0
      %4736 = vmatpush1.msra.mxu0 0.0
      %4737 = vmatprep.subr.mxu0 0.0
      %4738 = vmatpush1.msra.mxu0 0.0
      %4739 = vmatprep.subr.mxu0 0.0
      %4740 = vmatpush1.msra.mxu0 0.0
      %4741 = vmatprep.subr.mxu0 0.0
      %4742 = vmatpush1.msra.mxu0 0.0
      %4743 = vmatprep.subr.mxu0 0.0
      %4744 = vmatpush1.msra.mxu0 0.0
      %4745 = vmatprep.subr.mxu0 0.0
      %4746 = vmatpush1.msra.mxu0 0.0
      %4747 = vmatprep.subr.mxu0 0.0
      %4748 = vmatpush1.msra.mxu0 0.0
      %4749 = vmatprep.subr.mxu0 0.0
      %4750 = vmatpush1.msra.mxu0 0.0
      %4751 = vmatprep.subr.mxu0 0.0
      %4752 = vmatpush1.msra.mxu0 0.0
      %4753 = vmatprep.subr.mxu0 0.0
      %4754 = vmatpush1.msra.mxu0 0.0
      %4755 = vmatprep.subr.mxu0 0.0
      %4756 = vmatpush1.msra.mxu0 0.0
      %4757 = vmatprep.subr.mxu0 0.0
      %4758 = vmatpush1.msra.mxu0 0.0
      %4759 = vmatprep.subr.mxu0 0.0
      %4760 = vmatpush1.msra.mxu0 0.0
      %4761 = vmatprep.subr.mxu0 0.0
      %4762 = vmatpush1.msra.mxu0 0.0
      %4763 = vmatprep.subr.mxu0 0.0
      %4764 = vmatpush1.msra.mxu0 0.0
      %4765 = vmatprep.subr.mxu0 0.0
      %4766 = vmatpush1.msra.mxu0 0.0
      %4767 = vmatprep.subr.mxu0 0.0
      %4768 = vmatpush1.msra.mxu0 0.0
      %4769 = vmatprep.subr.mxu0 0.0
      %4770 = vmatpush1.msra.mxu0 0.0
      %4771 = vmatprep.subr.mxu0 0.0
      %4772 = vmatpush1.msra.mxu0 0.0
      %4773 = vmatprep.subr.mxu0 0.0
      %4774 = vmatpush1.msra.mxu0 0.0
      %4775 = vmatprep.subr.mxu0 0.0
      %4776 = vmatpush1.msra.mxu0 0.0
      %4777 = vmatprep.subr.mxu0 0.0
      %4778 = vmatpush1.msra.mxu0 0.0
      %4779 = vmatprep.subr.mxu0 0.0
      %4780 = vmatpush1.msra.mxu0 0.0
      %4781 = vmatprep.subr.mxu0 0.0
      %4782 = vmatpush1.msra.mxu0 0.0
      %4783 = vmatprep.mubr.f32.mxu0 0.0
      %4784 = vmatmul.mubr.f32.gmra.mrb[0].mxu0 %v4713
      %v4785 = vpop.f32.mrb[0].mxu0
      %v4786 = vadd.f32 0.0, %v4785
      %v4787 = vpop.f32.mrb[0].mxu0
      %v4788 = vadd.f32 0.0, %v4787
      %4789 = vdwg.mxu0
      %v4790 = vmul.f32 %v4786, %v3340
      %v4791 = vmul.f32 %v4788, %v3344
      %v4792 = vadd.f32 %v4695, %v4790
      %v4793 = vadd.f32 %v4696, %v4791
      %v4794 = vld [vmem:[%s348 + $0x4] sm:$0xff]
      %v4795 = vld [vmem:[%s348 + $0xc] sm:$0xf]
      %s4796 = scalar_lea.vmem %s3, 344
      %v4797 = vld [vmem:[%s4796] sm:$0xff]
      %v4800 = vcombine.high %v4794, %v4794
      %4801 = vrot.lane.b32.xlu0 %v4794, 48
      %v4802 = vpop.permute.xlu0 %4801
      %4803 = vrot.lane.b32.xlu0 %v4800, 48
      %v4804 = vpop.permute.xlu0 %4803
      %4805 = vrot.lane.b32.xlu0 %v4795, 48
      %v4806 = vpop.permute.xlu0 %4805
      %v4807 = vsel %vm3362, %v4802, %v4804
      %v4808 = vsel %vm3362, %v4804, %v4806
      %v4810 = vsel %vm370, %v4797, 0
      %v4812 = vsel %vm374, %v4807, 0
      %v4814 = vsel %vm374, %v4808, 0
      %4816 = vmatprep.subr.mxu0 %v4814
      %4817 = vmatpush1.msra.mxu0 %v4812
      %4818 = vmatprep.subr.mxu0 0.0
      %4819 = vmatpush1.msra.mxu0 0.0
      %4820 = vmatprep.subr.mxu0 0.0
      %4821 = vmatpush1.msra.mxu0 0.0
      %4822 = vmatprep.subr.mxu0 0.0
      %4823 = vmatpush1.msra.mxu0 0.0
      %4824 = vmatprep.subr.mxu0 0.0
      %4825 = vmatpush1.msra.mxu0 0.0
      %4826 = vmatprep.subr.mxu0 0.0
      %4827 = vmatpush1.msra.mxu0 0.0
      %4828 = vmatprep.subr.mxu0 0.0
      %4829 = vmatpush1.msra.mxu0 0.0
      %4830 = vmatprep.subr.mxu0 0.0
      %4831 = vmatpush1.msra.mxu0 0.0
      %4832 = vmatprep.subr.mxu0 0.0
      %4833 = vmatpush1.msra.mxu0 0.0
      %4834 = vmatprep.subr.mxu0 0.0
      %4835 = vmatpush1.msra.mxu0 0.0
      %4836 = vmatprep.subr.mxu0 0.0
      %4837 = vmatpush1.msra.mxu0 0.0
      %4838 = vmatprep.subr.mxu0 0.0
      %4839 = vmatpush1.msra.mxu0 0.0
      %4840 = vmatprep.subr.mxu0 0.0
      %4841 = vmatpush1.msra.mxu0 0.0
      %4842 = vmatprep.subr.mxu0 0.0
      %4843 = vmatpush1.msra.mxu0 0.0
      %4844 = vmatprep.subr.mxu0 0.0
      %4845 = vmatpush1.msra.mxu0 0.0
      %4846 = vmatprep.subr.mxu0 0.0
      %4847 = vmatpush1.msra.mxu0 0.0
      %4848 = vmatprep.subr.mxu0 0.0
      %4849 = vmatpush1.msra.mxu0 0.0
      %4850 = vmatprep.subr.mxu0 0.0
      %4851 = vmatpush1.msra.mxu0 0.0
      %4852 = vmatprep.subr.mxu0 0.0
      %4853 = vmatpush1.msra.mxu0 0.0
      %4854 = vmatprep.subr.mxu0 0.0
      %4855 = vmatpush1.msra.mxu0 0.0
      %4856 = vmatprep.subr.mxu0 0.0
      %4857 = vmatpush1.msra.mxu0 0.0
      %4858 = vmatprep.subr.mxu0 0.0
      %4859 = vmatpush1.msra.mxu0 0.0
      %4860 = vmatprep.subr.mxu0 0.0
      %4861 = vmatpush1.msra.mxu0 0.0
      %4862 = vmatprep.subr.mxu0 0.0
      %4863 = vmatpush1.msra.mxu0 0.0
      %4864 = vmatprep.subr.mxu0 0.0
      %4865 = vmatpush1.msra.mxu0 0.0
      %4866 = vmatprep.subr.mxu0 0.0
      %4867 = vmatpush1.msra.mxu0 0.0
      %4868 = vmatprep.subr.mxu0 0.0
      %4869 = vmatpush1.msra.mxu0 0.0
      %4870 = vmatprep.subr.mxu0 0.0
      %4871 = vmatpush1.msra.mxu0 0.0
      %4872 = vmatprep.subr.mxu0 0.0
      %4873 = vmatpush1.msra.mxu0 0.0
      %4874 = vmatprep.subr.mxu0 0.0
      %4875 = vmatpush1.msra.mxu0 0.0
      %4876 = vmatprep.subr.mxu0 0.0
      %4877 = vmatpush1.msra.mxu0 0.0
      %4878 = vmatprep.subr.mxu0 0.0
      %4879 = vmatpush1.msra.mxu0 0.0
      %4880 = vmatprep.mubr.f32.mxu0 0.0
      %4881 = vmatmul.mubr.f32.gmra.mrb[0].mxu0 %v4810
      %v4882 = vpop.f32.mrb[0].mxu0
      %v4883 = vadd.f32 0.0, %v4882
      %v4884 = vpop.f32.mrb[0].mxu0
      %v4885 = vadd.f32 0.0, %v4884
      %4886 = vdwg.mxu0
      %v4887 = vadd.f32 %v4792, %v4883
      %v4888 = vadd.f32 %v4793, %v4885
      %v4889 = vld [vmem:[%s348 + $0x4] sm:$0xff]
      %v4890 = vld [vmem:[%s348 + $0xc] sm:$0xf]
      %s4891 = scalar_lea.vmem %s3, 352
      %v4892 = vld [vmem:[%s4891] sm:$0xff]
      %v4895 = vcombine.high %v4889, %v4889
      %4896 = vrot.lane.b32.xlu0 %v4889, 44
      %v4897 = vpop.permute.xlu0 %4896
      %4898 = vrot.lane.b32.xlu0 %v4895, 44
      %v4899 = vpop.permute.xlu0 %4898
      %4900 = vrot.lane.b32.xlu0 %v4890, 44
      %v4901 = vpop.permute.xlu0 %4900
      %v4902 = vsel %vm3458, %v4897, %v4899
      %v4903 = vsel %vm3458, %v4899, %v4901
      %v4905 = vsel %vm370, %v4892, 0
      %v4907 = vsel %vm374, %v4902, 0
      %v4909 = vsel %vm374, %v4903, 0
      %4911 = vmatprep.subr.mxu0 %v4909
      %4912 = vmatpush1.msra.mxu0 %v4907
      %4913 = vmatprep.subr.mxu0 0.0
      %4914 = vmatpush1.msra.mxu0 0.0
      %4915 = vmatprep.subr.mxu0 0.0
      %4916 = vmatpush1.msra.mxu0 0.0
      %4917 = vmatprep.subr.mxu0 0.0
      %4918 = vmatpush1.msra.mxu0 0.0
      %4919 = vmatprep.subr.mxu0 0.0
      %4920 = vmatpush1.msra.mxu0 0.0
      %4921 = vmatprep.subr.mxu0 0.0
      %4922 = vmatpush1.msra.mxu0 0.0
      %4923 = vmatprep.subr.mxu0 0.0
      %4924 = vmatpush1.msra.mxu0 0.0
      %4925 = vmatprep.subr.mxu0 0.0
      %4926 = vmatpush1.msra.mxu0 0.0
      %4927 = vmatprep.subr.mxu0 0.0
      %4928 = vmatpush1.msra.mxu0 0.0
      %4929 = vmatprep.subr.mxu0 0.0
      %4930 = vmatpush1.msra.mxu0 0.0
      %4931 = vmatprep.subr.mxu0 0.0
      %4932 = vmatpush1.msra.mxu0 0.0
      %4933 = vmatprep.subr.mxu0 0.0
      %4934 = vmatpush1.msra.mxu0 0.0
      %4935 = vmatprep.subr.mxu0 0.0
      %4936 = vmatpush1.msra.mxu0 0.0
      %4937 = vmatprep.subr.mxu0 0.0
      %4938 = vmatpush1.msra.mxu0 0.0
      %4939 = vmatprep.subr.mxu0 0.0
      %4940 = vmatpush1.msra.mxu0 0.0
      %4941 = vmatprep.subr.mxu0 0.0
      %4942 = vmatpush1.msra.mxu0 0.0
      %4943 = vmatprep.subr.mxu0 0.0
      %4944 = vmatpush1.msra.mxu0 0.0
      %4945 = vmatprep.subr.mxu0 0.0
      %4946 = vmatpush1.msra.mxu0 0.0
      %4947 = vmatprep.subr.mxu0 0.0
      %4948 = vmatpush1.msra.mxu0 0.0
      %4949 = vmatprep.subr.mxu0 0.0
      %4950 = vmatpush1.msra.mxu0 0.0
      %4951 = vmatprep.subr.mxu0 0.0
      %4952 = vmatpush1.msra.mxu0 0.0
      %4953 = vmatprep.subr.mxu0 0.0
      %4954 = vmatpush1.msra.mxu0 0.0
      %4955 = vmatprep.subr.mxu0 0.0
      %4956 = vmatpush1.msra.mxu0 0.0
      %4957 = vmatprep.subr.mxu0 0.0
      %4958 = vmatpush1.msra.mxu0 0.0
      %4959 = vmatprep.subr.mxu0 0.0
      %4960 = vmatpush1.msra.mxu0 0.0
      %4961 = vmatprep.subr.mxu0 0.0
      %4962 = vmatpush1.msra.mxu0 0.0
      %4963 = vmatprep.subr.mxu0 0.0
      %4964 = vmatpush1.msra.mxu0 0.0
      %4965 = vmatprep.subr.mxu0 0.0
      %4966 = vmatpush1.msra.mxu0 0.0
      %4967 = vmatprep.subr.mxu0 0.0
      %4968 = vmatpush1.msra.mxu0 0.0
      %4969 = vmatprep.subr.mxu0 0.0
      %4970 = vmatpush1.msra.mxu0 0.0
      %4971 = vmatprep.subr.mxu0 0.0
      %4972 = vmatpush1.msra.mxu0 0.0
      %4973 = vmatprep.subr.mxu0 0.0
      %4974 = vmatpush1.msra.mxu0 0.0
      %4975 = vmatprep.mubr.f32.mxu0 0.0
      %4976 = vmatmul.mubr.f32.gmra.mrb[0].mxu0 %v4905
      %v4977 = vpop.f32.mrb[0].mxu0
      %v4978 = vadd.f32 0.0, %v4977
      %v4979 = vpop.f32.mrb[0].mxu0
      %v4980 = vadd.f32 0.0, %v4979
      %4981 = vdwg.mxu0
      %v4982 = vmul.f32 %v4978, %v3545
      %v4983 = vmul.f32 %v4980, %v3549
      %v4984 = vadd.f32 %v4887, %v4982
      %v4985 = vadd.f32 %v4888, %v4983
      %s4986 = sadd.s32 %s24, 12
      %s4987 = smul.u32 %s4986, 5
      %s4988 = smul.addr %s4987, 4
      %s4989 = scalar_lea.vmem %s331, %s4988
      %v4990 = vld [vmem:[%s4989] sm:$0xff]
      %v4991 = vld [vmem:[%s4989 + $0x8] sm:$0xf]
      %s4992 = scalar_lea.vmem %s3, 360
      %v4993 = vld [vmem:[%s4992] sm:$0xff]
      %v4996 = vcombine.high %v4990, %v4990
      %4997 = vrot.lane.b32.xlu0 %v4990, 52
      %v4998 = vpop.permute.xlu0 %4997
      %4999 = vrot.lane.b32.xlu0 %v4996, 52
      %v5000 = vpop.permute.xlu0 %4999
      %5001 = vrot.lane.b32.xlu0 %v4991, 52
      %v5002 = vpop.permute.xlu0 %5001
      %v5003 = vsel %vm3253, %v4998, %v5000
      %v5004 = vsel %vm3253, %v5000, %v5002
      %v5006 = vsel %vm370, %v4993, 0
      %v5008 = vsel %vm374, %v5003, 0
      %v5010 = vsel %vm374, %v5004, 0
      %5012 = vmatprep.subr.mxu0 %v5010
      %5013 = vmatpush1.msra.mxu0 %v5008
      %5014 = vmatprep.subr.mxu0 0.0
      %5015 = vmatpush1.msra.mxu0 0.0
      %5016 = vmatprep.subr.mxu0 0.0
      %5017 = vmatpush1.msra.mxu0 0.0
      %5018 = vmatprep.subr.mxu0 0.0
      %5019 = vmatpush1.msra.mxu0 0.0
      %5020 = vmatprep.subr.mxu0 0.0
      %5021 = vmatpush1.msra.mxu0 0.0
      %5022 = vmatprep.subr.mxu0 0.0
      %5023 = vmatpush1.msra.mxu0 0.0
      %5024 = vmatprep.subr.mxu0 0.0
      %5025 = vmatpush1.msra.mxu0 0.0
      %5026 = vmatprep.subr.mxu0 0.0
      %5027 = vmatpush1.msra.mxu0 0.0
      %5028 = vmatprep.subr.mxu0 0.0
      %5029 = vmatpush1.msra.mxu0 0.0
      %5030 = vmatprep.subr.mxu0 0.0
      %5031 = vmatpush1.msra.mxu0 0.0
      %5032 = vmatprep.subr.mxu0 0.0
      %5033 = vmatpush1.msra.mxu0 0.0
      %5034 = vmatprep.subr.mxu0 0.0
      %5035 = vmatpush1.msra.mxu0 0.0
      %5036 = vmatprep.subr.mxu0 0.0
      %5037 = vmatpush1.msra.mxu0 0.0
      %5038 = vmatprep.subr.mxu0 0.0
      %5039 = vmatpush1.msra.mxu0 0.0
      %5040 = vmatprep.subr.mxu0 0.0
      %5041 = vmatpush1.msra.mxu0 0.0
      %5042 = vmatprep.subr.mxu0 0.0
      %5043 = vmatpush1.msra.mxu0 0.0
      %5044 = vmatprep.subr.mxu0 0.0
      %5045 = vmatpush1.msra.mxu0 0.0
      %5046 = vmatprep.subr.mxu0 0.0
      %5047 = vmatpush1.msra.mxu0 0.0
      %5048 = vmatprep.subr.mxu0 0.0
      %5049 = vmatpush1.msra.mxu0 0.0
      %5050 = vmatprep.subr.mxu0 0.0
      %5051 = vmatpush1.msra.mxu0 0.0
      %5052 = vmatprep.subr.mxu0 0.0
      %5053 = vmatpush1.msra.mxu0 0.0
      %5054 = vmatprep.subr.mxu0 0.0
      %5055 = vmatpush1.msra.mxu0 0.0
      %5056 = vmatprep.subr.mxu0 0.0
      %5057 = vmatpush1.msra.mxu0 0.0
      %5058 = vmatprep.subr.mxu0 0.0
      %5059 = vmatpush1.msra.mxu0 0.0
      %5060 = vmatprep.subr.mxu0 0.0
      %5061 = vmatpush1.msra.mxu0 0.0
      %5062 = vmatprep.subr.mxu0 0.0
      %5063 = vmatpush1.msra.mxu0 0.0
      %5064 = vmatprep.subr.mxu0 0.0
      %5065 = vmatpush1.msra.mxu0 0.0
      %5066 = vmatprep.subr.mxu0 0.0
      %5067 = vmatpush1.msra.mxu0 0.0
      %5068 = vmatprep.subr.mxu0 0.0
      %5069 = vmatpush1.msra.mxu0 0.0
      %5070 = vmatprep.subr.mxu0 0.0
      %5071 = vmatpush1.msra.mxu0 0.0
      %5072 = vmatprep.subr.mxu0 0.0
      %5073 = vmatpush1.msra.mxu0 0.0
      %5074 = vmatprep.subr.mxu0 0.0
      %5075 = vmatpush1.msra.mxu0 0.0
      %5076 = vmatprep.mubr.f32.mxu0 0.0
      %5077 = vmatmul.mubr.f32.gmra.mrb[0].mxu0 %v5006
      %v5078 = vpop.f32.mrb[0].mxu0
      %v5079 = vadd.f32 0.0, %v5078
      %v5080 = vpop.f32.mrb[0].mxu0
      %v5081 = vadd.f32 0.0, %v5080
      %5082 = vdwg.mxu0
      %v5083 = vmul.f32 %v5079, %v3340
      %v5084 = vmul.f32 %v5081, %v3344
      %v5085 = vadd.f32 %v4984, %v5083
      %v5086 = vadd.f32 %v4985, %v5084
      %v5087 = vld [vmem:[%s4989] sm:$0xff]
      %v5088 = vld [vmem:[%s4989 + $0x8] sm:$0xf]
      %s5089 = scalar_lea.vmem %s3, 368
      %v5090 = vld [vmem:[%s5089] sm:$0xff]
      %v5093 = vcombine.high %v5087, %v5087
      %5094 = vrot.lane.b32.xlu0 %v5087, 48
      %v5095 = vpop.permute.xlu0 %5094
      %5096 = vrot.lane.b32.xlu0 %v5093, 48
      %v5097 = vpop.permute.xlu0 %5096
      %5098 = vrot.lane.b32.xlu0 %v5088, 48
      %v5099 = vpop.permute.xlu0 %5098
      %v5100 = vsel %vm3362, %v5095, %v5097
      %v5101 = vsel %vm3362, %v5097, %v5099
      %v5103 = vsel %vm370, %v5090, 0
      %v5105 = vsel %vm374, %v5100, 0
      %v5107 = vsel %vm374, %v5101, 0
      %5109 = vmatprep.subr.mxu0 %v5107
      %5110 = vmatpush1.msra.mxu0 %v5105
      %5111 = vmatprep.subr.mxu0 0.0
      %5112 = vmatpush1.msra.mxu0 0.0
      %5113 = vmatprep.subr.mxu0 0.0
      %5114 = vmatpush1.msra.mxu0 0.0
      %5115 = vmatprep.subr.mxu0 0.0
      %5116 = vmatpush1.msra.mxu0 0.0
      %5117 = vmatprep.subr.mxu0 0.0
      %5118 = vmatpush1.msra.mxu0 0.0
      %5119 = vmatprep.subr.mxu0 0.0
      %5120 = vmatpush1.msra.mxu0 0.0
      %5121 = vmatprep.subr.mxu0 0.0
      %5122 = vmatpush1.msra.mxu0 0.0
      %5123 = vmatprep.subr.mxu0 0.0
      %5124 = vmatpush1.msra.mxu0 0.0
      %5125 = vmatprep.subr.mxu0 0.0
      %5126 = vmatpush1.msra.mxu0 0.0
      %5127 = vmatprep.subr.mxu0 0.0
      %5128 = vmatpush1.msra.mxu0 0.0
      %5129 = vmatprep.subr.mxu0 0.0
      %5130 = vmatpush1.msra.mxu0 0.0
      %5131 = vmatprep.subr.mxu0 0.0
      %5132 = vmatpush1.msra.mxu0 0.0
      %5133 = vmatprep.subr.mxu0 0.0
      %5134 = vmatpush1.msra.mxu0 0.0
      %5135 = vmatprep.subr.mxu0 0.0
      %5136 = vmatpush1.msra.mxu0 0.0
      %5137 = vmatprep.subr.mxu0 0.0
      %5138 = vmatpush1.msra.mxu0 0.0
      %5139 = vmatprep.subr.mxu0 0.0
      %5140 = vmatpush1.msra.mxu0 0.0
      %5141 = vmatprep.subr.mxu0 0.0
      %5142 = vmatpush1.msra.mxu0 0.0
      %5143 = vmatprep.subr.mxu0 0.0
      %5144 = vmatpush1.msra.mxu0 0.0
      %5145 = vmatprep.subr.mxu0 0.0
      %5146 = vmatpush1.msra.mxu0 0.0
      %5147 = vmatprep.subr.mxu0 0.0
      %5148 = vmatpush1.msra.mxu0 0.0
      %5149 = vmatprep.subr.mxu0 0.0
      %5150 = vmatpush1.msra.mxu0 0.0
      %5151 = vmatprep.subr.mxu0 0.0
      %5152 = vmatpush1.msra.mxu0 0.0
      %5153 = vmatprep.subr.mxu0 0.0
      %5154 = vmatpush1.msra.mxu0 0.0
      %5155 = vmatprep.subr.mxu0 0.0
      %5156 = vmatpush1.msra.mxu0 0.0
      %5157 = vmatprep.subr.mxu0 0.0
      %5158 = vmatpush1.msra.mxu0 0.0
      %5159 = vmatprep.subr.mxu0 0.0
      %5160 = vmatpush1.msra.mxu0 0.0
      %5161 = vmatprep.subr.mxu0 0.0
      %5162 = vmatpush1.msra.mxu0 0.0
      %5163 = vmatprep.subr.mxu0 0.0
      %5164 = vmatpush1.msra.mxu0 0.0
      %5165 = vmatprep.subr.mxu0 0.0
      %5166 = vmatpush1.msra.mxu0 0.0
      %5167 = vmatprep.subr.mxu0 0.0
      %5168 = vmatpush1.msra.mxu0 0.0
      %5169 = vmatprep.subr.mxu0 0.0
      %5170 = vmatpush1.msra.mxu0 0.0
      %5171 = vmatprep.subr.mxu0 0.0
      %5172 = vmatpush1.msra.mxu0 0.0
      %5173 = vmatprep.mubr.f32.mxu0 0.0
      %5174 = vmatmul.mubr.f32.gmra.mrb[0].mxu0 %v5103
      %v5175 = vpop.f32.mrb[0].mxu0
      %v5176 = vadd.f32 0.0, %v5175
      %v5177 = vpop.f32.mrb[0].mxu0
      %v5178 = vadd.f32 0.0, %v5177
      %5179 = vdwg.mxu0
      %v5180 = vadd.f32 %v5085, %v5176
      %v5181 = vadd.f32 %v5086, %v5178
      %v5182 = vld [vmem:[%s4989] sm:$0xff]
      %v5183 = vld [vmem:[%s4989 + $0x8] sm:$0xf]
      %s5184 = scalar_lea.vmem %s3, 376
      %v5185 = vld [vmem:[%s5184] sm:$0xff]
      %v5188 = vcombine.high %v5182, %v5182
      %5189 = vrot.lane.b32.xlu0 %v5182, 44
      %v5190 = vpop.permute.xlu0 %5189
      %5191 = vrot.lane.b32.xlu0 %v5188, 44
      %v5192 = vpop.permute.xlu0 %5191
      %5193 = vrot.lane.b32.xlu0 %v5183, 44
      %v5194 = vpop.permute.xlu0 %5193
      %v5195 = vsel %vm3458, %v5190, %v5192
      %v5196 = vsel %vm3458, %v5192, %v5194
      %v5198 = vsel %vm370, %v5185, 0
      %v5200 = vsel %vm374, %v5195, 0
      %v5202 = vsel %vm374, %v5196, 0
      %5204 = vmatprep.subr.mxu0 %v5202
      %5205 = vmatpush1.msra.mxu0 %v5200
      %5206 = vmatprep.subr.mxu0 0.0
      %5207 = vmatpush1.msra.mxu0 0.0
      %5208 = vmatprep.subr.mxu0 0.0
      %5209 = vmatpush1.msra.mxu0 0.0
      %5210 = vmatprep.subr.mxu0 0.0
      %5211 = vmatpush1.msra.mxu0 0.0
      %5212 = vmatprep.subr.mxu0 0.0
      %5213 = vmatpush1.msra.mxu0 0.0
      %5214 = vmatprep.subr.mxu0 0.0
      %5215 = vmatpush1.msra.mxu0 0.0
      %5216 = vmatprep.subr.mxu0 0.0
      %5217 = vmatpush1.msra.mxu0 0.0
      %5218 = vmatprep.subr.mxu0 0.0
      %5219 = vmatpush1.msra.mxu0 0.0
      %5220 = vmatprep.subr.mxu0 0.0
      %5221 = vmatpush1.msra.mxu0 0.0
      %5222 = vmatprep.subr.mxu0 0.0
      %5223 = vmatpush1.msra.mxu0 0.0
      %5224 = vmatprep.subr.mxu0 0.0
      %5225 = vmatpush1.msra.mxu0 0.0
      %5226 = vmatprep.subr.mxu0 0.0
      %5227 = vmatpush1.msra.mxu0 0.0
      %5228 = vmatprep.subr.mxu0 0.0
      %5229 = vmatpush1.msra.mxu0 0.0
      %5230 = vmatprep.subr.mxu0 0.0
      %5231 = vmatpush1.msra.mxu0 0.0
      %5232 = vmatprep.subr.mxu0 0.0
      %5233 = vmatpush1.msra.mxu0 0.0
      %5234 = vmatprep.subr.mxu0 0.0
      %5235 = vmatpush1.msra.mxu0 0.0
      %5236 = vmatprep.subr.mxu0 0.0
      %5237 = vmatpush1.msra.mxu0 0.0
      %5238 = vmatprep.subr.mxu0 0.0
      %5239 = vmatpush1.msra.mxu0 0.0
      %5240 = vmatprep.subr.mxu0 0.0
      %5241 = vmatpush1.msra.mxu0 0.0
      %5242 = vmatprep.subr.mxu0 0.0
      %5243 = vmatpush1.msra.mxu0 0.0
      %5244 = vmatprep.subr.mxu0 0.0
      %5245 = vmatpush1.msra.mxu0 0.0
      %5246 = vmatprep.subr.mxu0 0.0
      %5247 = vmatpush1.msra.mxu0 0.0
      %5248 = vmatprep.subr.mxu0 0.0
      %5249 = vmatpush1.msra.mxu0 0.0
      %5250 = vmatprep.subr.mxu0 0.0
      %5251 = vmatpush1.msra.mxu0 0.0
      %5252 = vmatprep.subr.mxu0 0.0
      %5253 = vmatpush1.msra.mxu0 0.0
      %5254 = vmatprep.subr.mxu0 0.0
      %5255 = vmatpush1.msra.mxu0 0.0
      %5256 = vmatprep.subr.mxu0 0.0
      %5257 = vmatpush1.msra.mxu0 0.0
      %5258 = vmatprep.subr.mxu0 0.0
      %5259 = vmatpush1.msra.mxu0 0.0
      %5260 = vmatprep.subr.mxu0 0.0
      %5261 = vmatpush1.msra.mxu0 0.0
      %5262 = vmatprep.subr.mxu0 0.0
      %5263 = vmatpush1.msra.mxu0 0.0
      %5264 = vmatprep.subr.mxu0 0.0
      %5265 = vmatpush1.msra.mxu0 0.0
      %5266 = vmatprep.subr.mxu0 0.0
      %5267 = vmatpush1.msra.mxu0 0.0
      %5268 = vmatprep.mubr.f32.mxu0 0.0
      %5269 = vmatmul.mubr.f32.gmra.mrb[0].mxu0 %v5198
      %v5270 = vpop.f32.mrb[0].mxu0
      %v5271 = vadd.f32 0.0, %v5270
      %v5272 = vpop.f32.mrb[0].mxu0
      %v5273 = vadd.f32 0.0, %v5272
      %5274 = vdwg.mxu0
      %v5275 = vmul.f32 %v5271, %v3545
      %v5276 = vmul.f32 %v5273, %v3549
      %v5277 = vadd.f32 %v5180, %v5275
      %v5278 = vadd.f32 %v5181, %v5276
      %v5279 = vld [vmem:[%s4989 + $0x4] sm:$0xff]
      %v5280 = vld [vmem:[%s4989 + $0xc] sm:$0xf]
      %s5281 = scalar_lea.vmem %s3, 384
      %v5282 = vld [vmem:[%s5281] sm:$0xff]
      %v5285 = vcombine.high %v5279, %v5279
      %5286 = vrot.lane.b32.xlu0 %v5279, 116
      %v5287 = vpop.permute.xlu0 %5286
      %5288 = vrot.lane.b32.xlu0 %v5285, 116
      %v5289 = vpop.permute.xlu0 %5288
      %5290 = vrot.lane.b32.xlu0 %v5280, 116
      %v5291 = vpop.permute.xlu0 %5290
      %v5292 = vsel %vm3569, %v5287, %v5289
      %v5293 = vsel %vm3569, %v5289, %v5291
      %v5295 = vsel %vm370, %v5282, 0
      %v5297 = vsel %vm374, %v5292, 0
      %v5299 = vsel %vm374, %v5293, 0
      %5301 = vmatprep.subr.mxu0 %v5299
      %5302 = vmatpush1.msra.mxu0 %v5297
      %5303 = vmatprep.subr.mxu0 0.0
      %5304 = vmatpush1.msra.mxu0 0.0
      %5305 = vmatprep.subr.mxu0 0.0
      %5306 = vmatpush1.msra.mxu0 0.0
      %5307 = vmatprep.subr.mxu0 0.0
      %5308 = vmatpush1.msra.mxu0 0.0
      %5309 = vmatprep.subr.mxu0 0.0
      %5310 = vmatpush1.msra.mxu0 0.0
      %5311 = vmatprep.subr.mxu0 0.0
      %5312 = vmatpush1.msra.mxu0 0.0
      %5313 = vmatprep.subr.mxu0 0.0
      %5314 = vmatpush1.msra.mxu0 0.0
      %5315 = vmatprep.subr.mxu0 0.0
      %5316 = vmatpush1.msra.mxu0 0.0
      %5317 = vmatprep.subr.mxu0 0.0
      %5318 = vmatpush1.msra.mxu0 0.0
      %5319 = vmatprep.subr.mxu0 0.0
      %5320 = vmatpush1.msra.mxu0 0.0
      %5321 = vmatprep.subr.mxu0 0.0
      %5322 = vmatpush1.msra.mxu0 0.0
      %5323 = vmatprep.subr.mxu0 0.0
      %5324 = vmatpush1.msra.mxu0 0.0
      %5325 = vmatprep.subr.mxu0 0.0
      %5326 = vmatpush1.msra.mxu0 0.0
      %5327 = vmatprep.subr.mxu0 0.0
      %5328 = vmatpush1.msra.mxu0 0.0
      %5329 = vmatprep.subr.mxu0 0.0
      %5330 = vmatpush1.msra.mxu0 0.0
      %5331 = vmatprep.subr.mxu0 0.0
      %5332 = vmatpush1.msra.mxu0 0.0
      %5333 = vmatprep.subr.mxu0 0.0
      %5334 = vmatpush1.msra.mxu0 0.0
      %5335 = vmatprep.subr.mxu0 0.0
      %5336 = vmatpush1.msra.mxu0 0.0
      %5337 = vmatprep.subr.mxu0 0.0
      %5338 = vmatpush1.msra.mxu0 0.0
      %5339 = vmatprep.subr.mxu0 0.0
      %5340 = vmatpush1.msra.mxu0 0.0
      %5341 = vmatprep.subr.mxu0 0.0
      %5342 = vmatpush1.msra.mxu0 0.0
      %5343 = vmatprep.subr.mxu0 0.0
      %5344 = vmatpush1.msra.mxu0 0.0
      %5345 = vmatprep.subr.mxu0 0.0
      %5346 = vmatpush1.msra.mxu0 0.0
      %5347 = vmatprep.subr.mxu0 0.0
      %5348 = vmatpush1.msra.mxu0 0.0
      %5349 = vmatprep.subr.mxu0 0.0
      %5350 = vmatpush1.msra.mxu0 0.0
      %5351 = vmatprep.subr.mxu0 0.0
      %5352 = vmatpush1.msra.mxu0 0.0
      %5353 = vmatprep.subr.mxu0 0.0
      %5354 = vmatpush1.msra.mxu0 0.0
      %5355 = vmatprep.subr.mxu0 0.0
      %5356 = vmatpush1.msra.mxu0 0.0
      %5357 = vmatprep.subr.mxu0 0.0
      %5358 = vmatpush1.msra.mxu0 0.0
      %5359 = vmatprep.subr.mxu0 0.0
      %5360 = vmatpush1.msra.mxu0 0.0
      %5361 = vmatprep.subr.mxu0 0.0
      %5362 = vmatpush1.msra.mxu0 0.0
      %5363 = vmatprep.subr.mxu0 0.0
      %5364 = vmatpush1.msra.mxu0 0.0
      %5365 = vmatprep.mubr.f32.mxu0 0.0
      %5366 = vmatmul.mubr.f32.gmra.mrb[0].mxu0 %v5295
      %v5367 = vpop.f32.mrb[0].mxu0
      %v5368 = vadd.f32 0.0, %v5367
      %v5369 = vpop.f32.mrb[0].mxu0
      %v5370 = vadd.f32 0.0, %v5369
      %5371 = vdwg.mxu0
      %v5372 = vmul.f32 %v5368, %v3340
      %v5373 = vmul.f32 %v5370, %v3344
      %v5374 = vadd.f32 %v5277, %v5372
      %v5375 = vadd.f32 %v5278, %v5373
      %v5376 = vld [vmem:[%s4989 + $0x4] sm:$0xff]
      %v5377 = vld [vmem:[%s4989 + $0xc] sm:$0xf]
      %s5378 = scalar_lea.vmem %s3, 392
      %v5379 = vld [vmem:[%s5378] sm:$0xff]
      %v5382 = vcombine.high %v5376, %v5376
      %5383 = vrot.lane.b32.xlu0 %v5376, 112
      %v5384 = vpop.permute.xlu0 %5383
      %5385 = vrot.lane.b32.xlu0 %v5382, 112
      %v5386 = vpop.permute.xlu0 %5385
      %5387 = vrot.lane.b32.xlu0 %v5377, 112
      %v5388 = vpop.permute.xlu0 %5387
      %v5389 = vsel %vm367, %v5384, %v5386
      %v5390 = vsel %vm367, %v5386, %v5388
      %v5392 = vsel %vm370, %v5379, 0
      %v5394 = vsel %vm374, %v5389, 0
      %v5396 = vsel %vm374, %v5390, 0
      %5398 = vmatprep.subr.mxu0 %v5396
      %5399 = vmatpush1.msra.mxu0 %v5394
      %5400 = vmatprep.subr.mxu0 0.0
      %5401 = vmatpush1.msra.mxu0 0.0
      %5402 = vmatprep.subr.mxu0 0.0
      %5403 = vmatpush1.msra.mxu0 0.0
      %5404 = vmatprep.subr.mxu0 0.0
      %5405 = vmatpush1.msra.mxu0 0.0
      %5406 = vmatprep.subr.mxu0 0.0
      %5407 = vmatpush1.msra.mxu0 0.0
      %5408 = vmatprep.subr.mxu0 0.0
      %5409 = vmatpush1.msra.mxu0 0.0
      %5410 = vmatprep.subr.mxu0 0.0
      %5411 = vmatpush1.msra.mxu0 0.0
      %5412 = vmatprep.subr.mxu0 0.0
      %5413 = vmatpush1.msra.mxu0 0.0
      %5414 = vmatprep.subr.mxu0 0.0
      %5415 = vmatpush1.msra.mxu0 0.0
      %5416 = vmatprep.subr.mxu0 0.0
      %5417 = vmatpush1.msra.mxu0 0.0
      %5418 = vmatprep.subr.mxu0 0.0
      %5419 = vmatpush1.msra.mxu0 0.0
      %5420 = vmatprep.subr.mxu0 0.0
      %5421 = vmatpush1.msra.mxu0 0.0
      %5422 = vmatprep.subr.mxu0 0.0
      %5423 = vmatpush1.msra.mxu0 0.0
      %5424 = vmatprep.subr.mxu0 0.0
      %5425 = vmatpush1.msra.mxu0 0.0
      %5426 = vmatprep.subr.mxu0 0.0
      %5427 = vmatpush1.msra.mxu0 0.0
      %5428 = vmatprep.subr.mxu0 0.0
      %5429 = vmatpush1.msra.mxu0 0.0
      %5430 = vmatprep.subr.mxu0 0.0
      %5431 = vmatpush1.msra.mxu0 0.0
      %5432 = vmatprep.subr.mxu0 0.0
      %5433 = vmatpush1.msra.mxu0 0.0
      %5434 = vmatprep.subr.mxu0 0.0
      %5435 = vmatpush1.msra.mxu0 0.0
      %5436 = vmatprep.subr.mxu0 0.0
      %5437 = vmatpush1.msra.mxu0 0.0
      %5438 = vmatprep.subr.mxu0 0.0
      %5439 = vmatpush1.msra.mxu0 0.0
      %5440 = vmatprep.subr.mxu0 0.0
      %5441 = vmatpush1.msra.mxu0 0.0
      %5442 = vmatprep.subr.mxu0 0.0
      %5443 = vmatpush1.msra.mxu0 0.0
      %5444 = vmatprep.subr.mxu0 0.0
      %5445 = vmatpush1.msra.mxu0 0.0
      %5446 = vmatprep.subr.mxu0 0.0
      %5447 = vmatpush1.msra.mxu0 0.0
      %5448 = vmatprep.subr.mxu0 0.0
      %5449 = vmatpush1.msra.mxu0 0.0
      %5450 = vmatprep.subr.mxu0 0.0
      %5451 = vmatpush1.msra.mxu0 0.0
      %5452 = vmatprep.subr.mxu0 0.0
      %5453 = vmatpush1.msra.mxu0 0.0
      %5454 = vmatprep.subr.mxu0 0.0
      %5455 = vmatpush1.msra.mxu0 0.0
      %5456 = vmatprep.subr.mxu0 0.0
      %5457 = vmatpush1.msra.mxu0 0.0
      %5458 = vmatprep.subr.mxu0 0.0
      %5459 = vmatpush1.msra.mxu0 0.0
      %5460 = vmatprep.subr.mxu0 0.0
      %5461 = vmatpush1.msra.mxu0 0.0
      %5462 = vmatprep.mubr.f32.mxu0 0.0
      %5463 = vmatmul.mubr.f32.gmra.mrb[0].mxu0 %v5392
      %v5464 = vpop.f32.mrb[0].mxu0
      %v5465 = vadd.f32 0.0, %v5464
      %v5466 = vpop.f32.mrb[0].mxu0
      %v5467 = vadd.f32 0.0, %v5466
      %5468 = vdwg.mxu0
      %v5469 = vadd.f32 %v5374, %v5465
      %v5470 = vadd.f32 %v5375, %v5467
      %v5471 = vld [vmem:[%s4989 + $0x4] sm:$0xff]
      %v5472 = vld [vmem:[%s4989 + $0xc] sm:$0xf]
      %s5473 = scalar_lea.vmem %s3, 400
      %v5474 = vld [vmem:[%s5473] sm:$0xff]
      %v5477 = vcombine.high %v5471, %v5471
      %5478 = vrot.lane.b32.xlu0 %v5471, 108
      %v5479 = vpop.permute.xlu0 %5478
      %5480 = vrot.lane.b32.xlu0 %v5477, 108
      %v5481 = vpop.permute.xlu0 %5480
      %5482 = vrot.lane.b32.xlu0 %v5472, 108
      %v5483 = vpop.permute.xlu0 %5482
      %v5484 = vsel %vm3762, %v5479, %v5481
      %v5485 = vsel %vm3762, %v5481, %v5483
      %v5487 = vsel %vm370, %v5474, 0
      %v5489 = vsel %vm374, %v5484, 0
      %v5491 = vsel %vm374, %v5485, 0
      %5493 = vmatprep.subr.mxu0 %v5491
      %5494 = vmatpush1.msra.mxu0 %v5489
      %5495 = vmatprep.subr.mxu0 0.0
      %5496 = vmatpush1.msra.mxu0 0.0
      %5497 = vmatprep.subr.mxu0 0.0
      %5498 = vmatpush1.msra.mxu0 0.0
      %5499 = vmatprep.subr.mxu0 0.0
      %5500 = vmatpush1.msra.mxu0 0.0
      %5501 = vmatprep.subr.mxu0 0.0
      %5502 = vmatpush1.msra.mxu0 0.0
      %5503 = vmatprep.subr.mxu0 0.0
      %5504 = vmatpush1.msra.mxu0 0.0
      %5505 = vmatprep.subr.mxu0 0.0
      %5506 = vmatpush1.msra.mxu0 0.0
      %5507 = vmatprep.subr.mxu0 0.0
      %5508 = vmatpush1.msra.mxu0 0.0
      %5509 = vmatprep.subr.mxu0 0.0
      %5510 = vmatpush1.msra.mxu0 0.0
      %5511 = vmatprep.subr.mxu0 0.0
      %5512 = vmatpush1.msra.mxu0 0.0
      %5513 = vmatprep.subr.mxu0 0.0
      %5514 = vmatpush1.msra.mxu0 0.0
      %5515 = vmatprep.subr.mxu0 0.0
      %5516 = vmatpush1.msra.mxu0 0.0
      %5517 = vmatprep.subr.mxu0 0.0
      %5518 = vmatpush1.msra.mxu0 0.0
      %5519 = vmatprep.subr.mxu0 0.0
      %5520 = vmatpush1.msra.mxu0 0.0
      %5521 = vmatprep.subr.mxu0 0.0
      %5522 = vmatpush1.msra.mxu0 0.0
      %5523 = vmatprep.subr.mxu0 0.0
      %5524 = vmatpush1.msra.mxu0 0.0
      %5525 = vmatprep.subr.mxu0 0.0
      %5526 = vmatpush1.msra.mxu0 0.0
      %5527 = vmatprep.subr.mxu0 0.0
      %5528 = vmatpush1.msra.mxu0 0.0
      %5529 = vmatprep.subr.mxu0 0.0
      %5530 = vmatpush1.msra.mxu0 0.0
      %5531 = vmatprep.subr.mxu0 0.0
      %5532 = vmatpush1.msra.mxu0 0.0
      %5533 = vmatprep.subr.mxu0 0.0
      %5534 = vmatpush1.msra.mxu0 0.0
      %5535 = vmatprep.subr.mxu0 0.0
      %5536 = vmatpush1.msra.mxu0 0.0
      %5537 = vmatprep.subr.mxu0 0.0
      %5538 = vmatpush1.msra.mxu0 0.0
      %5539 = vmatprep.subr.mxu0 0.0
      %5540 = vmatpush1.msra.mxu0 0.0
      %5541 = vmatprep.subr.mxu0 0.0
      %5542 = vmatpush1.msra.mxu0 0.0
      %5543 = vmatprep.subr.mxu0 0.0
      %5544 = vmatpush1.msra.mxu0 0.0
      %5545 = vmatprep.subr.mxu0 0.0
      %5546 = vmatpush1.msra.mxu0 0.0
      %5547 = vmatprep.subr.mxu0 0.0
      %5548 = vmatpush1.msra.mxu0 0.0
      %5549 = vmatprep.subr.mxu0 0.0
      %5550 = vmatpush1.msra.mxu0 0.0
      %5551 = vmatprep.subr.mxu0 0.0
      %5552 = vmatpush1.msra.mxu0 0.0
      %5553 = vmatprep.subr.mxu0 0.0
      %5554 = vmatpush1.msra.mxu0 0.0
      %5555 = vmatprep.subr.mxu0 0.0
      %5556 = vmatpush1.msra.mxu0 0.0
      %5557 = vmatprep.mubr.f32.mxu0 0.0
      %5558 = vmatmul.mubr.f32.gmra.mrb[0].mxu0 %v5487
      %v5559 = vpop.f32.mrb[0].mxu0
      %v5560 = vadd.f32 0.0, %v5559
      %v5561 = vpop.f32.mrb[0].mxu0
      %v5562 = vadd.f32 0.0, %v5561
      %5563 = vdwg.mxu0
      %v5564 = vmul.f32 %v5560, %v3545
      %v5565 = vmul.f32 %v5562, %v3549
      %v5566 = vadd.f32 %v5469, %v5564
      %v5567 = vadd.f32 %v5470, %v5565
      %v5568 = vld [vmem:[%s4989 + $0x4] sm:$0xff]
      %v5569 = vld [vmem:[%s4989 + $0xc] sm:$0xf]
      %s5570 = scalar_lea.vmem %s3, 408
      %v5571 = vld [vmem:[%s5570] sm:$0xff]
      %v5574 = vcombine.high %v5568, %v5568
      %5575 = vrot.lane.b32.xlu0 %v5568, 52
      %v5576 = vpop.permute.xlu0 %5575
      %5577 = vrot.lane.b32.xlu0 %v5574, 52
      %v5578 = vpop.permute.xlu0 %5577
      %5579 = vrot.lane.b32.xlu0 %v5569, 52
      %v5580 = vpop.permute.xlu0 %5579
      %v5581 = vsel %vm3253, %v5576, %v5578
      %v5582 = vsel %vm3253, %v5578, %v5580
      %v5584 = vsel %vm370, %v5571, 0
      %v5586 = vsel %vm374, %v5581, 0
      %v5588 = vsel %vm374, %v5582, 0
      %5590 = vmatprep.subr.mxu0 %v5588
      %5591 = vmatpush1.msra.mxu0 %v5586
      %5592 = vmatprep.subr.mxu0 0.0
      %5593 = vmatpush1.msra.mxu0 0.0
      %5594 = vmatprep.subr.mxu0 0.0
      %5595 = vmatpush1.msra.mxu0 0.0
      %5596 = vmatprep.subr.mxu0 0.0
      %5597 = vmatpush1.msra.mxu0 0.0
      %5598 = vmatprep.subr.mxu0 0.0
      %5599 = vmatpush1.msra.mxu0 0.0
      %5600 = vmatprep.subr.mxu0 0.0
      %5601 = vmatpush1.msra.mxu0 0.0
      %5602 = vmatprep.subr.mxu0 0.0
      %5603 = vmatpush1.msra.mxu0 0.0
      %5604 = vmatprep.subr.mxu0 0.0
      %5605 = vmatpush1.msra.mxu0 0.0
      %5606 = vmatprep.subr.mxu0 0.0
      %5607 = vmatpush1.msra.mxu0 0.0
      %5608 = vmatprep.subr.mxu0 0.0
      %5609 = vmatpush1.msra.mxu0 0.0
      %5610 = vmatprep.subr.mxu0 0.0
      %5611 = vmatpush1.msra.mxu0 0.0
      %5612 = vmatprep.subr.mxu0 0.0
      %5613 = vmatpush1.msra.mxu0 0.0
      %5614 = vmatprep.subr.mxu0 0.0
      %5615 = vmatpush1.msra.mxu0 0.0
      %5616 = vmatprep.subr.mxu0 0.0
      %5617 = vmatpush1.msra.mxu0 0.0
      %5618 = vmatprep.subr.mxu0 0.0
      %5619 = vmatpush1.msra.mxu0 0.0
      %5620 = vmatprep.subr.mxu0 0.0
      %5621 = vmatpush1.msra.mxu0 0.0
      %5622 = vmatprep.subr.mxu0 0.0
      %5623 = vmatpush1.msra.mxu0 0.0
      %5624 = vmatprep.subr.mxu0 0.0
      %5625 = vmatpush1.msra.mxu0 0.0
      %5626 = vmatprep.subr.mxu0 0.0
      %5627 = vmatpush1.msra.mxu0 0.0
      %5628 = vmatprep.subr.mxu0 0.0
      %5629 = vmatpush1.msra.mxu0 0.0
      %5630 = vmatprep.subr.mxu0 0.0
      %5631 = vmatpush1.msra.mxu0 0.0
      %5632 = vmatprep.subr.mxu0 0.0
      %5633 = vmatpush1.msra.mxu0 0.0
      %5634 = vmatprep.subr.mxu0 0.0
      %5635 = vmatpush1.msra.mxu0 0.0
      %5636 = vmatprep.subr.mxu0 0.0
      %5637 = vmatpush1.msra.mxu0 0.0
      %5638 = vmatprep.subr.mxu0 0.0
      %5639 = vmatpush1.msra.mxu0 0.0
      %5640 = vmatprep.subr.mxu0 0.0
      %5641 = vmatpush1.msra.mxu0 0.0
      %5642 = vmatprep.subr.mxu0 0.0
      %5643 = vmatpush1.msra.mxu0 0.0
      %5644 = vmatprep.subr.mxu0 0.0
      %5645 = vmatpush1.msra.mxu0 0.0
      %5646 = vmatprep.subr.mxu0 0.0
      %5647 = vmatpush1.msra.mxu0 0.0
      %5648 = vmatprep.subr.mxu0 0.0
      %5649 = vmatpush1.msra.mxu0 0.0
      %5650 = vmatprep.subr.mxu0 0.0
      %5651 = vmatpush1.msra.mxu0 0.0
      %5652 = vmatprep.subr.mxu0 0.0
      %5653 = vmatpush1.msra.mxu0 0.0
      %5654 = vmatprep.mubr.f32.mxu0 0.0
      %5655 = vmatmul.mubr.f32.gmra.mrb[0].mxu0 %v5584
      %v5656 = vpop.f32.mrb[0].mxu0
      %v5657 = vadd.f32 0.0, %v5656
      %v5658 = vpop.f32.mrb[0].mxu0
      %v5659 = vadd.f32 0.0, %v5658
      %5660 = vdwg.mxu0
      %v5661 = vmul.f32 %v5657, %v3340
      %v5662 = vmul.f32 %v5659, %v3344
      %v5663 = vadd.f32 %v5566, %v5661
      %v5664 = vadd.f32 %v5567, %v5662
      %v5665 = vld [vmem:[%s4989 + $0x4] sm:$0xff]
      %v5666 = vld [vmem:[%s4989 + $0xc] sm:$0xf]
      %s5667 = scalar_lea.vmem %s3, 416
      %v5668 = vld [vmem:[%s5667] sm:$0xff]
      %v5671 = vcombine.high %v5665, %v5665
      %5672 = vrot.lane.b32.xlu0 %v5665, 48
      %v5673 = vpop.permute.xlu0 %5672
      %5674 = vrot.lane.b32.xlu0 %v5671, 48
      %v5675 = vpop.permute.xlu0 %5674
      %5676 = vrot.lane.b32.xlu0 %v5666, 48
      %v5677 = vpop.permute.xlu0 %5676
      %v5678 = vsel %vm3362, %v5673, %v5675
      %v5679 = vsel %vm3362, %v5675, %v5677
      %v5681 = vsel %vm370, %v5668, 0
      %v5683 = vsel %vm374, %v5678, 0
      %v5685 = vsel %vm374, %v5679, 0
      %5687 = vmatprep.subr.mxu0 %v5685
      %5688 = vmatpush1.msra.mxu0 %v5683
      %5689 = vmatprep.subr.mxu0 0.0
      %5690 = vmatpush1.msra.mxu0 0.0
      %5691 = vmatprep.subr.mxu0 0.0
      %5692 = vmatpush1.msra.mxu0 0.0
      %5693 = vmatprep.subr.mxu0 0.0
      %5694 = vmatpush1.msra.mxu0 0.0
      %5695 = vmatprep.subr.mxu0 0.0
      %5696 = vmatpush1.msra.mxu0 0.0
      %5697 = vmatprep.subr.mxu0 0.0
      %5698 = vmatpush1.msra.mxu0 0.0
      %5699 = vmatprep.subr.mxu0 0.0
      %5700 = vmatpush1.msra.mxu0 0.0
      %5701 = vmatprep.subr.mxu0 0.0
      %5702 = vmatpush1.msra.mxu0 0.0
      %5703 = vmatprep.subr.mxu0 0.0
      %5704 = vmatpush1.msra.mxu0 0.0
      %5705 = vmatprep.subr.mxu0 0.0
      %5706 = vmatpush1.msra.mxu0 0.0
      %5707 = vmatprep.subr.mxu0 0.0
      %5708 = vmatpush1.msra.mxu0 0.0
      %5709 = vmatprep.subr.mxu0 0.0
      %5710 = vmatpush1.msra.mxu0 0.0
      %5711 = vmatprep.subr.mxu0 0.0
      %5712 = vmatpush1.msra.mxu0 0.0
      %5713 = vmatprep.subr.mxu0 0.0
      %5714 = vmatpush1.msra.mxu0 0.0
      %5715 = vmatprep.subr.mxu0 0.0
      %5716 = vmatpush1.msra.mxu0 0.0
      %5717 = vmatprep.subr.mxu0 0.0
      %5718 = vmatpush1.msra.mxu0 0.0
      %5719 = vmatprep.subr.mxu0 0.0
      %5720 = vmatpush1.msra.mxu0 0.0
      %5721 = vmatprep.subr.mxu0 0.0
      %5722 = vmatpush1.msra.mxu0 0.0
      %5723 = vmatprep.subr.mxu0 0.0
      %5724 = vmatpush1.msra.mxu0 0.0
      %5725 = vmatprep.subr.mxu0 0.0
      %5726 = vmatpush1.msra.mxu0 0.0
      %5727 = vmatprep.subr.mxu0 0.0
      %5728 = vmatpush1.msra.mxu0 0.0
      %5729 = vmatprep.subr.mxu0 0.0
      %5730 = vmatpush1.msra.mxu0 0.0
      %5731 = vmatprep.subr.mxu0 0.0
      %5732 = vmatpush1.msra.mxu0 0.0
      %5733 = vmatprep.subr.mxu0 0.0
      %5734 = vmatpush1.msra.mxu0 0.0
      %5735 = vmatprep.subr.mxu0 0.0
      %5736 = vmatpush1.msra.mxu0 0.0
      %5737 = vmatprep.subr.mxu0 0.0
      %5738 = vmatpush1.msra.mxu0 0.0
      %5739 = vmatprep.subr.mxu0 0.0
      %5740 = vmatpush1.msra.mxu0 0.0
      %5741 = vmatprep.subr.mxu0 0.0
      %5742 = vmatpush1.msra.mxu0 0.0
      %5743 = vmatprep.subr.mxu0 0.0
      %5744 = vmatpush1.msra.mxu0 0.0
      %5745 = vmatprep.subr.mxu0 0.0
      %5746 = vmatpush1.msra.mxu0 0.0
      %5747 = vmatprep.subr.mxu0 0.0
      %5748 = vmatpush1.msra.mxu0 0.0
      %5749 = vmatprep.subr.mxu0 0.0
      %5750 = vmatpush1.msra.mxu0 0.0
      %5751 = vmatprep.mubr.f32.mxu0 0.0
      %5752 = vmatmul.mubr.f32.gmra.mrb[0].mxu0 %v5681
      %v5753 = vpop.f32.mrb[0].mxu0
      %v5754 = vadd.f32 0.0, %v5753
      %v5755 = vpop.f32.mrb[0].mxu0
      %v5756 = vadd.f32 0.0, %v5755
      %5757 = vdwg.mxu0
      %v5758 = vadd.f32 %v5663, %v5754
      %v5759 = vadd.f32 %v5664, %v5756
      %v5760 = vld [vmem:[%s4989 + $0x4] sm:$0xff]
      %v5761 = vld [vmem:[%s4989 + $0xc] sm:$0xf]
      %s5762 = scalar_lea.vmem %s3, 424
      %v5763 = vld [vmem:[%s5762] sm:$0xff]
      %v5766 = vcombine.high %v5760, %v5760
      %5767 = vrot.lane.b32.xlu0 %v5760, 44
      %v5768 = vpop.permute.xlu0 %5767
      %5769 = vrot.lane.b32.xlu0 %v5766, 44
      %v5770 = vpop.permute.xlu0 %5769
      %5771 = vrot.lane.b32.xlu0 %v5761, 44
      %v5772 = vpop.permute.xlu0 %5771
      %v5773 = vsel %vm3458, %v5768, %v5770
      %v5774 = vsel %vm3458, %v5770, %v5772
      %v5776 = vsel %vm370, %v5763, 0
      %v5778 = vsel %vm374, %v5773, 0
      %v5780 = vsel %vm374, %v5774, 0
      %5782 = vmatprep.subr.mxu0 %v5780
      %5783 = vmatpush1.msra.mxu0 %v5778
      %5784 = vmatprep.subr.mxu0 0.0
      %5785 = vmatpush1.msra.mxu0 0.0
      %5786 = vmatprep.subr.mxu0 0.0
      %5787 = vmatpush1.msra.mxu0 0.0
      %5788 = vmatprep.subr.mxu0 0.0
      %5789 = vmatpush1.msra.mxu0 0.0
      %5790 = vmatprep.subr.mxu0 0.0
      %5791 = vmatpush1.msra.mxu0 0.0
      %5792 = vmatprep.subr.mxu0 0.0
      %5793 = vmatpush1.msra.mxu0 0.0
      %5794 = vmatprep.subr.mxu0 0.0
      %5795 = vmatpush1.msra.mxu0 0.0
      %5796 = vmatprep.subr.mxu0 0.0
      %5797 = vmatpush1.msra.mxu0 0.0
      %5798 = vmatprep.subr.mxu0 0.0
      %5799 = vmatpush1.msra.mxu0 0.0
      %5800 = vmatprep.subr.mxu0 0.0
      %5801 = vmatpush1.msra.mxu0 0.0
      %5802 = vmatprep.subr.mxu0 0.0
      %5803 = vmatpush1.msra.mxu0 0.0
      %5804 = vmatprep.subr.mxu0 0.0
      %5805 = vmatpush1.msra.mxu0 0.0
      %5806 = vmatprep.subr.mxu0 0.0
      %5807 = vmatpush1.msra.mxu0 0.0
      %5808 = vmatprep.subr.mxu0 0.0
      %5809 = vmatpush1.msra.mxu0 0.0
      %5810 = vmatprep.subr.mxu0 0.0
      %5811 = vmatpush1.msra.mxu0 0.0
      %5812 = vmatprep.subr.mxu0 0.0
      %5813 = vmatpush1.msra.mxu0 0.0
      %5814 = vmatprep.subr.mxu0 0.0
      %5815 = vmatpush1.msra.mxu0 0.0
      %5816 = vmatprep.subr.mxu0 0.0
      %5817 = vmatpush1.msra.mxu0 0.0
      %5818 = vmatprep.subr.mxu0 0.0
      %5819 = vmatpush1.msra.mxu0 0.0
      %5820 = vmatprep.subr.mxu0 0.0
      %5821 = vmatpush1.msra.mxu0 0.0
      %5822 = vmatprep.subr.mxu0 0.0
      %5823 = vmatpush1.msra.mxu0 0.0
      %5824 = vmatprep.subr.mxu0 0.0
      %5825 = vmatpush1.msra.mxu0 0.0
      %5826 = vmatprep.subr.mxu0 0.0
      %5827 = vmatpush1.msra.mxu0 0.0
      %5828 = vmatprep.subr.mxu0 0.0
      %5829 = vmatpush1.msra.mxu0 0.0
      %5830 = vmatprep.subr.mxu0 0.0
      %5831 = vmatpush1.msra.mxu0 0.0
      %5832 = vmatprep.subr.mxu0 0.0
      %5833 = vmatpush1.msra.mxu0 0.0
      %5834 = vmatprep.subr.mxu0 0.0
      %5835 = vmatpush1.msra.mxu0 0.0
      %5836 = vmatprep.subr.mxu0 0.0
      %5837 = vmatpush1.msra.mxu0 0.0
      %5838 = vmatprep.subr.mxu0 0.0
      %5839 = vmatpush1.msra.mxu0 0.0
      %5840 = vmatprep.subr.mxu0 0.0
      %5841 = vmatpush1.msra.mxu0 0.0
      %5842 = vmatprep.subr.mxu0 0.0
      %5843 = vmatpush1.msra.mxu0 0.0
      %5844 = vmatprep.subr.mxu0 0.0
      %5845 = vmatpush1.msra.mxu0 0.0
      %5846 = vmatprep.mubr.f32.mxu0 0.0
      %5847 = vmatmul.mubr.f32.gmra.mrb[0].mxu0 %v5776
      %v5848 = vpop.f32.mrb[0].mxu0
      %v5849 = vadd.f32 0.0, %v5848
      %v5850 = vpop.f32.mrb[0].mxu0
      %v5851 = vadd.f32 0.0, %v5850
      %5852 = vdwg.mxu0
      %v5853 = vmul.f32 %v5849, %v3545
      %v5854 = vmul.f32 %v5851, %v3549
      %v5855 = vadd.f32 %v5758, %v5853
      %v5856 = vadd.f32 %v5759, %v5854
      %s5857 = scalar_lea.vmem %s4, 8
      %v5858 = vld [vmem:[%s5857] sm:$0xff]
      %5860 = vset.pattern.permute.xlu0 0
      %5861 = vperm.xlu0 %5860, %v5858
      %v5862 = vpop.permute.xlu0 %5861
      %v5864 = vadd.f32 %v5855, %v5862
      %v5865 = vadd.f32 %v5856, %v5862
      %v5866 = vmax.f32 %v5864, 0.0
      %v5867 = vmax.f32 %v5865, 0.0
      %s5868 = scalar_lea.vmem %s5, 16
      %v5869 = vld [vmem:[%s5868] sm:$0xff]
      %v5871 = vsel %vm3087, %v5869, 0
      %5873 = vmatprep.subr.mxu0 %v5867
      %5874 = vmatpush1.msra.mxu0 %v5866
      %5875 = vmatprep.subr.mxu0 0.0
      %5876 = vmatpush1.msra.mxu0 0.0
      %5877 = vmatprep.subr.mxu0 0.0
      %5878 = vmatpush1.msra.mxu0 0.0
      %5879 = vmatprep.subr.mxu0 0.0
      %5880 = vmatpush1.msra.mxu0 0.0
      %5881 = vmatprep.subr.mxu0 0.0
      %5882 = vmatpush1.msra.mxu0 0.0
      %5883 = vmatprep.subr.mxu0 0.0
      %5884 = vmatpush1.msra.mxu0 0.0
      %5885 = vmatprep.subr.mxu0 0.0
      %5886 = vmatpush1.msra.mxu0 0.0
      %5887 = vmatprep.subr.mxu0 0.0
      %5888 = vmatpush1.msra.mxu0 0.0
      %5889 = vmatprep.subr.mxu0 0.0
      %5890 = vmatpush1.msra.mxu0 0.0
      %5891 = vmatprep.subr.mxu0 0.0
      %5892 = vmatpush1.msra.mxu0 0.0
      %5893 = vmatprep.subr.mxu0 0.0
      %5894 = vmatpush1.msra.mxu0 0.0
      %5895 = vmatprep.subr.mxu0 0.0
      %5896 = vmatpush1.msra.mxu0 0.0
      %5897 = vmatprep.subr.mxu0 0.0
      %5898 = vmatpush1.msra.mxu0 0.0
      %5899 = vmatprep.subr.mxu0 0.0
      %5900 = vmatpush1.msra.mxu0 0.0
      %5901 = vmatprep.subr.mxu0 0.0
      %5902 = vmatpush1.msra.mxu0 0.0
      %5903 = vmatprep.subr.mxu0 0.0
      %5904 = vmatpush1.msra.mxu0 0.0
      %5905 = vmatprep.subr.mxu0 0.0
      %5906 = vmatpush1.msra.mxu0 0.0
      %5907 = vmatprep.subr.mxu0 0.0
      %5908 = vmatpush1.msra.mxu0 0.0
      %5909 = vmatprep.subr.mxu0 0.0
      %5910 = vmatpush1.msra.mxu0 0.0
      %5911 = vmatprep.subr.mxu0 0.0
      %5912 = vmatpush1.msra.mxu0 0.0
      %5913 = vmatprep.subr.mxu0 0.0
      %5914 = vmatpush1.msra.mxu0 0.0
      %5915 = vmatprep.subr.mxu0 0.0
      %5916 = vmatpush1.msra.mxu0 0.0
      %5917 = vmatprep.subr.mxu0 0.0
      %5918 = vmatpush1.msra.mxu0 0.0
      %5919 = vmatprep.subr.mxu0 0.0
      %5920 = vmatpush1.msra.mxu0 0.0
      %5921 = vmatprep.subr.mxu0 0.0
      %5922 = vmatpush1.msra.mxu0 0.0
      %5923 = vmatprep.subr.mxu0 0.0
      %5924 = vmatpush1.msra.mxu0 0.0
      %5925 = vmatprep.subr.mxu0 0.0
      %5926 = vmatpush1.msra.mxu0 0.0
      %5927 = vmatprep.subr.mxu0 0.0
      %5928 = vmatpush1.msra.mxu0 0.0
      %5929 = vmatprep.subr.mxu0 0.0
      %5930 = vmatpush1.msra.mxu0 0.0
      %5931 = vmatprep.subr.mxu0 0.0
      %5932 = vmatpush1.msra.mxu0 0.0
      %5933 = vmatprep.subr.mxu0 0.0
      %5934 = vmatpush1.msra.mxu0 0.0
      %5935 = vmatprep.subr.mxu0 0.0
      %5936 = vmatpush1.msra.mxu0 0.0
      %5937 = vmatprep.mubr.f32.mxu0 0.0
      %5938 = vmatmul.mubr.f32.gmra.mrb[0].mxu0 %v5871
      %v5939 = vpop.f32.mrb[0].mxu0
      %v5940 = vadd.f32 0.0, %v5939
      %v5941 = vpop.f32.mrb[0].mxu0
      %v5942 = vadd.f32 0.0, %v5941
      %5943 = vdwg.mxu0
      %v5944 = vadd.f32 %v3232, %v5940
      %v5945 = vadd.f32 %v3234, %v5942
      %s5946 = smul.u32 %s24, 5
      %s5947 = smul.addr %s5946, 4
      %s5948 = scalar_lea.vmem %s331, %s5947
      %v5949 = vld [vmem:[%s5948] sm:$0xff]
      %v5950 = vld [vmem:[%s5948 + $0x8] sm:$0xf]
      %s5951 = scalar_lea.vmem %s3, 432
      %v5952 = vld [vmem:[%s5951] sm:$0xff]
      %v5955 = vcombine.high %v5949, %v5949
      %5956 = vrot.lane.b32.xlu0 %v5949, 120
      %v5957 = vpop.permute.xlu0 %5956
      %5958 = vrot.lane.b32.xlu0 %v5955, 120
      %v5959 = vpop.permute.xlu0 %5958
      %5960 = vrot.lane.b32.xlu0 %v5950, 120
      %v5961 = vpop.permute.xlu0 %5960
      %vm5962 = vcmask 982016
      %v5963 = vsel %vm5962, %v5957, %v5959
      %v5964 = vsel %vm5962, %v5959, %v5961
      %v5966 = vsel %vm370, %v5952, 0
      %v5968 = vsel %vm374, %v5963, 0
      %v5970 = vsel %vm374, %v5964, 0
      %5972 = vmatprep.subr.mxu0 %v5970
      %5973 = vmatpush1.msra.mxu0 %v5968
      %5974 = vmatprep.subr.mxu0 0.0
      %5975 = vmatpush1.msra.mxu0 0.0
      %5976 = vmatprep.subr.mxu0 0.0
      %5977 = vmatpush1.msra.mxu0 0.0
      %5978 = vmatprep.subr.mxu0 0.0
      %5979 = vmatpush1.msra.mxu0 0.0
      %5980 = vmatprep.subr.mxu0 0.0
      %5981 = vmatpush1.msra.mxu0 0.0
      %5982 = vmatprep.subr.mxu0 0.0
      %5983 = vmatpush1.msra.mxu0 0.0
      %5984 = vmatprep.subr.mxu0 0.0
      %5985 = vmatpush1.msra.mxu0 0.0
      %5986 = vmatprep.subr.mxu0 0.0
      %5987 = vmatpush1.msra.mxu0 0.0
      %5988 = vmatprep.subr.mxu0 0.0
      %5989 = vmatpush1.msra.mxu0 0.0
      %5990 = vmatprep.subr.mxu0 0.0
      %5991 = vmatpush1.msra.mxu0 0.0
      %5992 = vmatprep.subr.mxu0 0.0
      %5993 = vmatpush1.msra.mxu0 0.0
      %5994 = vmatprep.subr.mxu0 0.0
      %5995 = vmatpush1.msra.mxu0 0.0
      %5996 = vmatprep.subr.mxu0 0.0
      %5997 = vmatpush1.msra.mxu0 0.0
      %5998 = vmatprep.subr.mxu0 0.0
      %5999 = vmatpush1.msra.mxu0 0.0
      %6000 = vmatprep.subr.mxu0 0.0
      %6001 = vmatpush1.msra.mxu0 0.0
      %6002 = vmatprep.subr.mxu0 0.0
      %6003 = vmatpush1.msra.mxu0 0.0
      %6004 = vmatprep.subr.mxu0 0.0
      %6005 = vmatpush1.msra.mxu0 0.0
      %6006 = vmatprep.subr.mxu0 0.0
      %6007 = vmatpush1.msra.mxu0 0.0
      %6008 = vmatprep.subr.mxu0 0.0
      %6009 = vmatpush1.msra.mxu0 0.0
      %6010 = vmatprep.subr.mxu0 0.0
      %6011 = vmatpush1.msra.mxu0 0.0
      %6012 = vmatprep.subr.mxu0 0.0
      %6013 = vmatpush1.msra.mxu0 0.0
      %6014 = vmatprep.subr.mxu0 0.0
      %6015 = vmatpush1.msra.mxu0 0.0
      %6016 = vmatprep.subr.mxu0 0.0
      %6017 = vmatpush1.msra.mxu0 0.0
      %6018 = vmatprep.subr.mxu0 0.0
      %6019 = vmatpush1.msra.mxu0 0.0
      %6020 = vmatprep.subr.mxu0 0.0
      %6021 = vmatpush1.msra.mxu0 0.0
      %6022 = vmatprep.subr.mxu0 0.0
      %6023 = vmatpush1.msra.mxu0 0.0
      %6024 = vmatprep.subr.mxu0 0.0
      %6025 = vmatpush1.msra.mxu0 0.0
      %6026 = vmatprep.subr.mxu0 0.0
      %6027 = vmatpush1.msra.mxu0 0.0
      %6028 = vmatprep.subr.mxu0 0.0
      %6029 = vmatpush1.msra.mxu0 0.0
      %6030 = vmatprep.subr.mxu0 0.0
      %6031 = vmatpush1.msra.mxu0 0.0
      %6032 = vmatprep.subr.mxu0 0.0
      %6033 = vmatpush1.msra.mxu0 0.0
      %6034 = vmatprep.subr.mxu0 0.0
      %6035 = vmatpush1.msra.mxu0 0.0
      %6036 = vmatprep.mubr.f32.mxu0 0.0
      %6037 = vmatmul.mubr.f32.gmra.mrb[0].mxu0 %v5966
      %v6038 = vpop.f32.mrb[0].mxu0
      %v6039 = vadd.f32 0.0, %v6038
      %v6040 = vpop.f32.mrb[0].mxu0
      %v6041 = vadd.f32 0.0, %v6040
      %6042 = vdwg.mxu0
      %s6043 = scalar_lea.vmem %s6, 6
      %v6044 = vld [vmem:[%s6043] ss:$8 sm:$0x3]
      %v6046 = vlaneseq
      %v6047 = vshrl.u32 %v6046, 7
      %v6048 = vsub.s32 0, %v6047
      %v6049 = vrot.slane %v6044, %v6048
      %v6050 = vlaneseq
      %v6051 = vshrl.u32 %v6050, 7
      %v6052 = vsub.s32 1, %v6051
      %v6053 = vrot.slane %v6044, %v6052
      %v6056 = vmul.f32 %v6039, %v6049
      %v6057 = vmul.f32 %v6041, %v6053
      %v6058 = vld [vmem:[%s5948] sm:$0xff]
      %v6059 = vld [vmem:[%s5948 + $0x8] sm:$0xf]
      %s6060 = scalar_lea.vmem %s3, 440
      %v6061 = vld [vmem:[%s6060] sm:$0xff]
      %v6064 = vcombine.high %v6058, %v6058
      %6065 = vrot.lane.b32.xlu0 %v6058, 112
      %v6066 = vpop.permute.xlu0 %6065
      %6067 = vrot.lane.b32.xlu0 %v6064, 112
      %v6068 = vpop.permute.xlu0 %6067
      %6069 = vrot.lane.b32.xlu0 %v6059, 112
      %v6070 = vpop.permute.xlu0 %6069
      %v6071 = vsel %vm367, %v6066, %v6068
      %v6072 = vsel %vm367, %v6068, %v6070
      %v6074 = vsel %vm370, %v6061, 0
      %v6076 = vsel %vm374, %v6071, 0
      %v6078 = vsel %vm374, %v6072, 0
      %6080 = vmatprep.subr.mxu0 %v6078
      %6081 = vmatpush1.msra.mxu0 %v6076
      %6082 = vmatprep.subr.mxu0 0.0
      %6083 = vmatpush1.msra.mxu0 0.0
      %6084 = vmatprep.subr.mxu0 0.0
      %6085 = vmatpush1.msra.mxu0 0.0
      %6086 = vmatprep.subr.mxu0 0.0
      %6087 = vmatpush1.msra.mxu0 0.0
      %6088 = vmatprep.subr.mxu0 0.0
      %6089 = vmatpush1.msra.mxu0 0.0
      %6090 = vmatprep.subr.mxu0 0.0
      %6091 = vmatpush1.msra.mxu0 0.0
      %6092 = vmatprep.subr.mxu0 0.0
      %6093 = vmatpush1.msra.mxu0 0.0
      %6094 = vmatprep.subr.mxu0 0.0
      %6095 = vmatpush1.msra.mxu0 0.0
      %6096 = vmatprep.subr.mxu0 0.0
      %6097 = vmatpush1.msra.mxu0 0.0
      %6098 = vmatprep.subr.mxu0 0.0
      %6099 = vmatpush1.msra.mxu0 0.0
      %6100 = vmatprep.subr.mxu0 0.0
      %6101 = vmatpush1.msra.mxu0 0.0
      %6102 = vmatprep.subr.mxu0 0.0
      %6103 = vmatpush1.msra.mxu0 0.0
      %6104 = vmatprep.subr.mxu0 0.0
      %6105 = vmatpush1.msra.mxu0 0.0
      %6106 = vmatprep.subr.mxu0 0.0
      %6107 = vmatpush1.msra.mxu0 0.0
      %6108 = vmatprep.subr.mxu0 0.0
      %6109 = vmatpush1.msra.mxu0 0.0
      %6110 = vmatprep.subr.mxu0 0.0
      %6111 = vmatpush1.msra.mxu0 0.0
      %6112 = vmatprep.subr.mxu0 0.0
      %6113 = vmatpush1.msra.mxu0 0.0
      %6114 = vmatprep.subr.mxu0 0.0
      %6115 = vmatpush1.msra.mxu0 0.0
      %6116 = vmatprep.subr.mxu0 0.0
      %6117 = vmatpush1.msra.mxu0 0.0
      %6118 = vmatprep.subr.mxu0 0.0
      %6119 = vmatpush1.msra.mxu0 0.0
      %6120 = vmatprep.subr.mxu0 0.0
      %6121 = vmatpush1.msra.mxu0 0.0
      %6122 = vmatprep.subr.mxu0 0.0
      %6123 = vmatpush1.msra.mxu0 0.0
      %6124 = vmatprep.subr.mxu0 0.0
      %6125 = vmatpush1.msra.mxu0 0.0
      %6126 = vmatprep.subr.mxu0 0.0
      %6127 = vmatpush1.msra.mxu0 0.0
      %6128 = vmatprep.subr.mxu0 0.0
      %6129 = vmatpush1.msra.mxu0 0.0
      %6130 = vmatprep.subr.mxu0 0.0
      %6131 = vmatpush1.msra.mxu0 0.0
      %6132 = vmatprep.subr.mxu0 0.0
      %6133 = vmatpush1.msra.mxu0 0.0
      %6134 = vmatprep.subr.mxu0 0.0
      %6135 = vmatpush1.msra.mxu0 0.0
      %6136 = vmatprep.subr.mxu0 0.0
      %6137 = vmatpush1.msra.mxu0 0.0
      %6138 = vmatprep.subr.mxu0 0.0
      %6139 = vmatpush1.msra.mxu0 0.0
      %6140 = vmatprep.subr.mxu0 0.0
      %6141 = vmatpush1.msra.mxu0 0.0
      %6142 = vmatprep.subr.mxu0 0.0
      %6143 = vmatpush1.msra.mxu0 0.0
      %6144 = vmatprep.mubr.f32.mxu0 0.0
      %6145 = vmatmul.mubr.f32.gmra.mrb[0].mxu0 %v6074
      %v6146 = vpop.f32.mrb[0].mxu0
      %v6147 = vadd.f32 0.0, %v6146
      %v6148 = vpop.f32.mrb[0].mxu0
      %v6149 = vadd.f32 0.0, %v6148
      %6150 = vdwg.mxu0
      %v6151 = vadd.f32 %v6056, %v6147
      %v6152 = vadd.f32 %v6057, %v6149
      %v6153 = vld [vmem:[%s5948] sm:$0xff]
      %v6154 = vld [vmem:[%s5948 + $0x8] sm:$0xf]
      %s6155 = scalar_lea.vmem %s3, 448
      %v6156 = vld [vmem:[%s6155] sm:$0xff]
      %v6159 = vcombine.high %v6153, %v6153
      %6160 = vrot.lane.b32.xlu0 %v6153, 104
      %v6161 = vpop.permute.xlu0 %6160
      %6162 = vrot.lane.b32.xlu0 %v6159, 104
      %v6163 = vpop.permute.xlu0 %6162
      %6164 = vrot.lane.b32.xlu0 %v6154, 104
      %v6165 = vpop.permute.xlu0 %6164
      %vm6166 = vcmask 850944
      %v6167 = vsel %vm6166, %v6161, %v6163
      %v6168 = vsel %vm6166, %v6163, %v6165
      %v6170 = vsel %vm370, %v6156, 0
      %v6172 = vsel %vm374, %v6167, 0
      %v6174 = vsel %vm374, %v6168, 0
      %6176 = vmatprep.subr.mxu0 %v6174
      %6177 = vmatpush1.msra.mxu0 %v6172
      %6178 = vmatprep.subr.mxu0 0.0
      %6179 = vmatpush1.msra.mxu0 0.0
      %6180 = vmatprep.subr.mxu0 0.0
      %6181 = vmatpush1.msra.mxu0 0.0
      %6182 = vmatprep.subr.mxu0 0.0
      %6183 = vmatpush1.msra.mxu0 0.0
      %6184 = vmatprep.subr.mxu0 0.0
      %6185 = vmatpush1.msra.mxu0 0.0
      %6186 = vmatprep.subr.mxu0 0.0
      %6187 = vmatpush1.msra.mxu0 0.0
      %6188 = vmatprep.subr.mxu0 0.0
      %6189 = vmatpush1.msra.mxu0 0.0
      %6190 = vmatprep.subr.mxu0 0.0
      %6191 = vmatpush1.msra.mxu0 0.0
      %6192 = vmatprep.subr.mxu0 0.0
      %6193 = vmatpush1.msra.mxu0 0.0
      %6194 = vmatprep.subr.mxu0 0.0
      %6195 = vmatpush1.msra.mxu0 0.0
      %6196 = vmatprep.subr.mxu0 0.0
      %6197 = vmatpush1.msra.mxu0 0.0
      %6198 = vmatprep.subr.mxu0 0.0
      %6199 = vmatpush1.msra.mxu0 0.0
      %6200 = vmatprep.subr.mxu0 0.0
      %6201 = vmatpush1.msra.mxu0 0.0
      %6202 = vmatprep.subr.mxu0 0.0
      %6203 = vmatpush1.msra.mxu0 0.0
      %6204 = vmatprep.subr.mxu0 0.0
      %6205 = vmatpush1.msra.mxu0 0.0
      %6206 = vmatprep.subr.mxu0 0.0
      %6207 = vmatpush1.msra.mxu0 0.0
      %6208 = vmatprep.subr.mxu0 0.0
      %6209 = vmatpush1.msra.mxu0 0.0
      %6210 = vmatprep.subr.mxu0 0.0
      %6211 = vmatpush1.msra.mxu0 0.0
      %6212 = vmatprep.subr.mxu0 0.0
      %6213 = vmatpush1.msra.mxu0 0.0
      %6214 = vmatprep.subr.mxu0 0.0
      %6215 = vmatpush1.msra.mxu0 0.0
      %6216 = vmatprep.subr.mxu0 0.0
      %6217 = vmatpush1.msra.mxu0 0.0
      %6218 = vmatprep.subr.mxu0 0.0
      %6219 = vmatpush1.msra.mxu0 0.0
      %6220 = vmatprep.subr.mxu0 0.0
      %6221 = vmatpush1.msra.mxu0 0.0
      %6222 = vmatprep.subr.mxu0 0.0
      %6223 = vmatpush1.msra.mxu0 0.0
      %6224 = vmatprep.subr.mxu0 0.0
      %6225 = vmatpush1.msra.mxu0 0.0
      %6226 = vmatprep.subr.mxu0 0.0
      %6227 = vmatpush1.msra.mxu0 0.0
      %6228 = vmatprep.subr.mxu0 0.0
      %6229 = vmatpush1.msra.mxu0 0.0
      %6230 = vmatprep.subr.mxu0 0.0
      %6231 = vmatpush1.msra.mxu0 0.0
      %6232 = vmatprep.subr.mxu0 0.0
      %6233 = vmatpush1.msra.mxu0 0.0
      %6234 = vmatprep.subr.mxu0 0.0
      %6235 = vmatpush1.msra.mxu0 0.0
      %6236 = vmatprep.subr.mxu0 0.0
      %6237 = vmatpush1.msra.mxu0 0.0
      %6238 = vmatprep.subr.mxu0 0.0
      %6239 = vmatpush1.msra.mxu0 0.0
      %6240 = vmatprep.mubr.f32.mxu0 0.0
      %6241 = vmatmul.mubr.f32.gmra.mrb[0].mxu0 %v6170
      %v6242 = vpop.f32.mrb[0].mxu0
      %v6243 = vadd.f32 0.0, %v6242
      %v6244 = vpop.f32.mrb[0].mxu0
      %v6245 = vadd.f32 0.0, %v6244
      %6246 = vdwg.mxu0
      %s6247 = scalar_lea.vmem %s6, 16
      %v6248 = vld [vmem:[%s6247] ss:$8 sm:$0x3]
      %v6250 = vlaneseq
      %v6251 = vshrl.u32 %v6250, 7
      %v6252 = vsub.s32 0, %v6251
      %v6253 = vrot.slane %v6248, %v6252
      %v6254 = vlaneseq
      %v6255 = vshrl.u32 %v6254, 7
      %v6256 = vsub.s32 1, %v6255
      %v6257 = vrot.slane %v6248, %v6256
      %v6260 = vmul.f32 %v6243, %v6253
      %v6261 = vmul.f32 %v6245, %v6257
      %v6262 = vadd.f32 %v6151, %v6260
      %v6263 = vadd.f32 %v6152, %v6261
      %v6264 = vld [vmem:[%s5948 + $0x4] sm:$0xff]
      %v6265 = vld [vmem:[%s5948 + $0xc] sm:$0xf]
      %s6266 = scalar_lea.vmem %s3, 456
      %v6267 = vld [vmem:[%s6266] sm:$0xff]
      %v6270 = vcombine.high %v6264, %v6264
      %6271 = vrot.lane.b32.xlu0 %v6264, 120
      %v6272 = vpop.permute.xlu0 %6271
      %6273 = vrot.lane.b32.xlu0 %v6270, 120
      %v6274 = vpop.permute.xlu0 %6273
      %6275 = vrot.lane.b32.xlu0 %v6265, 120
      %v6276 = vpop.permute.xlu0 %6275
      %v6277 = vsel %vm5962, %v6272, %v6274
      %v6278 = vsel %vm5962, %v6274, %v6276
      %v6280 = vsel %vm370, %v6267, 0
      %v6282 = vsel %vm374, %v6277, 0
      %v6284 = vsel %vm374, %v6278, 0
      %6286 = vmatprep.subr.mxu0 %v6284
      %6287 = vmatpush1.msra.mxu0 %v6282
      %6288 = vmatprep.subr.mxu0 0.0
      %6289 = vmatpush1.msra.mxu0 0.0
      %6290 = vmatprep.subr.mxu0 0.0
      %6291 = vmatpush1.msra.mxu0 0.0
      %6292 = vmatprep.subr.mxu0 0.0
      %6293 = vmatpush1.msra.mxu0 0.0
      %6294 = vmatprep.subr.mxu0 0.0
      %6295 = vmatpush1.msra.mxu0 0.0
      %6296 = vmatprep.subr.mxu0 0.0
      %6297 = vmatpush1.msra.mxu0 0.0
      %6298 = vmatprep.subr.mxu0 0.0
      %6299 = vmatpush1.msra.mxu0 0.0
      %6300 = vmatprep.subr.mxu0 0.0
      %6301 = vmatpush1.msra.mxu0 0.0
      %6302 = vmatprep.subr.mxu0 0.0
      %6303 = vmatpush1.msra.mxu0 0.0
      %6304 = vmatprep.subr.mxu0 0.0
      %6305 = vmatpush1.msra.mxu0 0.0
      %6306 = vmatprep.subr.mxu0 0.0
      %6307 = vmatpush1.msra.mxu0 0.0
      %6308 = vmatprep.subr.mxu0 0.0
      %6309 = vmatpush1.msra.mxu0 0.0
      %6310 = vmatprep.subr.mxu0 0.0
      %6311 = vmatpush1.msra.mxu0 0.0
      %6312 = vmatprep.subr.mxu0 0.0
      %6313 = vmatpush1.msra.mxu0 0.0
      %6314 = vmatprep.subr.mxu0 0.0
      %6315 = vmatpush1.msra.mxu0 0.0
      %6316 = vmatprep.subr.mxu0 0.0
      %6317 = vmatpush1.msra.mxu0 0.0
      %6318 = vmatprep.subr.mxu0 0.0
      %6319 = vmatpush1.msra.mxu0 0.0
      %6320 = vmatprep.subr.mxu0 0.0
      %6321 = vmatpush1.msra.mxu0 0.0
      %6322 = vmatprep.subr.mxu0 0.0
      %6323 = vmatpush1.msra.mxu0 0.0
      %6324 = vmatprep.subr.mxu0 0.0
      %6325 = vmatpush1.msra.mxu0 0.0
      %6326 = vmatprep.subr.mxu0 0.0
      %6327 = vmatpush1.msra.mxu0 0.0
      %6328 = vmatprep.subr.mxu0 0.0
      %6329 = vmatpush1.msra.mxu0 0.0
      %6330 = vmatprep.subr.mxu0 0.0
      %6331 = vmatpush1.msra.mxu0 0.0
      %6332 = vmatprep.subr.mxu0 0.0
      %6333 = vmatpush1.msra.mxu0 0.0
      %6334 = vmatprep.subr.mxu0 0.0
      %6335 = vmatpush1.msra.mxu0 0.0
      %6336 = vmatprep.subr.mxu0 0.0
      %6337 = vmatpush1.msra.mxu0 0.0
      %6338 = vmatprep.subr.mxu0 0.0
      %6339 = vmatpush1.msra.mxu0 0.0
      %6340 = vmatprep.subr.mxu0 0.0
      %6341 = vmatpush1.msra.mxu0 0.0
      %6342 = vmatprep.subr.mxu0 0.0
      %6343 = vmatpush1.msra.mxu0 0.0
      %6344 = vmatprep.subr.mxu0 0.0
      %6345 = vmatpush1.msra.mxu0 0.0
      %6346 = vmatprep.subr.mxu0 0.0
      %6347 = vmatpush1.msra.mxu0 0.0
      %6348 = vmatprep.subr.mxu0 0.0
      %6349 = vmatpush1.msra.mxu0 0.0
      %6350 = vmatprep.mubr.f32.mxu0 0.0
      %6351 = vmatmul.mubr.f32.gmra.mrb[0].mxu0 %v6280
      %v6352 = vpop.f32.mrb[0].mxu0
      %v6353 = vadd.f32 0.0, %v6352
      %v6354 = vpop.f32.mrb[0].mxu0
      %v6355 = vadd.f32 0.0, %v6354
      %6356 = vdwg.mxu0
      %v6357 = vmul.f32 %v6353, %v6049
      %v6358 = vmul.f32 %v6355, %v6053
      %v6359 = vadd.f32 %v6262, %v6357
      %v6360 = vadd.f32 %v6263, %v6358
      %v6361 = vld [vmem:[%s5948 + $0x4] sm:$0xff]
      %v6362 = vld [vmem:[%s5948 + $0xc] sm:$0xf]
      %s6363 = scalar_lea.vmem %s3, 464
      %v6364 = vld [vmem:[%s6363] sm:$0xff]
      %v6367 = vcombine.high %v6361, %v6361
      %6368 = vrot.lane.b32.xlu0 %v6361, 112
      %v6369 = vpop.permute.xlu0 %6368
      %6370 = vrot.lane.b32.xlu0 %v6367, 112
      %v6371 = vpop.permute.xlu0 %6370
      %6372 = vrot.lane.b32.xlu0 %v6362, 112
      %v6373 = vpop.permute.xlu0 %6372
      %v6374 = vsel %vm367, %v6369, %v6371
      %v6375 = vsel %vm367, %v6371, %v6373
      %v6377 = vsel %vm370, %v6364, 0
      %v6379 = vsel %vm374, %v6374, 0
      %v6381 = vsel %vm374, %v6375, 0
      %6383 = vmatprep.subr.mxu0 %v6381
      %6384 = vmatpush1.msra.mxu0 %v6379
      %6385 = vmatprep.subr.mxu0 0.0
      %6386 = vmatpush1.msra.mxu0 0.0
      %6387 = vmatprep.subr.mxu0 0.0
      %6388 = vmatpush1.msra.mxu0 0.0
      %6389 = vmatprep.subr.mxu0 0.0
      %6390 = vmatpush1.msra.mxu0 0.0
      %6391 = vmatprep.subr.mxu0 0.0
      %6392 = vmatpush1.msra.mxu0 0.0
      %6393 = vmatprep.subr.mxu0 0.0
      %6394 = vmatpush1.msra.mxu0 0.0
      %6395 = vmatprep.subr.mxu0 0.0
      %6396 = vmatpush1.msra.mxu0 0.0
      %6397 = vmatprep.subr.mxu0 0.0
      %6398 = vmatpush1.msra.mxu0 0.0
      %6399 = vmatprep.subr.mxu0 0.0
      %6400 = vmatpush1.msra.mxu0 0.0
      %6401 = vmatprep.subr.mxu0 0.0
      %6402 = vmatpush1.msra.mxu0 0.0
      %6403 = vmatprep.subr.mxu0 0.0
      %6404 = vmatpush1.msra.mxu0 0.0
      %6405 = vmatprep.subr.mxu0 0.0
      %6406 = vmatpush1.msra.mxu0 0.0
      %6407 = vmatprep.subr.mxu0 0.0
      %6408 = vmatpush1.msra.mxu0 0.0
      %6409 = vmatprep.subr.mxu0 0.0
      %6410 = vmatpush1.msra.mxu0 0.0
      %6411 = vmatprep.subr.mxu0 0.0
      %6412 = vmatpush1.msra.mxu0 0.0
      %6413 = vmatprep.subr.mxu0 0.0
      %6414 = vmatpush1.msra.mxu0 0.0
      %6415 = vmatprep.subr.mxu0 0.0
      %6416 = vmatpush1.msra.mxu0 0.0
      %6417 = vmatprep.subr.mxu0 0.0
      %6418 = vmatpush1.msra.mxu0 0.0
      %6419 = vmatprep.subr.mxu0 0.0
      %6420 = vmatpush1.msra.mxu0 0.0
      %6421 = vmatprep.subr.mxu0 0.0
      %6422 = vmatpush1.msra.mxu0 0.0
      %6423 = vmatprep.subr.mxu0 0.0
      %6424 = vmatpush1.msra.mxu0 0.0
      %6425 = vmatprep.subr.mxu0 0.0
      %6426 = vmatpush1.msra.mxu0 0.0
      %6427 = vmatprep.subr.mxu0 0.0
      %6428 = vmatpush1.msra.mxu0 0.0
      %6429 = vmatprep.subr.mxu0 0.0
      %6430 = vmatpush1.msra.mxu0 0.0
      %6431 = vmatprep.subr.mxu0 0.0
      %6432 = vmatpush1.msra.mxu0 0.0
      %6433 = vmatprep.subr.mxu0 0.0
      %6434 = vmatpush1.msra.mxu0 0.0
      %6435 = vmatprep.subr.mxu0 0.0
      %6436 = vmatpush1.msra.mxu0 0.0
      %6437 = vmatprep.subr.mxu0 0.0
      %6438 = vmatpush1.msra.mxu0 0.0
      %6439 = vmatprep.subr.mxu0 0.0
      %6440 = vmatpush1.msra.mxu0 0.0
      %6441 = vmatprep.subr.mxu0 0.0
      %6442 = vmatpush1.msra.mxu0 0.0
      %6443 = vmatprep.subr.mxu0 0.0
      %6444 = vmatpush1.msra.mxu0 0.0
      %6445 = vmatprep.subr.mxu0 0.0
      %6446 = vmatpush1.msra.mxu0 0.0
      %6447 = vmatprep.mubr.f32.mxu0 0.0
      %6448 = vmatmul.mubr.f32.gmra.mrb[0].mxu0 %v6377
      %v6449 = vpop.f32.mrb[0].mxu0
      %v6450 = vadd.f32 0.0, %v6449
      %v6451 = vpop.f32.mrb[0].mxu0
      %v6452 = vadd.f32 0.0, %v6451
      %6453 = vdwg.mxu0
      %v6454 = vadd.f32 %v6359, %v6450
      %v6455 = vadd.f32 %v6360, %v6452
      %v6456 = vld [vmem:[%s5948 + $0x4] sm:$0xff]
      %v6457 = vld [vmem:[%s5948 + $0xc] sm:$0xf]
      %s6458 = scalar_lea.vmem %s3, 472
      %v6459 = vld [vmem:[%s6458] sm:$0xff]
      %v6462 = vcombine.high %v6456, %v6456
      %6463 = vrot.lane.b32.xlu0 %v6456, 104
      %v6464 = vpop.permute.xlu0 %6463
      %6465 = vrot.lane.b32.xlu0 %v6462, 104
      %v6466 = vpop.permute.xlu0 %6465
      %6467 = vrot.lane.b32.xlu0 %v6457, 104
      %v6468 = vpop.permute.xlu0 %6467
      %v6469 = vsel %vm6166, %v6464, %v6466
      %v6470 = vsel %vm6166, %v6466, %v6468
      %v6472 = vsel %vm370, %v6459, 0
      %v6474 = vsel %vm374, %v6469, 0
      %v6476 = vsel %vm374, %v6470, 0
      %6478 = vmatprep.subr.mxu0 %v6476
      %6479 = vmatpush1.msra.mxu0 %v6474
      %6480 = vmatprep.subr.mxu0 0.0
      %6481 = vmatpush1.msra.mxu0 0.0
      %6482 = vmatprep.subr.mxu0 0.0
      %6483 = vmatpush1.msra.mxu0 0.0
      %6484 = vmatprep.subr.mxu0 0.0
      %6485 = vmatpush1.msra.mxu0 0.0
      %6486 = vmatprep.subr.mxu0 0.0
      %6487 = vmatpush1.msra.mxu0 0.0
      %6488 = vmatprep.subr.mxu0 0.0
      %6489 = vmatpush1.msra.mxu0 0.0
      %6490 = vmatprep.subr.mxu0 0.0
      %6491 = vmatpush1.msra.mxu0 0.0
      %6492 = vmatprep.subr.mxu0 0.0
      %6493 = vmatpush1.msra.mxu0 0.0
      %6494 = vmatprep.subr.mxu0 0.0
      %6495 = vmatpush1.msra.mxu0 0.0
      %6496 = vmatprep.subr.mxu0 0.0
      %6497 = vmatpush1.msra.mxu0 0.0
      %6498 = vmatprep.subr.mxu0 0.0
      %6499 = vmatpush1.msra.mxu0 0.0
      %6500 = vmatprep.subr.mxu0 0.0
      %6501 = vmatpush1.msra.mxu0 0.0
      %6502 = vmatprep.subr.mxu0 0.0
      %6503 = vmatpush1.msra.mxu0 0.0
      %6504 = vmatprep.subr.mxu0 0.0
      %6505 = vmatpush1.msra.mxu0 0.0
      %6506 = vmatprep.subr.mxu0 0.0
      %6507 = vmatpush1.msra.mxu0 0.0
      %6508 = vmatprep.subr.mxu0 0.0
      %6509 = vmatpush1.msra.mxu0 0.0
      %6510 = vmatprep.subr.mxu0 0.0
      %6511 = vmatpush1.msra.mxu0 0.0
      %6512 = vmatprep.subr.mxu0 0.0
      %6513 = vmatpush1.msra.mxu0 0.0
      %6514 = vmatprep.subr.mxu0 0.0
      %6515 = vmatpush1.msra.mxu0 0.0
      %6516 = vmatprep.subr.mxu0 0.0
      %6517 = vmatpush1.msra.mxu0 0.0
      %6518 = vmatprep.subr.mxu0 0.0
      %6519 = vmatpush1.msra.mxu0 0.0
      %6520 = vmatprep.subr.mxu0 0.0
      %6521 = vmatpush1.msra.mxu0 0.0
      %6522 = vmatprep.subr.mxu0 0.0
      %6523 = vmatpush1.msra.mxu0 0.0
      %6524 = vmatprep.subr.mxu0 0.0
      %6525 = vmatpush1.msra.mxu0 0.0
      %6526 = vmatprep.subr.mxu0 0.0
      %6527 = vmatpush1.msra.mxu0 0.0
      %6528 = vmatprep.subr.mxu0 0.0
      %6529 = vmatpush1.msra.mxu0 0.0
      %6530 = vmatprep.subr.mxu0 0.0
      %6531 = vmatpush1.msra.mxu0 0.0
      %6532 = vmatprep.subr.mxu0 0.0
      %6533 = vmatpush1.msra.mxu0 0.0
      %6534 = vmatprep.subr.mxu0 0.0
      %6535 = vmatpush1.msra.mxu0 0.0
      %6536 = vmatprep.subr.mxu0 0.0
      %6537 = vmatpush1.msra.mxu0 0.0
      %6538 = vmatprep.subr.mxu0 0.0
      %6539 = vmatpush1.msra.mxu0 0.0
      %6540 = vmatprep.subr.mxu0 0.0
      %6541 = vmatpush1.msra.mxu0 0.0
      %6542 = vmatprep.mubr.f32.mxu0 0.0
      %6543 = vmatmul.mubr.f32.gmra.mrb[0].mxu0 %v6472
      %v6544 = vpop.f32.mrb[0].mxu0
      %v6545 = vadd.f32 0.0, %v6544
      %v6546 = vpop.f32.mrb[0].mxu0
      %v6547 = vadd.f32 0.0, %v6546
      %6548 = vdwg.mxu0
      %v6549 = vmul.f32 %v6545, %v6253
      %v6550 = vmul.f32 %v6547, %v6257
      %v6551 = vadd.f32 %v6454, %v6549
      %v6552 = vadd.f32 %v6455, %v6550
      %v6553 = vld [vmem:[%s5948 + $0x8] sm:$0xff]
      %v6554 = vld [vmem:[%s5948 + $0x10] sm:$0xf]
      %s6555 = scalar_lea.vmem %s3, 480
      %v6556 = vld [vmem:[%s6555] sm:$0xff]
      %v6559 = vcombine.high %v6553, %v6553
      %6560 = vrot.lane.b32.xlu0 %v6553, 120
      %v6561 = vpop.permute.xlu0 %6560
      %6562 = vrot.lane.b32.xlu0 %v6559, 120
      %v6563 = vpop.permute.xlu0 %6562
      %6564 = vrot.lane.b32.xlu0 %v6554, 120
      %v6565 = vpop.permute.xlu0 %6564
      %v6566 = vsel %vm5962, %v6561, %v6563
      %v6567 = vsel %vm5962, %v6563, %v6565
      %v6569 = vsel %vm370, %v6556, 0
      %v6571 = vsel %vm374, %v6566, 0
      %v6573 = vsel %vm374, %v6567, 0
      %6575 = vmatprep.subr.mxu0 %v6573
      %6576 = vmatpush1.msra.mxu0 %v6571
      %6577 = vmatprep.subr.mxu0 0.0
      %6578 = vmatpush1.msra.mxu0 0.0
      %6579 = vmatprep.subr.mxu0 0.0
      %6580 = vmatpush1.msra.mxu0 0.0
      %6581 = vmatprep.subr.mxu0 0.0
      %6582 = vmatpush1.msra.mxu0 0.0
      %6583 = vmatprep.subr.mxu0 0.0
      %6584 = vmatpush1.msra.mxu0 0.0
      %6585 = vmatprep.subr.mxu0 0.0
      %6586 = vmatpush1.msra.mxu0 0.0
      %6587 = vmatprep.subr.mxu0 0.0
      %6588 = vmatpush1.msra.mxu0 0.0
      %6589 = vmatprep.subr.mxu0 0.0
      %6590 = vmatpush1.msra.mxu0 0.0
      %6591 = vmatprep.subr.mxu0 0.0
      %6592 = vmatpush1.msra.mxu0 0.0
      %6593 = vmatprep.subr.mxu0 0.0
      %6594 = vmatpush1.msra.mxu0 0.0
      %6595 = vmatprep.subr.mxu0 0.0
      %6596 = vmatpush1.msra.mxu0 0.0
      %6597 = vmatprep.subr.mxu0 0.0
      %6598 = vmatpush1.msra.mxu0 0.0
      %6599 = vmatprep.subr.mxu0 0.0
      %6600 = vmatpush1.msra.mxu0 0.0
      %6601 = vmatprep.subr.mxu0 0.0
      %6602 = vmatpush1.msra.mxu0 0.0
      %6603 = vmatprep.subr.mxu0 0.0
      %6604 = vmatpush1.msra.mxu0 0.0
      %6605 = vmatprep.subr.mxu0 0.0
      %6606 = vmatpush1.msra.mxu0 0.0
      %6607 = vmatprep.subr.mxu0 0.0
      %6608 = vmatpush1.msra.mxu0 0.0
      %6609 = vmatprep.subr.mxu0 0.0
      %6610 = vmatpush1.msra.mxu0 0.0
      %6611 = vmatprep.subr.mxu0 0.0
      %6612 = vmatpush1.msra.mxu0 0.0
      %6613 = vmatprep.subr.mxu0 0.0
      %6614 = vmatpush1.msra.mxu0 0.0
      %6615 = vmatprep.subr.mxu0 0.0
      %6616 = vmatpush1.msra.mxu0 0.0
      %6617 = vmatprep.subr.mxu0 0.0
      %6618 = vmatpush1.msra.mxu0 0.0
      %6619 = vmatprep.subr.mxu0 0.0
      %6620 = vmatpush1.msra.mxu0 0.0
      %6621 = vmatprep.subr.mxu0 0.0
      %6622 = vmatpush1.msra.mxu0 0.0
      %6623 = vmatprep.subr.mxu0 0.0
      %6624 = vmatpush1.msra.mxu0 0.0
      %6625 = vmatprep.subr.mxu0 0.0
      %6626 = vmatpush1.msra.mxu0 0.0
      %6627 = vmatprep.subr.mxu0 0.0
      %6628 = vmatpush1.msra.mxu0 0.0
      %6629 = vmatprep.subr.mxu0 0.0
      %6630 = vmatpush1.msra.mxu0 0.0
      %6631 = vmatprep.subr.mxu0 0.0
      %6632 = vmatpush1.msra.mxu0 0.0
      %6633 = vmatprep.subr.mxu0 0.0
      %6634 = vmatpush1.msra.mxu0 0.0
      %6635 = vmatprep.subr.mxu0 0.0
      %6636 = vmatpush1.msra.mxu0 0.0
      %6637 = vmatprep.subr.mxu0 0.0
      %6638 = vmatpush1.msra.mxu0 0.0
      %6639 = vmatprep.mubr.f32.mxu0 0.0
      %6640 = vmatmul.mubr.f32.gmra.mrb[0].mxu0 %v6569
      %v6641 = vpop.f32.mrb[0].mxu0
      %v6642 = vadd.f32 0.0, %v6641
      %v6643 = vpop.f32.mrb[0].mxu0
      %v6644 = vadd.f32 0.0, %v6643
      %6645 = vdwg.mxu0
      %v6646 = vmul.f32 %v6642, %v6049
      %v6647 = vmul.f32 %v6644, %v6053
      %v6648 = vadd.f32 %v6551, %v6646
      %v6649 = vadd.f32 %v6552, %v6647
      %v6650 = vld [vmem:[%s5948 + $0x8] sm:$0xff]
      %v6651 = vld [vmem:[%s5948 + $0x10] sm:$0xf]
      %s6652 = scalar_lea.vmem %s3, 488
      %v6653 = vld [vmem:[%s6652] sm:$0xff]
      %v6656 = vcombine.high %v6650, %v6650
      %6657 = vrot.lane.b32.xlu0 %v6650, 112
      %v6658 = vpop.permute.xlu0 %6657
      %6659 = vrot.lane.b32.xlu0 %v6656, 112
      %v6660 = vpop.permute.xlu0 %6659
      %6661 = vrot.lane.b32.xlu0 %v6651, 112
      %v6662 = vpop.permute.xlu0 %6661
      %v6663 = vsel %vm367, %v6658, %v6660
      %v6664 = vsel %vm367, %v6660, %v6662
      %v6666 = vsel %vm370, %v6653, 0
      %v6668 = vsel %vm374, %v6663, 0
      %v6670 = vsel %vm374, %v6664, 0
      %6672 = vmatprep.subr.mxu0 %v6670
      %6673 = vmatpush1.msra.mxu0 %v6668
      %6674 = vmatprep.subr.mxu0 0.0
      %6675 = vmatpush1.msra.mxu0 0.0
      %6676 = vmatprep.subr.mxu0 0.0
      %6677 = vmatpush1.msra.mxu0 0.0
      %6678 = vmatprep.subr.mxu0 0.0
      %6679 = vmatpush1.msra.mxu0 0.0
      %6680 = vmatprep.subr.mxu0 0.0
      %6681 = vmatpush1.msra.mxu0 0.0
      %6682 = vmatprep.subr.mxu0 0.0
      %6683 = vmatpush1.msra.mxu0 0.0
      %6684 = vmatprep.subr.mxu0 0.0
      %6685 = vmatpush1.msra.mxu0 0.0
      %6686 = vmatprep.subr.mxu0 0.0
      %6687 = vmatpush1.msra.mxu0 0.0
      %6688 = vmatprep.subr.mxu0 0.0
      %6689 = vmatpush1.msra.mxu0 0.0
      %6690 = vmatprep.subr.mxu0 0.0
      %6691 = vmatpush1.msra.mxu0 0.0
      %6692 = vmatprep.subr.mxu0 0.0
      %6693 = vmatpush1.msra.mxu0 0.0
      %6694 = vmatprep.subr.mxu0 0.0
      %6695 = vmatpush1.msra.mxu0 0.0
      %6696 = vmatprep.subr.mxu0 0.0
      %6697 = vmatpush1.msra.mxu0 0.0
      %6698 = vmatprep.subr.mxu0 0.0
      %6699 = vmatpush1.msra.mxu0 0.0
      %6700 = vmatprep.subr.mxu0 0.0
      %6701 = vmatpush1.msra.mxu0 0.0
      %6702 = vmatprep.subr.mxu0 0.0
      %6703 = vmatpush1.msra.mxu0 0.0
      %6704 = vmatprep.subr.mxu0 0.0
      %6705 = vmatpush1.msra.mxu0 0.0
      %6706 = vmatprep.subr.mxu0 0.0
      %6707 = vmatpush1.msra.mxu0 0.0
      %6708 = vmatprep.subr.mxu0 0.0
      %6709 = vmatpush1.msra.mxu0 0.0
      %6710 = vmatprep.subr.mxu0 0.0
      %6711 = vmatpush1.msra.mxu0 0.0
      %6712 = vmatprep.subr.mxu0 0.0
      %6713 = vmatpush1.msra.mxu0 0.0
      %6714 = vmatprep.subr.mxu0 0.0
      %6715 = vmatpush1.msra.mxu0 0.0
      %6716 = vmatprep.subr.mxu0 0.0
      %6717 = vmatpush1.msra.mxu0 0.0
      %6718 = vmatprep.subr.mxu0 0.0
      %6719 = vmatpush1.msra.mxu0 0.0
      %6720 = vmatprep.subr.mxu0 0.0
      %6721 = vmatpush1.msra.mxu0 0.0
      %6722 = vmatprep.subr.mxu0 0.0
      %6723 = vmatpush1.msra.mxu0 0.0
      %6724 = vmatprep.subr.mxu0 0.0
      %6725 = vmatpush1.msra.mxu0 0.0
      %6726 = vmatprep.subr.mxu0 0.0
      %6727 = vmatpush1.msra.mxu0 0.0
      %6728 = vmatprep.subr.mxu0 0.0
      %6729 = vmatpush1.msra.mxu0 0.0
      %6730 = vmatprep.subr.mxu0 0.0
      %6731 = vmatpush1.msra.mxu0 0.0
      %6732 = vmatprep.subr.mxu0 0.0
      %6733 = vmatpush1.msra.mxu0 0.0
      %6734 = vmatprep.subr.mxu0 0.0
      %6735 = vmatpush1.msra.mxu0 0.0
      %6736 = vmatprep.mubr.f32.mxu0 0.0
      %6737 = vmatmul.mubr.f32.gmra.mrb[0].mxu0 %v6666
      %v6738 = vpop.f32.mrb[0].mxu0
      %v6739 = vadd.f32 0.0, %v6738
      %v6740 = vpop.f32.mrb[0].mxu0
      %v6741 = vadd.f32 0.0, %v6740
      %6742 = vdwg.mxu0
      %v6743 = vadd.f32 %v6648, %v6739
      %v6744 = vadd.f32 %v6649, %v6741
      %v6745 = vld [vmem:[%s5948 + $0x8] sm:$0xff]
      %v6746 = vld [vmem:[%s5948 + $0x10] sm:$0xf]
      %s6747 = scalar_lea.vmem %s3, 496
      %v6748 = vld [vmem:[%s6747] sm:$0xff]
      %v6751 = vcombine.high %v6745, %v6745
      %6752 = vrot.lane.b32.xlu0 %v6745, 104
      %v6753 = vpop.permute.xlu0 %6752
      %6754 = vrot.lane.b32.xlu0 %v6751, 104
      %v6755 = vpop.permute.xlu0 %6754
      %6756 = vrot.lane.b32.xlu0 %v6746, 104
      %v6757 = vpop.permute.xlu0 %6756
      %v6758 = vsel %vm6166, %v6753, %v6755
      %v6759 = vsel %vm6166, %v6755, %v6757
      %v6761 = vsel %vm370, %v6748, 0
      %v6763 = vsel %vm374, %v6758, 0
      %v6765 = vsel %vm374, %v6759, 0
      %6767 = vmatprep.subr.mxu0 %v6765
      %6768 = vmatpush1.msra.mxu0 %v6763
      %6769 = vmatprep.subr.mxu0 0.0
      %6770 = vmatpush1.msra.mxu0 0.0
      %6771 = vmatprep.subr.mxu0 0.0
      %6772 = vmatpush1.msra.mxu0 0.0
      %6773 = vmatprep.subr.mxu0 0.0
      %6774 = vmatpush1.msra.mxu0 0.0
      %6775 = vmatprep.subr.mxu0 0.0
      %6776 = vmatpush1.msra.mxu0 0.0
      %6777 = vmatprep.subr.mxu0 0.0
      %6778 = vmatpush1.msra.mxu0 0.0
      %6779 = vmatprep.subr.mxu0 0.0
      %6780 = vmatpush1.msra.mxu0 0.0
      %6781 = vmatprep.subr.mxu0 0.0
      %6782 = vmatpush1.msra.mxu0 0.0
      %6783 = vmatprep.subr.mxu0 0.0
      %6784 = vmatpush1.msra.mxu0 0.0
      %6785 = vmatprep.subr.mxu0 0.0
      %6786 = vmatpush1.msra.mxu0 0.0
      %6787 = vmatprep.subr.mxu0 0.0
      %6788 = vmatpush1.msra.mxu0 0.0
      %6789 = vmatprep.subr.mxu0 0.0
      %6790 = vmatpush1.msra.mxu0 0.0
      %6791 = vmatprep.subr.mxu0 0.0
      %6792 = vmatpush1.msra.mxu0 0.0
      %6793 = vmatprep.subr.mxu0 0.0
      %6794 = vmatpush1.msra.mxu0 0.0
      %6795 = vmatprep.subr.mxu0 0.0
      %6796 = vmatpush1.msra.mxu0 0.0
      %6797 = vmatprep.subr.mxu0 0.0
      %6798 = vmatpush1.msra.mxu0 0.0
      %6799 = vmatprep.subr.mxu0 0.0
      %6800 = vmatpush1.msra.mxu0 0.0
      %6801 = vmatprep.subr.mxu0 0.0
      %6802 = vmatpush1.msra.mxu0 0.0
      %6803 = vmatprep.subr.mxu0 0.0
      %6804 = vmatpush1.msra.mxu0 0.0
      %6805 = vmatprep.subr.mxu0 0.0
      %6806 = vmatpush1.msra.mxu0 0.0
      %6807 = vmatprep.subr.mxu0 0.0
      %6808 = vmatpush1.msra.mxu0 0.0
      %6809 = vmatprep.subr.mxu0 0.0
      %6810 = vmatpush1.msra.mxu0 0.0
      %6811 = vmatprep.subr.mxu0 0.0
      %6812 = vmatpush1.msra.mxu0 0.0
      %6813 = vmatprep.subr.mxu0 0.0
      %6814 = vmatpush1.msra.mxu0 0.0
      %6815 = vmatprep.subr.mxu0 0.0
      %6816 = vmatpush1.msra.mxu0 0.0
      %6817 = vmatprep.subr.mxu0 0.0
      %6818 = vmatpush1.msra.mxu0 0.0
      %6819 = vmatprep.subr.mxu0 0.0
      %6820 = vmatpush1.msra.mxu0 0.0
      %6821 = vmatprep.subr.mxu0 0.0
      %6822 = vmatpush1.msra.mxu0 0.0
      %6823 = vmatprep.subr.mxu0 0.0
      %6824 = vmatpush1.msra.mxu0 0.0
      %6825 = vmatprep.subr.mxu0 0.0
      %6826 = vmatpush1.msra.mxu0 0.0
      %6827 = vmatprep.subr.mxu0 0.0
      %6828 = vmatpush1.msra.mxu0 0.0
      %6829 = vmatprep.subr.mxu0 0.0
      %6830 = vmatpush1.msra.mxu0 0.0
      %6831 = vmatprep.mubr.f32.mxu0 0.0
      %6832 = vmatmul.mubr.f32.gmra.mrb[0].mxu0 %v6761
      %v6833 = vpop.f32.mrb[0].mxu0
      %v6834 = vadd.f32 0.0, %v6833
      %v6835 = vpop.f32.mrb[0].mxu0
      %v6836 = vadd.f32 0.0, %v6835
      %6837 = vdwg.mxu0
      %v6838 = vmul.f32 %v6834, %v6253
      %v6839 = vmul.f32 %v6836, %v6257
      %v6840 = vadd.f32 %v6743, %v6838
      %v6841 = vadd.f32 %v6744, %v6839
      %v6842 = vld [vmem:[%s348] sm:$0xff]
      %v6843 = vld [vmem:[%s348 + $0x8] sm:$0xf]
      %s6844 = scalar_lea.vmem %s3, 504
      %v6845 = vld [vmem:[%s6844] sm:$0xff]
      %v6848 = vcombine.high %v6842, %v6842
      %6849 = vrot.lane.b32.xlu0 %v6842, 120
      %v6850 = vpop.permute.xlu0 %6849
      %6851 = vrot.lane.b32.xlu0 %v6848, 120
      %v6852 = vpop.permute.xlu0 %6851
      %6853 = vrot.lane.b32.xlu0 %v6843, 120
      %v6854 = vpop.permute.xlu0 %6853
      %v6855 = vsel %vm5962, %v6850, %v6852
      %v6856 = vsel %vm5962, %v6852, %v6854
      %v6858 = vsel %vm370, %v6845, 0
      %v6860 = vsel %vm374, %v6855, 0
      %v6862 = vsel %vm374, %v6856, 0
      %6864 = vmatprep.subr.mxu0 %v6862
      %6865 = vmatpush1.msra.mxu0 %v6860
      %6866 = vmatprep.subr.mxu0 0.0
      %6867 = vmatpush1.msra.mxu0 0.0
      %6868 = vmatprep.subr.mxu0 0.0
      %6869 = vmatpush1.msra.mxu0 0.0
      %6870 = vmatprep.subr.mxu0 0.0
      %6871 = vmatpush1.msra.mxu0 0.0
      %6872 = vmatprep.subr.mxu0 0.0
      %6873 = vmatpush1.msra.mxu0 0.0
      %6874 = vmatprep.subr.mxu0 0.0
      %6875 = vmatpush1.msra.mxu0 0.0
      %6876 = vmatprep.subr.mxu0 0.0
      %6877 = vmatpush1.msra.mxu0 0.0
      %6878 = vmatprep.subr.mxu0 0.0
      %6879 = vmatpush1.msra.mxu0 0.0
      %6880 = vmatprep.subr.mxu0 0.0
      %6881 = vmatpush1.msra.mxu0 0.0
      %6882 = vmatprep.subr.mxu0 0.0
      %6883 = vmatpush1.msra.mxu0 0.0
      %6884 = vmatprep.subr.mxu0 0.0
      %6885 = vmatpush1.msra.mxu0 0.0
      %6886 = vmatprep.subr.mxu0 0.0
      %6887 = vmatpush1.msra.mxu0 0.0
      %6888 = vmatprep.subr.mxu0 0.0
      %6889 = vmatpush1.msra.mxu0 0.0
      %6890 = vmatprep.subr.mxu0 0.0
      %6891 = vmatpush1.msra.mxu0 0.0
      %6892 = vmatprep.subr.mxu0 0.0
      %6893 = vmatpush1.msra.mxu0 0.0
      %6894 = vmatprep.subr.mxu0 0.0
      %6895 = vmatpush1.msra.mxu0 0.0
      %6896 = vmatprep.subr.mxu0 0.0
      %6897 = vmatpush1.msra.mxu0 0.0
      %6898 = vmatprep.subr.mxu0 0.0
      %6899 = vmatpush1.msra.mxu0 0.0
      %6900 = vmatprep.subr.mxu0 0.0
      %6901 = vmatpush1.msra.mxu0 0.0
      %6902 = vmatprep.subr.mxu0 0.0
      %6903 = vmatpush1.msra.mxu0 0.0
      %6904 = vmatprep.subr.mxu0 0.0
      %6905 = vmatpush1.msra.mxu0 0.0
      %6906 = vmatprep.subr.mxu0 0.0
      %6907 = vmatpush1.msra.mxu0 0.0
      %6908 = vmatprep.subr.mxu0 0.0
      %6909 = vmatpush1.msra.mxu0 0.0
      %6910 = vmatprep.subr.mxu0 0.0
      %6911 = vmatpush1.msra.mxu0 0.0
      %6912 = vmatprep.subr.mxu0 0.0
      %6913 = vmatpush1.msra.mxu0 0.0
      %6914 = vmatprep.subr.mxu0 0.0
      %6915 = vmatpush1.msra.mxu0 0.0
      %6916 = vmatprep.subr.mxu0 0.0
      %6917 = vmatpush1.msra.mxu0 0.0
      %6918 = vmatprep.subr.mxu0 0.0
      %6919 = vmatpush1.msra.mxu0 0.0
      %6920 = vmatprep.subr.mxu0 0.0
      %6921 = vmatpush1.msra.mxu0 0.0
      %6922 = vmatprep.subr.mxu0 0.0
      %6923 = vmatpush1.msra.mxu0 0.0
      %6924 = vmatprep.subr.mxu0 0.0
      %6925 = vmatpush1.msra.mxu0 0.0
      %6926 = vmatprep.subr.mxu0 0.0
      %6927 = vmatpush1.msra.mxu0 0.0
      %6928 = vmatprep.mubr.f32.mxu0 0.0
      %6929 = vmatmul.mubr.f32.gmra.mrb[0].mxu0 %v6858
      %v6930 = vpop.f32.mrb[0].mxu0
      %v6931 = vadd.f32 0.0, %v6930
      %v6932 = vpop.f32.mrb[0].mxu0
      %v6933 = vadd.f32 0.0, %v6932
      %6934 = vdwg.mxu0
      %v6935 = vmul.f32 %v6931, %v6049
      %v6936 = vmul.f32 %v6933, %v6053
      %v6937 = vadd.f32 %v6840, %v6935
      %v6938 = vadd.f32 %v6841, %v6936
      %v6939 = vld [vmem:[%s348] sm:$0xff]
      %v6940 = vld [vmem:[%s348 + $0x8] sm:$0xf]
      %s6941 = scalar_lea.vmem %s3, 512
      %v6942 = vld [vmem:[%s6941] sm:$0xff]
      %v6945 = vcombine.high %v6939, %v6939
      %6946 = vrot.lane.b32.xlu0 %v6939, 112
      %v6947 = vpop.permute.xlu0 %6946
      %6948 = vrot.lane.b32.xlu0 %v6945, 112
      %v6949 = vpop.permute.xlu0 %6948
      %6950 = vrot.lane.b32.xlu0 %v6940, 112
      %v6951 = vpop.permute.xlu0 %6950
      %v6952 = vsel %vm367, %v6947, %v6949
      %v6953 = vsel %vm367, %v6949, %v6951
      %v6955 = vsel %vm370, %v6942, 0
      %v6957 = vsel %vm374, %v6952, 0
      %v6959 = vsel %vm374, %v6953, 0
      %6961 = vmatprep.subr.mxu0 %v6959
      %6962 = vmatpush1.msra.mxu0 %v6957
      %6963 = vmatprep.subr.mxu0 0.0
      %6964 = vmatpush1.msra.mxu0 0.0
      %6965 = vmatprep.subr.mxu0 0.0
      %6966 = vmatpush1.msra.mxu0 0.0
      %6967 = vmatprep.subr.mxu0 0.0
      %6968 = vmatpush1.msra.mxu0 0.0
      %6969 = vmatprep.subr.mxu0 0.0
      %6970 = vmatpush1.msra.mxu0 0.0
      %6971 = vmatprep.subr.mxu0 0.0
      %6972 = vmatpush1.msra.mxu0 0.0
      %6973 = vmatprep.subr.mxu0 0.0
      %6974 = vmatpush1.msra.mxu0 0.0
      %6975 = vmatprep.subr.mxu0 0.0
      %6976 = vmatpush1.msra.mxu0 0.0
      %6977 = vmatprep.subr.mxu0 0.0
      %6978 = vmatpush1.msra.mxu0 0.0
      %6979 = vmatprep.subr.mxu0 0.0
      %6980 = vmatpush1.msra.mxu0 0.0
      %6981 = vmatprep.subr.mxu0 0.0
      %6982 = vmatpush1.msra.mxu0 0.0
      %6983 = vmatprep.subr.mxu0 0.0
      %6984 = vmatpush1.msra.mxu0 0.0
      %6985 = vmatprep.subr.mxu0 0.0
      %6986 = vmatpush1.msra.mxu0 0.0
      %6987 = vmatprep.subr.mxu0 0.0
      %6988 = vmatpush1.msra.mxu0 0.0
      %6989 = vmatprep.subr.mxu0 0.0
      %6990 = vmatpush1.msra.mxu0 0.0
      %6991 = vmatprep.subr.mxu0 0.0
      %6992 = vmatpush1.msra.mxu0 0.0
      %6993 = vmatprep.subr.mxu0 0.0
      %6994 = vmatpush1.msra.mxu0 0.0
      %6995 = vmatprep.subr.mxu0 0.0
      %6996 = vmatpush1.msra.mxu0 0.0
      %6997 = vmatprep.subr.mxu0 0.0
      %6998 = vmatpush1.msra.mxu0 0.0
      %6999 = vmatprep.subr.mxu0 0.0
      %7000 = vmatpush1.msra.mxu0 0.0
      %7001 = vmatprep.subr.mxu0 0.0
      %7002 = vmatpush1.msra.mxu0 0.0
      %7003 = vmatprep.subr.mxu0 0.0
      %7004 = vmatpush1.msra.mxu0 0.0
      %7005 = vmatprep.subr.mxu0 0.0
      %7006 = vmatpush1.msra.mxu0 0.0
      %7007 = vmatprep.subr.mxu0 0.0
      %7008 = vmatpush1.msra.mxu0 0.0
      %7009 = vmatprep.subr.mxu0 0.0
      %7010 = vmatpush1.msra.mxu0 0.0
      %7011 = vmatprep.subr.mxu0 0.0
      %7012 = vmatpush1.msra.mxu0 0.0
      %7013 = vmatprep.subr.mxu0 0.0
      %7014 = vmatpush1.msra.mxu0 0.0
      %7015 = vmatprep.subr.mxu0 0.0
      %7016 = vmatpush1.msra.mxu0 0.0
      %7017 = vmatprep.subr.mxu0 0.0
      %7018 = vmatpush1.msra.mxu0 0.0
      %7019 = vmatprep.subr.mxu0 0.0
      %7020 = vmatpush1.msra.mxu0 0.0
      %7021 = vmatprep.subr.mxu0 0.0
      %7022 = vmatpush1.msra.mxu0 0.0
      %7023 = vmatprep.subr.mxu0 0.0
      %7024 = vmatpush1.msra.mxu0 0.0
      %7025 = vmatprep.mubr.f32.mxu0 0.0
      %7026 = vmatmul.mubr.f32.gmra.mrb[0].mxu0 %v6955
      %v7027 = vpop.f32.mrb[0].mxu0
      %v7028 = vadd.f32 0.0, %v7027
      %v7029 = vpop.f32.mrb[0].mxu0
      %v7030 = vadd.f32 0.0, %v7029
      %7031 = vdwg.mxu0
      %v7032 = vadd.f32 %v6937, %v7028
      %v7033 = vadd.f32 %v6938, %v7030
      %v7034 = vld [vmem:[%s348] sm:$0xff]
      %v7035 = vld [vmem:[%s348 + $0x8] sm:$0xf]
      %s7036 = scalar_lea.vmem %s3, 520
      %v7037 = vld [vmem:[%s7036] sm:$0xff]
      %v7040 = vcombine.high %v7034, %v7034
      %7041 = vrot.lane.b32.xlu0 %v7034, 104
      %v7042 = vpop.permute.xlu0 %7041
      %7043 = vrot.lane.b32.xlu0 %v7040, 104
      %v7044 = vpop.permute.xlu0 %7043
      %7045 = vrot.lane.b32.xlu0 %v7035, 104
      %v7046 = vpop.permute.xlu0 %7045
      %v7047 = vsel %vm6166, %v7042, %v7044
      %v7048 = vsel %vm6166, %v7044, %v7046
      %v7050 = vsel %vm370, %v7037, 0
      %v7052 = vsel %vm374, %v7047, 0
      %v7054 = vsel %vm374, %v7048, 0
      %7056 = vmatprep.subr.mxu0 %v7054
      %7057 = vmatpush1.msra.mxu0 %v7052
      %7058 = vmatprep.subr.mxu0 0.0
      %7059 = vmatpush1.msra.mxu0 0.0
      %7060 = vmatprep.subr.mxu0 0.0
      %7061 = vmatpush1.msra.mxu0 0.0
      %7062 = vmatprep.subr.mxu0 0.0
      %7063 = vmatpush1.msra.mxu0 0.0
      %7064 = vmatprep.subr.mxu0 0.0
      %7065 = vmatpush1.msra.mxu0 0.0
      %7066 = vmatprep.subr.mxu0 0.0
      %7067 = vmatpush1.msra.mxu0 0.0
      %7068 = vmatprep.subr.mxu0 0.0
      %7069 = vmatpush1.msra.mxu0 0.0
      %7070 = vmatprep.subr.mxu0 0.0
      %7071 = vmatpush1.msra.mxu0 0.0
      %7072 = vmatprep.subr.mxu0 0.0
      %7073 = vmatpush1.msra.mxu0 0.0
      %7074 = vmatprep.subr.mxu0 0.0
      %7075 = vmatpush1.msra.mxu0 0.0
      %7076 = vmatprep.subr.mxu0 0.0
      %7077 = vmatpush1.msra.mxu0 0.0
      %7078 = vmatprep.subr.mxu0 0.0
      %7079 = vmatpush1.msra.mxu0 0.0
      %7080 = vmatprep.subr.mxu0 0.0
      %7081 = vmatpush1.msra.mxu0 0.0
      %7082 = vmatprep.subr.mxu0 0.0
      %7083 = vmatpush1.msra.mxu0 0.0
      %7084 = vmatprep.subr.mxu0 0.0
      %7085 = vmatpush1.msra.mxu0 0.0
      %7086 = vmatprep.subr.mxu0 0.0
      %7087 = vmatpush1.msra.mxu0 0.0
      %7088 = vmatprep.subr.mxu0 0.0
      %7089 = vmatpush1.msra.mxu0 0.0
      %7090 = vmatprep.subr.mxu0 0.0
      %7091 = vmatpush1.msra.mxu0 0.0
      %7092 = vmatprep.subr.mxu0 0.0
      %7093 = vmatpush1.msra.mxu0 0.0
      %7094 = vmatprep.subr.mxu0 0.0
      %7095 = vmatpush1.msra.mxu0 0.0
      %7096 = vmatprep.subr.mxu0 0.0
      %7097 = vmatpush1.msra.mxu0 0.0
      %7098 = vmatprep.subr.mxu0 0.0
      %7099 = vmatpush1.msra.mxu0 0.0
      %7100 = vmatprep.subr.mxu0 0.0
      %7101 = vmatpush1.msra.mxu0 0.0
      %7102 = vmatprep.subr.mxu0 0.0
      %7103 = vmatpush1.msra.mxu0 0.0
      %7104 = vmatprep.subr.mxu0 0.0
      %7105 = vmatpush1.msra.mxu0 0.0
      %7106 = vmatprep.subr.mxu0 0.0
      %7107 = vmatpush1.msra.mxu0 0.0
      %7108 = vmatprep.subr.mxu0 0.0
      %7109 = vmatpush1.msra.mxu0 0.0
      %7110 = vmatprep.subr.mxu0 0.0
      %7111 = vmatpush1.msra.mxu0 0.0
      %7112 = vmatprep.subr.mxu0 0.0
      %7113 = vmatpush1.msra.mxu0 0.0
      %7114 = vmatprep.subr.mxu0 0.0
      %7115 = vmatpush1.msra.mxu0 0.0
      %7116 = vmatprep.subr.mxu0 0.0
      %7117 = vmatpush1.msra.mxu0 0.0
      %7118 = vmatprep.subr.mxu0 0.0
      %7119 = vmatpush1.msra.mxu0 0.0
      %7120 = vmatprep.mubr.f32.mxu0 0.0
      %7121 = vmatmul.mubr.f32.gmra.mrb[0].mxu0 %v7050
      %v7122 = vpop.f32.mrb[0].mxu0
      %v7123 = vadd.f32 0.0, %v7122
      %v7124 = vpop.f32.mrb[0].mxu0
      %v7125 = vadd.f32 0.0, %v7124
      %7126 = vdwg.mxu0
      %v7127 = vmul.f32 %v7123, %v6253
      %v7128 = vmul.f32 %v7125, %v6257
      %v7129 = vadd.f32 %v7032, %v7127
      %v7130 = vadd.f32 %v7033, %v7128
      %v7131 = vld [vmem:[%s348 + $0x4] sm:$0xff]
      %v7132 = vld [vmem:[%s348 + $0xc] sm:$0xf]
      %s7133 = scalar_lea.vmem %s3, 528
      %v7134 = vld [vmem:[%s7133] sm:$0xff]
      %v7137 = vcombine.high %v7131, %v7131
      %7138 = vrot.lane.b32.xlu0 %v7131, 120
      %v7139 = vpop.permute.xlu0 %7138
      %7140 = vrot.lane.b32.xlu0 %v7137, 120
      %v7141 = vpop.permute.xlu0 %7140
      %7142 = vrot.lane.b32.xlu0 %v7132, 120
      %v7143 = vpop.permute.xlu0 %7142
      %v7144 = vsel %vm5962, %v7139, %v7141
      %v7145 = vsel %vm5962, %v7141, %v7143
      %v7147 = vsel %vm370, %v7134, 0
      %v7149 = vsel %vm374, %v7144, 0
      %v7151 = vsel %vm374, %v7145, 0
      %7153 = vmatprep.subr.mxu0 %v7151
      %7154 = vmatpush1.msra.mxu0 %v7149
      %7155 = vmatprep.subr.mxu0 0.0
      %7156 = vmatpush1.msra.mxu0 0.0
      %7157 = vmatprep.subr.mxu0 0.0
      %7158 = vmatpush1.msra.mxu0 0.0
      %7159 = vmatprep.subr.mxu0 0.0
      %7160 = vmatpush1.msra.mxu0 0.0
      %7161 = vmatprep.subr.mxu0 0.0
      %7162 = vmatpush1.msra.mxu0 0.0
      %7163 = vmatprep.subr.mxu0 0.0
      %7164 = vmatpush1.msra.mxu0 0.0
      %7165 = vmatprep.subr.mxu0 0.0
      %7166 = vmatpush1.msra.mxu0 0.0
      %7167 = vmatprep.subr.mxu0 0.0
      %7168 = vmatpush1.msra.mxu0 0.0
      %7169 = vmatprep.subr.mxu0 0.0
      %7170 = vmatpush1.msra.mxu0 0.0
      %7171 = vmatprep.subr.mxu0 0.0
      %7172 = vmatpush1.msra.mxu0 0.0
      %7173 = vmatprep.subr.mxu0 0.0
      %7174 = vmatpush1.msra.mxu0 0.0
      %7175 = vmatprep.subr.mxu0 0.0
      %7176 = vmatpush1.msra.mxu0 0.0
      %7177 = vmatprep.subr.mxu0 0.0
      %7178 = vmatpush1.msra.mxu0 0.0
      %7179 = vmatprep.subr.mxu0 0.0
      %7180 = vmatpush1.msra.mxu0 0.0
      %7181 = vmatprep.subr.mxu0 0.0
      %7182 = vmatpush1.msra.mxu0 0.0
      %7183 = vmatprep.subr.mxu0 0.0
      %7184 = vmatpush1.msra.mxu0 0.0
      %7185 = vmatprep.subr.mxu0 0.0
      %7186 = vmatpush1.msra.mxu0 0.0
      %7187 = vmatprep.subr.mxu0 0.0
      %7188 = vmatpush1.msra.mxu0 0.0
      %7189 = vmatprep.subr.mxu0 0.0
      %7190 = vmatpush1.msra.mxu0 0.0
      %7191 = vmatprep.subr.mxu0 0.0
      %7192 = vmatpush1.msra.mxu0 0.0
      %7193 = vmatprep.subr.mxu0 0.0
      %7194 = vmatpush1.msra.mxu0 0.0
      %7195 = vmatprep.subr.mxu0 0.0
      %7196 = vmatpush1.msra.mxu0 0.0
      %7197 = vmatprep.subr.mxu0 0.0
      %7198 = vmatpush1.msra.mxu0 0.0
      %7199 = vmatprep.subr.mxu0 0.0
      %7200 = vmatpush1.msra.mxu0 0.0
      %7201 = vmatprep.subr.mxu0 0.0
      %7202 = vmatpush1.msra.mxu0 0.0
      %7203 = vmatprep.subr.mxu0 0.0
      %7204 = vmatpush1.msra.mxu0 0.0
      %7205 = vmatprep.subr.mxu0 0.0
      %7206 = vmatpush1.msra.mxu0 0.0
      %7207 = vmatprep.subr.mxu0 0.0
      %7208 = vmatpush1.msra.mxu0 0.0
      %7209 = vmatprep.subr.mxu0 0.0
      %7210 = vmatpush1.msra.mxu0 0.0
      %7211 = vmatprep.subr.mxu0 0.0
      %7212 = vmatpush1.msra.mxu0 0.0
      %7213 = vmatprep.subr.mxu0 0.0
      %7214 = vmatpush1.msra.mxu0 0.0
      %7215 = vmatprep.subr.mxu0 0.0
      %7216 = vmatpush1.msra.mxu0 0.0
      %7217 = vmatprep.mubr.f32.mxu0 0.0
      %7218 = vmatmul.mubr.f32.gmra.mrb[0].mxu0 %v7147
      %v7219 = vpop.f32.mrb[0].mxu0
      %v7220 = vadd.f32 0.0, %v7219
      %v7221 = vpop.f32.mrb[0].mxu0
      %v7222 = vadd.f32 0.0, %v7221
      %7223 = vdwg.mxu0
      %v7224 = vmul.f32 %v7220, %v6049
      %v7225 = vmul.f32 %v7222, %v6053
      %v7226 = vadd.f32 %v7129, %v7224
      %v7227 = vadd.f32 %v7130, %v7225
      %s7228 = scalar_lea.vmem %s3, 536
      %v7229 = vld [vmem:[%s7228] sm:$0xff]
      %v7231 = vsel %vm370, %v7229, 0
      %7233 = vmatprep.subr.mxu0 %v377
      %7234 = vmatpush1.msra.mxu0 %v375
      %7235 = vmatprep.subr.mxu0 0.0
      %7236 = vmatpush1.msra.mxu0 0.0
      %7237 = vmatprep.subr.mxu0 0.0
      %7238 = vmatpush1.msra.mxu0 0.0
      %7239 = vmatprep.subr.mxu0 0.0
      %7240 = vmatpush1.msra.mxu0 0.0
      %7241 = vmatprep.subr.mxu0 0.0
      %7242 = vmatpush1.msra.mxu0 0.0
      %7243 = vmatprep.subr.mxu0 0.0
      %7244 = vmatpush1.msra.mxu0 0.0
      %7245 = vmatprep.subr.mxu0 0.0
      %7246 = vmatpush1.msra.mxu0 0.0
      %7247 = vmatprep.subr.mxu0 0.0
      %7248 = vmatpush1.msra.mxu0 0.0
      %7249 = vmatprep.subr.mxu0 0.0
      %7250 = vmatpush1.msra.mxu0 0.0
      %7251 = vmatprep.subr.mxu0 0.0
      %7252 = vmatpush1.msra.mxu0 0.0
      %7253 = vmatprep.subr.mxu0 0.0
      %7254 = vmatpush1.msra.mxu0 0.0
      %7255 = vmatprep.subr.mxu0 0.0
      %7256 = vmatpush1.msra.mxu0 0.0
      %7257 = vmatprep.subr.mxu0 0.0
      %7258 = vmatpush1.msra.mxu0 0.0
      %7259 = vmatprep.subr.mxu0 0.0
      %7260 = vmatpush1.msra.mxu0 0.0
      %7261 = vmatprep.subr.mxu0 0.0
      %7262 = vmatpush1.msra.mxu0 0.0
      %7263 = vmatprep.subr.mxu0 0.0
      %7264 = vmatpush1.msra.mxu0 0.0
      %7265 = vmatprep.subr.mxu0 0.0
      %7266 = vmatpush1.msra.mxu0 0.0
      %7267 = vmatprep.subr.mxu0 0.0
      %7268 = vmatpush1.msra.mxu0 0.0
      %7269 = vmatprep.subr.mxu0 0.0
      %7270 = vmatpush1.msra.mxu0 0.0
      %7271 = vmatprep.subr.mxu0 0.0
      %7272 = vmatpush1.msra.mxu0 0.0
      %7273 = vmatprep.subr.mxu0 0.0
      %7274 = vmatpush1.msra.mxu0 0.0
      %7275 = vmatprep.subr.mxu0 0.0
      %7276 = vmatpush1.msra.mxu0 0.0
      %7277 = vmatprep.subr.mxu0 0.0
      %7278 = vmatpush1.msra.mxu0 0.0
      %7279 = vmatprep.subr.mxu0 0.0
      %7280 = vmatpush1.msra.mxu0 0.0
      %7281 = vmatprep.subr.mxu0 0.0
      %7282 = vmatpush1.msra.mxu0 0.0
      %7283 = vmatprep.subr.mxu0 0.0
      %7284 = vmatpush1.msra.mxu0 0.0
      %7285 = vmatprep.subr.mxu0 0.0
      %7286 = vmatpush1.msra.mxu0 0.0
      %7287 = vmatprep.subr.mxu0 0.0
      %7288 = vmatpush1.msra.mxu0 0.0
      %7289 = vmatprep.subr.mxu0 0.0
      %7290 = vmatpush1.msra.mxu0 0.0
      %7291 = vmatprep.subr.mxu0 0.0
      %7292 = vmatpush1.msra.mxu0 0.0
      %7293 = vmatprep.subr.mxu0 0.0
      %7294 = vmatpush1.msra.mxu0 0.0
      %7295 = vmatprep.subr.mxu0 0.0
      %7296 = vmatpush1.msra.mxu0 0.0
      %7297 = vmatprep.mubr.f32.mxu0 0.0
      %7298 = vmatmul.mubr.f32.gmra.mrb[0].mxu0 %v7231
      %v7299 = vpop.f32.mrb[0].mxu0
      %v7300 = vadd.f32 0.0, %v7299
      %v7301 = vpop.f32.mrb[0].mxu0
      %v7302 = vadd.f32 0.0, %v7301
      %7303 = vdwg.mxu0
      %v7304 = vadd.f32 %v7226, %v7300
      %v7305 = vadd.f32 %v7227, %v7302
      %v7306 = vld [vmem:[%s348 + $0x4] sm:$0xff]
      %v7307 = vld [vmem:[%s348 + $0xc] sm:$0xf]
      %s7308 = scalar_lea.vmem %s3, 544
      %v7309 = vld [vmem:[%s7308] sm:$0xff]
      %v7312 = vcombine.high %v7306, %v7306
      %7313 = vrot.lane.b32.xlu0 %v7306, 104
      %v7314 = vpop.permute.xlu0 %7313
      %7315 = vrot.lane.b32.xlu0 %v7312, 104
      %v7316 = vpop.permute.xlu0 %7315
      %7317 = vrot.lane.b32.xlu0 %v7307, 104
      %v7318 = vpop.permute.xlu0 %7317
      %v7319 = vsel %vm6166, %v7314, %v7316
      %v7320 = vsel %vm6166, %v7316, %v7318
      %v7322 = vsel %vm370, %v7309, 0
      %v7324 = vsel %vm374, %v7319, 0
      %v7326 = vsel %vm374, %v7320, 0
      %7328 = vmatprep.subr.mxu0 %v7326
      %7329 = vmatpush1.msra.mxu0 %v7324
      %7330 = vmatprep.subr.mxu0 0.0
      %7331 = vmatpush1.msra.mxu0 0.0
      %7332 = vmatprep.subr.mxu0 0.0
      %7333 = vmatpush1.msra.mxu0 0.0
      %7334 = vmatprep.subr.mxu0 0.0
      %7335 = vmatpush1.msra.mxu0 0.0
      %7336 = vmatprep.subr.mxu0 0.0
      %7337 = vmatpush1.msra.mxu0 0.0
      %7338 = vmatprep.subr.mxu0 0.0
      %7339 = vmatpush1.msra.mxu0 0.0
      %7340 = vmatprep.subr.mxu0 0.0
      %7341 = vmatpush1.msra.mxu0 0.0
      %7342 = vmatprep.subr.mxu0 0.0
      %7343 = vmatpush1.msra.mxu0 0.0
      %7344 = vmatprep.subr.mxu0 0.0
      %7345 = vmatpush1.msra.mxu0 0.0
      %7346 = vmatprep.subr.mxu0 0.0
      %7347 = vmatpush1.msra.mxu0 0.0
      %7348 = vmatprep.subr.mxu0 0.0
      %7349 = vmatpush1.msra.mxu0 0.0
      %7350 = vmatprep.subr.mxu0 0.0
      %7351 = vmatpush1.msra.mxu0 0.0
      %7352 = vmatprep.subr.mxu0 0.0
      %7353 = vmatpush1.msra.mxu0 0.0
      %7354 = vmatprep.subr.mxu0 0.0
      %7355 = vmatpush1.msra.mxu0 0.0
      %7356 = vmatprep.subr.mxu0 0.0
      %7357 = vmatpush1.msra.mxu0 0.0
      %7358 = vmatprep.subr.mxu0 0.0
      %7359 = vmatpush1.msra.mxu0 0.0
      %7360 = vmatprep.subr.mxu0 0.0
      %7361 = vmatpush1.msra.mxu0 0.0
      %7362 = vmatprep.subr.mxu0 0.0
      %7363 = vmatpush1.msra.mxu0 0.0
      %7364 = vmatprep.subr.mxu0 0.0
      %7365 = vmatpush1.msra.mxu0 0.0
      %7366 = vmatprep.subr.mxu0 0.0
      %7367 = vmatpush1.msra.mxu0 0.0
      %7368 = vmatprep.subr.mxu0 0.0
      %7369 = vmatpush1.msra.mxu0 0.0
      %7370 = vmatprep.subr.mxu0 0.0
      %7371 = vmatpush1.msra.mxu0 0.0
      %7372 = vmatprep.subr.mxu0 0.0
      %7373 = vmatpush1.msra.mxu0 0.0
      %7374 = vmatprep.subr.mxu0 0.0
      %7375 = vmatpush1.msra.mxu0 0.0
      %7376 = vmatprep.subr.mxu0 0.0
      %7377 = vmatpush1.msra.mxu0 0.0
      %7378 = vmatprep.subr.mxu0 0.0
      %7379 = vmatpush1.msra.mxu0 0.0
      %7380 = vmatprep.subr.mxu0 0.0
      %7381 = vmatpush1.msra.mxu0 0.0
      %7382 = vmatprep.subr.mxu0 0.0
      %7383 = vmatpush1.msra.mxu0 0.0
      %7384 = vmatprep.subr.mxu0 0.0
      %7385 = vmatpush1.msra.mxu0 0.0
      %7386 = vmatprep.subr.mxu0 0.0
      %7387 = vmatpush1.msra.mxu0 0.0
      %7388 = vmatprep.subr.mxu0 0.0
      %7389 = vmatpush1.msra.mxu0 0.0
      %7390 = vmatprep.subr.mxu0 0.0
      %7391 = vmatpush1.msra.mxu0 0.0
      %7392 = vmatprep.mubr.f32.mxu0 0.0
      %7393 = vmatmul.mubr.f32.gmra.mrb[0].mxu0 %v7322
      %v7394 = vpop.f32.mrb[0].mxu0
      %v7395 = vadd.f32 0.0, %v7394
      %v7396 = vpop.f32.mrb[0].mxu0
      %v7397 = vadd.f32 0.0, %v7396
      %7398 = vdwg.mxu0
      %v7399 = vmul.f32 %v7395, %v6253
      %v7400 = vmul.f32 %v7397, %v6257
      %v7401 = vadd.f32 %v7304, %v7399
      %v7402 = vadd.f32 %v7305, %v7400
      %v7403 = vld [vmem:[%s348 + $0x8] sm:$0xff]
      %v7404 = vld [vmem:[%s348 + $0x10] sm:$0xf]
      %s7405 = scalar_lea.vmem %s3, 552
      %v7406 = vld [vmem:[%s7405] sm:$0xff]
      %v7409 = vcombine.high %v7403, %v7403
      %7410 = vrot.lane.b32.xlu0 %v7403, 120
      %v7411 = vpop.permute.xlu0 %7410
      %7412 = vrot.lane.b32.xlu0 %v7409, 120
      %v7413 = vpop.permute.xlu0 %7412
      %7414 = vrot.lane.b32.xlu0 %v7404, 120
      %v7415 = vpop.permute.xlu0 %7414
      %v7416 = vsel %vm5962, %v7411, %v7413
      %v7417 = vsel %vm5962, %v7413, %v7415
      %v7419 = vsel %vm370, %v7406, 0
      %v7421 = vsel %vm374, %v7416, 0
      %v7423 = vsel %vm374, %v7417, 0
      %7425 = vmatprep.subr.mxu0 %v7423
      %7426 = vmatpush1.msra.mxu0 %v7421
      %7427 = vmatprep.subr.mxu0 0.0
      %7428 = vmatpush1.msra.mxu0 0.0
      %7429 = vmatprep.subr.mxu0 0.0
      %7430 = vmatpush1.msra.mxu0 0.0
      %7431 = vmatprep.subr.mxu0 0.0
      %7432 = vmatpush1.msra.mxu0 0.0
      %7433 = vmatprep.subr.mxu0 0.0
      %7434 = vmatpush1.msra.mxu0 0.0
      %7435 = vmatprep.subr.mxu0 0.0
      %7436 = vmatpush1.msra.mxu0 0.0
      %7437 = vmatprep.subr.mxu0 0.0
      %7438 = vmatpush1.msra.mxu0 0.0
      %7439 = vmatprep.subr.mxu0 0.0
      %7440 = vmatpush1.msra.mxu0 0.0
      %7441 = vmatprep.subr.mxu0 0.0
      %7442 = vmatpush1.msra.mxu0 0.0
      %7443 = vmatprep.subr.mxu0 0.0
      %7444 = vmatpush1.msra.mxu0 0.0
      %7445 = vmatprep.subr.mxu0 0.0
      %7446 = vmatpush1.msra.mxu0 0.0
      %7447 = vmatprep.subr.mxu0 0.0
      %7448 = vmatpush1.msra.mxu0 0.0
      %7449 = vmatprep.subr.mxu0 0.0
      %7450 = vmatpush1.msra.mxu0 0.0
      %7451 = vmatprep.subr.mxu0 0.0
      %7452 = vmatpush1.msra.mxu0 0.0
      %7453 = vmatprep.subr.mxu0 0.0
      %7454 = vmatpush1.msra.mxu0 0.0
      %7455 = vmatprep.subr.mxu0 0.0
      %7456 = vmatpush1.msra.mxu0 0.0
      %7457 = vmatprep.subr.mxu0 0.0
      %7458 = vmatpush1.msra.mxu0 0.0
      %7459 = vmatprep.subr.mxu0 0.0
      %7460 = vmatpush1.msra.mxu0 0.0
      %7461 = vmatprep.subr.mxu0 0.0
      %7462 = vmatpush1.msra.mxu0 0.0
      %7463 = vmatprep.subr.mxu0 0.0
      %7464 = vmatpush1.msra.mxu0 0.0
      %7465 = vmatprep.subr.mxu0 0.0
      %7466 = vmatpush1.msra.mxu0 0.0
      %7467 = vmatprep.subr.mxu0 0.0
      %7468 = vmatpush1.msra.mxu0 0.0
      %7469 = vmatprep.subr.mxu0 0.0
      %7470 = vmatpush1.msra.mxu0 0.0
      %7471 = vmatprep.subr.mxu0 0.0
      %7472 = vmatpush1.msra.mxu0 0.0
      %7473 = vmatprep.subr.mxu0 0.0
      %7474 = vmatpush1.msra.mxu0 0.0
      %7475 = vmatprep.subr.mxu0 0.0
      %7476 = vmatpush1.msra.mxu0 0.0
      %7477 = vmatprep.subr.mxu0 0.0
      %7478 = vmatpush1.msra.mxu0 0.0
      %7479 = vmatprep.subr.mxu0 0.0
      %7480 = vmatpush1.msra.mxu0 0.0
      %7481 = vmatprep.subr.mxu0 0.0
      %7482 = vmatpush1.msra.mxu0 0.0
      %7483 = vmatprep.subr.mxu0 0.0
      %7484 = vmatpush1.msra.mxu0 0.0
      %7485 = vmatprep.subr.mxu0 0.0
      %7486 = vmatpush1.msra.mxu0 0.0
      %7487 = vmatprep.subr.mxu0 0.0
      %7488 = vmatpush1.msra.mxu0 0.0
      %7489 = vmatprep.mubr.f32.mxu0 0.0
      %7490 = vmatmul.mubr.f32.gmra.mrb[0].mxu0 %v7419
      %v7491 = vpop.f32.mrb[0].mxu0
      %v7492 = vadd.f32 0.0, %v7491
      %v7493 = vpop.f32.mrb[0].mxu0
      %v7494 = vadd.f32 0.0, %v7493
      %7495 = vdwg.mxu0
      %v7496 = vmul.f32 %v7492, %v6049
      %v7497 = vmul.f32 %v7494, %v6053
      %v7498 = vadd.f32 %v7401, %v7496
      %v7499 = vadd.f32 %v7402, %v7497
      %v7500 = vld [vmem:[%s348 + $0x8] sm:$0xff]
      %v7501 = vld [vmem:[%s348 + $0x10] sm:$0xf]
      %s7502 = scalar_lea.vmem %s3, 560
      %v7503 = vld [vmem:[%s7502] sm:$0xff]
      %v7506 = vcombine.high %v7500, %v7500
      %7507 = vrot.lane.b32.xlu0 %v7500, 112
      %v7508 = vpop.permute.xlu0 %7507
      %7509 = vrot.lane.b32.xlu0 %v7506, 112
      %v7510 = vpop.permute.xlu0 %7509
      %7511 = vrot.lane.b32.xlu0 %v7501, 112
      %v7512 = vpop.permute.xlu0 %7511
      %v7513 = vsel %vm367, %v7508, %v7510
      %v7514 = vsel %vm367, %v7510, %v7512
      %v7516 = vsel %vm370, %v7503, 0
      %v7518 = vsel %vm374, %v7513, 0
      %v7520 = vsel %vm374, %v7514, 0
      %7522 = vmatprep.subr.mxu0 %v7520
      %7523 = vmatpush1.msra.mxu0 %v7518
      %7524 = vmatprep.subr.mxu0 0.0
      %7525 = vmatpush1.msra.mxu0 0.0
      %7526 = vmatprep.subr.mxu0 0.0
      %7527 = vmatpush1.msra.mxu0 0.0
      %7528 = vmatprep.subr.mxu0 0.0
      %7529 = vmatpush1.msra.mxu0 0.0
      %7530 = vmatprep.subr.mxu0 0.0
      %7531 = vmatpush1.msra.mxu0 0.0
      %7532 = vmatprep.subr.mxu0 0.0
      %7533 = vmatpush1.msra.mxu0 0.0
      %7534 = vmatprep.subr.mxu0 0.0
      %7535 = vmatpush1.msra.mxu0 0.0
      %7536 = vmatprep.subr.mxu0 0.0
      %7537 = vmatpush1.msra.mxu0 0.0
      %7538 = vmatprep.subr.mxu0 0.0
      %7539 = vmatpush1.msra.mxu0 0.0
      %7540 = vmatprep.subr.mxu0 0.0
      %7541 = vmatpush1.msra.mxu0 0.0
      %7542 = vmatprep.subr.mxu0 0.0
      %7543 = vmatpush1.msra.mxu0 0.0
      %7544 = vmatprep.subr.mxu0 0.0
      %7545 = vmatpush1.msra.mxu0 0.0
      %7546 = vmatprep.subr.mxu0 0.0
      %7547 = vmatpush1.msra.mxu0 0.0
      %7548 = vmatprep.subr.mxu0 0.0
      %7549 = vmatpush1.msra.mxu0 0.0
      %7550 = vmatprep.subr.mxu0 0.0
      %7551 = vmatpush1.msra.mxu0 0.0
      %7552 = vmatprep.subr.mxu0 0.0
      %7553 = vmatpush1.msra.mxu0 0.0
      %7554 = vmatprep.subr.mxu0 0.0
      %7555 = vmatpush1.msra.mxu0 0.0
      %7556 = vmatprep.subr.mxu0 0.0
      %7557 = vmatpush1.msra.mxu0 0.0
      %7558 = vmatprep.subr.mxu0 0.0
      %7559 = vmatpush1.msra.mxu0 0.0
      %7560 = vmatprep.subr.mxu0 0.0
      %7561 = vmatpush1.msra.mxu0 0.0
      %7562 = vmatprep.subr.mxu0 0.0
      %7563 = vmatpush1.msra.mxu0 0.0
      %7564 = vmatprep.subr.mxu0 0.0
      %7565 = vmatpush1.msra.mxu0 0.0
      %7566 = vmatprep.subr.mxu0 0.0
      %7567 = vmatpush1.msra.mxu0 0.0
      %7568 = vmatprep.subr.mxu0 0.0
      %7569 = vmatpush1.msra.mxu0 0.0
      %7570 = vmatprep.subr.mxu0 0.0
      %7571 = vmatpush1.msra.mxu0 0.0
      %7572 = vmatprep.subr.mxu0 0.0
      %7573 = vmatpush1.msra.mxu0 0.0
      %7574 = vmatprep.subr.mxu0 0.0
      %7575 = vmatpush1.msra.mxu0 0.0
      %7576 = vmatprep.subr.mxu0 0.0
      %7577 = vmatpush1.msra.mxu0 0.0
      %7578 = vmatprep.subr.mxu0 0.0
      %7579 = vmatpush1.msra.mxu0 0.0
      %7580 = vmatprep.subr.mxu0 0.0
      %7581 = vmatpush1.msra.mxu0 0.0
      %7582 = vmatprep.subr.mxu0 0.0
      %7583 = vmatpush1.msra.mxu0 0.0
      %7584 = vmatprep.subr.mxu0 0.0
      %7585 = vmatpush1.msra.mxu0 0.0
      %7586 = vmatprep.mubr.f32.mxu0 0.0
      %7587 = vmatmul.mubr.f32.gmra.mrb[0].mxu0 %v7516
      %v7588 = vpop.f32.mrb[0].mxu0
      %v7589 = vadd.f32 0.0, %v7588
      %v7590 = vpop.f32.mrb[0].mxu0
      %v7591 = vadd.f32 0.0, %v7590
      %7592 = vdwg.mxu0
      %v7593 = vadd.f32 %v7498, %v7589
      %v7594 = vadd.f32 %v7499, %v7591
      %v7595 = vld [vmem:[%s348 + $0x8] sm:$0xff]
      %v7596 = vld [vmem:[%s348 + $0x10] sm:$0xf]
      %s7597 = scalar_lea.vmem %s3, 568
      %v7598 = vld [vmem:[%s7597] sm:$0xff]
      %v7601 = vcombine.high %v7595, %v7595
      %7602 = vrot.lane.b32.xlu0 %v7595, 104
      %v7603 = vpop.permute.xlu0 %7602
      %7604 = vrot.lane.b32.xlu0 %v7601, 104
      %v7605 = vpop.permute.xlu0 %7604
      %7606 = vrot.lane.b32.xlu0 %v7596, 104
      %v7607 = vpop.permute.xlu0 %7606
      %v7608 = vsel %vm6166, %v7603, %v7605
      %v7609 = vsel %vm6166, %v7605, %v7607
      %v7611 = vsel %vm370, %v7598, 0
      %v7613 = vsel %vm374, %v7608, 0
      %v7615 = vsel %vm374, %v7609, 0
      %7617 = vmatprep.subr.mxu0 %v7615
      %7618 = vmatpush1.msra.mxu0 %v7613
      %7619 = vmatprep.subr.mxu0 0.0
      %7620 = vmatpush1.msra.mxu0 0.0
      %7621 = vmatprep.subr.mxu0 0.0
      %7622 = vmatpush1.msra.mxu0 0.0
      %7623 = vmatprep.subr.mxu0 0.0
      %7624 = vmatpush1.msra.mxu0 0.0
      %7625 = vmatprep.subr.mxu0 0.0
      %7626 = vmatpush1.msra.mxu0 0.0
      %7627 = vmatprep.subr.mxu0 0.0
      %7628 = vmatpush1.msra.mxu0 0.0
      %7629 = vmatprep.subr.mxu0 0.0
      %7630 = vmatpush1.msra.mxu0 0.0
      %7631 = vmatprep.subr.mxu0 0.0
      %7632 = vmatpush1.msra.mxu0 0.0
      %7633 = vmatprep.subr.mxu0 0.0
      %7634 = vmatpush1.msra.mxu0 0.0
      %7635 = vmatprep.subr.mxu0 0.0
      %7636 = vmatpush1.msra.mxu0 0.0
      %7637 = vmatprep.subr.mxu0 0.0
      %7638 = vmatpush1.msra.mxu0 0.0
      %7639 = vmatprep.subr.mxu0 0.0
      %7640 = vmatpush1.msra.mxu0 0.0
      %7641 = vmatprep.subr.mxu0 0.0
      %7642 = vmatpush1.msra.mxu0 0.0
      %7643 = vmatprep.subr.mxu0 0.0
      %7644 = vmatpush1.msra.mxu0 0.0
      %7645 = vmatprep.subr.mxu0 0.0
      %7646 = vmatpush1.msra.mxu0 0.0
      %7647 = vmatprep.subr.mxu0 0.0
      %7648 = vmatpush1.msra.mxu0 0.0
      %7649 = vmatprep.subr.mxu0 0.0
      %7650 = vmatpush1.msra.mxu0 0.0
      %7651 = vmatprep.subr.mxu0 0.0
      %7652 = vmatpush1.msra.mxu0 0.0
      %7653 = vmatprep.subr.mxu0 0.0
      %7654 = vmatpush1.msra.mxu0 0.0
      %7655 = vmatprep.subr.mxu0 0.0
      %7656 = vmatpush1.msra.mxu0 0.0
      %7657 = vmatprep.subr.mxu0 0.0
      %7658 = vmatpush1.msra.mxu0 0.0
      %7659 = vmatprep.subr.mxu0 0.0
      %7660 = vmatpush1.msra.mxu0 0.0
      %7661 = vmatprep.subr.mxu0 0.0
      %7662 = vmatpush1.msra.mxu0 0.0
      %7663 = vmatprep.subr.mxu0 0.0
      %7664 = vmatpush1.msra.mxu0 0.0
      %7665 = vmatprep.subr.mxu0 0.0
      %7666 = vmatpush1.msra.mxu0 0.0
      %7667 = vmatprep.subr.mxu0 0.0
      %7668 = vmatpush1.msra.mxu0 0.0
      %7669 = vmatprep.subr.mxu0 0.0
      %7670 = vmatpush1.msra.mxu0 0.0
      %7671 = vmatprep.subr.mxu0 0.0
      %7672 = vmatpush1.msra.mxu0 0.0
      %7673 = vmatprep.subr.mxu0 0.0
      %7674 = vmatpush1.msra.mxu0 0.0
      %7675 = vmatprep.subr.mxu0 0.0
      %7676 = vmatpush1.msra.mxu0 0.0
      %7677 = vmatprep.subr.mxu0 0.0
      %7678 = vmatpush1.msra.mxu0 0.0
      %7679 = vmatprep.subr.mxu0 0.0
      %7680 = vmatpush1.msra.mxu0 0.0
      %7681 = vmatprep.mubr.f32.mxu0 0.0
      %7682 = vmatmul.mubr.f32.gmra.mrb[0].mxu0 %v7611
      %v7683 = vpop.f32.mrb[0].mxu0
      %v7684 = vadd.f32 0.0, %v7683
      %v7685 = vpop.f32.mrb[0].mxu0
      %v7686 = vadd.f32 0.0, %v7685
      %7687 = vdwg.mxu0
      %v7688 = vmul.f32 %v7684, %v6253
      %v7689 = vmul.f32 %v7686, %v6257
      %v7690 = vadd.f32 %v7593, %v7688
      %v7691 = vadd.f32 %v7594, %v7689
      %s7692 = sadd.s32 %s24, 16
      %s7693 = smul.u32 %s7692, 5
      %s7694 = smul.addr %s7693, 4
      %s7695 = scalar_lea.vmem %s331, %s7694
      %v7696 = vld [vmem:[%s7695] sm:$0xff]
      %v7697 = vld [vmem:[%s7695 + $0x8] sm:$0xf]
      %s7698 = scalar_lea.vmem %s3, 576
      %v7699 = vld [vmem:[%s7698] sm:$0xff]
      %v7702 = vcombine.high %v7696, %v7696
      %7703 = vrot.lane.b32.xlu0 %v7696, 120
      %v7704 = vpop.permute.xlu0 %7703
      %7705 = vrot.lane.b32.xlu0 %v7702, 120
      %v7706 = vpop.permute.xlu0 %7705
      %7707 = vrot.lane.b32.xlu0 %v7697, 120
      %v7708 = vpop.permute.xlu0 %7707
      %v7709 = vsel %vm5962, %v7704, %v7706
      %v7710 = vsel %vm5962, %v7706, %v7708
      %v7712 = vsel %vm370, %v7699, 0
      %v7714 = vsel %vm374, %v7709, 0
      %v7716 = vsel %vm374, %v7710, 0
      %7718 = vmatprep.subr.mxu0 %v7716
      %7719 = vmatpush1.msra.mxu0 %v7714
      %7720 = vmatprep.subr.mxu0 0.0
      %7721 = vmatpush1.msra.mxu0 0.0
      %7722 = vmatprep.subr.mxu0 0.0
      %7723 = vmatpush1.msra.mxu0 0.0
      %7724 = vmatprep.subr.mxu0 0.0
      %7725 = vmatpush1.msra.mxu0 0.0
      %7726 = vmatprep.subr.mxu0 0.0
      %7727 = vmatpush1.msra.mxu0 0.0
      %7728 = vmatprep.subr.mxu0 0.0
      %7729 = vmatpush1.msra.mxu0 0.0
      %7730 = vmatprep.subr.mxu0 0.0
      %7731 = vmatpush1.msra.mxu0 0.0
      %7732 = vmatprep.subr.mxu0 0.0
      %7733 = vmatpush1.msra.mxu0 0.0
      %7734 = vmatprep.subr.mxu0 0.0
      %7735 = vmatpush1.msra.mxu0 0.0
      %7736 = vmatprep.subr.mxu0 0.0
      %7737 = vmatpush1.msra.mxu0 0.0
      %7738 = vmatprep.subr.mxu0 0.0
      %7739 = vmatpush1.msra.mxu0 0.0
      %7740 = vmatprep.subr.mxu0 0.0
      %7741 = vmatpush1.msra.mxu0 0.0
      %7742 = vmatprep.subr.mxu0 0.0
      %7743 = vmatpush1.msra.mxu0 0.0
      %7744 = vmatprep.subr.mxu0 0.0
      %7745 = vmatpush1.msra.mxu0 0.0
      %7746 = vmatprep.subr.mxu0 0.0
      %7747 = vmatpush1.msra.mxu0 0.0
      %7748 = vmatprep.subr.mxu0 0.0
      %7749 = vmatpush1.msra.mxu0 0.0
      %7750 = vmatprep.subr.mxu0 0.0
      %7751 = vmatpush1.msra.mxu0 0.0
      %7752 = vmatprep.subr.mxu0 0.0
      %7753 = vmatpush1.msra.mxu0 0.0
      %7754 = vmatprep.subr.mxu0 0.0
      %7755 = vmatpush1.msra.mxu0 0.0
      %7756 = vmatprep.subr.mxu0 0.0
      %7757 = vmatpush1.msra.mxu0 0.0
      %7758 = vmatprep.subr.mxu0 0.0
      %7759 = vmatpush1.msra.mxu0 0.0
      %7760 = vmatprep.subr.mxu0 0.0
      %7761 = vmatpush1.msra.mxu0 0.0
      %7762 = vmatprep.subr.mxu0 0.0
      %7763 = vmatpush1.msra.mxu0 0.0
      %7764 = vmatprep.subr.mxu0 0.0
      %7765 = vmatpush1.msra.mxu0 0.0
      %7766 = vmatprep.subr.mxu0 0.0
      %7767 = vmatpush1.msra.mxu0 0.0
      %7768 = vmatprep.subr.mxu0 0.0
      %7769 = vmatpush1.msra.mxu0 0.0
      %7770 = vmatprep.subr.mxu0 0.0
      %7771 = vmatpush1.msra.mxu0 0.0
      %7772 = vmatprep.subr.mxu0 0.0
      %7773 = vmatpush1.msra.mxu0 0.0
      %7774 = vmatprep.subr.mxu0 0.0
      %7775 = vmatpush1.msra.mxu0 0.0
      %7776 = vmatprep.subr.mxu0 0.0
      %7777 = vmatpush1.msra.mxu0 0.0
      %7778 = vmatprep.subr.mxu0 0.0
      %7779 = vmatpush1.msra.mxu0 0.0
      %7780 = vmatprep.subr.mxu0 0.0
      %7781 = vmatpush1.msra.mxu0 0.0
      %7782 = vmatprep.mubr.f32.mxu0 0.0
      %7783 = vmatmul.mubr.f32.gmra.mrb[0].mxu0 %v7712
      %v7784 = vpop.f32.mrb[0].mxu0
      %v7785 = vadd.f32 0.0, %v7784
      %v7786 = vpop.f32.mrb[0].mxu0
      %v7787 = vadd.f32 0.0, %v7786
      %7788 = vdwg.mxu0
      %v7789 = vmul.f32 %v7785, %v6049
      %v7790 = vmul.f32 %v7787, %v6053
      %v7791 = vadd.f32 %v7690, %v7789
      %v7792 = vadd.f32 %v7691, %v7790
      %v7793 = vld [vmem:[%s7695] sm:$0xff]
      %v7794 = vld [vmem:[%s7695 + $0x8] sm:$0xf]
      %s7795 = scalar_lea.vmem %s3, 584
      %v7796 = vld [vmem:[%s7795] sm:$0xff]
      %v7799 = vcombine.high %v7793, %v7793
      %7800 = vrot.lane.b32.xlu0 %v7793, 112
      %v7801 = vpop.permute.xlu0 %7800
      %7802 = vrot.lane.b32.xlu0 %v7799, 112
      %v7803 = vpop.permute.xlu0 %7802
      %7804 = vrot.lane.b32.xlu0 %v7794, 112
      %v7805 = vpop.permute.xlu0 %7804
      %v7806 = vsel %vm367, %v7801, %v7803
      %v7807 = vsel %vm367, %v7803, %v7805
      %v7809 = vsel %vm370, %v7796, 0
      %v7811 = vsel %vm374, %v7806, 0
      %v7813 = vsel %vm374, %v7807, 0
      %7815 = vmatprep.subr.mxu0 %v7813
      %7816 = vmatpush1.msra.mxu0 %v7811
      %7817 = vmatprep.subr.mxu0 0.0
      %7818 = vmatpush1.msra.mxu0 0.0
      %7819 = vmatprep.subr.mxu0 0.0
      %7820 = vmatpush1.msra.mxu0 0.0
      %7821 = vmatprep.subr.mxu0 0.0
      %7822 = vmatpush1.msra.mxu0 0.0
      %7823 = vmatprep.subr.mxu0 0.0
      %7824 = vmatpush1.msra.mxu0 0.0
      %7825 = vmatprep.subr.mxu0 0.0
      %7826 = vmatpush1.msra.mxu0 0.0
      %7827 = vmatprep.subr.mxu0 0.0
      %7828 = vmatpush1.msra.mxu0 0.0
      %7829 = vmatprep.subr.mxu0 0.0
      %7830 = vmatpush1.msra.mxu0 0.0
      %7831 = vmatprep.subr.mxu0 0.0
      %7832 = vmatpush1.msra.mxu0 0.0
      %7833 = vmatprep.subr.mxu0 0.0
      %7834 = vmatpush1.msra.mxu0 0.0
      %7835 = vmatprep.subr.mxu0 0.0
      %7836 = vmatpush1.msra.mxu0 0.0
      %7837 = vmatprep.subr.mxu0 0.0
      %7838 = vmatpush1.msra.mxu0 0.0
      %7839 = vmatprep.subr.mxu0 0.0
      %7840 = vmatpush1.msra.mxu0 0.0
      %7841 = vmatprep.subr.mxu0 0.0
      %7842 = vmatpush1.msra.mxu0 0.0
      %7843 = vmatprep.subr.mxu0 0.0
      %7844 = vmatpush1.msra.mxu0 0.0
      %7845 = vmatprep.subr.mxu0 0.0
      %7846 = vmatpush1.msra.mxu0 0.0
      %7847 = vmatprep.subr.mxu0 0.0
      %7848 = vmatpush1.msra.mxu0 0.0
      %7849 = vmatprep.subr.mxu0 0.0
      %7850 = vmatpush1.msra.mxu0 0.0
      %7851 = vmatprep.subr.mxu0 0.0
      %7852 = vmatpush1.msra.mxu0 0.0
      %7853 = vmatprep.subr.mxu0 0.0
      %7854 = vmatpush1.msra.mxu0 0.0
      %7855 = vmatprep.subr.mxu0 0.0
      %7856 = vmatpush1.msra.mxu0 0.0
      %7857 = vmatprep.subr.mxu0 0.0
      %7858 = vmatpush1.msra.mxu0 0.0
      %7859 = vmatprep.subr.mxu0 0.0
      %7860 = vmatpush1.msra.mxu0 0.0
      %7861 = vmatprep.subr.mxu0 0.0
      %7862 = vmatpush1.msra.mxu0 0.0
      %7863 = vmatprep.subr.mxu0 0.0
      %7864 = vmatpush1.msra.mxu0 0.0
      %7865 = vmatprep.subr.mxu0 0.0
      %7866 = vmatpush1.msra.mxu0 0.0
      %7867 = vmatprep.subr.mxu0 0.0
      %7868 = vmatpush1.msra.mxu0 0.0
      %7869 = vmatprep.subr.mxu0 0.0
      %7870 = vmatpush1.msra.mxu0 0.0
      %7871 = vmatprep.subr.mxu0 0.0
      %7872 = vmatpush1.msra.mxu0 0.0
      %7873 = vmatprep.subr.mxu0 0.0
      %7874 = vmatpush1.msra.mxu0 0.0
      %7875 = vmatprep.subr.mxu0 0.0
      %7876 = vmatpush1.msra.mxu0 0.0
      %7877 = vmatprep.subr.mxu0 0.0
      %7878 = vmatpush1.msra.mxu0 0.0
      %7879 = vmatprep.mubr.f32.mxu0 0.0
      %7880 = vmatmul.mubr.f32.gmra.mrb[0].mxu0 %v7809
      %v7881 = vpop.f32.mrb[0].mxu0
      %v7882 = vadd.f32 0.0, %v7881
      %v7883 = vpop.f32.mrb[0].mxu0
      %v7884 = vadd.f32 0.0, %v7883
      %7885 = vdwg.mxu0
      %v7886 = vadd.f32 %v7791, %v7882
      %v7887 = vadd.f32 %v7792, %v7884
      %v7888 = vld [vmem:[%s7695] sm:$0xff]
      %v7889 = vld [vmem:[%s7695 + $0x8] sm:$0xf]
      %s7890 = scalar_lea.vmem %s3, 592
      %v7891 = vld [vmem:[%s7890] sm:$0xff]
      %v7894 = vcombine.high %v7888, %v7888
      %7895 = vrot.lane.b32.xlu0 %v7888, 104
      %v7896 = vpop.permute.xlu0 %7895
      %7897 = vrot.lane.b32.xlu0 %v7894, 104
      %v7898 = vpop.permute.xlu0 %7897
      %7899 = vrot.lane.b32.xlu0 %v7889, 104
      %v7900 = vpop.permute.xlu0 %7899
      %v7901 = vsel %vm6166, %v7896, %v7898
      %v7902 = vsel %vm6166, %v7898, %v7900
      %v7904 = vsel %vm370, %v7891, 0
      %v7906 = vsel %vm374, %v7901, 0
      %v7908 = vsel %vm374, %v7902, 0
      %7910 = vmatprep.subr.mxu0 %v7908
      %7911 = vmatpush1.msra.mxu0 %v7906
      %7912 = vmatprep.subr.mxu0 0.0
      %7913 = vmatpush1.msra.mxu0 0.0
      %7914 = vmatprep.subr.mxu0 0.0
      %7915 = vmatpush1.msra.mxu0 0.0
      %7916 = vmatprep.subr.mxu0 0.0
      %7917 = vmatpush1.msra.mxu0 0.0
      %7918 = vmatprep.subr.mxu0 0.0
      %7919 = vmatpush1.msra.mxu0 0.0
      %7920 = vmatprep.subr.mxu0 0.0
      %7921 = vmatpush1.msra.mxu0 0.0
      %7922 = vmatprep.subr.mxu0 0.0
      %7923 = vmatpush1.msra.mxu0 0.0
      %7924 = vmatprep.subr.mxu0 0.0
      %7925 = vmatpush1.msra.mxu0 0.0
      %7926 = vmatprep.subr.mxu0 0.0
      %7927 = vmatpush1.msra.mxu0 0.0
      %7928 = vmatprep.subr.mxu0 0.0
      %7929 = vmatpush1.msra.mxu0 0.0
      %7930 = vmatprep.subr.mxu0 0.0
      %7931 = vmatpush1.msra.mxu0 0.0
      %7932 = vmatprep.subr.mxu0 0.0
      %7933 = vmatpush1.msra.mxu0 0.0
      %7934 = vmatprep.subr.mxu0 0.0
      %7935 = vmatpush1.msra.mxu0 0.0
      %7936 = vmatprep.subr.mxu0 0.0
      %7937 = vmatpush1.msra.mxu0 0.0
      %7938 = vmatprep.subr.mxu0 0.0
      %7939 = vmatpush1.msra.mxu0 0.0
      %7940 = vmatprep.subr.mxu0 0.0
      %7941 = vmatpush1.msra.mxu0 0.0
      %7942 = vmatprep.subr.mxu0 0.0
      %7943 = vmatpush1.msra.mxu0 0.0
      %7944 = vmatprep.subr.mxu0 0.0
      %7945 = vmatpush1.msra.mxu0 0.0
      %7946 = vmatprep.subr.mxu0 0.0
      %7947 = vmatpush1.msra.mxu0 0.0
      %7948 = vmatprep.subr.mxu0 0.0
      %7949 = vmatpush1.msra.mxu0 0.0
      %7950 = vmatprep.subr.mxu0 0.0
      %7951 = vmatpush1.msra.mxu0 0.0
      %7952 = vmatprep.subr.mxu0 0.0
      %7953 = vmatpush1.msra.mxu0 0.0
      %7954 = vmatprep.subr.mxu0 0.0
      %7955 = vmatpush1.msra.mxu0 0.0
      %7956 = vmatprep.subr.mxu0 0.0
      %7957 = vmatpush1.msra.mxu0 0.0
      %7958 = vmatprep.subr.mxu0 0.0
      %7959 = vmatpush1.msra.mxu0 0.0
      %7960 = vmatprep.subr.mxu0 0.0
      %7961 = vmatpush1.msra.mxu0 0.0
      %7962 = vmatprep.subr.mxu0 0.0
      %7963 = vmatpush1.msra.mxu0 0.0
      %7964 = vmatprep.subr.mxu0 0.0
      %7965 = vmatpush1.msra.mxu0 0.0
      %7966 = vmatprep.subr.mxu0 0.0
      %7967 = vmatpush1.msra.mxu0 0.0
      %7968 = vmatprep.subr.mxu0 0.0
      %7969 = vmatpush1.msra.mxu0 0.0
      %7970 = vmatprep.subr.mxu0 0.0
      %7971 = vmatpush1.msra.mxu0 0.0
      %7972 = vmatprep.subr.mxu0 0.0
      %7973 = vmatpush1.msra.mxu0 0.0
      %7974 = vmatprep.mubr.f32.mxu0 0.0
      %7975 = vmatmul.mubr.f32.gmra.mrb[0].mxu0 %v7904
      %v7976 = vpop.f32.mrb[0].mxu0
      %v7977 = vadd.f32 0.0, %v7976
      %v7978 = vpop.f32.mrb[0].mxu0
      %v7979 = vadd.f32 0.0, %v7978
      %7980 = vdwg.mxu0
      %v7981 = vmul.f32 %v7977, %v6253
      %v7982 = vmul.f32 %v7979, %v6257
      %v7983 = vadd.f32 %v7886, %v7981
      %v7984 = vadd.f32 %v7887, %v7982
      %v7985 = vld [vmem:[%s7695 + $0x4] sm:$0xff]
      %v7986 = vld [vmem:[%s7695 + $0xc] sm:$0xf]
      %s7987 = scalar_lea.vmem %s3, 600
      %v7988 = vld [vmem:[%s7987] sm:$0xff]
      %v7991 = vcombine.high %v7985, %v7985
      %7992 = vrot.lane.b32.xlu0 %v7985, 120
      %v7993 = vpop.permute.xlu0 %7992
      %7994 = vrot.lane.b32.xlu0 %v7991, 120
      %v7995 = vpop.permute.xlu0 %7994
      %7996 = vrot.lane.b32.xlu0 %v7986, 120
      %v7997 = vpop.permute.xlu0 %7996
      %v7998 = vsel %vm5962, %v7993, %v7995
      %v7999 = vsel %vm5962, %v7995, %v7997
      %v8001 = vsel %vm370, %v7988, 0
      %v8003 = vsel %vm374, %v7998, 0
      %v8005 = vsel %vm374, %v7999, 0
      %8007 = vmatprep.subr.mxu0 %v8005
      %8008 = vmatpush1.msra.mxu0 %v8003
      %8009 = vmatprep.subr.mxu0 0.0
      %8010 = vmatpush1.msra.mxu0 0.0
      %8011 = vmatprep.subr.mxu0 0.0
      %8012 = vmatpush1.msra.mxu0 0.0
      %8013 = vmatprep.subr.mxu0 0.0
      %8014 = vmatpush1.msra.mxu0 0.0
      %8015 = vmatprep.subr.mxu0 0.0
      %8016 = vmatpush1.msra.mxu0 0.0
      %8017 = vmatprep.subr.mxu0 0.0
      %8018 = vmatpush1.msra.mxu0 0.0
      %8019 = vmatprep.subr.mxu0 0.0
      %8020 = vmatpush1.msra.mxu0 0.0
      %8021 = vmatprep.subr.mxu0 0.0
      %8022 = vmatpush1.msra.mxu0 0.0
      %8023 = vmatprep.subr.mxu0 0.0
      %8024 = vmatpush1.msra.mxu0 0.0
      %8025 = vmatprep.subr.mxu0 0.0
      %8026 = vmatpush1.msra.mxu0 0.0
      %8027 = vmatprep.subr.mxu0 0.0
      %8028 = vmatpush1.msra.mxu0 0.0
      %8029 = vmatprep.subr.mxu0 0.0
      %8030 = vmatpush1.msra.mxu0 0.0
      %8031 = vmatprep.subr.mxu0 0.0
      %8032 = vmatpush1.msra.mxu0 0.0
      %8033 = vmatprep.subr.mxu0 0.0
      %8034 = vmatpush1.msra.mxu0 0.0
      %8035 = vmatprep.subr.mxu0 0.0
      %8036 = vmatpush1.msra.mxu0 0.0
      %8037 = vmatprep.subr.mxu0 0.0
      %8038 = vmatpush1.msra.mxu0 0.0
      %8039 = vmatprep.subr.mxu0 0.0
      %8040 = vmatpush1.msra.mxu0 0.0
      %8041 = vmatprep.subr.mxu0 0.0
      %8042 = vmatpush1.msra.mxu0 0.0
      %8043 = vmatprep.subr.mxu0 0.0
      %8044 = vmatpush1.msra.mxu0 0.0
      %8045 = vmatprep.subr.mxu0 0.0
      %8046 = vmatpush1.msra.mxu0 0.0
      %8047 = vmatprep.subr.mxu0 0.0
      %8048 = vmatpush1.msra.mxu0 0.0
      %8049 = vmatprep.subr.mxu0 0.0
      %8050 = vmatpush1.msra.mxu0 0.0
      %8051 = vmatprep.subr.mxu0 0.0
      %8052 = vmatpush1.msra.mxu0 0.0
      %8053 = vmatprep.subr.mxu0 0.0
      %8054 = vmatpush1.msra.mxu0 0.0
      %8055 = vmatprep.subr.mxu0 0.0
      %8056 = vmatpush1.msra.mxu0 0.0
      %8057 = vmatprep.subr.mxu0 0.0
      %8058 = vmatpush1.msra.mxu0 0.0
      %8059 = vmatprep.subr.mxu0 0.0
      %8060 = vmatpush1.msra.mxu0 0.0
      %8061 = vmatprep.subr.mxu0 0.0
      %8062 = vmatpush1.msra.mxu0 0.0
      %8063 = vmatprep.subr.mxu0 0.0
      %8064 = vmatpush1.msra.mxu0 0.0
      %8065 = vmatprep.subr.mxu0 0.0
      %8066 = vmatpush1.msra.mxu0 0.0
      %8067 = vmatprep.subr.mxu0 0.0
      %8068 = vmatpush1.msra.mxu0 0.0
      %8069 = vmatprep.subr.mxu0 0.0
      %8070 = vmatpush1.msra.mxu0 0.0
      %8071 = vmatprep.mubr.f32.mxu0 0.0
      %8072 = vmatmul.mubr.f32.gmra.mrb[0].mxu0 %v8001
      %v8073 = vpop.f32.mrb[0].mxu0
      %v8074 = vadd.f32 0.0, %v8073
      %v8075 = vpop.f32.mrb[0].mxu0
      %v8076 = vadd.f32 0.0, %v8075
      %8077 = vdwg.mxu0
      %v8078 = vmul.f32 %v8074, %v6049
      %v8079 = vmul.f32 %v8076, %v6053
      %v8080 = vadd.f32 %v7983, %v8078
      %v8081 = vadd.f32 %v7984, %v8079
      %v8082 = vld [vmem:[%s7695 + $0x4] sm:$0xff]
      %v8083 = vld [vmem:[%s7695 + $0xc] sm:$0xf]
      %s8084 = scalar_lea.vmem %s3, 608
      %v8085 = vld [vmem:[%s8084] sm:$0xff]
      %v8088 = vcombine.high %v8082, %v8082
      %8089 = vrot.lane.b32.xlu0 %v8082, 112
      %v8090 = vpop.permute.xlu0 %8089
      %8091 = vrot.lane.b32.xlu0 %v8088, 112
      %v8092 = vpop.permute.xlu0 %8091
      %8093 = vrot.lane.b32.xlu0 %v8083, 112
      %v8094 = vpop.permute.xlu0 %8093
      %v8095 = vsel %vm367, %v8090, %v8092
      %v8096 = vsel %vm367, %v8092, %v8094
      %v8098 = vsel %vm370, %v8085, 0
      %v8100 = vsel %vm374, %v8095, 0
      %v8102 = vsel %vm374, %v8096, 0
      %8104 = vmatprep.subr.mxu0 %v8102
      %8105 = vmatpush1.msra.mxu0 %v8100
      %8106 = vmatprep.subr.mxu0 0.0
      %8107 = vmatpush1.msra.mxu0 0.0
      %8108 = vmatprep.subr.mxu0 0.0
      %8109 = vmatpush1.msra.mxu0 0.0
      %8110 = vmatprep.subr.mxu0 0.0
      %8111 = vmatpush1.msra.mxu0 0.0
      %8112 = vmatprep.subr.mxu0 0.0
      %8113 = vmatpush1.msra.mxu0 0.0
      %8114 = vmatprep.subr.mxu0 0.0
      %8115 = vmatpush1.msra.mxu0 0.0
      %8116 = vmatprep.subr.mxu0 0.0
      %8117 = vmatpush1.msra.mxu0 0.0
      %8118 = vmatprep.subr.mxu0 0.0
      %8119 = vmatpush1.msra.mxu0 0.0
      %8120 = vmatprep.subr.mxu0 0.0
      %8121 = vmatpush1.msra.mxu0 0.0
      %8122 = vmatprep.subr.mxu0 0.0
      %8123 = vmatpush1.msra.mxu0 0.0
      %8124 = vmatprep.subr.mxu0 0.0
      %8125 = vmatpush1.msra.mxu0 0.0
      %8126 = vmatprep.subr.mxu0 0.0
      %8127 = vmatpush1.msra.mxu0 0.0
      %8128 = vmatprep.subr.mxu0 0.0
      %8129 = vmatpush1.msra.mxu0 0.0
      %8130 = vmatprep.subr.mxu0 0.0
      %8131 = vmatpush1.msra.mxu0 0.0
      %8132 = vmatprep.subr.mxu0 0.0
      %8133 = vmatpush1.msra.mxu0 0.0
      %8134 = vmatprep.subr.mxu0 0.0
      %8135 = vmatpush1.msra.mxu0 0.0
      %8136 = vmatprep.subr.mxu0 0.0
      %8137 = vmatpush1.msra.mxu0 0.0
      %8138 = vmatprep.subr.mxu0 0.0
      %8139 = vmatpush1.msra.mxu0 0.0
      %8140 = vmatprep.subr.mxu0 0.0
      %8141 = vmatpush1.msra.mxu0 0.0
      %8142 = vmatprep.subr.mxu0 0.0
      %8143 = vmatpush1.msra.mxu0 0.0
      %8144 = vmatprep.subr.mxu0 0.0
      %8145 = vmatpush1.msra.mxu0 0.0
      %8146 = vmatprep.subr.mxu0 0.0
      %8147 = vmatpush1.msra.mxu0 0.0
      %8148 = vmatprep.subr.mxu0 0.0
      %8149 = vmatpush1.msra.mxu0 0.0
      %8150 = vmatprep.subr.mxu0 0.0
      %8151 = vmatpush1.msra.mxu0 0.0
      %8152 = vmatprep.subr.mxu0 0.0
      %8153 = vmatpush1.msra.mxu0 0.0
      %8154 = vmatprep.subr.mxu0 0.0
      %8155 = vmatpush1.msra.mxu0 0.0
      %8156 = vmatprep.subr.mxu0 0.0
      %8157 = vmatpush1.msra.mxu0 0.0
      %8158 = vmatprep.subr.mxu0 0.0
      %8159 = vmatpush1.msra.mxu0 0.0
      %8160 = vmatprep.subr.mxu0 0.0
      %8161 = vmatpush1.msra.mxu0 0.0
      %8162 = vmatprep.subr.mxu0 0.0
      %8163 = vmatpush1.msra.mxu0 0.0
      %8164 = vmatprep.subr.mxu0 0.0
      %8165 = vmatpush1.msra.mxu0 0.0
      %8166 = vmatprep.subr.mxu0 0.0
      %8167 = vmatpush1.msra.mxu0 0.0
      %8168 = vmatprep.mubr.f32.mxu0 0.0
      %8169 = vmatmul.mubr.f32.gmra.mrb[0].mxu0 %v8098
      %v8170 = vpop.f32.mrb[0].mxu0
      %v8171 = vadd.f32 0.0, %v8170
      %v8172 = vpop.f32.mrb[0].mxu0
      %v8173 = vadd.f32 0.0, %v8172
      %8174 = vdwg.mxu0
      %v8175 = vadd.f32 %v8080, %v8171
      %v8176 = vadd.f32 %v8081, %v8173
      %v8177 = vld [vmem:[%s7695 + $0x4] sm:$0xff]
      %v8178 = vld [vmem:[%s7695 + $0xc] sm:$0xf]
      %s8179 = scalar_lea.vmem %s3, 616
      %v8180 = vld [vmem:[%s8179] sm:$0xff]
      %v8183 = vcombine.high %v8177, %v8177
      %8184 = vrot.lane.b32.xlu0 %v8177, 104
      %v8185 = vpop.permute.xlu0 %8184
      %8186 = vrot.lane.b32.xlu0 %v8183, 104
      %v8187 = vpop.permute.xlu0 %8186
      %8188 = vrot.lane.b32.xlu0 %v8178, 104
      %v8189 = vpop.permute.xlu0 %8188
      %v8190 = vsel %vm6166, %v8185, %v8187
      %v8191 = vsel %vm6166, %v8187, %v8189
      %v8193 = vsel %vm370, %v8180, 0
      %v8195 = vsel %vm374, %v8190, 0
      %v8197 = vsel %vm374, %v8191, 0
      %8199 = vmatprep.subr.mxu0 %v8197
      %8200 = vmatpush1.msra.mxu0 %v8195
      %8201 = vmatprep.subr.mxu0 0.0
      %8202 = vmatpush1.msra.mxu0 0.0
      %8203 = vmatprep.subr.mxu0 0.0
      %8204 = vmatpush1.msra.mxu0 0.0
      %8205 = vmatprep.subr.mxu0 0.0
      %8206 = vmatpush1.msra.mxu0 0.0
      %8207 = vmatprep.subr.mxu0 0.0
      %8208 = vmatpush1.msra.mxu0 0.0
      %8209 = vmatprep.subr.mxu0 0.0
      %8210 = vmatpush1.msra.mxu0 0.0
      %8211 = vmatprep.subr.mxu0 0.0
      %8212 = vmatpush1.msra.mxu0 0.0
      %8213 = vmatprep.subr.mxu0 0.0
      %8214 = vmatpush1.msra.mxu0 0.0
      %8215 = vmatprep.subr.mxu0 0.0
      %8216 = vmatpush1.msra.mxu0 0.0
      %8217 = vmatprep.subr.mxu0 0.0
      %8218 = vmatpush1.msra.mxu0 0.0
      %8219 = vmatprep.subr.mxu0 0.0
      %8220 = vmatpush1.msra.mxu0 0.0
      %8221 = vmatprep.subr.mxu0 0.0
      %8222 = vmatpush1.msra.mxu0 0.0
      %8223 = vmatprep.subr.mxu0 0.0
      %8224 = vmatpush1.msra.mxu0 0.0
      %8225 = vmatprep.subr.mxu0 0.0
      %8226 = vmatpush1.msra.mxu0 0.0
      %8227 = vmatprep.subr.mxu0 0.0
      %8228 = vmatpush1.msra.mxu0 0.0
      %8229 = vmatprep.subr.mxu0 0.0
      %8230 = vmatpush1.msra.mxu0 0.0
      %8231 = vmatprep.subr.mxu0 0.0
      %8232 = vmatpush1.msra.mxu0 0.0
      %8233 = vmatprep.subr.mxu0 0.0
      %8234 = vmatpush1.msra.mxu0 0.0
      %8235 = vmatprep.subr.mxu0 0.0
      %8236 = vmatpush1.msra.mxu0 0.0
      %8237 = vmatprep.subr.mxu0 0.0
      %8238 = vmatpush1.msra.mxu0 0.0
      %8239 = vmatprep.subr.mxu0 0.0
      %8240 = vmatpush1.msra.mxu0 0.0
      %8241 = vmatprep.subr.mxu0 0.0
      %8242 = vmatpush1.msra.mxu0 0.0
      %8243 = vmatprep.subr.mxu0 0.0
      %8244 = vmatpush1.msra.mxu0 0.0
      %8245 = vmatprep.subr.mxu0 0.0
      %8246 = vmatpush1.msra.mxu0 0.0
      %8247 = vmatprep.subr.mxu0 0.0
      %8248 = vmatpush1.msra.mxu0 0.0
      %8249 = vmatprep.subr.mxu0 0.0
      %8250 = vmatpush1.msra.mxu0 0.0
      %8251 = vmatprep.subr.mxu0 0.0
      %8252 = vmatpush1.msra.mxu0 0.0
      %8253 = vmatprep.subr.mxu0 0.0
      %8254 = vmatpush1.msra.mxu0 0.0
      %8255 = vmatprep.subr.mxu0 0.0
      %8256 = vmatpush1.msra.mxu0 0.0
      %8257 = vmatprep.subr.mxu0 0.0
      %8258 = vmatpush1.msra.mxu0 0.0
      %8259 = vmatprep.subr.mxu0 0.0
      %8260 = vmatpush1.msra.mxu0 0.0
      %8261 = vmatprep.subr.mxu0 0.0
      %8262 = vmatpush1.msra.mxu0 0.0
      %8263 = vmatprep.mubr.f32.mxu0 0.0
      %8264 = vmatmul.mubr.f32.gmra.mrb[0].mxu0 %v8193
      %v8265 = vpop.f32.mrb[0].mxu0
      %v8266 = vadd.f32 0.0, %v8265
      %v8267 = vpop.f32.mrb[0].mxu0
      %v8268 = vadd.f32 0.0, %v8267
      %8269 = vdwg.mxu0
      %v8270 = vmul.f32 %v8266, %v6253
      %v8271 = vmul.f32 %v8268, %v6257
      %v8272 = vadd.f32 %v8175, %v8270
      %v8273 = vadd.f32 %v8176, %v8271
      %v8274 = vld [vmem:[%s7695 + $0x8] sm:$0xff]
      %v8275 = vld [vmem:[%s7695 + $0x10] sm:$0xf]
      %s8276 = scalar_lea.vmem %s3, 624
      %v8277 = vld [vmem:[%s8276] sm:$0xff]
      %v8280 = vcombine.high %v8274, %v8274
      %8281 = vrot.lane.b32.xlu0 %v8274, 120
      %v8282 = vpop.permute.xlu0 %8281
      %8283 = vrot.lane.b32.xlu0 %v8280, 120
      %v8284 = vpop.permute.xlu0 %8283
      %8285 = vrot.lane.b32.xlu0 %v8275, 120
      %v8286 = vpop.permute.xlu0 %8285
      %v8287 = vsel %vm5962, %v8282, %v8284
      %v8288 = vsel %vm5962, %v8284, %v8286
      %v8290 = vsel %vm370, %v8277, 0
      %v8292 = vsel %vm374, %v8287, 0
      %v8294 = vsel %vm374, %v8288, 0
      %8296 = vmatprep.subr.mxu0 %v8294
      %8297 = vmatpush1.msra.mxu0 %v8292
      %8298 = vmatprep.subr.mxu0 0.0
      %8299 = vmatpush1.msra.mxu0 0.0
      %8300 = vmatprep.subr.mxu0 0.0
      %8301 = vmatpush1.msra.mxu0 0.0
      %8302 = vmatprep.subr.mxu0 0.0
      %8303 = vmatpush1.msra.mxu0 0.0
      %8304 = vmatprep.subr.mxu0 0.0
      %8305 = vmatpush1.msra.mxu0 0.0
      %8306 = vmatprep.subr.mxu0 0.0
      %8307 = vmatpush1.msra.mxu0 0.0
      %8308 = vmatprep.subr.mxu0 0.0
      %8309 = vmatpush1.msra.mxu0 0.0
      %8310 = vmatprep.subr.mxu0 0.0
      %8311 = vmatpush1.msra.mxu0 0.0
      %8312 = vmatprep.subr.mxu0 0.0
      %8313 = vmatpush1.msra.mxu0 0.0
      %8314 = vmatprep.subr.mxu0 0.0
      %8315 = vmatpush1.msra.mxu0 0.0
      %8316 = vmatprep.subr.mxu0 0.0
      %8317 = vmatpush1.msra.mxu0 0.0
      %8318 = vmatprep.subr.mxu0 0.0
      %8319 = vmatpush1.msra.mxu0 0.0
      %8320 = vmatprep.subr.mxu0 0.0
      %8321 = vmatpush1.msra.mxu0 0.0
      %8322 = vmatprep.subr.mxu0 0.0
      %8323 = vmatpush1.msra.mxu0 0.0
      %8324 = vmatprep.subr.mxu0 0.0
      %8325 = vmatpush1.msra.mxu0 0.0
      %8326 = vmatprep.subr.mxu0 0.0
      %8327 = vmatpush1.msra.mxu0 0.0
      %8328 = vmatprep.subr.mxu0 0.0
      %8329 = vmatpush1.msra.mxu0 0.0
      %8330 = vmatprep.subr.mxu0 0.0
      %8331 = vmatpush1.msra.mxu0 0.0
      %8332 = vmatprep.subr.mxu0 0.0
      %8333 = vmatpush1.msra.mxu0 0.0
      %8334 = vmatprep.subr.mxu0 0.0
      %8335 = vmatpush1.msra.mxu0 0.0
      %8336 = vmatprep.subr.mxu0 0.0
      %8337 = vmatpush1.msra.mxu0 0.0
      %8338 = vmatprep.subr.mxu0 0.0
      %8339 = vmatpush1.msra.mxu0 0.0
      %8340 = vmatprep.subr.mxu0 0.0
      %8341 = vmatpush1.msra.mxu0 0.0
      %8342 = vmatprep.subr.mxu0 0.0
      %8343 = vmatpush1.msra.mxu0 0.0
      %8344 = vmatprep.subr.mxu0 0.0
      %8345 = vmatpush1.msra.mxu0 0.0
      %8346 = vmatprep.subr.mxu0 0.0
      %8347 = vmatpush1.msra.mxu0 0.0
      %8348 = vmatprep.subr.mxu0 0.0
      %8349 = vmatpush1.msra.mxu0 0.0
      %8350 = vmatprep.subr.mxu0 0.0
      %8351 = vmatpush1.msra.mxu0 0.0
      %8352 = vmatprep.subr.mxu0 0.0
      %8353 = vmatpush1.msra.mxu0 0.0
      %8354 = vmatprep.subr.mxu0 0.0
      %8355 = vmatpush1.msra.mxu0 0.0
      %8356 = vmatprep.subr.mxu0 0.0
      %8357 = vmatpush1.msra.mxu0 0.0
      %8358 = vmatprep.subr.mxu0 0.0
      %8359 = vmatpush1.msra.mxu0 0.0
      %8360 = vmatprep.mubr.f32.mxu0 0.0
      %8361 = vmatmul.mubr.f32.gmra.mrb[0].mxu0 %v8290
      %v8362 = vpop.f32.mrb[0].mxu0
      %v8363 = vadd.f32 0.0, %v8362
      %v8364 = vpop.f32.mrb[0].mxu0
      %v8365 = vadd.f32 0.0, %v8364
      %8366 = vdwg.mxu0
      %v8367 = vmul.f32 %v8363, %v6049
      %v8368 = vmul.f32 %v8365, %v6053
      %v8369 = vadd.f32 %v8272, %v8367
      %v8370 = vadd.f32 %v8273, %v8368
      %v8371 = vld [vmem:[%s7695 + $0x8] sm:$0xff]
      %v8372 = vld [vmem:[%s7695 + $0x10] sm:$0xf]
      %s8373 = scalar_lea.vmem %s3, 632
      %v8374 = vld [vmem:[%s8373] sm:$0xff]
      %v8377 = vcombine.high %v8371, %v8371
      %8378 = vrot.lane.b32.xlu0 %v8371, 112
      %v8379 = vpop.permute.xlu0 %8378
      %8380 = vrot.lane.b32.xlu0 %v8377, 112
      %v8381 = vpop.permute.xlu0 %8380
      %8382 = vrot.lane.b32.xlu0 %v8372, 112
      %v8383 = vpop.permute.xlu0 %8382
      %v8384 = vsel %vm367, %v8379, %v8381
      %v8385 = vsel %vm367, %v8381, %v8383
      %v8387 = vsel %vm370, %v8374, 0
      %v8389 = vsel %vm374, %v8384, 0
      %v8391 = vsel %vm374, %v8385, 0
      %8393 = vmatprep.subr.mxu0 %v8391
      %8394 = vmatpush1.msra.mxu0 %v8389
      %8395 = vmatprep.subr.mxu0 0.0
      %8396 = vmatpush1.msra.mxu0 0.0
      %8397 = vmatprep.subr.mxu0 0.0
      %8398 = vmatpush1.msra.mxu0 0.0
      %8399 = vmatprep.subr.mxu0 0.0
      %8400 = vmatpush1.msra.mxu0 0.0
      %8401 = vmatprep.subr.mxu0 0.0
      %8402 = vmatpush1.msra.mxu0 0.0
      %8403 = vmatprep.subr.mxu0 0.0
      %8404 = vmatpush1.msra.mxu0 0.0
      %8405 = vmatprep.subr.mxu0 0.0
      %8406 = vmatpush1.msra.mxu0 0.0
      %8407 = vmatprep.subr.mxu0 0.0
      %8408 = vmatpush1.msra.mxu0 0.0
      %8409 = vmatprep.subr.mxu0 0.0
      %8410 = vmatpush1.msra.mxu0 0.0
      %8411 = vmatprep.subr.mxu0 0.0
      %8412 = vmatpush1.msra.mxu0 0.0
      %8413 = vmatprep.subr.mxu0 0.0
      %8414 = vmatpush1.msra.mxu0 0.0
      %8415 = vmatprep.subr.mxu0 0.0
      %8416 = vmatpush1.msra.mxu0 0.0
      %8417 = vmatprep.subr.mxu0 0.0
      %8418 = vmatpush1.msra.mxu0 0.0
      %8419 = vmatprep.subr.mxu0 0.0
      %8420 = vmatpush1.msra.mxu0 0.0
      %8421 = vmatprep.subr.mxu0 0.0
      %8422 = vmatpush1.msra.mxu0 0.0
      %8423 = vmatprep.subr.mxu0 0.0
      %8424 = vmatpush1.msra.mxu0 0.0
      %8425 = vmatprep.subr.mxu0 0.0
      %8426 = vmatpush1.msra.mxu0 0.0
      %8427 = vmatprep.subr.mxu0 0.0
      %8428 = vmatpush1.msra.mxu0 0.0
      %8429 = vmatprep.subr.mxu0 0.0
      %8430 = vmatpush1.msra.mxu0 0.0
      %8431 = vmatprep.subr.mxu0 0.0
      %8432 = vmatpush1.msra.mxu0 0.0
      %8433 = vmatprep.subr.mxu0 0.0
      %8434 = vmatpush1.msra.mxu0 0.0
      %8435 = vmatprep.subr.mxu0 0.0
      %8436 = vmatpush1.msra.mxu0 0.0
      %8437 = vmatprep.subr.mxu0 0.0
      %8438 = vmatpush1.msra.mxu0 0.0
      %8439 = vmatprep.subr.mxu0 0.0
      %8440 = vmatpush1.msra.mxu0 0.0
      %8441 = vmatprep.subr.mxu0 0.0
      %8442 = vmatpush1.msra.mxu0 0.0
      %8443 = vmatprep.subr.mxu0 0.0
      %8444 = vmatpush1.msra.mxu0 0.0
      %8445 = vmatprep.subr.mxu0 0.0
      %8446 = vmatpush1.msra.mxu0 0.0
      %8447 = vmatprep.subr.mxu0 0.0
      %8448 = vmatpush1.msra.mxu0 0.0
      %8449 = vmatprep.subr.mxu0 0.0
      %8450 = vmatpush1.msra.mxu0 0.0
      %8451 = vmatprep.subr.mxu0 0.0
      %8452 = vmatpush1.msra.mxu0 0.0
      %8453 = vmatprep.subr.mxu0 0.0
      %8454 = vmatpush1.msra.mxu0 0.0
      %8455 = vmatprep.subr.mxu0 0.0
      %8456 = vmatpush1.msra.mxu0 0.0
      %8457 = vmatprep.mubr.f32.mxu0 0.0
      %8458 = vmatmul.mubr.f32.gmra.mrb[0].mxu0 %v8387
      %v8459 = vpop.f32.mrb[0].mxu0
      %v8460 = vadd.f32 0.0, %v8459
      %v8461 = vpop.f32.mrb[0].mxu0
      %v8462 = vadd.f32 0.0, %v8461
      %8463 = vdwg.mxu0
      %v8464 = vadd.f32 %v8369, %v8460
      %v8465 = vadd.f32 %v8370, %v8462
      %v8466 = vld [vmem:[%s7695 + $0x8] sm:$0xff]
      %v8467 = vld [vmem:[%s7695 + $0x10] sm:$0xf]
      %s8468 = scalar_lea.vmem %s3, 640
      %v8469 = vld [vmem:[%s8468] sm:$0xff]
      %v8472 = vcombine.high %v8466, %v8466
      %8473 = vrot.lane.b32.xlu0 %v8466, 104
      %v8474 = vpop.permute.xlu0 %8473
      %8475 = vrot.lane.b32.xlu0 %v8472, 104
      %v8476 = vpop.permute.xlu0 %8475
      %8477 = vrot.lane.b32.xlu0 %v8467, 104
      %v8478 = vpop.permute.xlu0 %8477
      %v8479 = vsel %vm6166, %v8474, %v8476
      %v8480 = vsel %vm6166, %v8476, %v8478
      %v8482 = vsel %vm370, %v8469, 0
      %v8484 = vsel %vm374, %v8479, 0
      %v8486 = vsel %vm374, %v8480, 0
      %8488 = vmatprep.subr.mxu0 %v8486
      %8489 = vmatpush1.msra.mxu0 %v8484
      %8490 = vmatprep.subr.mxu0 0.0
      %8491 = vmatpush1.msra.mxu0 0.0
      %8492 = vmatprep.subr.mxu0 0.0
      %8493 = vmatpush1.msra.mxu0 0.0
      %8494 = vmatprep.subr.mxu0 0.0
      %8495 = vmatpush1.msra.mxu0 0.0
      %8496 = vmatprep.subr.mxu0 0.0
      %8497 = vmatpush1.msra.mxu0 0.0
      %8498 = vmatprep.subr.mxu0 0.0
      %8499 = vmatpush1.msra.mxu0 0.0
      %8500 = vmatprep.subr.mxu0 0.0
      %8501 = vmatpush1.msra.mxu0 0.0
      %8502 = vmatprep.subr.mxu0 0.0
      %8503 = vmatpush1.msra.mxu0 0.0
      %8504 = vmatprep.subr.mxu0 0.0
      %8505 = vmatpush1.msra.mxu0 0.0
      %8506 = vmatprep.subr.mxu0 0.0
      %8507 = vmatpush1.msra.mxu0 0.0
      %8508 = vmatprep.subr.mxu0 0.0
      %8509 = vmatpush1.msra.mxu0 0.0
      %8510 = vmatprep.subr.mxu0 0.0
      %8511 = vmatpush1.msra.mxu0 0.0
      %8512 = vmatprep.subr.mxu0 0.0
      %8513 = vmatpush1.msra.mxu0 0.0
      %8514 = vmatprep.subr.mxu0 0.0
      %8515 = vmatpush1.msra.mxu0 0.0
      %8516 = vmatprep.subr.mxu0 0.0
      %8517 = vmatpush1.msra.mxu0 0.0
      %8518 = vmatprep.subr.mxu0 0.0
      %8519 = vmatpush1.msra.mxu0 0.0
      %8520 = vmatprep.subr.mxu0 0.0
      %8521 = vmatpush1.msra.mxu0 0.0
      %8522 = vmatprep.subr.mxu0 0.0
      %8523 = vmatpush1.msra.mxu0 0.0
      %8524 = vmatprep.subr.mxu0 0.0
      %8525 = vmatpush1.msra.mxu0 0.0
      %8526 = vmatprep.subr.mxu0 0.0
      %8527 = vmatpush1.msra.mxu0 0.0
      %8528 = vmatprep.subr.mxu0 0.0
      %8529 = vmatpush1.msra.mxu0 0.0
      %8530 = vmatprep.subr.mxu0 0.0
      %8531 = vmatpush1.msra.mxu0 0.0
      %8532 = vmatprep.subr.mxu0 0.0
      %8533 = vmatpush1.msra.mxu0 0.0
      %8534 = vmatprep.subr.mxu0 0.0
      %8535 = vmatpush1.msra.mxu0 0.0
      %8536 = vmatprep.subr.mxu0 0.0
      %8537 = vmatpush1.msra.mxu0 0.0
      %8538 = vmatprep.subr.mxu0 0.0
      %8539 = vmatpush1.msra.mxu0 0.0
      %8540 = vmatprep.subr.mxu0 0.0
      %8541 = vmatpush1.msra.mxu0 0.0
      %8542 = vmatprep.subr.mxu0 0.0
      %8543 = vmatpush1.msra.mxu0 0.0
      %8544 = vmatprep.subr.mxu0 0.0
      %8545 = vmatpush1.msra.mxu0 0.0
      %8546 = vmatprep.subr.mxu0 0.0
      %8547 = vmatpush1.msra.mxu0 0.0
      %8548 = vmatprep.subr.mxu0 0.0
      %8549 = vmatpush1.msra.mxu0 0.0
      %8550 = vmatprep.subr.mxu0 0.0
      %8551 = vmatpush1.msra.mxu0 0.0
      %8552 = vmatprep.mubr.f32.mxu0 0.0
      %8553 = vmatmul.mubr.f32.gmra.mrb[0].mxu0 %v8482
      %v8554 = vpop.f32.mrb[0].mxu0
      %v8555 = vadd.f32 0.0, %v8554
      %v8556 = vpop.f32.mrb[0].mxu0
      %v8557 = vadd.f32 0.0, %v8556
      %8558 = vdwg.mxu0
      %v8559 = vmul.f32 %v8555, %v6253
      %v8560 = vmul.f32 %v8557, %v6257
      %v8561 = vadd.f32 %v8464, %v8559
      %v8562 = vadd.f32 %v8465, %v8560
      %s8563 = scalar_lea.vmem %s4, 16
      %v8564 = vld [vmem:[%s8563] sm:$0xff]
      %8566 = vset.pattern.permute.xlu0 0
      %8567 = vperm.xlu0 %8566, %v8564
      %v8568 = vpop.permute.xlu0 %8567
      %v8570 = vadd.f32 %v8561, %v8568
      %v8571 = vadd.f32 %v8562, %v8568
      %v8572 = vmax.f32 %v8570, 0.0
      %v8573 = vmax.f32 %v8571, 0.0
      %s8574 = scalar_lea.vmem %s5, 24
      %v8575 = vld [vmem:[%s8574] sm:$0xff]
      %v8577 = vsel %vm3087, %v8575, 0
      %8579 = vmatprep.subr.mxu0 %v8573
      %8580 = vmatpush1.msra.mxu0 %v8572
      %8581 = vmatprep.subr.mxu0 0.0
      %8582 = vmatpush1.msra.mxu0 0.0
      %8583 = vmatprep.subr.mxu0 0.0
      %8584 = vmatpush1.msra.mxu0 0.0
      %8585 = vmatprep.subr.mxu0 0.0
      %8586 = vmatpush1.msra.mxu0 0.0
      %8587 = vmatprep.subr.mxu0 0.0
      %8588 = vmatpush1.msra.mxu0 0.0
      %8589 = vmatprep.subr.mxu0 0.0
      %8590 = vmatpush1.msra.mxu0 0.0
      %8591 = vmatprep.subr.mxu0 0.0
      %8592 = vmatpush1.msra.mxu0 0.0
      %8593 = vmatprep.subr.mxu0 0.0
      %8594 = vmatpush1.msra.mxu0 0.0
      %8595 = vmatprep.subr.mxu0 0.0
      %8596 = vmatpush1.msra.mxu0 0.0
      %8597 = vmatprep.subr.mxu0 0.0
      %8598 = vmatpush1.msra.mxu0 0.0
      %8599 = vmatprep.subr.mxu0 0.0
      %8600 = vmatpush1.msra.mxu0 0.0
      %8601 = vmatprep.subr.mxu0 0.0
      %8602 = vmatpush1.msra.mxu0 0.0
      %8603 = vmatprep.subr.mxu0 0.0
      %8604 = vmatpush1.msra.mxu0 0.0
      %8605 = vmatprep.subr.mxu0 0.0
      %8606 = vmatpush1.msra.mxu0 0.0
      %8607 = vmatprep.subr.mxu0 0.0
      %8608 = vmatpush1.msra.mxu0 0.0
      %8609 = vmatprep.subr.mxu0 0.0
      %8610 = vmatpush1.msra.mxu0 0.0
      %8611 = vmatprep.subr.mxu0 0.0
      %8612 = vmatpush1.msra.mxu0 0.0
      %8613 = vmatprep.subr.mxu0 0.0
      %8614 = vmatpush1.msra.mxu0 0.0
      %8615 = vmatprep.subr.mxu0 0.0
      %8616 = vmatpush1.msra.mxu0 0.0
      %8617 = vmatprep.subr.mxu0 0.0
      %8618 = vmatpush1.msra.mxu0 0.0
      %8619 = vmatprep.subr.mxu0 0.0
      %8620 = vmatpush1.msra.mxu0 0.0
      %8621 = vmatprep.subr.mxu0 0.0
      %8622 = vmatpush1.msra.mxu0 0.0
      %8623 = vmatprep.subr.mxu0 0.0
      %8624 = vmatpush1.msra.mxu0 0.0
      %8625 = vmatprep.subr.mxu0 0.0
      %8626 = vmatpush1.msra.mxu0 0.0
      %8627 = vmatprep.subr.mxu0 0.0
      %8628 = vmatpush1.msra.mxu0 0.0
      %8629 = vmatprep.subr.mxu0 0.0
      %8630 = vmatpush1.msra.mxu0 0.0
      %8631 = vmatprep.subr.mxu0 0.0
      %8632 = vmatpush1.msra.mxu0 0.0
      %8633 = vmatprep.subr.mxu0 0.0
      %8634 = vmatpush1.msra.mxu0 0.0
      %8635 = vmatprep.subr.mxu0 0.0
      %8636 = vmatpush1.msra.mxu0 0.0
      %8637 = vmatprep.subr.mxu0 0.0
      %8638 = vmatpush1.msra.mxu0 0.0
      %8639 = vmatprep.subr.mxu0 0.0
      %8640 = vmatpush1.msra.mxu0 0.0
      %8641 = vmatprep.subr.mxu0 0.0
      %8642 = vmatpush1.msra.mxu0 0.0
      %8643 = vmatprep.mubr.f32.mxu0 0.0
      %8644 = vmatmul.mubr.f32.gmra.mrb[0].mxu0 %v8577
      %v8645 = vpop.f32.mrb[0].mxu0
      %v8646 = vadd.f32 0.0, %v8645
      %v8647 = vpop.f32.mrb[0].mxu0
      %v8648 = vadd.f32 0.0, %v8647
      %8649 = vdwg.mxu0
      %v8650 = vadd.f32 %v5944, %v8646
      %v8651 = vadd.f32 %v5945, %v8648
      %v8652 = vld [vmem:[%s335] sm:$0xff]
      %8654 = vset.pattern.permute.xlu0 0
      %8655 = vperm.xlu0 %8654, %v8652
      %v8656 = vpop.permute.xlu0 %8655
      %v8658 = vadd.f32 %v8650, %v8656
      %v8659 = vadd.f32 %v8651, %v8656
      %v8660 = vmax.f32 %v8658, 0.0
      %v8661 = vmax.f32 %v8659, 0.0
      %8662 = vst [vmem:[%s344] sm:$0xff] %v8660
      %8663 = vst [vmem:[%s344 + $0x8] sm:$0xff] %v8661
      %p8664 = scmp.lt.s32.totalorder %s23, 1
      %s8665 = scalar_select %p8664, %s23, 1
      %p8666 = scmp.lt.s32.totalorder %s24, 15
      %s8667 = scalar_select %p8666, %s24, 15
      %s8668 = smul.addr %s8667, 2
      %s8669 = smul.addr %s8665, 32
      %s8670 = sadd.s32 %s8668, %s8669
      %s8671 = smul.addr %s8670, 8
      %s8672 = scalar_lea.vmem %s8, %s8671
      // Predicated region
      $region53: #{aspp_forward_pallas.1} parent=51 // pred_check
        %p8673 = pneg %p229
      $region54: #{aspp_forward_pallas.1} parent=51 // pred_check_branch
        %8675 = sbr.rel (%p8673) target = $region56
      $region55: #{aspp_forward_pallas.1} parent=51 // pred_region
        _
      $region56: #{aspp_forward_pallas.1} parent=51 // pred_fallthru
        _
    $region52: #{aspp_forward_pallas.1} parent=5 // pred_fallthru
      _
    %p8676 = scmp.le.s32.totalorder 2, %s14
    // Predicated region
    $region57: #{aspp_forward_pallas.1} parent=5 // pred_check
      %p8677 = pneg %p8676
    $region58: #{aspp_forward_pallas.1} parent=5 // pred_check_branch
      %8679 = sbr.rel (%p8677) target = $region60
    $region59: #{aspp_forward_pallas.1} parent=5 // pred_region
      %s8680 = ssub.s32 %s14, 2
      // Predicated region
      $region61: #{aspp_forward_pallas.1} parent=59 // pred_check
        %p8681 = pneg %p235
      $region62: #{aspp_forward_pallas.1} parent=59 // pred_check_branch
        %8683 = sbr.rel (%p8681) target = $region64
      $region63: #{aspp_forward_pallas.1} parent=59 // pred_region
        %p8684 = scmp.lt.s32.totalorder %s25, 1
        %s8685 = scalar_select %p8684, %s25, 1
        %p8686 = scmp.lt.s32.totalorder %s26, 15
        %s8687 = scalar_select %p8686, %s26, 15
        %s8688 = smul.addr %s8687, 2
        %s8689 = smul.addr %s8685, 32
        %s8690 = sadd.s32 %s8688, %s8689
        %s8691 = smul.addr %s8690, 8
        %s8692 = scalar_lea.vmem %s8, %s8691
      $region64: #{aspp_forward_pallas.1} parent=59 // pred_fallthru
        _
    $region60: #{aspp_forward_pallas.1} parent=5 // pred_fallthru
      _
  $region6: #{aspp_forward_pallas.1} parent=0 // loop_footer
    %s18 = sadd.s32 1, %s14
  $region7: #{aspp_forward_pallas.1} parent=0 // loop_footer_branch
    %13 = sbr.rel target = $region3
  $region8: #{aspp_forward_pallas.1} parent=0 // loop_exit
    _

</llo_original>
